<compile_context>
chip_gen: v7x
topology: tpu7x:2x2x1
jax: 0.10.0
libtpu: 0.0.40
codegen_flags: <defaults>
</compile_context>

<pallas_src>
import functools

import jax
import jax.numpy as jnp
import numpy as np
from jax import lax
from jax.experimental import pallas as pl
from jax.experimental.pallas import tpu as pltpu

EPS = 1e-5
LANE = 128


def _round_up(x, m):
    return (x + m - 1) // m * m


# -----------------------------------------------------------------------------------
# Probe: pin pltpu.roll's shift convention (should match jnp.roll) and verify that a
# sublane (axis=0) roll lowers on this backend.  Returns (supported, sign) where
# sign=+1 means jnp.roll convention (out[i] = x[i - shift]).
# -----------------------------------------------------------------------------------
_ROLL_PROBE = None


def _probe_roll():
    global _ROLL_PROBE
    if _ROLL_PROBE is not None:
        return _ROLL_PROBE

    def k(x_ref, o_ref):
        o_ref[...] = pltpu.roll(x_ref[...], 1, 0)

    try:
        x = jnp.arange(16, dtype=jnp.float32)[:, None] * jnp.ones((1, 128), jnp.float32)
        y = pl.pallas_call(
            k, out_shape=jax.ShapeDtypeStruct((16, 128), jnp.float32))(x)
        first = float(jax.block_until_ready(y)[0, 0])
        if first == 15.0:        # jnp.roll(x, 1, axis=0)[0] == x[-1]
            _ROLL_PROBE = (True, 1)
        elif first == 1.0:       # opposite rotate convention
            _ROLL_PROBE = (True, -1)
        else:
            _ROLL_PROBE = (False, 1)
    except Exception:
        _ROLL_PROBE = (False, 1)
    return _ROLL_PROBE


# -----------------------------------------------------------------------------------
# Kernel
# -----------------------------------------------------------------------------------
def _basic_block_kernel(x_ref, w1_ref, w2_ref, w3_ref, b_ref, out_ref, *scratch,
                        H, W, use_roll, roll_sign, pad_rows):
    bb, HW, Cin = x_ref.shape          # bb images per grid step, channels unpadded
    M = bb * HW
    C1p = w1_ref.shape[1]
    C2p = w3_ref.shape[0]
    C3p = w3_ref.shape[1]

    x2d = x_ref[...].reshape(M, Cin)   # (M, Cin) bf16

    # ---- stage 1: 1x1 conv (BN scale folded into weights) + bias + ReLU ----
    y1 = jnp.dot(x2d, w1_ref[...], preferred_element_type=jnp.float32)
    y1 = jnp.maximum(y1 + b_ref[0:1, :C1p], 0.0)            # (M, C1p) f32

    # ---- per-row boundary masks for the 3x3 conv (multiplicative, f32, (M, 1)) ----
    m_idx = lax.broadcasted_iota(jnp.int32, (M, 1), 0)
    if (W & (W - 1)) == 0 and (H & (H - 1)) == 0:
        w_id = jnp.bitwise_and(m_idx, W - 1)
        h_id = jnp.bitwise_and(jnp.right_shift(m_idx, (W - 1).bit_length()), H - 1)
    else:
        # TODO(synk): non power-of-two H/W relies on vector int div/rem lowering.
        w_id = m_idx % W
        h_id = (m_idx // W) % H
    mh = {0: jnp.where(h_id != 0, 1.0, 0.0), 2: jnp.where(h_id != H - 1, 1.0, 0.0)}
    mw = {0: jnp.where(w_id != 0, 1.0, 0.0), 2: jnp.where(w_id != W - 1, 1.0, 0.0)}

    # Fallback tap source: flat scratch with zero slabs above/below the image block.
    if not use_roll:
        plane = scratch[0]
        zeros = jnp.zeros((pad_rows, C1p), jnp.float32)
        plane[pl.ds(0, pad_rows), :] = zeros
        plane[pl.ds(pad_rows + M, pad_rows), :] = zeros
        plane[pl.ds(pad_rows, M), :] = y1

    def tap(off):
        # tap[m] == y1[m + off]  (rows made invalid by the shift are masked below)
        if off == 0:
            return y1
        if use_roll:
            return pltpu.roll(y1, (-off * roll_sign) % M, axis=0)
        return scratch[0][pl.ds(pad_rows + off, M), :]

    # ---- stage 2: 3x3 conv as 3 K-fused MXU dots (K = 3*C1p each) ----
    acc = None
    for kh in range(3):
        cols = []
        for kw in range(3):
            t = tap((kh - 1) * W + (kw - 1))
            mask = None
            if kh in mh:
                mask = mh[kh]
            if kw in mw:
                mask = mw[kw] if mask is None else mask * mw[kw]
            cols.append(t if mask is None else t * mask)
        lhs = jnp.concatenate(cols, axis=1).astype(jnp.bfloat16)   # (M, 3*C1p)
        part = jnp.dot(lhs, w2_ref[kh], preferred_element_type=jnp.float32)
        acc = part if acc is None else acc + part
    h2 = jnp.maximum(acc + b_ref[1:2, :C2p], 0.0)            # (M, C2p) f32

    # ---- stage 3: 1x1 conv + bias + ReLU ----
    h3 = jnp.dot(h2.astype(jnp.bfloat16), w3_ref[...],
                 preferred_element_type=jnp.float32)
    h3 = jnp.maximum(h3 + b_ref[2:3, :C3p], 0.0)             # (M, C3p) f32

    # ---- residual: expand x to the 128-lane layout exactly via an identity matmul ----
    rr = lax.broadcasted_iota(jnp.int32, (Cin, C3p), 0)
    cc = lax.broadcasted_iota(jnp.int32, (Cin, C3p), 1)
    eye = jnp.where(rr == cc, 1.0, 0.0).astype(jnp.bfloat16)
    resid = jnp.dot(x2d, eye, preferred_element_type=jnp.float32)  # exact copy of x

    out = jnp.maximum(resid + h3, 0.0).astype(out_ref.dtype)
    out_ref[...] = out.reshape(bb, HW, C3p)                  # lane-dense bf16 store


# -----------------------------------------------------------------------------------
# Wrapper
# -----------------------------------------------------------------------------------
def basic_block_pallas(x_nhwc, w1_hwio, bn1, w2_hwio, bn2, w3_hwio, bn3):
    """x_nhwc: (B, H, W, Cin) f32. w*_hwio: HWIO conv weights. bn* = (gamma, beta, mean, var)."""
    B, H, W, Cin = x_nhwc.shape
    C1 = w1_hwio.shape[-1]
    C2 = w2_hwio.shape[-1]
    C3 = w3_hwio.shape[-1]
    assert C3 == Cin, "residual add requires c3 == in_channel"
    HW = H * W
    assert HW % 8 == 0 and H >= 2 and W >= 2

    C1p = _round_up(C1, LANE)
    C2p = _round_up(C2, LANE)
    C3p = _round_up(C3, LANE)
    CBp = max(C1p, C2p, C3p)

    def fold(gamma, beta, mean, var):
        scale = gamma / jnp.sqrt(var + EPS)
        return scale, beta - mean * scale

    s1, b1 = fold(*bn1)
    s2, b2 = fold(*bn2)
    s3, b3 = fold(*bn3)

    # Fold BN scale into conv weights (valid: per-output-channel scale precedes ReLU).
    w1 = w1_hwio[0, 0] * s1[None, :]                   # (Cin, C1)
    w2 = w2_hwio * s2[None, None, None, :]             # (3, 3, C1, C2)
    w3 = w3_hwio[0, 0] * s3[None, :]                   # (C2, C3)

    # Lane-pad output channel dims, bf16 for the MXU; stage-1 K stays unpadded at Cin.
    w1p = jnp.zeros((Cin, C1p), jnp.float32).at[:, :C1].set(w1).astype(jnp.bfloat16)
    w2p = jnp.zeros((3, 3, C1p, C2p), jnp.float32).at[:, :, :C1, :C2].set(w2)
    w2r = w2p.reshape(3, 3 * C1p, C2p).astype(jnp.bfloat16)     # per-row K-fused weights
    w3p = jnp.zeros((C2p, C3p), jnp.float32).at[:C2, :C3].set(w3).astype(jnp.bfloat16)

    bias = jnp.zeros((3, CBp), jnp.float32)
    bias = bias.at[0, :C1].set(b1).at[1, :C2].set(b2).at[2, :C3].set(b3)

    # Unpadded bf16 input: 4x less input HBM traffic than padding channels to 128.
    xf = x_nhwc.reshape(B, HW, Cin).astype(jnp.bfloat16)

    # Grid strategy: v7x has 2 TensorCores per device -> split batch across them;
    # v5e/v6e have a single TensorCore -> fold the whole batch into the matmul M dim.
    try:
        kind = jax.devices()[0].device_kind.lower()
    except Exception:
        kind = ""
    two_tc = "v7" in kind
    if two_tc and B > 1:
        grid_b, bb = B, 1
    else:
        grid_b, bb = 1, B
    M = bb * HW

    roll_ok, roll_sign = _probe_roll()
    pad_rows = _round_up(W + 1, 8)     # fallback scratch halo (covers |shift| <= W+1)

    def build(use_roll):
        kern = functools.partial(
            _basic_block_kernel, H=H, W=W, use_roll=use_roll,
            roll_sign=roll_sign, pad_rows=pad_rows)
        scratch = ([] if use_roll
                   else [pltpu.VMEM((M + 2 * pad_rows, C1p), jnp.float32)])
        return pl.pallas_call(
            kern,
            out_shape=jax.ShapeDtypeStruct((B, HW, C3p), jnp.bfloat16),
            grid_spec=pltpu.PrefetchScalarGridSpec(
                num_scalar_prefetch=0,
                grid=(grid_b,),
                in_specs=[
                    pl.BlockSpec((bb, HW, Cin), lambda i: (i, 0, 0)),
                    pl.BlockSpec(w1p.shape, lambda i: (0, 0)),
                    pl.BlockSpec(w2r.shape, lambda i: (0, 0, 0)),
                    pl.BlockSpec(w3p.shape, lambda i: (0, 0)),
                    pl.BlockSpec(bias.shape, lambda i: (0, 0)),
                ],
                out_specs=pl.BlockSpec((bb, HW, C3p), lambda i: (i, 0, 0)),
                scratch_shapes=scratch,
            ),
            compiler_params=pltpu.CompilerParams(
                dimension_semantics=("parallel",)),
        )(xf, w1p, w2r, w3p, bias)

    if roll_ok:
        try:
            out = jax.block_until_ready(build(True))
        except Exception:
            out = jax.block_until_ready(build(False))
    else:
        out = jax.block_until_ready(build(False))

    out = out.reshape(B, H, W, C3p)[..., :C3]
    # Kernel writes bf16 (halves HBM writeback); upcast outside the kernel to match the
    # module's f32 output dtype.
    return out.astype(jnp.float32)


# ---------------------------- reference (pure JAX / XLA, f32) ----------------------------
def _conv_nhwc(x, w_hwio):
    return jax.lax.conv_general_dilated(
        x, w_hwio, window_strides=(1, 1), padding="SAME",
        dimension_numbers=("NHWC", "HWIO", "NHWC"))


def _bn(x, gamma, beta, mean, var):
    return (x - mean) / jnp.sqrt(var + EPS) * gamma + beta


def basic_block_reference(x_nhwc, convs, bns):
    (w1, w2, w3) = convs
    h = x_nhwc
    h = jax.nn.relu(_bn(_conv_nhwc(h, w1), *bns[0]))
    h = jax.nn.relu(_bn(_conv_nhwc(h, w2), *bns[1]))
    h = jax.nn.relu(_bn(_conv_nhwc(h, w3), *bns[2]))
    return jax.nn.relu(x_nhwc + h)


if __name__ == "__main__":
    # Small shapes consistent with BasicBlock(in_channel=32, filters=(16, 16, 32)).
    B, Cin, H, W = 2, 32, 16, 16
    C1, C2, C3 = 16, 16, 32

    key = jax.random.PRNGKey(0)
    keys = jax.random.split(key, 16)

    # Deterministic parameter init (conv weights in HWIO; no conv bias, as in the module).
    w1_hwio = 0.1 * jax.random.normal(keys[0], (1, 1, Cin, C1), jnp.float32)
    w2_hwio = 0.1 * jax.random.normal(keys[1], (3, 3, C1, C2), jnp.float32)
    w3_hwio = 0.1 * jax.random.normal(keys[2], (1, 1, C2, C3), jnp.float32)

    def bn_params(k, c):
        k1, k2, k3, k4 = jax.random.split(k, 4)
        gamma = jax.random.uniform(k1, (c,), jnp.float32, 0.5, 1.5)
        beta = 0.1 * jax.random.normal(k2, (c,), jnp.float32)
        mean = 0.1 * jax.random.normal(k3, (c,), jnp.float32)
        var = jax.random.uniform(k4, (c,), jnp.float32, 0.5, 1.5)
        return gamma, beta, mean, var

    bn1 = bn_params(keys[3], C1)
    bn2 = bn_params(keys[4], C2)
    bn3 = bn_params(keys[5], C3)

    # Input (PyTorch NCHW convention), transposed to NHWC for the kernel.
    x_nchw = jax.random.normal(keys[6], (B, Cin, H, W), jnp.float32)
    x_nhwc = jnp.transpose(x_nchw, (0, 2, 3, 1))

    out_nhwc = basic_block_pallas(x_nhwc, w1_hwio, bn1, w2_hwio, bn2, w3_hwio, bn3)
    out_nhwc = jax.block_until_ready(out_nhwc)
    out_nchw = jnp.transpose(out_nhwc, (0, 3, 1, 2))  # back to PyTorch NCHW

    ref_nhwc = basic_block_reference(x_nhwc, (w1_hwio, w2_hwio, w3_hwio), (bn1, bn2, bn3))
    ref_nhwc = jax.block_until_ready(ref_nhwc)

    # Matmuls and the kernel's HBM I/O are bf16 (f32 accumulation); the reference is
    # pure f32, hence the loose tolerance.
    np.testing.assert_allclose(np.asarray(out_nhwc), np.asarray(ref_nhwc),
                               rtol=2.5e-2, atol=7.5e-2)
    assert out_nchw.shape == (B, C3, H, W)
    print("KERNEL_OK")
</pallas_src>

<mosaic_0001>
module attributes {stable_mosaic.version = 11 : i64} {
  func.func @k(%arg0: memref<16x128xf32, #tpu.memory_space<vmem>>, %arg1: memref<16x128xf32, #tpu.memory_space<vmem>>) attributes {dimension_semantics = [], scalar_prefetch = 0 : i64, scratch_operands = 0 : i64, tpu.core_type = #tpu.core_type<tc>} {
    %c0 = arith.constant 0 : index
    %c0_0 = arith.constant 0 : index
    %0 = vector.load %arg0[%c0, %c0_0] : memref<16x128xf32, #tpu.memory_space<vmem>>, vector<16x128xf32>
    %c1_i32 = arith.constant 1 : i32
    %1 = tpu.dynamic_rotate %0 by %c1_i32 dim 0 : vector<16x128xf32>, i32 -> vector<16x128xf32>
    %c0_1 = arith.constant 0 : index
    %c0_2 = arith.constant 0 : index
    %2 = vector.load %arg1[%c0_1, %c0_2] : memref<16x128xf32, #tpu.memory_space<vmem>>, vector<16x128xf32>
    tpu.vector_store %arg1[%c0_1, %c0_2], %1 {strides = array<i32>} : memref<16x128xf32, #tpu.memory_space<vmem>>, vector<16x128xf32>,
    return
  }
}

module attributes {stable_mosaic.version = 11 : i64} {
  func.func @_basic_block_kernel(%arg0: i32, %arg1: memref<2x256x32xbf16, #tpu.memory_space<vmem>>, %arg2: memref<32x128xbf16, #tpu.memory_space<vmem>>, %arg3: memref<3x384x128xbf16, #tpu.memory_space<vmem>>, %arg4: memref<128x128xbf16, #tpu.memory_space<vmem>>, %arg5: memref<3x128xf32, #tpu.memory_space<vmem>>, %arg6: memref<2x256x128xbf16, #tpu.memory_space<vmem>>, %arg7: memref<560x128xf32, #tpu.memory_space<vmem>>) attributes {dimension_semantics = [#tpu.dimension_semantics<parallel>], iteration_bounds = array<i64: 1>, scalar_prefetch = 0 : i64, scratch_operands = 1 : i64, tpu.core_type = #tpu.core_type<tc>, window_params = [{transform_indices = @transform_0, window_bounds = array<i64: 2, 256, 32>}, {pipeline_mode = #tpu.pipeline_mode<synchronous>, transform_indices = @transform_1, window_bounds = array<i64: 32, 128>}, {pipeline_mode = #tpu.pipeline_mode<synchronous>, transform_indices = @transform_2, window_bounds = array<i64: 3, 384, 128>}, {pipeline_mode = #tpu.pipeline_mode<synchronous>, transform_indices = @transform_3, window_bounds = array<i64: 128, 128>}, {pipeline_mode = #tpu.pipeline_mode<synchronous>, transform_indices = @transform_4, window_bounds = array<i64: 3, 128>}, {transform_indices = @transform_5, window_bounds = array<i64: 2, 256, 128>}]} {
    %c0 = arith.constant 0 : index
    %c0_0 = arith.constant 0 : index
    %c0_1 = arith.constant 0 : index
    %0 = vector.load %arg1[%c0, %c0_0, %c0_1] : memref<2x256x32xbf16, #tpu.memory_space<vmem>>, vector<2x256x32xbf16>
    %1 = vector.shape_cast %0 : vector<2x256x32xbf16> to vector<512x32xbf16>
    %c0_2 = arith.constant 0 : index
    %c0_3 = arith.constant 0 : index
    %2 = vector.load %arg2[%c0_2, %c0_3] : memref<32x128xbf16, #tpu.memory_space<vmem>>, vector<32x128xbf16>
    %cst = arith.constant dense<0.000000e+00> : vector<512x128xf32>
    %3 = tpu.matmul %1, %2, %cst {dimension_numbers = #tpu.dot_dimension_numbers<[1], [0], [0], [1], [0, 0, 1, 1], [], []>} : vector<512x32xbf16>, vector<32x128xbf16>, vector<512x128xf32> -> vector<512x128xf32>
    %c0_4 = arith.constant 0 : index
    %c0_5 = arith.constant 0 : index
    %4 = vector.load %arg5[%c0_4, %c0_5] : memref<3x128xf32, #tpu.memory_space<vmem>>, vector<1x128xf32>
    %5 = vector.broadcast %4 : vector<1x128xf32> to vector<512x128xf32>
    %6 = arith.addf %3, %5 : vector<512x128xf32>
    %cst_6 = arith.constant 0.000000e+00 : f32
    %7 = vector.broadcast %cst_6 : f32 to vector<512x128xf32>
    %8 = arith.maximumf %6, %7 : vector<512x128xf32>
    %9 = tpu.iota {dimensions = array<i32: 0>} : vector<512x1xi32>
    %c15_i32 = arith.constant 15 : i32
    %10 = vector.broadcast %c15_i32 : i32 to vector<512x1xi32>
    %11 = arith.andi %9, %10 : vector<512x1xi32>
    %c4_i32 = arith.constant 4 : i32
    %12 = vector.broadcast %c4_i32 : i32 to vector<512x1xi32>
    %13 = arith.shrsi %9, %12 : vector<512x1xi32>
    %c15_i32_7 = arith.constant 15 : i32
    %14 = vector.broadcast %c15_i32_7 : i32 to vector<512x1xi32>
    %15 = arith.andi %13, %14 : vector<512x1xi32>
    %c0_i32 = arith.constant 0 : i32
    %16 = vector.broadcast %c0_i32 : i32 to vector<512x1xi32>
    %17 = arith.cmpi ne, %15, %16 : vector<512x1xi32>
    %cst_8 = arith.constant 1.000000e+00 : f32
    %cst_9 = arith.constant 0.000000e+00 : f32
    %18 = vector.broadcast %cst_8 : f32 to vector<512x1xf32>
    %19 = vector.broadcast %cst_9 : f32 to vector<512x1xf32>
    %20 = arith.select %17, %18, %19 : vector<512x1xi1>, vector<512x1xf32>
    %c15_i32_10 = arith.constant 15 : i32
    %21 = vector.broadcast %c15_i32_10 : i32 to vector<512x1xi32>
    %22 = arith.cmpi ne, %15, %21 : vector<512x1xi32>
    %cst_11 = arith.constant 1.000000e+00 : f32
    %cst_12 = arith.constant 0.000000e+00 : f32
    %23 = vector.broadcast %cst_11 : f32 to vector<512x1xf32>
    %24 = vector.broadcast %cst_12 : f32 to vector<512x1xf32>
    %25 = arith.select %22, %23, %24 : vector<512x1xi1>, vector<512x1xf32>
    %c0_i32_13 = arith.constant 0 : i32
    %26 = vector.broadcast %c0_i32_13 : i32 to vector<512x1xi32>
    %27 = arith.cmpi ne, %11, %26 : vector<512x1xi32>
    %cst_14 = arith.constant 1.000000e+00 : f32
    %cst_15 = arith.constant 0.000000e+00 : f32
    %28 = vector.broadcast %cst_14 : f32 to vector<512x1xf32>
    %29 = vector.broadcast %cst_15 : f32 to vector<512x1xf32>
    %30 = arith.select %27, %28, %29 : vector<512x1xi1>, vector<512x1xf32>
    %c15_i32_16 = arith.constant 15 : i32
    %31 = vector.broadcast %c15_i32_16 : i32 to vector<512x1xi32>
    %32 = arith.cmpi ne, %11, %31 : vector<512x1xi32>
    %cst_17 = arith.constant 1.000000e+00 : f32
    %cst_18 = arith.constant 0.000000e+00 : f32
    %33 = vector.broadcast %cst_17 : f32 to vector<512x1xf32>
    %34 = vector.broadcast %cst_18 : f32 to vector<512x1xf32>
    %35 = arith.select %32, %33, %34 : vector<512x1xi1>, vector<512x1xf32>
    %cst_19 = arith.constant 0.000000e+00 : f32
    %36 = vector.broadcast %cst_19 : f32 to vector<24x128xf32>
    %c0_20 = arith.constant 0 : index
    %c0_21 = arith.constant 0 : index
    %37 = vector.load %arg7[%c0_20, %c0_21] : memref<560x128xf32, #tpu.memory_space<vmem>>, vector<24x128xf32>
    tpu.vector_store %arg7[%c0_20, %c0_21], %36 {strides = array<i32>} : memref<560x128xf32, #tpu.memory_space<vmem>>, vector<24x128xf32>,
    %c536 = arith.constant 536 : index
    %c0_22 = arith.constant 0 : index
    %38 = vector.load %arg7[%c536, %c0_22] : memref<560x128xf32, #tpu.memory_space<vmem>>, vector<24x128xf32>
    tpu.vector_store %arg7[%c536, %c0_22], %36 {strides = array<i32>} : memref<560x128xf32, #tpu.memory_space<vmem>>, vector<24x128xf32>,
    %c24 = arith.constant 24 : index
    %c0_23 = arith.constant 0 : index
    %39 = vector.load %arg7[%c24, %c0_23] : memref<560x128xf32, #tpu.memory_space<vmem>>, vector<512x128xf32>
    tpu.vector_store %arg7[%c24, %c0_23], %8 {strides = array<i32>} : memref<560x128xf32, #tpu.memory_space<vmem>>, vector<512x128xf32>,
    %c7 = arith.constant 7 : index
    %c0_24 = arith.constant 0 : index
    %40 = vector.load %arg7[%c7, %c0_24] : memref<560x128xf32, #tpu.memory_space<vmem>>, vector<512x128xf32>
    %41 = arith.mulf %20, %30 : vector<512x1xf32>
    %42 = vector.broadcast %41 : vector<512x1xf32> to vector<512x128xf32>
    %43 = arith.mulf %40, %42 : vector<512x128xf32>
    %c8 = arith.constant 8 : index
    %c0_25 = arith.constant 0 : index
    %44 = vector.load %arg7[%c8, %c0_25] : memref<560x128xf32, #tpu.memory_space<vmem>>, vector<512x128xf32>
    %45 = vector.broadcast %20 : vector<512x1xf32> to vector<512x128xf32>
    %46 = arith.mulf %44, %45 : vector<512x128xf32>
    %c9 = arith.constant 9 : index
    %c0_26 = arith.constant 0 : index
    %47 = vector.load %arg7[%c9, %c0_26] : memref<560x128xf32, #tpu.memory_space<vmem>>, vector<512x128xf32>
    %48 = arith.mulf %20, %35 : vector<512x1xf32>
    %49 = vector.broadcast %48 : vector<512x1xf32> to vector<512x128xf32>
    %50 = arith.mulf %47, %49 : vector<512x128xf32>
    %51 = tpu.concatenate %43, %46, %50 in 1 : vector<512x128xf32>, vector<512x128xf32>, vector<512x128xf32> -> vector<512x384xf32>
    %52 = arith.truncf %51 : vector<512x384xf32> to vector<512x384xbf16>
    %c0_27 = arith.constant 0 : index
    %c0_28 = arith.constant 0 : index
    %c0_29 = arith.constant 0 : index
    %53 = vector.load %arg3[%c0_27, %c0_28, %c0_29] : memref<3x384x128xbf16, #tpu.memory_space<vmem>>, vector<1x384x128xbf16>
    %54 = vector.shape_cast %53 : vector<1x384x128xbf16> to vector<384x128xbf16>
    %cst_30 = arith.constant dense<0.000000e+00> : vector<512x128xf32>
    %55 = tpu.matmul %52, %54, %cst_30 {dimension_numbers = #tpu.dot_dimension_numbers<[1], [0], [0], [1], [0, 0, 1, 1], [], []>} : vector<512x384xbf16>, vector<384x128xbf16>, vector<512x128xf32> -> vector<512x128xf32>
    %c23 = arith.constant 23 : index
    %c0_31 = arith.constant 0 : index
    %56 = vector.load %arg7[%c23, %c0_31] : memref<560x128xf32, #tpu.memory_space<vmem>>, vector<512x128xf32>
    %57 = vector.broadcast %30 : vector<512x1xf32> to vector<512x128xf32>
    %58 = arith.mulf %56, %57 : vector<512x128xf32>
    %c25 = arith.constant 25 : index
    %c0_32 = arith.constant 0 : index
    %59 = vector.load %arg7[%c25, %c0_32] : memref<560x128xf32, #tpu.memory_space<vmem>>, vector<512x128xf32>
    %60 = vector.broadcast %35 : vector<512x1xf32> to vector<512x128xf32>
    %61 = arith.mulf %59, %60 : vector<512x128xf32>
    %62 = tpu.concatenate %58, %8, %61 in 1 : vector<512x128xf32>, vector<512x128xf32>, vector<512x128xf32> -> vector<512x384xf32>
    %63 = arith.truncf %62 : vector<512x384xf32> to vector<512x384xbf16>
    %c1 = arith.constant 1 : index
    %c0_33 = arith.constant 0 : index
    %c0_34 = arith.constant 0 : index
    %64 = vector.load %arg3[%c1, %c0_33, %c0_34] : memref<3x384x128xbf16, #tpu.memory_space<vmem>>, vector<1x384x128xbf16>
    %65 = vector.shape_cast %64 : vector<1x384x128xbf16> to vector<384x128xbf16>
    %cst_35 = arith.constant dense<0.000000e+00> : vector<512x128xf32>
    %66 = tpu.matmul %63, %65, %cst_35 {dimension_numbers = #tpu.dot_dimension_numbers<[1], [0], [0], [1], [0, 0, 1, 1], [], []>} : vector<512x384xbf16>, vector<384x128xbf16>, vector<512x128xf32> -> vector<512x128xf32>
    %67 = arith.addf %55, %66 : vector<512x128xf32>
    %c39 = arith.constant 39 : index
    %c0_36 = arith.constant 0 : index
    %68 = vector.load %arg7[%c39, %c0_36] : memref<560x128xf32, #tpu.memory_space<vmem>>, vector<512x128xf32>
    %69 = arith.mulf %25, %30 : vector<512x1xf32>
    %70 = vector.broadcast %69 : vector<512x1xf32> to vector<512x128xf32>
    %71 = arith.mulf %68, %70 : vector<512x128xf32>
    %c40 = arith.constant 40 : index
    %c0_37 = arith.constant 0 : index
    %72 = vector.load %arg7[%c40, %c0_37] : memref<560x128xf32, #tpu.memory_space<vmem>>, vector<512x128xf32>
    %73 = vector.broadcast %25 : vector<512x1xf32> to vector<512x128xf32>
    %74 = arith.mulf %72, %73 : vector<512x128xf32>
    %c41 = arith.constant 41 : index
    %c0_38 = arith.constant 0 : index
    %75 = vector.load %arg7[%c41, %c0_38] : memref<560x128xf32, #tpu.memory_space<vmem>>, vector<512x128xf32>
    %76 = arith.mulf %25, %35 : vector<512x1xf32>
    %77 = vector.broadcast %76 : vector<512x1xf32> to vector<512x128xf32>
    %78 = arith.mulf %75, %77 : vector<512x128xf32>
    %79 = tpu.concatenate %71, %74, %78 in 1 : vector<512x128xf32>, vector<512x128xf32>, vector<512x128xf32> -> vector<512x384xf32>
    %80 = arith.truncf %79 : vector<512x384xf32> to vector<512x384xbf16>
    %c2 = arith.constant 2 : index
    %c0_39 = arith.constant 0 : index
    %c0_40 = arith.constant 0 : index
    %81 = vector.load %arg3[%c2, %c0_39, %c0_40] : memref<3x384x128xbf16, #tpu.memory_space<vmem>>, vector<1x384x128xbf16>
    %82 = vector.shape_cast %81 : vector<1x384x128xbf16> to vector<384x128xbf16>
    %cst_41 = arith.constant dense<0.000000e+00> : vector<512x128xf32>
    %83 = tpu.matmul %80, %82, %cst_41 {dimension_numbers = #tpu.dot_dimension_numbers<[1], [0], [0], [1], [0, 0, 1, 1], [], []>} : vector<512x384xbf16>, vector<384x128xbf16>, vector<512x128xf32> -> vector<512x128xf32>
    %84 = arith.addf %67, %83 : vector<512x128xf32>
    %c1_42 = arith.constant 1 : index
    %c0_43 = arith.constant 0 : index
    %85 = vector.load %arg5[%c1_42, %c0_43] : memref<3x128xf32, #tpu.memory_space<vmem>>, vector<1x128xf32>
    %86 = vector.broadcast %85 : vector<1x128xf32> to vector<512x128xf32>
    %87 = arith.addf %84, %86 : vector<512x128xf32>
    %cst_44 = arith.constant 0.000000e+00 : f32
    %88 = vector.broadcast %cst_44 : f32 to vector<512x128xf32>
    %89 = arith.maximumf %87, %88 : vector<512x128xf32>
    %90 = arith.truncf %89 : vector<512x128xf32> to vector<512x128xbf16>
    %c0_45 = arith.constant 0 : index
    %c0_46 = arith.constant 0 : index
    %91 = vector.load %arg4[%c0_45, %c0_46] : memref<128x128xbf16, #tpu.memory_space<vmem>>, vector<128x128xbf16>
    %cst_47 = arith.constant dense<0.000000e+00> : vector<512x128xf32>
    %92 = tpu.matmul %90, %91, %cst_47 {dimension_numbers = #tpu.dot_dimension_numbers<[1], [0], [0], [1], [0, 0, 1, 1], [], []>} : vector<512x128xbf16>, vector<128x128xbf16>, vector<512x128xf32> -> vector<512x128xf32>
    %c2_48 = arith.constant 2 : index
    %c0_49 = arith.constant 0 : index
    %93 = vector.load %arg5[%c2_48, %c0_49] : memref<3x128xf32, #tpu.memory_space<vmem>>, vector<1x128xf32>
    %94 = vector.broadcast %93 : vector<1x128xf32> to vector<512x128xf32>
    %95 = arith.addf %92, %94 : vector<512x128xf32>
    %cst_50 = arith.constant 0.000000e+00 : f32
    %96 = vector.broadcast %cst_50 : f32 to vector<512x128xf32>
    %97 = arith.maximumf %95, %96 : vector<512x128xf32>
    %98 = tpu.iota {dimensions = array<i32: 0>} : vector<32x128xi32>
    %99 = tpu.iota {dimensions = array<i32: 1>} : vector<32x128xi32>
    %100 = arith.cmpi eq, %98, %99 : vector<32x128xi32>
    %cst_51 = arith.constant 1.000000e+00 : f32
    %cst_52 = arith.constant 0.000000e+00 : f32
    %101 = vector.broadcast %cst_51 : f32 to vector<32x128xf32>
    %102 = vector.broadcast %cst_52 : f32 to vector<32x128xf32>
    %103 = arith.select %100, %101, %102 : vector<32x128xi1>, vector<32x128xf32>
    %104 = arith.truncf %103 : vector<32x128xf32> to vector<32x128xbf16>
    %cst_53 = arith.constant dense<0.000000e+00> : vector<512x128xf32>
    %105 = tpu.matmul %1, %104, %cst_53 {dimension_numbers = #tpu.dot_dimension_numbers<[1], [0], [0], [1], [0, 0, 1, 1], [], []>} : vector<512x32xbf16>, vector<32x128xbf16>, vector<512x128xf32> -> vector<512x128xf32>
    %106 = arith.addf %105, %97 : vector<512x128xf32>
    %cst_54 = arith.constant 0.000000e+00 : f32
    %107 = vector.broadcast %cst_54 : f32 to vector<512x128xf32>
    %108 = arith.maximumf %106, %107 : vector<512x128xf32>
    %109 = arith.truncf %108 : vector<512x128xf32> to vector<512x128xbf16>
    %110 = vector.shape_cast %109 : vector<512x128xbf16> to vector<2x256x128xbf16>
    %c0_55 = arith.constant 0 : index
    %c0_56 = arith.constant 0 : index
    %c0_57 = arith.constant 0 : index
    %111 = vector.load %arg6[%c0_55, %c0_56, %c0_57] : memref<2x256x128xbf16, #tpu.memory_space<vmem>>, vector<2x256x128xbf16>
    tpu.vector_store %arg6[%c0_55, %c0_56, %c0_57], %110 {strides = array<i32>} : memref<2x256x128xbf16, #tpu.memory_space<vmem>>, vector<2x256x128xbf16>,
    return
  }
  func.func @transform_0(%arg0: i32) -> (i32, i32, i32) {
    %c0_i32 = arith.constant 0 : i32
    %c0_i32_0 = arith.constant 0 : i32
    %c0_i32_1 = arith.constant 0 : i32
    return %arg0, %c0_i32, %c0_i32_0 : i32, i32, i32
  }
  func.func @transform_1(%arg0: i32) -> (i32, i32) {
    %c0_i32 = arith.constant 0 : i32
    %c0_i32_0 = arith.constant 0 : i32
    %c0_i32_1 = arith.constant 0 : i32
    return %c0_i32, %c0_i32_0 : i32, i32
  }
  func.func @transform_2(%arg0: i32) -> (i32, i32, i32) {
    %c0_i32 = arith.constant 0 : i32
    %c0_i32_0 = arith.constant 0 : i32
    %c0_i32_1 = arith.constant 0 : i32
    %c0_i32_2 = arith.constant 0 : i32
    return %c0_i32, %c0_i32_0, %c0_i32_1 : i32, i32, i32
  }
  func.func @transform_3(%arg0: i32) -> (i32, i32) {
    %c0_i32 = arith.constant 0 : i32
    %c0_i32_0 = arith.constant 0 : i32
    %c0_i32_1 = arith.constant 0 : i32
    return %c0_i32, %c0_i32_0 : i32, i32
  }
  func.func @transform_4(%arg0: i32) -> (i32, i32) {
    %c0_i32 = arith.constant 0 : i32
    %c0_i32_0 = arith.constant 0 : i32
    %c0_i32_1 = arith.constant 0 : i32
    return %c0_i32, %c0_i32_0 : i32, i32
  }
  func.func @transform_5(%arg0: i32) -> (i32, i32, i32) {
    %c0_i32 = arith.constant 0 : i32
    %c0_i32_0 = arith.constant 0 : i32
    %c0_i32_1 = arith.constant 0 : i32
    return %arg0, %c0_i32, %c0_i32_0 : i32, i32, i32
  }
}

</mosaic_0001>

<llo_original>
// kernel: tpu_custom_call.1
$region0: #{tpu_custom_call.1}
  #allocation0 [shape = 'u32[]', space=smem, size = 0x4, offset = 0x4, fixed_abs, tag = 'smem constant byte address 0x4 - core index']
  #allocation1 [shape = 'u32[144,128]{1,0:T(1,128)}', space=vmem, size = 0x12000, scoped, tag = 'internal scratch']
  %s0 = inlined_call_operand.hbm [shape: f32[16,128], index: 0, kind: input, shape index: {}]
  %s1 = inlined_call_operand.hbm [shape: f32[16,128], index: 1, kind: output, shape index: {}]
  %s2 = sld [smem:[#allocation0]]
  $region18: #{tpu_custom_call.1} parent=0
    _
  %s4 = ssub.s32 1, %s2
  %s5 = scalar_select 0, %s4, %s2
  $region1: #{tpu_custom_call.1} parent=0
    #allocation2 [shape = 'u8[8192]{0}', space=vmem, size = 0x2000, scoped, tag = 'input window, operand 0, single buffered']
    #allocation3 [shape = 's32[1]{0}', space=sflag, size = 0x4, scoped, tag = 'scoped memory for tpu_custom_call.1']
    #allocation4 [shape = 's32[1]{0}', space=sflag, size = 0x4, scoped, tag = 'scoped memory for tpu_custom_call.1']
    #allocation5 [shape = 'u8[8192]{0}', space=vmem, size = 0x2000, scoped, tag = 'output window, operand 0, single buffered']
    %6 = vsyncpa [#allocation3], 0
    %7 = vsyncpa [#allocation4], 0
    // Predicated region
    $region2: #{tpu_custom_call.1} parent=1 // pred_check
      _
    $region3: #{tpu_custom_call.1} parent=1 // pred_check_branch
      %9 = sbr.rel (0) target = $region5
    $region4: #{tpu_custom_call.1} parent=1 // pred_region
      %s11 = ssub.s32 256, 256
      %12 = vsyncadd [#allocation3], %s11
      %s13 = sshll.u32 [#allocation2], 4
      %s14 = int_to_ptr.vmem [resolvable:$true] %s13
      %19 = dma.hbm_to_vmem [thread:$0]  %s0, 256, %s14, [#allocation3], 128, 128, 8
    $region5: #{tpu_custom_call.1} parent=1 // pred_fallthru
      _
    // Predicated region
    $region6: #{tpu_custom_call.1} parent=1 // pred_check
      _
    $region7: #{tpu_custom_call.1} parent=1 // pred_check_branch
      %21 = sbr.rel (0) target = $region9
    $region8: #{tpu_custom_call.1} parent=1 // pred_region
      %22 = dma.done [#allocation3], 256
    $region9: #{tpu_custom_call.1} parent=1 // pred_fallthru
      _
    %v23 = vld [vmem:[#allocation2] sm:$0xff]
    %v24 = vld [vmem:[#allocation2 + $0x8] sm:$0xff]
    %v25 = vrot.slane %v23, 7
    %v26 = vrot.slane %v24, 7
    %v27 = vlaneseq
    %v28 = vshrl.u32 %v27, 7
    %vm29 = vcmp.lt.s32.totalorder %v28, 1
    %v30 = vsel %vm29, %v25, %v26
    %v31 = vsel %vm29, %v26, %v25
    %32 = vst [vmem:[#allocation5] sm:$0xff] %v31
    %33 = vst [vmem:[#allocation5 + $0x8] sm:$0xff] %v30
    // Predicated region
    $region10: #{tpu_custom_call.1} parent=1 // pred_check
      _
    $region11: #{tpu_custom_call.1} parent=1 // pred_check_branch
      %35 = sbr.rel (0) target = $region13
    $region12: #{tpu_custom_call.1} parent=1 // pred_region
      %s37 = ssub.s32 256, 256
      %38 = vsyncadd [#allocation4], %s37
      %s39 = sshll.u32 [#allocation5], 4
      %s40 = int_to_ptr.vmem [resolvable:$true] %s39
      %45 = dma.vmem_to_hbm [thread:$0]  %s40, 256, %s1, [#allocation4], 128, 128, 8
    $region13: #{tpu_custom_call.1} parent=1 // pred_fallthru
      _
    // Predicated region
    $region14: #{tpu_custom_call.1} parent=1 // pred_check
      _
    $region15: #{tpu_custom_call.1} parent=1 // pred_check_branch
      %47 = sbr.rel (0) target = $region17
    $region16: #{tpu_custom_call.1} parent=1 // pred_region
      %48 = dma.done [#allocation4], 256
    $region17: #{tpu_custom_call.1} parent=1 // pred_fallthru
      _
    %49 = vsyncpa [#allocation3], 1
    %50 = vsyncpa [#allocation4], 1

// kernel: tpu_custom_call.1
$region0: #{tpu_custom_call.1}
  #allocation0 [shape = 'u32[]', space=smem, size = 0x4, offset = 0x4, fixed_abs, tag = 'smem constant byte address 0x4 - core index']
  #allocation1 [shape = 'u32[144,128]{1,0:T(1,128)}', space=vmem, size = 0x12000, scoped, tag = 'internal scratch']
  #allocation2 [shape = 'f32[560,128]{1,0:T(8,128)}', space=vmem, size = 0x46000, scoped, tag = 'scratch operand']
  %s0 = inlined_call_operand.vmem [shape: bf16[2,256,32], index: 0, kind: input, shape index: {}]
  %s1 = inlined_call_operand.vmem [shape: bf16[32,128], index: 1, kind: input, shape index: {}]
  %s2 = inlined_call_operand.hbm [shape: bf16[3,384,128], index: 2, kind: input, shape index: {}]
  %s3 = inlined_call_operand.vmem [shape: bf16[128,128], index: 3, kind: input, shape index: {}]
  %s4 = inlined_call_operand.vmem [shape: f32[3,128], index: 4, kind: input, shape index: {}]
  %s5 = inlined_call_operand.hbm [shape: bf16[2,256,128], index: 5, kind: output, shape index: {}]
  %s6 = sld [smem:[#allocation0]]
  $region34: #{tpu_custom_call.1} parent=0
    _
  %s8 = ssub.s32 1, %s6
  %s9 = scalar_select 0, %s8, %s6
  $region1: #{tpu_custom_call.1} parent=0
    #allocation3 [shape = 'u8[294912]{0}', space=vmem, size = 0x48000, scoped, tag = 'input window, operand 2, single buffered']
    #allocation4 [shape = 's32[1]{0}', space=sflag, size = 0x4, scoped, tag = 'scoped memory for tpu_custom_call.1']
    #allocation5 [shape = 's32[1]{0}', space=sflag, size = 0x4, scoped, tag = 'scoped memory for tpu_custom_call.1']
    #allocation6 [shape = 'u8[131072]{0}', space=vmem, size = 0x20000, scoped, tag = 'output window, operand 0, single buffered']
    %10 = vsyncpa [#allocation4], 0
    %11 = vsyncpa [#allocation5], 0
    // Predicated region
    $region2: #{tpu_custom_call.1} parent=1 // pred_check
      _
    $region3: #{tpu_custom_call.1} parent=1 // pred_check_branch
      %13 = sbr.rel (0) target = $region5
    $region4: #{tpu_custom_call.1} parent=1 // pred_region
      _
    $region5: #{tpu_custom_call.1} parent=1 // pred_fallthru
      _
    // Predicated region
    $region6: #{tpu_custom_call.1} parent=1 // pred_check
      _
    $region7: #{tpu_custom_call.1} parent=1 // pred_check_branch
      %15 = sbr.rel (0) target = $region9
    $region8: #{tpu_custom_call.1} parent=1 // pred_region
      _
    $region9: #{tpu_custom_call.1} parent=1 // pred_fallthru
      _
    // Predicated region
    $region10: #{tpu_custom_call.1} parent=1 // pred_check
      _
    $region11: #{tpu_custom_call.1} parent=1 // pred_check_branch
      %17 = sbr.rel (0) target = $region13
    $region12: #{tpu_custom_call.1} parent=1 // pred_region
      %s19 = ssub.s32 9216, 9216
      %20 = vsyncadd [#allocation4], %s19
      %s21 = sshll.u32 [#allocation3], 4
      %s22 = int_to_ptr.vmem [resolvable:$true] %s21
      %27 = dma.hbm_to_vmem [thread:$0]  %s2, 9216, %s22, [#allocation4], 64, 64, 4
    $region13: #{tpu_custom_call.1} parent=1 // pred_fallthru
      _
    // Predicated region
    $region14: #{tpu_custom_call.1} parent=1 // pred_check
      _
    $region15: #{tpu_custom_call.1} parent=1 // pred_check_branch
      %29 = sbr.rel (0) target = $region17
    $region16: #{tpu_custom_call.1} parent=1 // pred_region
      _
    $region17: #{tpu_custom_call.1} parent=1 // pred_fallthru
      _
    // Predicated region
    $region18: #{tpu_custom_call.1} parent=1 // pred_check
      _
    $region19: #{tpu_custom_call.1} parent=1 // pred_check_branch
      %31 = sbr.rel (0) target = $region21
    $region20: #{tpu_custom_call.1} parent=1 // pred_region
      _
    $region21: #{tpu_custom_call.1} parent=1 // pred_fallthru
      _
    // Predicated region
    $region22: #{tpu_custom_call.1} parent=1 // pred_check
      _
    $region23: #{tpu_custom_call.1} parent=1 // pred_check_branch
      %33 = sbr.rel (0) target = $region25
    $region24: #{tpu_custom_call.1} parent=1 // pred_region
      %34 = dma.done [#allocation4], 9216
    $region25: #{tpu_custom_call.1} parent=1 // pred_fallthru
      _
    %v36 = vld [vmem:[%s0] sm:$0xf]
    %v37 = vld [vmem:[%s0 + $0x4] sm:$0xf]
    %v38 = vld [vmem:[%s0 + $0x8] sm:$0xf]
    %v39 = vld [vmem:[%s0 + $0xc] sm:$0xf]
    %v40 = vld [vmem:[%s0 + $0x10] sm:$0xf]
    %v41 = vld [vmem:[%s0 + $0x14] sm:$0xf]
    %v42 = vld [vmem:[%s0 + $0x18] sm:$0xf]
    %v43 = vld [vmem:[%s0 + $0x1c] sm:$0xf]
    %v44 = vld [vmem:[%s0 + $0x20] sm:$0xf]
    %v45 = vld [vmem:[%s0 + $0x24] sm:$0xf]
    %v46 = vld [vmem:[%s0 + $0x28] sm:$0xf]
    %v47 = vld [vmem:[%s0 + $0x2c] sm:$0xf]
    %v48 = vld [vmem:[%s0 + $0x30] sm:$0xf]
    %v49 = vld [vmem:[%s0 + $0x34] sm:$0xf]
    %v50 = vld [vmem:[%s0 + $0x38] sm:$0xf]
    %v51 = vld [vmem:[%s0 + $0x3c] sm:$0xf]
    %v52 = vld [vmem:[%s0 + $0x40] sm:$0xf]
    %v53 = vld [vmem:[%s0 + $0x44] sm:$0xf]
    %v54 = vld [vmem:[%s0 + $0x48] sm:$0xf]
    %v55 = vld [vmem:[%s0 + $0x4c] sm:$0xf]
    %v56 = vld [vmem:[%s0 + $0x50] sm:$0xf]
    %v57 = vld [vmem:[%s0 + $0x54] sm:$0xf]
    %v58 = vld [vmem:[%s0 + $0x58] sm:$0xf]
    %v59 = vld [vmem:[%s0 + $0x5c] sm:$0xf]
    %v60 = vld [vmem:[%s0 + $0x60] sm:$0xf]
    %v61 = vld [vmem:[%s0 + $0x64] sm:$0xf]
    %v62 = vld [vmem:[%s0 + $0x68] sm:$0xf]
    %v63 = vld [vmem:[%s0 + $0x6c] sm:$0xf]
    %v64 = vld [vmem:[%s0 + $0x70] sm:$0xf]
    %v65 = vld [vmem:[%s0 + $0x74] sm:$0xf]
    %v66 = vld [vmem:[%s0 + $0x78] sm:$0xf]
    %v67 = vld [vmem:[%s0 + $0x7c] sm:$0xf]
    %v68 = vld [vmem:[%s0 + $0x80] sm:$0xf]
    %v69 = vld [vmem:[%s0 + $0x84] sm:$0xf]
    %v70 = vld [vmem:[%s0 + $0x88] sm:$0xf]
    %v71 = vld [vmem:[%s0 + $0x8c] sm:$0xf]
    %v72 = vld [vmem:[%s0 + $0x90] sm:$0xf]
    %v73 = vld [vmem:[%s0 + $0x94] sm:$0xf]
    %v74 = vld [vmem:[%s0 + $0x98] sm:$0xf]
    %v75 = vld [vmem:[%s0 + $0x9c] sm:$0xf]
    %v76 = vld [vmem:[%s0 + $0xa0] sm:$0xf]
    %v77 = vld [vmem:[%s0 + $0xa4] sm:$0xf]
    %v78 = vld [vmem:[%s0 + $0xa8] sm:$0xf]
    %v79 = vld [vmem:[%s0 + $0xac] sm:$0xf]
    %v80 = vld [vmem:[%s0 + $0xb0] sm:$0xf]
    %v81 = vld [vmem:[%s0 + $0xb4] sm:$0xf]
    %v82 = vld [vmem:[%s0 + $0xb8] sm:$0xf]
    %v83 = vld [vmem:[%s0 + $0xbc] sm:$0xf]
    %v84 = vld [vmem:[%s0 + $0xc0] sm:$0xf]
    %v85 = vld [vmem:[%s0 + $0xc4] sm:$0xf]
    %v86 = vld [vmem:[%s0 + $0xc8] sm:$0xf]
    %v87 = vld [vmem:[%s0 + $0xcc] sm:$0xf]
    %v88 = vld [vmem:[%s0 + $0xd0] sm:$0xf]
    %v89 = vld [vmem:[%s0 + $0xd4] sm:$0xf]
    %v90 = vld [vmem:[%s0 + $0xd8] sm:$0xf]
    %v91 = vld [vmem:[%s0 + $0xdc] sm:$0xf]
    %v92 = vld [vmem:[%s0 + $0xe0] sm:$0xf]
    %v93 = vld [vmem:[%s0 + $0xe4] sm:$0xf]
    %v94 = vld [vmem:[%s0 + $0xe8] sm:$0xf]
    %v95 = vld [vmem:[%s0 + $0xec] sm:$0xf]
    %v96 = vld [vmem:[%s0 + $0xf0] sm:$0xf]
    %v97 = vld [vmem:[%s0 + $0xf4] sm:$0xf]
    %v98 = vld [vmem:[%s0 + $0xf8] sm:$0xf]
    %v99 = vld [vmem:[%s0 + $0xfc] sm:$0xf]
    %v100 = vld [vmem:[%s1] sm:$0xf]
    %v101 = vld [vmem:[%s1 + $0x4] sm:$0xf]
    %v102 = vld [vmem:[%s1 + $0x8] sm:$0xf]
    %v103 = vld [vmem:[%s1 + $0xc] sm:$0xf]
    %v104 = vld [vmem:[%s4] sm:$0x1]
    %v105 = vlaneseq
    %v106 = vshrl.u32 %v105, 7
    %v107 = vsub.s32 0, %v106
    %v108 = vrot.slane %v104, %v107
    %v173 = vunpack.c.l.b16 %v36
    %v174 = vunpack.c.l.b16 %v37
    %v175 = vunpack.c.l.b16 %v38
    %v176 = vunpack.c.l.b16 %v39
    %v177 = vunpack.c.l.b16 %v40
    %v178 = vunpack.c.l.b16 %v41
    %v179 = vunpack.c.l.b16 %v42
    %v180 = vunpack.c.l.b16 %v43
    %v181 = vunpack.c.l.b16 %v44
    %v182 = vunpack.c.l.b16 %v45
    %v183 = vunpack.c.l.b16 %v46
    %v184 = vunpack.c.l.b16 %v47
    %v185 = vunpack.c.l.b16 %v48
    %v186 = vunpack.c.l.b16 %v49
    %v187 = vunpack.c.l.b16 %v50
    %v188 = vunpack.c.l.b16 %v51
    %v189 = vunpack.c.l.b16 %v52
    %v190 = vunpack.c.l.b16 %v53
    %v191 = vunpack.c.l.b16 %v54
    %v192 = vunpack.c.l.b16 %v55
    %v193 = vunpack.c.l.b16 %v56
    %v194 = vunpack.c.l.b16 %v57
    %v195 = vunpack.c.l.b16 %v58
    %v196 = vunpack.c.l.b16 %v59
    %v197 = vunpack.c.l.b16 %v60
    %v198 = vunpack.c.l.b16 %v61
    %v199 = vunpack.c.l.b16 %v62
    %v200 = vunpack.c.l.b16 %v63
    %v201 = vunpack.c.l.b16 %v64
    %v202 = vunpack.c.l.b16 %v65
    %v203 = vunpack.c.l.b16 %v66
    %v204 = vunpack.c.l.b16 %v67
    %v205 = vunpack.c.l.b16 %v68
    %v206 = vunpack.c.l.b16 %v69
    %v207 = vunpack.c.l.b16 %v70
    %v208 = vunpack.c.l.b16 %v71
    %v209 = vunpack.c.l.b16 %v72
    %v210 = vunpack.c.l.b16 %v73
    %v211 = vunpack.c.l.b16 %v74
    %v212 = vunpack.c.l.b16 %v75
    %v213 = vunpack.c.l.b16 %v76
    %v214 = vunpack.c.l.b16 %v77
    %v215 = vunpack.c.l.b16 %v78
    %v216 = vunpack.c.l.b16 %v79
    %v217 = vunpack.c.l.b16 %v80
    %v218 = vunpack.c.l.b16 %v81
    %v219 = vunpack.c.l.b16 %v82
    %v220 = vunpack.c.l.b16 %v83
    %v221 = vunpack.c.l.b16 %v84
    %v222 = vunpack.c.l.b16 %v85
    %v223 = vunpack.c.l.b16 %v86
    %v224 = vunpack.c.l.b16 %v87
    %v225 = vunpack.c.l.b16 %v88
    %v226 = vunpack.c.l.b16 %v89
    %v227 = vunpack.c.l.b16 %v90
    %v228 = vunpack.c.l.b16 %v91
    %v229 = vunpack.c.l.b16 %v92
    %v230 = vunpack.c.l.b16 %v93
    %v231 = vunpack.c.l.b16 %v94
    %v232 = vunpack.c.l.b16 %v95
    %v233 = vunpack.c.l.b16 %v96
    %v234 = vunpack.c.l.b16 %v97
    %v235 = vunpack.c.l.b16 %v98
    %v236 = vunpack.c.l.b16 %v99
    %v237 = vpack.c.b16 %v174, %v173
    %v238 = vpack.c.b16 %v176, %v175
    %v239 = vpack.c.b16 %v178, %v177
    %v240 = vpack.c.b16 %v180, %v179
    %v241 = vpack.c.b16 %v182, %v181
    %v242 = vpack.c.b16 %v184, %v183
    %v243 = vpack.c.b16 %v186, %v185
    %v244 = vpack.c.b16 %v188, %v187
    %v245 = vpack.c.b16 %v190, %v189
    %v246 = vpack.c.b16 %v192, %v191
    %v247 = vpack.c.b16 %v194, %v193
    %v248 = vpack.c.b16 %v196, %v195
    %v249 = vpack.c.b16 %v198, %v197
    %v250 = vpack.c.b16 %v200, %v199
    %v251 = vpack.c.b16 %v202, %v201
    %v252 = vpack.c.b16 %v204, %v203
    %v253 = vpack.c.b16 %v206, %v205
    %v254 = vpack.c.b16 %v208, %v207
    %v255 = vpack.c.b16 %v210, %v209
    %v256 = vpack.c.b16 %v212, %v211
    %v257 = vpack.c.b16 %v214, %v213
    %v258 = vpack.c.b16 %v216, %v215
    %v259 = vpack.c.b16 %v218, %v217
    %v260 = vpack.c.b16 %v220, %v219
    %v261 = vpack.c.b16 %v222, %v221
    %v262 = vpack.c.b16 %v224, %v223
    %v263 = vpack.c.b16 %v226, %v225
    %v264 = vpack.c.b16 %v228, %v227
    %v265 = vpack.c.b16 %v230, %v229
    %v266 = vpack.c.b16 %v232, %v231
    %v267 = vpack.c.b16 %v234, %v233
    %v268 = vpack.c.b16 %v236, %v235
    %v273 = vunpack.c.l.b16 %v100
    %v274 = vunpack.c.l.b16 %v101
    %v275 = vunpack.c.l.b16 %v102
    %v276 = vunpack.c.l.b16 %v103
    %v277 = vpack.c.b16 %v274, %v273
    %v278 = vpack.c.b16 %v276, %v275
    %vm281 = vcmask 261120
    %v283 = vsel %vm281, %v237, 0
    %v286 = vsel %vm281, %v238, 0
    %v289 = vsel %vm281, %v239, 0
    %v292 = vsel %vm281, %v240, 0
    %v295 = vsel %vm281, %v241, 0
    %v298 = vsel %vm281, %v242, 0
    %v301 = vsel %vm281, %v243, 0
    %v304 = vsel %vm281, %v244, 0
    %v307 = vsel %vm281, %v245, 0
    %v310 = vsel %vm281, %v246, 0
    %v313 = vsel %vm281, %v247, 0
    %v316 = vsel %vm281, %v248, 0
    %v319 = vsel %vm281, %v249, 0
    %v322 = vsel %vm281, %v250, 0
    %v325 = vsel %vm281, %v251, 0
    %v328 = vsel %vm281, %v252, 0
    %v331 = vsel %vm281, %v253, 0
    %v334 = vsel %vm281, %v254, 0
    %v337 = vsel %vm281, %v255, 0
    %v340 = vsel %vm281, %v256, 0
    %v343 = vsel %vm281, %v257, 0
    %v346 = vsel %vm281, %v258, 0
    %v349 = vsel %vm281, %v259, 0
    %v352 = vsel %vm281, %v260, 0
    %v355 = vsel %vm281, %v261, 0
    %v358 = vsel %vm281, %v262, 0
    %v361 = vsel %vm281, %v263, 0
    %v364 = vsel %vm281, %v264, 0
    %v367 = vsel %vm281, %v265, 0
    %v370 = vsel %vm281, %v266, 0
    %v373 = vsel %vm281, %v267, 0
    %v376 = vsel %vm281, %v268, 0
    %378 = vmatprep.subr.bf16.mxu0 0
    %379 = vmatpush1.bf16.msra.mxu0 %v277
    %380 = vmatprep.subr.bf16.mxu0 0
    %381 = vmatpush1.bf16.msra.mxu0 %v278
    %382 = vmatprep.subr.bf16.mxu0 0
    %383 = vmatpush1.bf16.msra.mxu0 0
    %384 = vmatprep.subr.bf16.mxu0 0
    %385 = vmatpush1.bf16.msra.mxu0 0
    %386 = vmatprep.subr.bf16.mxu0 0
    %387 = vmatpush1.bf16.msra.mxu0 0
    %388 = vmatprep.subr.bf16.mxu0 0
    %389 = vmatpush1.bf16.msra.mxu0 0
    %390 = vmatprep.subr.bf16.mxu0 0
    %391 = vmatpush1.bf16.msra.mxu0 0
    %392 = vmatprep.subr.bf16.mxu0 0
    %393 = vmatpush1.bf16.msra.mxu0 0
    %394 = vmatprep.subr.bf16.mxu0 0
    %395 = vmatpush1.bf16.msra.mxu0 0
    %396 = vmatprep.subr.bf16.mxu0 0
    %397 = vmatpush1.bf16.msra.mxu0 0
    %398 = vmatprep.subr.bf16.mxu0 0
    %399 = vmatpush1.bf16.msra.mxu0 0
    %400 = vmatprep.subr.bf16.mxu0 0
    %401 = vmatpush1.bf16.msra.mxu0 0
    %402 = vmatprep.subr.bf16.mxu0 0
    %403 = vmatpush1.bf16.msra.mxu0 0
    %404 = vmatprep.subr.bf16.mxu0 0
    %405 = vmatpush1.bf16.msra.mxu0 0
    %406 = vmatprep.subr.bf16.mxu0 0
    %407 = vmatpush1.bf16.msra.mxu0 0
    %408 = vmatprep.subr.bf16.mxu0 0
    %409 = vmatpush1.bf16.msra.mxu0 0
    %410 = vmatprep.mubr.bf16.mxu0 0
    %411 = vmatmul.mubr.bf16.gmra.mrb[0].mxu0 %v283
    %v412 = vpop.f32.mrb[0].mxu0
    %v413 = vadd.f32 %v108, %v412
    %v414 = vpop.f32.mrb[0].mxu0
    %v415 = vpop.f32.mrb[0].mxu0
    %v416 = vadd.f32 %v108, %v415
    %v417 = vpop.f32.mrb[0].mxu0
    %418 = vmatprep.mubr.bf16.mxu0 0
    %419 = vmatmul.mubr.bf16.gmra.mrb[0].mxu0 %v286
    %v420 = vpop.f32.mrb[0].mxu0
    %v421 = vadd.f32 %v108, %v420
    %v422 = vpop.f32.mrb[0].mxu0
    %v423 = vpop.f32.mrb[0].mxu0
    %v424 = vadd.f32 %v108, %v423
    %v425 = vpop.f32.mrb[0].mxu0
    %426 = vmatprep.mubr.bf16.mxu0 0
    %427 = vmatmul.mubr.bf16.gmra.mrb[0].mxu0 %v289
    %v428 = vpop.f32.mrb[0].mxu0
    %v429 = vadd.f32 %v108, %v428
    %v430 = vpop.f32.mrb[0].mxu0
    %v431 = vpop.f32.mrb[0].mxu0
    %v432 = vadd.f32 %v108, %v431
    %v433 = vpop.f32.mrb[0].mxu0
    %434 = vmatprep.mubr.bf16.mxu0 0
    %435 = vmatmul.mubr.bf16.gmra.mrb[0].mxu0 %v292
    %v436 = vpop.f32.mrb[0].mxu0
    %v437 = vadd.f32 %v108, %v436
    %v438 = vpop.f32.mrb[0].mxu0
    %v439 = vpop.f32.mrb[0].mxu0
    %v440 = vadd.f32 %v108, %v439
    %v441 = vpop.f32.mrb[0].mxu0
    %442 = vmatprep.mubr.bf16.mxu0 0
    %443 = vmatmul.mubr.bf16.gmra.mrb[0].mxu0 %v295
    %v444 = vpop.f32.mrb[0].mxu0
    %v445 = vadd.f32 %v108, %v444
    %v446 = vpop.f32.mrb[0].mxu0
    %v447 = vpop.f32.mrb[0].mxu0
    %v448 = vadd.f32 %v108, %v447
    %v449 = vpop.f32.mrb[0].mxu0
    %450 = vmatprep.mubr.bf16.mxu0 0
    %451 = vmatmul.mubr.bf16.gmra.mrb[0].mxu0 %v298
    %v452 = vpop.f32.mrb[0].mxu0
    %v453 = vadd.f32 %v108, %v452
    %v454 = vpop.f32.mrb[0].mxu0
    %v455 = vpop.f32.mrb[0].mxu0
    %v456 = vadd.f32 %v108, %v455
    %v457 = vpop.f32.mrb[0].mxu0
    %458 = vmatprep.mubr.bf16.mxu0 0
    %459 = vmatmul.mubr.bf16.gmra.mrb[0].mxu0 %v301
    %v460 = vpop.f32.mrb[0].mxu0
    %v461 = vadd.f32 %v108, %v460
    %v462 = vpop.f32.mrb[0].mxu0
    %v463 = vpop.f32.mrb[0].mxu0
    %v464 = vadd.f32 %v108, %v463
    %v465 = vpop.f32.mrb[0].mxu0
    %466 = vmatprep.mubr.bf16.mxu0 0
    %467 = vmatmul.mubr.bf16.gmra.mrb[0].mxu0 %v304
    %v468 = vpop.f32.mrb[0].mxu0
    %v469 = vadd.f32 %v108, %v468
    %v470 = vpop.f32.mrb[0].mxu0
    %v471 = vpop.f32.mrb[0].mxu0
    %v472 = vadd.f32 %v108, %v471
    %v473 = vpop.f32.mrb[0].mxu0
    %474 = vmatprep.mubr.bf16.mxu0 0
    %475 = vmatmul.mubr.bf16.gmra.mrb[0].mxu0 %v307
    %v476 = vpop.f32.mrb[0].mxu0
    %v477 = vadd.f32 %v108, %v476
    %v478 = vpop.f32.mrb[0].mxu0
    %v479 = vpop.f32.mrb[0].mxu0
    %v480 = vadd.f32 %v108, %v479
    %v481 = vpop.f32.mrb[0].mxu0
    %482 = vmatprep.mubr.bf16.mxu0 0
    %483 = vmatmul.mubr.bf16.gmra.mrb[0].mxu0 %v310
    %v484 = vpop.f32.mrb[0].mxu0
    %v485 = vadd.f32 %v108, %v484
    %v486 = vpop.f32.mrb[0].mxu0
    %v487 = vpop.f32.mrb[0].mxu0
    %v488 = vadd.f32 %v108, %v487
    %v489 = vpop.f32.mrb[0].mxu0
    %490 = vmatprep.mubr.bf16.mxu0 0
    %491 = vmatmul.mubr.bf16.gmra.mrb[0].mxu0 %v313
    %v492 = vpop.f32.mrb[0].mxu0
    %v493 = vadd.f32 %v108, %v492
    %v494 = vpop.f32.mrb[0].mxu0
    %v495 = vpop.f32.mrb[0].mxu0
    %v496 = vadd.f32 %v108, %v495
    %v497 = vpop.f32.mrb[0].mxu0
    %498 = vmatprep.mubr.bf16.mxu0 0
    %499 = vmatmul.mubr.bf16.gmra.mrb[0].mxu0 %v316
    %v500 = vpop.f32.mrb[0].mxu0
    %v501 = vadd.f32 %v108, %v500
    %v502 = vpop.f32.mrb[0].mxu0
    %v503 = vpop.f32.mrb[0].mxu0
    %v504 = vadd.f32 %v108, %v503
    %v505 = vpop.f32.mrb[0].mxu0
    %506 = vmatprep.mubr.bf16.mxu0 0
    %507 = vmatmul.mubr.bf16.gmra.mrb[0].mxu0 %v319
    %v508 = vpop.f32.mrb[0].mxu0
    %v509 = vadd.f32 %v108, %v508
    %v510 = vpop.f32.mrb[0].mxu0
    %v511 = vpop.f32.mrb[0].mxu0
    %v512 = vadd.f32 %v108, %v511
    %v513 = vpop.f32.mrb[0].mxu0
    %514 = vmatprep.mubr.bf16.mxu0 0
    %515 = vmatmul.mubr.bf16.gmra.mrb[0].mxu0 %v322
    %v516 = vpop.f32.mrb[0].mxu0
    %v517 = vadd.f32 %v108, %v516
    %v518 = vpop.f32.mrb[0].mxu0
    %v519 = vpop.f32.mrb[0].mxu0
    %v520 = vadd.f32 %v108, %v519
    %v521 = vpop.f32.mrb[0].mxu0
    %522 = vmatprep.mubr.bf16.mxu0 0
    %523 = vmatmul.mubr.bf16.gmra.mrb[0].mxu0 %v325
    %v524 = vpop.f32.mrb[0].mxu0
    %v525 = vadd.f32 %v108, %v524
    %v526 = vpop.f32.mrb[0].mxu0
    %v527 = vpop.f32.mrb[0].mxu0
    %v528 = vadd.f32 %v108, %v527
    %v529 = vpop.f32.mrb[0].mxu0
    %530 = vmatprep.mubr.bf16.mxu0 0
    %531 = vmatmul.mubr.bf16.gmra.mrb[0].mxu0 %v328
    %v532 = vpop.f32.mrb[0].mxu0
    %v533 = vadd.f32 %v108, %v532
    %v534 = vpop.f32.mrb[0].mxu0
    %v535 = vpop.f32.mrb[0].mxu0
    %v536 = vadd.f32 %v108, %v535
    %v537 = vpop.f32.mrb[0].mxu0
    %538 = vmatprep.mubr.bf16.mxu0 0
    %539 = vmatmul.mubr.bf16.gmra.mrb[0].mxu0 %v331
    %v540 = vpop.f32.mrb[0].mxu0
    %v541 = vadd.f32 %v108, %v540
    %v542 = vpop.f32.mrb[0].mxu0
    %v543 = vpop.f32.mrb[0].mxu0
    %v544 = vadd.f32 %v108, %v543
    %v545 = vpop.f32.mrb[0].mxu0
    %546 = vmatprep.mubr.bf16.mxu0 0
    %547 = vmatmul.mubr.bf16.gmra.mrb[0].mxu0 %v334
    %v548 = vpop.f32.mrb[0].mxu0
    %v549 = vadd.f32 %v108, %v548
    %v550 = vpop.f32.mrb[0].mxu0
    %v551 = vpop.f32.mrb[0].mxu0
    %v552 = vadd.f32 %v108, %v551
    %v553 = vpop.f32.mrb[0].mxu0
    %554 = vmatprep.mubr.bf16.mxu0 0
    %555 = vmatmul.mubr.bf16.gmra.mrb[0].mxu0 %v337
    %v556 = vpop.f32.mrb[0].mxu0
    %v557 = vadd.f32 %v108, %v556
    %v558 = vpop.f32.mrb[0].mxu0
    %v559 = vpop.f32.mrb[0].mxu0
    %v560 = vadd.f32 %v108, %v559
    %v561 = vpop.f32.mrb[0].mxu0
    %562 = vmatprep.mubr.bf16.mxu0 0
    %563 = vmatmul.mubr.bf16.gmra.mrb[0].mxu0 %v340
    %v564 = vpop.f32.mrb[0].mxu0
    %v565 = vadd.f32 %v108, %v564
    %v566 = vpop.f32.mrb[0].mxu0
    %v567 = vpop.f32.mrb[0].mxu0
    %v568 = vadd.f32 %v108, %v567
    %v569 = vpop.f32.mrb[0].mxu0
    %570 = vmatprep.mubr.bf16.mxu0 0
    %571 = vmatmul.mubr.bf16.gmra.mrb[0].mxu0 %v343
    %v572 = vpop.f32.mrb[0].mxu0
    %v573 = vadd.f32 %v108, %v572
    %v574 = vpop.f32.mrb[0].mxu0
    %v575 = vpop.f32.mrb[0].mxu0
    %v576 = vadd.f32 %v108, %v575
    %v577 = vpop.f32.mrb[0].mxu0
    %578 = vmatprep.mubr.bf16.mxu0 0
    %579 = vmatmul.mubr.bf16.gmra.mrb[0].mxu0 %v346
    %v580 = vpop.f32.mrb[0].mxu0
    %v581 = vadd.f32 %v108, %v580
    %v582 = vpop.f32.mrb[0].mxu0
    %v583 = vpop.f32.mrb[0].mxu0
    %v584 = vadd.f32 %v108, %v583
    %v585 = vpop.f32.mrb[0].mxu0
    %586 = vmatprep.mubr.bf16.mxu0 0
    %587 = vmatmul.mubr.bf16.gmra.mrb[0].mxu0 %v349
    %v588 = vpop.f32.mrb[0].mxu0
    %v589 = vadd.f32 %v108, %v588
    %v590 = vpop.f32.mrb[0].mxu0
    %v591 = vpop.f32.mrb[0].mxu0
    %v592 = vadd.f32 %v108, %v591
    %v593 = vpop.f32.mrb[0].mxu0
    %594 = vmatprep.mubr.bf16.mxu0 0
    %595 = vmatmul.mubr.bf16.gmra.mrb[0].mxu0 %v352
    %v596 = vpop.f32.mrb[0].mxu0
    %v597 = vadd.f32 %v108, %v596
    %v598 = vpop.f32.mrb[0].mxu0
    %v599 = vpop.f32.mrb[0].mxu0
    %v600 = vadd.f32 %v108, %v599
    %v601 = vpop.f32.mrb[0].mxu0
    %602 = vmatprep.mubr.bf16.mxu0 0
    %603 = vmatmul.mubr.bf16.gmra.mrb[0].mxu0 %v355
    %v604 = vpop.f32.mrb[0].mxu0
    %v605 = vadd.f32 %v108, %v604
    %v606 = vpop.f32.mrb[0].mxu0
    %v607 = vpop.f32.mrb[0].mxu0
    %v608 = vadd.f32 %v108, %v607
    %v609 = vpop.f32.mrb[0].mxu0
    %610 = vmatprep.mubr.bf16.mxu0 0
    %611 = vmatmul.mubr.bf16.gmra.mrb[0].mxu0 %v358
    %v612 = vpop.f32.mrb[0].mxu0
    %v613 = vadd.f32 %v108, %v612
    %v614 = vpop.f32.mrb[0].mxu0
    %v615 = vpop.f32.mrb[0].mxu0
    %v616 = vadd.f32 %v108, %v615
    %v617 = vpop.f32.mrb[0].mxu0
    %618 = vmatprep.mubr.bf16.mxu0 0
    %619 = vmatmul.mubr.bf16.gmra.mrb[0].mxu0 %v361
    %v620 = vpop.f32.mrb[0].mxu0
    %v621 = vadd.f32 %v108, %v620
    %v622 = vpop.f32.mrb[0].mxu0
    %v623 = vpop.f32.mrb[0].mxu0
    %v624 = vadd.f32 %v108, %v623
    %v625 = vpop.f32.mrb[0].mxu0
    %626 = vmatprep.mubr.bf16.mxu0 0
    %627 = vmatmul.mubr.bf16.gmra.mrb[0].mxu0 %v364
    %v628 = vpop.f32.mrb[0].mxu0
    %v629 = vadd.f32 %v108, %v628
    %v630 = vpop.f32.mrb[0].mxu0
    %v631 = vpop.f32.mrb[0].mxu0
    %v632 = vadd.f32 %v108, %v631
    %v633 = vpop.f32.mrb[0].mxu0
    %634 = vmatprep.mubr.bf16.mxu0 0
    %635 = vmatmul.mubr.bf16.gmra.mrb[0].mxu0 %v367
    %v636 = vpop.f32.mrb[0].mxu0
    %v637 = vadd.f32 %v108, %v636
    %v638 = vpop.f32.mrb[0].mxu0
    %v639 = vpop.f32.mrb[0].mxu0
    %v640 = vadd.f32 %v108, %v639
    %v641 = vpop.f32.mrb[0].mxu0
    %642 = vmatprep.mubr.bf16.mxu0 0
    %643 = vmatmul.mubr.bf16.gmra.mrb[0].mxu0 %v370
    %v644 = vpop.f32.mrb[0].mxu0
    %v645 = vadd.f32 %v108, %v644
    %v646 = vpop.f32.mrb[0].mxu0
    %v647 = vpop.f32.mrb[0].mxu0
    %v648 = vadd.f32 %v108, %v647
    %v649 = vpop.f32.mrb[0].mxu0
    %650 = vmatprep.mubr.bf16.mxu0 0
    %651 = vmatmul.mubr.bf16.gmra.mrb[0].mxu0 %v373
    %v652 = vpop.f32.mrb[0].mxu0
    %v653 = vadd.f32 %v108, %v652
    %v654 = vpop.f32.mrb[0].mxu0
    %v655 = vpop.f32.mrb[0].mxu0
    %v656 = vadd.f32 %v108, %v655
    %v657 = vpop.f32.mrb[0].mxu0
    %658 = vmatprep.mubr.bf16.mxu0 0
    %659 = vmatmul.mubr.bf16.gmra.mrb[0].mxu0 %v376
    %v660 = vpop.f32.mrb[0].mxu0
    %v661 = vadd.f32 %v108, %v660
    %v662 = vpop.f32.mrb[0].mxu0
    %v663 = vpop.f32.mrb[0].mxu0
    %v664 = vadd.f32 %v108, %v663
    %v665 = vpop.f32.mrb[0].mxu0
    %666 = vdwg.mxu0
    %v667 = vmax.f32 %v413, 0.0
    %v668 = vmax.f32 %v416, 0.0
    %v669 = vmax.f32 %v421, 0.0
    %v670 = vmax.f32 %v424, 0.0
    %v671 = vmax.f32 %v429, 0.0
    %v672 = vmax.f32 %v432, 0.0
    %v673 = vmax.f32 %v437, 0.0
    %v674 = vmax.f32 %v440, 0.0
    %v675 = vmax.f32 %v445, 0.0
    %v676 = vmax.f32 %v448, 0.0
    %v677 = vmax.f32 %v453, 0.0
    %v678 = vmax.f32 %v456, 0.0
    %v679 = vmax.f32 %v461, 0.0
    %v680 = vmax.f32 %v464, 0.0
    %v681 = vmax.f32 %v469, 0.0
    %v682 = vmax.f32 %v472, 0.0
    %v683 = vmax.f32 %v477, 0.0
    %v684 = vmax.f32 %v480, 0.0
    %v685 = vmax.f32 %v485, 0.0
    %v686 = vmax.f32 %v488, 0.0
    %v687 = vmax.f32 %v493, 0.0
    %v688 = vmax.f32 %v496, 0.0
    %v689 = vmax.f32 %v501, 0.0
    %v690 = vmax.f32 %v504, 0.0
    %v691 = vmax.f32 %v509, 0.0
    %v692 = vmax.f32 %v512, 0.0
    %v693 = vmax.f32 %v517, 0.0
    %v694 = vmax.f32 %v520, 0.0
    %v695 = vmax.f32 %v525, 0.0
    %v696 = vmax.f32 %v528, 0.0
    %v697 = vmax.f32 %v533, 0.0
    %v698 = vmax.f32 %v536, 0.0
    %v699 = vmax.f32 %v541, 0.0
    %v700 = vmax.f32 %v544, 0.0
    %v701 = vmax.f32 %v549, 0.0
    %v702 = vmax.f32 %v552, 0.0
    %v703 = vmax.f32 %v557, 0.0
    %v704 = vmax.f32 %v560, 0.0
    %v705 = vmax.f32 %v565, 0.0
    %v706 = vmax.f32 %v568, 0.0
    %v707 = vmax.f32 %v573, 0.0
    %v708 = vmax.f32 %v576, 0.0
    %v709 = vmax.f32 %v581, 0.0
    %v710 = vmax.f32 %v584, 0.0
    %v711 = vmax.f32 %v589, 0.0
    %v712 = vmax.f32 %v592, 0.0
    %v713 = vmax.f32 %v597, 0.0
    %v714 = vmax.f32 %v600, 0.0
    %v715 = vmax.f32 %v605, 0.0
    %v716 = vmax.f32 %v608, 0.0
    %v717 = vmax.f32 %v613, 0.0
    %v718 = vmax.f32 %v616, 0.0
    %v719 = vmax.f32 %v621, 0.0
    %v720 = vmax.f32 %v624, 0.0
    %v721 = vmax.f32 %v629, 0.0
    %v722 = vmax.f32 %v632, 0.0
    %v723 = vmax.f32 %v637, 0.0
    %v724 = vmax.f32 %v640, 0.0
    %v725 = vmax.f32 %v645, 0.0
    %v726 = vmax.f32 %v648, 0.0
    %v727 = vmax.f32 %v653, 0.0
    %v728 = vmax.f32 %v656, 0.0
    %v729 = vmax.f32 %v661, 0.0
    %v730 = vmax.f32 %v664, 0.0
    %v731 = vlaneseq
    %v732 = vshrl.u32 %v731, 7
    %v733 = vadd.s32 %v732, 8
    %v734 = vadd.s32 %v732, 16
    %v735 = vadd.s32 %v732, 24
    %v736 = vadd.s32 %v732, 32
    %v737 = vadd.s32 %v732, 40
    %v738 = vadd.s32 %v732, 48
    %v739 = vadd.s32 %v732, 56
    %v740 = vadd.s32 %v732, 64
    %v741 = vadd.s32 %v732, 72
    %v742 = vadd.s32 %v732, 80
    %v743 = vadd.s32 %v732, 88
    %v744 = vadd.s32 %v732, 96
    %v745 = vadd.s32 %v732, 104
    %v746 = vadd.s32 %v732, 112
    %v747 = vadd.s32 %v732, 120
    %v748 = vadd.s32 %v732, 128
    %v749 = vadd.s32 %v732, 136
    %v750 = vadd.s32 %v732, 144
    %v751 = vadd.s32 %v732, 152
    %v752 = vadd.s32 %v732, 160
    %v753 = vadd.s32 %v732, 168
    %v754 = vadd.s32 %v732, 176
    %v755 = vadd.s32 %v732, 184
    %v756 = vadd.s32 %v732, 192
    %v757 = vadd.s32 %v732, 200
    %v758 = vadd.s32 %v732, 208
    %v759 = vadd.s32 %v732, 216
    %v760 = vadd.s32 %v732, 224
    %v761 = vadd.s32 %v732, 232
    %v762 = vadd.s32 %v732, 240
    %v763 = vadd.s32 %v732, 248
    %v764 = vadd.s32 %v732, 256
    %v765 = vadd.s32 %v732, 264
    %v766 = vadd.s32 %v732, 272
    %v767 = vadd.s32 %v732, 280
    %v768 = vadd.s32 %v732, 288
    %v769 = vadd.s32 %v732, 296
    %v770 = vadd.s32 %v732, 304
    %v771 = vadd.s32 %v732, 312
    %v772 = vadd.s32 %v732, 320
    %v773 = vadd.s32 %v732, 328
    %v774 = vadd.s32 %v732, 336
    %v775 = vadd.s32 %v732, 344
    %v776 = vadd.s32 %v732, 352
    %v777 = vadd.s32 %v732, 360
    %v778 = vadd.s32 %v732, 368
    %v779 = vadd.s32 %v732, 376
    %v780 = vadd.s32 %v732, 384
    %v781 = vadd.s32 %v732, 392
    %v782 = vadd.s32 %v732, 400
    %v783 = vadd.s32 %v732, 408
    %v784 = vadd.s32 %v732, 416
    %v785 = vadd.s32 %v732, 424
    %v786 = vadd.s32 %v732, 432
    %v787 = vadd.s32 %v732, 440
    %v788 = vadd.s32 %v732, 448
    %v789 = vadd.s32 %v732, 456
    %v790 = vadd.s32 %v732, 464
    %v791 = vadd.s32 %v732, 472
    %v792 = vadd.s32 %v732, 480
    %v793 = vadd.s32 %v732, 488
    %v794 = vadd.s32 %v732, 496
    %v795 = vadd.s32 %v732, 504
    %v796 = vand.u32 %v732, 15
    %v797 = vand.u32 %v733, 15
    %v798 = vand.u32 %v734, 15
    %v799 = vand.u32 %v735, 15
    %v800 = vand.u32 %v736, 15
    %v801 = vand.u32 %v737, 15
    %v802 = vand.u32 %v738, 15
    %v803 = vand.u32 %v739, 15
    %v804 = vand.u32 %v740, 15
    %v805 = vand.u32 %v741, 15
    %v806 = vand.u32 %v742, 15
    %v807 = vand.u32 %v743, 15
    %v808 = vand.u32 %v744, 15
    %v809 = vand.u32 %v745, 15
    %v810 = vand.u32 %v746, 15
    %v811 = vand.u32 %v747, 15
    %v812 = vand.u32 %v748, 15
    %v813 = vand.u32 %v749, 15
    %v814 = vand.u32 %v750, 15
    %v815 = vand.u32 %v751, 15
    %v816 = vand.u32 %v752, 15
    %v817 = vand.u32 %v753, 15
    %v818 = vand.u32 %v754, 15
    %v819 = vand.u32 %v755, 15
    %v820 = vand.u32 %v756, 15
    %v821 = vand.u32 %v757, 15
    %v822 = vand.u32 %v758, 15
    %v823 = vand.u32 %v759, 15
    %v824 = vand.u32 %v760, 15
    %v825 = vand.u32 %v761, 15
    %v826 = vand.u32 %v762, 15
    %v827 = vand.u32 %v763, 15
    %v828 = vand.u32 %v764, 15
    %v829 = vand.u32 %v765, 15
    %v830 = vand.u32 %v766, 15
    %v831 = vand.u32 %v767, 15
    %v832 = vand.u32 %v768, 15
    %v833 = vand.u32 %v769, 15
    %v834 = vand.u32 %v770, 15
    %v835 = vand.u32 %v771, 15
    %v836 = vand.u32 %v772, 15
    %v837 = vand.u32 %v773, 15
    %v838 = vand.u32 %v774, 15
    %v839 = vand.u32 %v775, 15
    %v840 = vand.u32 %v776, 15
    %v841 = vand.u32 %v777, 15
    %v842 = vand.u32 %v778, 15
    %v843 = vand.u32 %v779, 15
    %v844 = vand.u32 %v780, 15
    %v845 = vand.u32 %v781, 15
    %v846 = vand.u32 %v782, 15
    %v847 = vand.u32 %v783, 15
    %v848 = vand.u32 %v784, 15
    %v849 = vand.u32 %v785, 15
    %v850 = vand.u32 %v786, 15
    %v851 = vand.u32 %v787, 15
    %v852 = vand.u32 %v788, 15
    %v853 = vand.u32 %v789, 15
    %v854 = vand.u32 %v790, 15
    %v855 = vand.u32 %v791, 15
    %v856 = vand.u32 %v792, 15
    %v857 = vand.u32 %v793, 15
    %v858 = vand.u32 %v794, 15
    %v859 = vand.u32 %v795, 15
    %v860 = vshra.s32 %v732, 4
    %v861 = vshra.s32 %v733, 4
    %v862 = vshra.s32 %v734, 4
    %v863 = vshra.s32 %v735, 4
    %v864 = vshra.s32 %v736, 4
    %v865 = vshra.s32 %v737, 4
    %v866 = vshra.s32 %v738, 4
    %v867 = vshra.s32 %v739, 4
    %v868 = vshra.s32 %v740, 4
    %v869 = vshra.s32 %v741, 4
    %v870 = vshra.s32 %v742, 4
    %v871 = vshra.s32 %v743, 4
    %v872 = vshra.s32 %v744, 4
    %v873 = vshra.s32 %v745, 4
    %v874 = vshra.s32 %v746, 4
    %v875 = vshra.s32 %v747, 4
    %v876 = vshra.s32 %v748, 4
    %v877 = vshra.s32 %v749, 4
    %v878 = vshra.s32 %v750, 4
    %v879 = vshra.s32 %v751, 4
    %v880 = vshra.s32 %v752, 4
    %v881 = vshra.s32 %v753, 4
    %v882 = vshra.s32 %v754, 4
    %v883 = vshra.s32 %v755, 4
    %v884 = vshra.s32 %v756, 4
    %v885 = vshra.s32 %v757, 4
    %v886 = vshra.s32 %v758, 4
    %v887 = vshra.s32 %v759, 4
    %v888 = vshra.s32 %v760, 4
    %v889 = vshra.s32 %v761, 4
    %v890 = vshra.s32 %v762, 4
    %v891 = vshra.s32 %v763, 4
    %v892 = vshra.s32 %v764, 4
    %v893 = vshra.s32 %v765, 4
    %v894 = vshra.s32 %v766, 4
    %v895 = vshra.s32 %v767, 4
    %v896 = vshra.s32 %v768, 4
    %v897 = vshra.s32 %v769, 4
    %v898 = vshra.s32 %v770, 4
    %v899 = vshra.s32 %v771, 4
    %v900 = vshra.s32 %v772, 4
    %v901 = vshra.s32 %v773, 4
    %v902 = vshra.s32 %v774, 4
    %v903 = vshra.s32 %v775, 4
    %v904 = vshra.s32 %v776, 4
    %v905 = vshra.s32 %v777, 4
    %v906 = vshra.s32 %v778, 4
    %v907 = vshra.s32 %v779, 4
    %v908 = vshra.s32 %v780, 4
    %v909 = vshra.s32 %v781, 4
    %v910 = vshra.s32 %v782, 4
    %v911 = vshra.s32 %v783, 4
    %v912 = vshra.s32 %v784, 4
    %v913 = vshra.s32 %v785, 4
    %v914 = vshra.s32 %v786, 4
    %v915 = vshra.s32 %v787, 4
    %v916 = vshra.s32 %v788, 4
    %v917 = vshra.s32 %v789, 4
    %v918 = vshra.s32 %v790, 4
    %v919 = vshra.s32 %v791, 4
    %v920 = vshra.s32 %v792, 4
    %v921 = vshra.s32 %v793, 4
    %v922 = vshra.s32 %v794, 4
    %v923 = vshra.s32 %v795, 4
    %v924 = vand.u32 %v860, 15
    %v925 = vand.u32 %v861, 15
    %v926 = vand.u32 %v862, 15
    %v927 = vand.u32 %v863, 15
    %v928 = vand.u32 %v864, 15
    %v929 = vand.u32 %v865, 15
    %v930 = vand.u32 %v866, 15
    %v931 = vand.u32 %v867, 15
    %v932 = vand.u32 %v868, 15
    %v933 = vand.u32 %v869, 15
    %v934 = vand.u32 %v870, 15
    %v935 = vand.u32 %v871, 15
    %v936 = vand.u32 %v872, 15
    %v937 = vand.u32 %v873, 15
    %v938 = vand.u32 %v874, 15
    %v939 = vand.u32 %v875, 15
    %v940 = vand.u32 %v876, 15
    %v941 = vand.u32 %v877, 15
    %v942 = vand.u32 %v878, 15
    %v943 = vand.u32 %v879, 15
    %v944 = vand.u32 %v880, 15
    %v945 = vand.u32 %v881, 15
    %v946 = vand.u32 %v882, 15
    %v947 = vand.u32 %v883, 15
    %v948 = vand.u32 %v884, 15
    %v949 = vand.u32 %v885, 15
    %v950 = vand.u32 %v886, 15
    %v951 = vand.u32 %v887, 15
    %v952 = vand.u32 %v888, 15
    %v953 = vand.u32 %v889, 15
    %v954 = vand.u32 %v890, 15
    %v955 = vand.u32 %v891, 15
    %v956 = vand.u32 %v892, 15
    %v957 = vand.u32 %v893, 15
    %v958 = vand.u32 %v894, 15
    %v959 = vand.u32 %v895, 15
    %v960 = vand.u32 %v896, 15
    %v961 = vand.u32 %v897, 15
    %v962 = vand.u32 %v898, 15
    %v963 = vand.u32 %v899, 15
    %v964 = vand.u32 %v900, 15
    %v965 = vand.u32 %v901, 15
    %v966 = vand.u32 %v902, 15
    %v967 = vand.u32 %v903, 15
    %v968 = vand.u32 %v904, 15
    %v969 = vand.u32 %v905, 15
    %v970 = vand.u32 %v906, 15
    %v971 = vand.u32 %v907, 15
    %v972 = vand.u32 %v908, 15
    %v973 = vand.u32 %v909, 15
    %v974 = vand.u32 %v910, 15
    %v975 = vand.u32 %v911, 15
    %v976 = vand.u32 %v912, 15
    %v977 = vand.u32 %v913, 15
    %v978 = vand.u32 %v914, 15
    %v979 = vand.u32 %v915, 15
    %v980 = vand.u32 %v916, 15
    %v981 = vand.u32 %v917, 15
    %v982 = vand.u32 %v918, 15
    %v983 = vand.u32 %v919, 15
    %v984 = vand.u32 %v920, 15
    %v985 = vand.u32 %v921, 15
    %v986 = vand.u32 %v922, 15
    %v987 = vand.u32 %v923, 15
    %vm988 = vcmp.ne.s32.totalorder %v924, 0
    %vm989 = vcmp.ne.s32.totalorder %v925, 0
    %vm990 = vcmp.ne.s32.totalorder %v926, 0
    %vm991 = vcmp.ne.s32.totalorder %v927, 0
    %vm992 = vcmp.ne.s32.totalorder %v928, 0
    %vm993 = vcmp.ne.s32.totalorder %v929, 0
    %vm994 = vcmp.ne.s32.totalorder %v930, 0
    %vm995 = vcmp.ne.s32.totalorder %v931, 0
    %vm996 = vcmp.ne.s32.totalorder %v932, 0
    %vm997 = vcmp.ne.s32.totalorder %v933, 0
    %vm998 = vcmp.ne.s32.totalorder %v934, 0
    %vm999 = vcmp.ne.s32.totalorder %v935, 0
    %vm1000 = vcmp.ne.s32.totalorder %v936, 0
    %vm1001 = vcmp.ne.s32.totalorder %v937, 0
    %vm1002 = vcmp.ne.s32.totalorder %v938, 0
    %vm1003 = vcmp.ne.s32.totalorder %v939, 0
    %vm1004 = vcmp.ne.s32.totalorder %v940, 0
    %vm1005 = vcmp.ne.s32.totalorder %v941, 0
    %vm1006 = vcmp.ne.s32.totalorder %v942, 0
    %vm1007 = vcmp.ne.s32.totalorder %v943, 0
    %vm1008 = vcmp.ne.s32.totalorder %v944, 0
    %vm1009 = vcmp.ne.s32.totalorder %v945, 0
    %vm1010 = vcmp.ne.s32.totalorder %v946, 0
    %vm1011 = vcmp.ne.s32.totalorder %v947, 0
    %vm1012 = vcmp.ne.s32.totalorder %v948, 0
    %vm1013 = vcmp.ne.s32.totalorder %v949, 0
    %vm1014 = vcmp.ne.s32.totalorder %v950, 0
    %vm1015 = vcmp.ne.s32.totalorder %v951, 0
    %vm1016 = vcmp.ne.s32.totalorder %v952, 0
    %vm1017 = vcmp.ne.s32.totalorder %v953, 0
    %vm1018 = vcmp.ne.s32.totalorder %v954, 0
    %vm1019 = vcmp.ne.s32.totalorder %v955, 0
    %vm1020 = vcmp.ne.s32.totalorder %v956, 0
    %vm1021 = vcmp.ne.s32.totalorder %v957, 0
    %vm1022 = vcmp.ne.s32.totalorder %v958, 0
    %vm1023 = vcmp.ne.s32.totalorder %v959, 0
    %vm1024 = vcmp.ne.s32.totalorder %v960, 0
    %vm1025 = vcmp.ne.s32.totalorder %v961, 0
    %vm1026 = vcmp.ne.s32.totalorder %v962, 0
    %vm1027 = vcmp.ne.s32.totalorder %v963, 0
    %vm1028 = vcmp.ne.s32.totalorder %v964, 0
    %vm1029 = vcmp.ne.s32.totalorder %v965, 0
    %vm1030 = vcmp.ne.s32.totalorder %v966, 0
    %vm1031 = vcmp.ne.s32.totalorder %v967, 0
    %vm1032 = vcmp.ne.s32.totalorder %v968, 0
    %vm1033 = vcmp.ne.s32.totalorder %v969, 0
    %vm1034 = vcmp.ne.s32.totalorder %v970, 0
    %vm1035 = vcmp.ne.s32.totalorder %v971, 0
    %vm1036 = vcmp.ne.s32.totalorder %v972, 0
    %vm1037 = vcmp.ne.s32.totalorder %v973, 0
    %vm1038 = vcmp.ne.s32.totalorder %v974, 0
    %vm1039 = vcmp.ne.s32.totalorder %v975, 0
    %vm1040 = vcmp.ne.s32.totalorder %v976, 0
    %vm1041 = vcmp.ne.s32.totalorder %v977, 0
    %vm1042 = vcmp.ne.s32.totalorder %v978, 0
    %vm1043 = vcmp.ne.s32.totalorder %v979, 0
    %vm1044 = vcmp.ne.s32.totalorder %v980, 0
    %vm1045 = vcmp.ne.s32.totalorder %v981, 0
    %vm1046 = vcmp.ne.s32.totalorder %v982, 0
    %vm1047 = vcmp.ne.s32.totalorder %v983, 0
    %vm1048 = vcmp.ne.s32.totalorder %v984, 0
    %vm1049 = vcmp.ne.s32.totalorder %v985, 0
    %vm1050 = vcmp.ne.s32.totalorder %v986, 0
    %vm1051 = vcmp.ne.s32.totalorder %v987, 0
    %v1052 = vsel %vm988, 1.0, 0.0
    %v1053 = vsel %vm989, 1.0, 0.0
    %v1054 = vsel %vm990, 1.0, 0.0
    %v1055 = vsel %vm991, 1.0, 0.0
    %v1056 = vsel %vm992, 1.0, 0.0
    %v1057 = vsel %vm993, 1.0, 0.0
    %v1058 = vsel %vm994, 1.0, 0.0
    %v1059 = vsel %vm995, 1.0, 0.0
    %v1060 = vsel %vm996, 1.0, 0.0
    %v1061 = vsel %vm997, 1.0, 0.0
    %v1062 = vsel %vm998, 1.0, 0.0
    %v1063 = vsel %vm999, 1.0, 0.0
    %v1064 = vsel %vm1000, 1.0, 0.0
    %v1065 = vsel %vm1001, 1.0, 0.0
    %v1066 = vsel %vm1002, 1.0, 0.0
    %v1067 = vsel %vm1003, 1.0, 0.0
    %v1068 = vsel %vm1004, 1.0, 0.0
    %v1069 = vsel %vm1005, 1.0, 0.0
    %v1070 = vsel %vm1006, 1.0, 0.0
    %v1071 = vsel %vm1007, 1.0, 0.0
    %v1072 = vsel %vm1008, 1.0, 0.0
    %v1073 = vsel %vm1009, 1.0, 0.0
    %v1074 = vsel %vm1010, 1.0, 0.0
    %v1075 = vsel %vm1011, 1.0, 0.0
    %v1076 = vsel %vm1012, 1.0, 0.0
    %v1077 = vsel %vm1013, 1.0, 0.0
    %v1078 = vsel %vm1014, 1.0, 0.0
    %v1079 = vsel %vm1015, 1.0, 0.0
    %v1080 = vsel %vm1016, 1.0, 0.0
    %v1081 = vsel %vm1017, 1.0, 0.0
    %v1082 = vsel %vm1018, 1.0, 0.0
    %v1083 = vsel %vm1019, 1.0, 0.0
    %v1084 = vsel %vm1020, 1.0, 0.0
    %v1085 = vsel %vm1021, 1.0, 0.0
    %v1086 = vsel %vm1022, 1.0, 0.0
    %v1087 = vsel %vm1023, 1.0, 0.0
    %v1088 = vsel %vm1024, 1.0, 0.0
    %v1089 = vsel %vm1025, 1.0, 0.0
    %v1090 = vsel %vm1026, 1.0, 0.0
    %v1091 = vsel %vm1027, 1.0, 0.0
    %v1092 = vsel %vm1028, 1.0, 0.0
    %v1093 = vsel %vm1029, 1.0, 0.0
    %v1094 = vsel %vm1030, 1.0, 0.0
    %v1095 = vsel %vm1031, 1.0, 0.0
    %v1096 = vsel %vm1032, 1.0, 0.0
    %v1097 = vsel %vm1033, 1.0, 0.0
    %v1098 = vsel %vm1034, 1.0, 0.0
    %v1099 = vsel %vm1035, 1.0, 0.0
    %v1100 = vsel %vm1036, 1.0, 0.0
    %v1101 = vsel %vm1037, 1.0, 0.0
    %v1102 = vsel %vm1038, 1.0, 0.0
    %v1103 = vsel %vm1039, 1.0, 0.0
    %v1104 = vsel %vm1040, 1.0, 0.0
    %v1105 = vsel %vm1041, 1.0, 0.0
    %v1106 = vsel %vm1042, 1.0, 0.0
    %v1107 = vsel %vm1043, 1.0, 0.0
    %v1108 = vsel %vm1044, 1.0, 0.0
    %v1109 = vsel %vm1045, 1.0, 0.0
    %v1110 = vsel %vm1046, 1.0, 0.0
    %v1111 = vsel %vm1047, 1.0, 0.0
    %v1112 = vsel %vm1048, 1.0, 0.0
    %v1113 = vsel %vm1049, 1.0, 0.0
    %v1114 = vsel %vm1050, 1.0, 0.0
    %v1115 = vsel %vm1051, 1.0, 0.0
    %vm1116 = vcmp.ne.s32.totalorder %v924, 15
    %vm1117 = vcmp.ne.s32.totalorder %v925, 15
    %vm1118 = vcmp.ne.s32.totalorder %v926, 15
    %vm1119 = vcmp.ne.s32.totalorder %v927, 15
    %vm1120 = vcmp.ne.s32.totalorder %v928, 15
    %vm1121 = vcmp.ne.s32.totalorder %v929, 15
    %vm1122 = vcmp.ne.s32.totalorder %v930, 15
    %vm1123 = vcmp.ne.s32.totalorder %v931, 15
    %vm1124 = vcmp.ne.s32.totalorder %v932, 15
    %vm1125 = vcmp.ne.s32.totalorder %v933, 15
    %vm1126 = vcmp.ne.s32.totalorder %v934, 15
    %vm1127 = vcmp.ne.s32.totalorder %v935, 15
    %vm1128 = vcmp.ne.s32.totalorder %v936, 15
    %vm1129 = vcmp.ne.s32.totalorder %v937, 15
    %vm1130 = vcmp.ne.s32.totalorder %v938, 15
    %vm1131 = vcmp.ne.s32.totalorder %v939, 15
    %vm1132 = vcmp.ne.s32.totalorder %v940, 15
    %vm1133 = vcmp.ne.s32.totalorder %v941, 15
    %vm1134 = vcmp.ne.s32.totalorder %v942, 15
    %vm1135 = vcmp.ne.s32.totalorder %v943, 15
    %vm1136 = vcmp.ne.s32.totalorder %v944, 15
    %vm1137 = vcmp.ne.s32.totalorder %v945, 15
    %vm1138 = vcmp.ne.s32.totalorder %v946, 15
    %vm1139 = vcmp.ne.s32.totalorder %v947, 15
    %vm1140 = vcmp.ne.s32.totalorder %v948, 15
    %vm1141 = vcmp.ne.s32.totalorder %v949, 15
    %vm1142 = vcmp.ne.s32.totalorder %v950, 15
    %vm1143 = vcmp.ne.s32.totalorder %v951, 15
    %vm1144 = vcmp.ne.s32.totalorder %v952, 15
    %vm1145 = vcmp.ne.s32.totalorder %v953, 15
    %vm1146 = vcmp.ne.s32.totalorder %v954, 15
    %vm1147 = vcmp.ne.s32.totalorder %v955, 15
    %vm1148 = vcmp.ne.s32.totalorder %v956, 15
    %vm1149 = vcmp.ne.s32.totalorder %v957, 15
    %vm1150 = vcmp.ne.s32.totalorder %v958, 15
    %vm1151 = vcmp.ne.s32.totalorder %v959, 15
    %vm1152 = vcmp.ne.s32.totalorder %v960, 15
    %vm1153 = vcmp.ne.s32.totalorder %v961, 15
    %vm1154 = vcmp.ne.s32.totalorder %v962, 15
    %vm1155 = vcmp.ne.s32.totalorder %v963, 15
    %vm1156 = vcmp.ne.s32.totalorder %v964, 15
    %vm1157 = vcmp.ne.s32.totalorder %v965, 15
    %vm1158 = vcmp.ne.s32.totalorder %v966, 15
    %vm1159 = vcmp.ne.s32.totalorder %v967, 15
    %vm1160 = vcmp.ne.s32.totalorder %v968, 15
    %vm1161 = vcmp.ne.s32.totalorder %v969, 15
    %vm1162 = vcmp.ne.s32.totalorder %v970, 15
    %vm1163 = vcmp.ne.s32.totalorder %v971, 15
    %vm1164 = vcmp.ne.s32.totalorder %v972, 15
    %vm1165 = vcmp.ne.s32.totalorder %v973, 15
    %vm1166 = vcmp.ne.s32.totalorder %v974, 15
    %vm1167 = vcmp.ne.s32.totalorder %v975, 15
    %vm1168 = vcmp.ne.s32.totalorder %v976, 15
    %vm1169 = vcmp.ne.s32.totalorder %v977, 15
    %vm1170 = vcmp.ne.s32.totalorder %v978, 15
    %vm1171 = vcmp.ne.s32.totalorder %v979, 15
    %vm1172 = vcmp.ne.s32.totalorder %v980, 15
    %vm1173 = vcmp.ne.s32.totalorder %v981, 15
    %vm1174 = vcmp.ne.s32.totalorder %v982, 15
    %vm1175 = vcmp.ne.s32.totalorder %v983, 15
    %vm1176 = vcmp.ne.s32.totalorder %v984, 15
    %vm1177 = vcmp.ne.s32.totalorder %v985, 15
    %vm1178 = vcmp.ne.s32.totalorder %v986, 15
    %vm1179 = vcmp.ne.s32.totalorder %v987, 15
    %v1180 = vsel %vm1116, 1.0, 0.0
    %v1181 = vsel %vm1117, 1.0, 0.0
    %v1182 = vsel %vm1118, 1.0, 0.0
    %v1183 = vsel %vm1119, 1.0, 0.0
    %v1184 = vsel %vm1120, 1.0, 0.0
    %v1185 = vsel %vm1121, 1.0, 0.0
    %v1186 = vsel %vm1122, 1.0, 0.0
    %v1187 = vsel %vm1123, 1.0, 0.0
    %v1188 = vsel %vm1124, 1.0, 0.0
    %v1189 = vsel %vm1125, 1.0, 0.0
    %v1190 = vsel %vm1126, 1.0, 0.0
    %v1191 = vsel %vm1127, 1.0, 0.0
    %v1192 = vsel %vm1128, 1.0, 0.0
    %v1193 = vsel %vm1129, 1.0, 0.0
    %v1194 = vsel %vm1130, 1.0, 0.0
    %v1195 = vsel %vm1131, 1.0, 0.0
    %v1196 = vsel %vm1132, 1.0, 0.0
    %v1197 = vsel %vm1133, 1.0, 0.0
    %v1198 = vsel %vm1134, 1.0, 0.0
    %v1199 = vsel %vm1135, 1.0, 0.0
    %v1200 = vsel %vm1136, 1.0, 0.0
    %v1201 = vsel %vm1137, 1.0, 0.0
    %v1202 = vsel %vm1138, 1.0, 0.0
    %v1203 = vsel %vm1139, 1.0, 0.0
    %v1204 = vsel %vm1140, 1.0, 0.0
    %v1205 = vsel %vm1141, 1.0, 0.0
    %v1206 = vsel %vm1142, 1.0, 0.0
    %v1207 = vsel %vm1143, 1.0, 0.0
    %v1208 = vsel %vm1144, 1.0, 0.0
    %v1209 = vsel %vm1145, 1.0, 0.0
    %v1210 = vsel %vm1146, 1.0, 0.0
    %v1211 = vsel %vm1147, 1.0, 0.0
    %v1212 = vsel %vm1148, 1.0, 0.0
    %v1213 = vsel %vm1149, 1.0, 0.0
    %v1214 = vsel %vm1150, 1.0, 0.0
    %v1215 = vsel %vm1151, 1.0, 0.0
    %v1216 = vsel %vm1152, 1.0, 0.0
    %v1217 = vsel %vm1153, 1.0, 0.0
    %v1218 = vsel %vm1154, 1.0, 0.0
    %v1219 = vsel %vm1155, 1.0, 0.0
    %v1220 = vsel %vm1156, 1.0, 0.0
    %v1221 = vsel %vm1157, 1.0, 0.0
    %v1222 = vsel %vm1158, 1.0, 0.0
    %v1223 = vsel %vm1159, 1.0, 0.0
    %v1224 = vsel %vm1160, 1.0, 0.0
    %v1225 = vsel %vm1161, 1.0, 0.0
    %v1226 = vsel %vm1162, 1.0, 0.0
    %v1227 = vsel %vm1163, 1.0, 0.0
    %v1228 = vsel %vm1164, 1.0, 0.0
    %v1229 = vsel %vm1165, 1.0, 0.0
    %v1230 = vsel %vm1166, 1.0, 0.0
    %v1231 = vsel %vm1167, 1.0, 0.0
    %v1232 = vsel %vm1168, 1.0, 0.0
    %v1233 = vsel %vm1169, 1.0, 0.0
    %v1234 = vsel %vm1170, 1.0, 0.0
    %v1235 = vsel %vm1171, 1.0, 0.0
    %v1236 = vsel %vm1172, 1.0, 0.0
    %v1237 = vsel %vm1173, 1.0, 0.0
    %v1238 = vsel %vm1174, 1.0, 0.0
    %v1239 = vsel %vm1175, 1.0, 0.0
    %v1240 = vsel %vm1176, 1.0, 0.0
    %v1241 = vsel %vm1177, 1.0, 0.0
    %v1242 = vsel %vm1178, 1.0, 0.0
    %v1243 = vsel %vm1179, 1.0, 0.0
    %vm1244 = vcmp.ne.s32.totalorder %v796, 0
    %vm1245 = vcmp.ne.s32.totalorder %v797, 0
    %vm1246 = vcmp.ne.s32.totalorder %v798, 0
    %vm1247 = vcmp.ne.s32.totalorder %v799, 0
    %vm1248 = vcmp.ne.s32.totalorder %v800, 0
    %vm1249 = vcmp.ne.s32.totalorder %v801, 0
    %vm1250 = vcmp.ne.s32.totalorder %v802, 0
    %vm1251 = vcmp.ne.s32.totalorder %v803, 0
    %vm1252 = vcmp.ne.s32.totalorder %v804, 0
    %vm1253 = vcmp.ne.s32.totalorder %v805, 0
    %vm1254 = vcmp.ne.s32.totalorder %v806, 0
    %vm1255 = vcmp.ne.s32.totalorder %v807, 0
    %vm1256 = vcmp.ne.s32.totalorder %v808, 0
    %vm1257 = vcmp.ne.s32.totalorder %v809, 0
    %vm1258 = vcmp.ne.s32.totalorder %v810, 0
    %vm1259 = vcmp.ne.s32.totalorder %v811, 0
    %vm1260 = vcmp.ne.s32.totalorder %v812, 0
    %vm1261 = vcmp.ne.s32.totalorder %v813, 0
    %vm1262 = vcmp.ne.s32.totalorder %v814, 0
    %vm1263 = vcmp.ne.s32.totalorder %v815, 0
    %vm1264 = vcmp.ne.s32.totalorder %v816, 0
    %vm1265 = vcmp.ne.s32.totalorder %v817, 0
    %vm1266 = vcmp.ne.s32.totalorder %v818, 0
    %vm1267 = vcmp.ne.s32.totalorder %v819, 0
    %vm1268 = vcmp.ne.s32.totalorder %v820, 0
    %vm1269 = vcmp.ne.s32.totalorder %v821, 0
    %vm1270 = vcmp.ne.s32.totalorder %v822, 0
    %vm1271 = vcmp.ne.s32.totalorder %v823, 0
    %vm1272 = vcmp.ne.s32.totalorder %v824, 0
    %vm1273 = vcmp.ne.s32.totalorder %v825, 0
    %vm1274 = vcmp.ne.s32.totalorder %v826, 0
    %vm1275 = vcmp.ne.s32.totalorder %v827, 0
    %vm1276 = vcmp.ne.s32.totalorder %v828, 0
    %vm1277 = vcmp.ne.s32.totalorder %v829, 0
    %vm1278 = vcmp.ne.s32.totalorder %v830, 0
    %vm1279 = vcmp.ne.s32.totalorder %v831, 0
    %vm1280 = vcmp.ne.s32.totalorder %v832, 0
    %vm1281 = vcmp.ne.s32.totalorder %v833, 0
    %vm1282 = vcmp.ne.s32.totalorder %v834, 0
    %vm1283 = vcmp.ne.s32.totalorder %v835, 0
    %vm1284 = vcmp.ne.s32.totalorder %v836, 0
    %vm1285 = vcmp.ne.s32.totalorder %v837, 0
    %vm1286 = vcmp.ne.s32.totalorder %v838, 0
    %vm1287 = vcmp.ne.s32.totalorder %v839, 0
    %vm1288 = vcmp.ne.s32.totalorder %v840, 0
    %vm1289 = vcmp.ne.s32.totalorder %v841, 0
    %vm1290 = vcmp.ne.s32.totalorder %v842, 0
    %vm1291 = vcmp.ne.s32.totalorder %v843, 0
    %vm1292 = vcmp.ne.s32.totalorder %v844, 0
    %vm1293 = vcmp.ne.s32.totalorder %v845, 0
    %vm1294 = vcmp.ne.s32.totalorder %v846, 0
    %vm1295 = vcmp.ne.s32.totalorder %v847, 0
    %vm1296 = vcmp.ne.s32.totalorder %v848, 0
    %vm1297 = vcmp.ne.s32.totalorder %v849, 0
    %vm1298 = vcmp.ne.s32.totalorder %v850, 0
    %vm1299 = vcmp.ne.s32.totalorder %v851, 0
    %vm1300 = vcmp.ne.s32.totalorder %v852, 0
    %vm1301 = vcmp.ne.s32.totalorder %v853, 0
    %vm1302 = vcmp.ne.s32.totalorder %v854, 0
    %vm1303 = vcmp.ne.s32.totalorder %v855, 0
    %vm1304 = vcmp.ne.s32.totalorder %v856, 0
    %vm1305 = vcmp.ne.s32.totalorder %v857, 0
    %vm1306 = vcmp.ne.s32.totalorder %v858, 0
    %vm1307 = vcmp.ne.s32.totalorder %v859, 0
    %v1308 = vsel %vm1244, 1.0, 0.0
    %v1309 = vsel %vm1245, 1.0, 0.0
    %v1310 = vsel %vm1246, 1.0, 0.0
    %v1311 = vsel %vm1247, 1.0, 0.0
    %v1312 = vsel %vm1248, 1.0, 0.0
    %v1313 = vsel %vm1249, 1.0, 0.0
    %v1314 = vsel %vm1250, 1.0, 0.0
    %v1315 = vsel %vm1251, 1.0, 0.0
    %v1316 = vsel %vm1252, 1.0, 0.0
    %v1317 = vsel %vm1253, 1.0, 0.0
    %v1318 = vsel %vm1254, 1.0, 0.0
    %v1319 = vsel %vm1255, 1.0, 0.0
    %v1320 = vsel %vm1256, 1.0, 0.0
    %v1321 = vsel %vm1257, 1.0, 0.0
    %v1322 = vsel %vm1258, 1.0, 0.0
    %v1323 = vsel %vm1259, 1.0, 0.0
    %v1324 = vsel %vm1260, 1.0, 0.0
    %v1325 = vsel %vm1261, 1.0, 0.0
    %v1326 = vsel %vm1262, 1.0, 0.0
    %v1327 = vsel %vm1263, 1.0, 0.0
    %v1328 = vsel %vm1264, 1.0, 0.0
    %v1329 = vsel %vm1265, 1.0, 0.0
    %v1330 = vsel %vm1266, 1.0, 0.0
    %v1331 = vsel %vm1267, 1.0, 0.0
    %v1332 = vsel %vm1268, 1.0, 0.0
    %v1333 = vsel %vm1269, 1.0, 0.0
    %v1334 = vsel %vm1270, 1.0, 0.0
    %v1335 = vsel %vm1271, 1.0, 0.0
    %v1336 = vsel %vm1272, 1.0, 0.0
    %v1337 = vsel %vm1273, 1.0, 0.0
    %v1338 = vsel %vm1274, 1.0, 0.0
    %v1339 = vsel %vm1275, 1.0, 0.0
    %v1340 = vsel %vm1276, 1.0, 0.0
    %v1341 = vsel %vm1277, 1.0, 0.0
    %v1342 = vsel %vm1278, 1.0, 0.0
    %v1343 = vsel %vm1279, 1.0, 0.0
    %v1344 = vsel %vm1280, 1.0, 0.0
    %v1345 = vsel %vm1281, 1.0, 0.0
    %v1346 = vsel %vm1282, 1.0, 0.0
    %v1347 = vsel %vm1283, 1.0, 0.0
    %v1348 = vsel %vm1284, 1.0, 0.0
    %v1349 = vsel %vm1285, 1.0, 0.0
    %v1350 = vsel %vm1286, 1.0, 0.0
    %v1351 = vsel %vm1287, 1.0, 0.0
    %v1352 = vsel %vm1288, 1.0, 0.0
    %v1353 = vsel %vm1289, 1.0, 0.0
    %v1354 = vsel %vm1290, 1.0, 0.0
    %v1355 = vsel %vm1291, 1.0, 0.0
    %v1356 = vsel %vm1292, 1.0, 0.0
    %v1357 = vsel %vm1293, 1.0, 0.0
    %v1358 = vsel %vm1294, 1.0, 0.0
    %v1359 = vsel %vm1295, 1.0, 0.0
    %v1360 = vsel %vm1296, 1.0, 0.0
    %v1361 = vsel %vm1297, 1.0, 0.0
    %v1362 = vsel %vm1298, 1.0, 0.0
    %v1363 = vsel %vm1299, 1.0, 0.0
    %v1364 = vsel %vm1300, 1.0, 0.0
    %v1365 = vsel %vm1301, 1.0, 0.0
    %v1366 = vsel %vm1302, 1.0, 0.0
    %v1367 = vsel %vm1303, 1.0, 0.0
    %v1368 = vsel %vm1304, 1.0, 0.0
    %v1369 = vsel %vm1305, 1.0, 0.0
    %v1370 = vsel %vm1306, 1.0, 0.0
    %v1371 = vsel %vm1307, 1.0, 0.0
    %vm1372 = vcmp.ne.s32.totalorder %v796, 15
    %vm1373 = vcmp.ne.s32.totalorder %v797, 15
    %vm1374 = vcmp.ne.s32.totalorder %v798, 15
    %vm1375 = vcmp.ne.s32.totalorder %v799, 15
    %vm1376 = vcmp.ne.s32.totalorder %v800, 15
    %vm1377 = vcmp.ne.s32.totalorder %v801, 15
    %vm1378 = vcmp.ne.s32.totalorder %v802, 15
    %vm1379 = vcmp.ne.s32.totalorder %v803, 15
    %vm1380 = vcmp.ne.s32.totalorder %v804, 15
    %vm1381 = vcmp.ne.s32.totalorder %v805, 15
    %vm1382 = vcmp.ne.s32.totalorder %v806, 15
    %vm1383 = vcmp.ne.s32.totalorder %v807, 15
    %vm1384 = vcmp.ne.s32.totalorder %v808, 15
    %vm1385 = vcmp.ne.s32.totalorder %v809, 15
    %vm1386 = vcmp.ne.s32.totalorder %v810, 15
    %vm1387 = vcmp.ne.s32.totalorder %v811, 15
    %vm1388 = vcmp.ne.s32.totalorder %v812, 15
    %vm1389 = vcmp.ne.s32.totalorder %v813, 15
    %vm1390 = vcmp.ne.s32.totalorder %v814, 15
    %vm1391 = vcmp.ne.s32.totalorder %v815, 15
    %vm1392 = vcmp.ne.s32.totalorder %v816, 15
    %vm1393 = vcmp.ne.s32.totalorder %v817, 15
    %vm1394 = vcmp.ne.s32.totalorder %v818, 15
    %vm1395 = vcmp.ne.s32.totalorder %v819, 15
    %vm1396 = vcmp.ne.s32.totalorder %v820, 15
    %vm1397 = vcmp.ne.s32.totalorder %v821, 15
    %vm1398 = vcmp.ne.s32.totalorder %v822, 15
    %vm1399 = vcmp.ne.s32.totalorder %v823, 15
    %vm1400 = vcmp.ne.s32.totalorder %v824, 15
    %vm1401 = vcmp.ne.s32.totalorder %v825, 15
    %vm1402 = vcmp.ne.s32.totalorder %v826, 15
    %vm1403 = vcmp.ne.s32.totalorder %v827, 15
    %vm1404 = vcmp.ne.s32.totalorder %v828, 15
    %vm1405 = vcmp.ne.s32.totalorder %v829, 15
    %vm1406 = vcmp.ne.s32.totalorder %v830, 15
    %vm1407 = vcmp.ne.s32.totalorder %v831, 15
    %vm1408 = vcmp.ne.s32.totalorder %v832, 15
    %vm1409 = vcmp.ne.s32.totalorder %v833, 15
    %vm1410 = vcmp.ne.s32.totalorder %v834, 15
    %vm1411 = vcmp.ne.s32.totalorder %v835, 15
    %vm1412 = vcmp.ne.s32.totalorder %v836, 15
    %vm1413 = vcmp.ne.s32.totalorder %v837, 15
    %vm1414 = vcmp.ne.s32.totalorder %v838, 15
    %vm1415 = vcmp.ne.s32.totalorder %v839, 15
    %vm1416 = vcmp.ne.s32.totalorder %v840, 15
    %vm1417 = vcmp.ne.s32.totalorder %v841, 15
    %vm1418 = vcmp.ne.s32.totalorder %v842, 15
    %vm1419 = vcmp.ne.s32.totalorder %v843, 15
    %vm1420 = vcmp.ne.s32.totalorder %v844, 15
    %vm1421 = vcmp.ne.s32.totalorder %v845, 15
    %vm1422 = vcmp.ne.s32.totalorder %v846, 15
    %vm1423 = vcmp.ne.s32.totalorder %v847, 15
    %vm1424 = vcmp.ne.s32.totalorder %v848, 15
    %vm1425 = vcmp.ne.s32.totalorder %v849, 15
    %vm1426 = vcmp.ne.s32.totalorder %v850, 15
    %vm1427 = vcmp.ne.s32.totalorder %v851, 15
    %vm1428 = vcmp.ne.s32.totalorder %v852, 15
    %vm1429 = vcmp.ne.s32.totalorder %v853, 15
    %vm1430 = vcmp.ne.s32.totalorder %v854, 15
    %vm1431 = vcmp.ne.s32.totalorder %v855, 15
    %vm1432 = vcmp.ne.s32.totalorder %v856, 15
    %vm1433 = vcmp.ne.s32.totalorder %v857, 15
    %vm1434 = vcmp.ne.s32.totalorder %v858, 15
    %vm1435 = vcmp.ne.s32.totalorder %v859, 15
    %v1436 = vsel %vm1372, 1.0, 0.0
    %v1437 = vsel %vm1373, 1.0, 0.0
    %v1438 = vsel %vm1374, 1.0, 0.0
    %v1439 = vsel %vm1375, 1.0, 0.0
    %v1440 = vsel %vm1376, 1.0, 0.0
    %v1441 = vsel %vm1377, 1.0, 0.0
    %v1442 = vsel %vm1378, 1.0, 0.0
    %v1443 = vsel %vm1379, 1.0, 0.0
    %v1444 = vsel %vm1380, 1.0, 0.0
    %v1445 = vsel %vm1381, 1.0, 0.0
    %v1446 = vsel %vm1382, 1.0, 0.0
    %v1447 = vsel %vm1383, 1.0, 0.0
    %v1448 = vsel %vm1384, 1.0, 0.0
    %v1449 = vsel %vm1385, 1.0, 0.0
    %v1450 = vsel %vm1386, 1.0, 0.0
    %v1451 = vsel %vm1387, 1.0, 0.0
    %v1452 = vsel %vm1388, 1.0, 0.0
    %v1453 = vsel %vm1389, 1.0, 0.0
    %v1454 = vsel %vm1390, 1.0, 0.0
    %v1455 = vsel %vm1391, 1.0, 0.0
    %v1456 = vsel %vm1392, 1.0, 0.0
    %v1457 = vsel %vm1393, 1.0, 0.0
    %v1458 = vsel %vm1394, 1.0, 0.0
    %v1459 = vsel %vm1395, 1.0, 0.0
    %v1460 = vsel %vm1396, 1.0, 0.0
    %v1461 = vsel %vm1397, 1.0, 0.0
    %v1462 = vsel %vm1398, 1.0, 0.0
    %v1463 = vsel %vm1399, 1.0, 0.0
    %v1464 = vsel %vm1400, 1.0, 0.0
    %v1465 = vsel %vm1401, 1.0, 0.0
    %v1466 = vsel %vm1402, 1.0, 0.0
    %v1467 = vsel %vm1403, 1.0, 0.0
    %v1468 = vsel %vm1404, 1.0, 0.0
    %v1469 = vsel %vm1405, 1.0, 0.0
    %v1470 = vsel %vm1406, 1.0, 0.0
    %v1471 = vsel %vm1407, 1.0, 0.0
    %v1472 = vsel %vm1408, 1.0, 0.0
    %v1473 = vsel %vm1409, 1.0, 0.0
    %v1474 = vsel %vm1410, 1.0, 0.0
    %v1475 = vsel %vm1411, 1.0, 0.0
    %v1476 = vsel %vm1412, 1.0, 0.0
    %v1477 = vsel %vm1413, 1.0, 0.0
    %v1478 = vsel %vm1414, 1.0, 0.0
    %v1479 = vsel %vm1415, 1.0, 0.0
    %v1480 = vsel %vm1416, 1.0, 0.0
    %v1481 = vsel %vm1417, 1.0, 0.0
    %v1482 = vsel %vm1418, 1.0, 0.0
    %v1483 = vsel %vm1419, 1.0, 0.0
    %v1484 = vsel %vm1420, 1.0, 0.0
    %v1485 = vsel %vm1421, 1.0, 0.0
    %v1486 = vsel %vm1422, 1.0, 0.0
    %v1487 = vsel %vm1423, 1.0, 0.0
    %v1488 = vsel %vm1424, 1.0, 0.0
    %v1489 = vsel %vm1425, 1.0, 0.0
    %v1490 = vsel %vm1426, 1.0, 0.0
    %v1491 = vsel %vm1427, 1.0, 0.0
    %v1492 = vsel %vm1428, 1.0, 0.0
    %v1493 = vsel %vm1429, 1.0, 0.0
    %v1494 = vsel %vm1430, 1.0, 0.0
    %v1495 = vsel %vm1431, 1.0, 0.0
    %v1496 = vsel %vm1432, 1.0, 0.0
    %v1497 = vsel %vm1433, 1.0, 0.0
    %v1498 = vsel %vm1434, 1.0, 0.0
    %v1499 = vsel %vm1435, 1.0, 0.0
    %1500 = vst [vmem:[#allocation2] sm:$0xff] 0.0
    %1501 = vst [vmem:[#allocation2 + $0x8] sm:$0xff] 0.0
    %1502 = vst [vmem:[#allocation2 + $0x10] sm:$0xff] 0.0
    %1503 = vst [vmem:[#allocation2 + $0x218] sm:$0xff] 0.0
    %1504 = vst [vmem:[#allocation2 + $0x220] sm:$0xff] 0.0
    %1505 = vst [vmem:[#allocation2 + $0x228] sm:$0xff] 0.0
    %1506 = vst [vmem:[#allocation2 + $0x18] sm:$0xff] %v667
    %1507 = vst [vmem:[#allocation2 + $0x20] sm:$0xff] %v668
    %1508 = vst [vmem:[#allocation2 + $0x28] sm:$0xff] %v669
    %1509 = vst [vmem:[#allocation2 + $0x30] sm:$0xff] %v670
    %1510 = vst [vmem:[#allocation2 + $0x38] sm:$0xff] %v671
    %1511 = vst [vmem:[#allocation2 + $0x40] sm:$0xff] %v672
    %1512 = vst [vmem:[#allocation2 + $0x48] sm:$0xff] %v673
    %1513 = vst [vmem:[#allocation2 + $0x50] sm:$0xff] %v674
    %1514 = vst [vmem:[#allocation2 + $0x58] sm:$0xff] %v675
    %1515 = vst [vmem:[#allocation2 + $0x60] sm:$0xff] %v676
    %1516 = vst [vmem:[#allocation2 + $0x68] sm:$0xff] %v677
    %1517 = vst [vmem:[#allocation2 + $0x70] sm:$0xff] %v678
    %1518 = vst [vmem:[#allocation2 + $0x78] sm:$0xff] %v679
    %1519 = vst [vmem:[#allocation2 + $0x80] sm:$0xff] %v680
    %1520 = vst [vmem:[#allocation2 + $0x88] sm:$0xff] %v681
    %1521 = vst [vmem:[#allocation2 + $0x90] sm:$0xff] %v682
    %1522 = vst [vmem:[#allocation2 + $0x98] sm:$0xff] %v683
    %1523 = vst [vmem:[#allocation2 + $0xa0] sm:$0xff] %v684
    %1524 = vst [vmem:[#allocation2 + $0xa8] sm:$0xff] %v685
    %1525 = vst [vmem:[#allocation2 + $0xb0] sm:$0xff] %v686
    %1526 = vst [vmem:[#allocation2 + $0xb8] sm:$0xff] %v687
    %1527 = vst [vmem:[#allocation2 + $0xc0] sm:$0xff] %v688
    %1528 = vst [vmem:[#allocation2 + $0xc8] sm:$0xff] %v689
    %1529 = vst [vmem:[#allocation2 + $0xd0] sm:$0xff] %v690
    %1530 = vst [vmem:[#allocation2 + $0xd8] sm:$0xff] %v691
    %1531 = vst [vmem:[#allocation2 + $0xe0] sm:$0xff] %v692
    %1532 = vst [vmem:[#allocation2 + $0xe8] sm:$0xff] %v693
    %1533 = vst [vmem:[#allocation2 + $0xf0] sm:$0xff] %v694
    %1534 = vst [vmem:[#allocation2 + $0xf8] sm:$0xff] %v695
    %1535 = vst [vmem:[#allocation2 + $0x100] sm:$0xff] %v696
    %1536 = vst [vmem:[#allocation2 + $0x108] sm:$0xff] %v697
    %1537 = vst [vmem:[#allocation2 + $0x110] sm:$0xff] %v698
    %1538 = vst [vmem:[#allocation2 + $0x118] sm:$0xff] %v699
    %1539 = vst [vmem:[#allocation2 + $0x120] sm:$0xff] %v700
    %1540 = vst [vmem:[#allocation2 + $0x128] sm:$0xff] %v701
    %1541 = vst [vmem:[#allocation2 + $0x130] sm:$0xff] %v702
    %1542 = vst [vmem:[#allocation2 + $0x138] sm:$0xff] %v703
    %1543 = vst [vmem:[#allocation2 + $0x140] sm:$0xff] %v704
    %1544 = vst [vmem:[#allocation2 + $0x148] sm:$0xff] %v705
    %1545 = vst [vmem:[#allocation2 + $0x150] sm:$0xff] %v706
    %1546 = vst [vmem:[#allocation2 + $0x158] sm:$0xff] %v707
    %1547 = vst [vmem:[#allocation2 + $0x160] sm:$0xff] %v708
    %1548 = vst [vmem:[#allocation2 + $0x168] sm:$0xff] %v709
    %1549 = vst [vmem:[#allocation2 + $0x170] sm:$0xff] %v710
    %1550 = vst [vmem:[#allocation2 + $0x178] sm:$0xff] %v711
    %1551 = vst [vmem:[#allocation2 + $0x180] sm:$0xff] %v712
    %1552 = vst [vmem:[#allocation2 + $0x188] sm:$0xff] %v713
    %1553 = vst [vmem:[#allocation2 + $0x190] sm:$0xff] %v714
    %1554 = vst [vmem:[#allocation2 + $0x198] sm:$0xff] %v715
    %1555 = vst [vmem:[#allocation2 + $0x1a0] sm:$0xff] %v716
    %1556 = vst [vmem:[#allocation2 + $0x1a8] sm:$0xff] %v717
    %1557 = vst [vmem:[#allocation2 + $0x1b0] sm:$0xff] %v718
    %1558 = vst [vmem:[#allocation2 + $0x1b8] sm:$0xff] %v719
    %1559 = vst [vmem:[#allocation2 + $0x1c0] sm:$0xff] %v720
    %1560 = vst [vmem:[#allocation2 + $0x1c8] sm:$0xff] %v721
    %1561 = vst [vmem:[#allocation2 + $0x1d0] sm:$0xff] %v722
    %1562 = vst [vmem:[#allocation2 + $0x1d8] sm:$0xff] %v723
    %1563 = vst [vmem:[#allocation2 + $0x1e0] sm:$0xff] %v724
    %1564 = vst [vmem:[#allocation2 + $0x1e8] sm:$0xff] %v725
    %1565 = vst [vmem:[#allocation2 + $0x1f0] sm:$0xff] %v726
    %1566 = vst [vmem:[#allocation2 + $0x1f8] sm:$0xff] %v727
    %1567 = vst [vmem:[#allocation2 + $0x200] sm:$0xff] %v728
    %1568 = vst [vmem:[#allocation2 + $0x208] sm:$0xff] %v729
    %1569 = vst [vmem:[#allocation2 + $0x210] sm:$0xff] %v730
    %v1570 = vld [vmem:[#allocation2 + $0x7] sm:$0xff]
    %v1571 = vld [vmem:[#allocation2 + $0xf] sm:$0xff]
    %v1572 = vld [vmem:[#allocation2 + $0x17] sm:$0xff]
    %v1573 = vld [vmem:[#allocation2 + $0x1f] sm:$0xff]
    %v1574 = vld [vmem:[#allocation2 + $0x27] sm:$0xff]
    %v1575 = vld [vmem:[#allocation2 + $0x2f] sm:$0xff]
    %v1576 = vld [vmem:[#allocation2 + $0x37] sm:$0xff]
    %v1577 = vld [vmem:[#allocation2 + $0x3f] sm:$0xff]
    %v1578 = vld [vmem:[#allocation2 + $0x47] sm:$0xff]
    %v1579 = vld [vmem:[#allocation2 + $0x4f] sm:$0xff]
    %v1580 = vld [vmem:[#allocation2 + $0x57] sm:$0xff]
    %v1581 = vld [vmem:[#allocation2 + $0x5f] sm:$0xff]
    %v1582 = vld [vmem:[#allocation2 + $0x67] sm:$0xff]
    %v1583 = vld [vmem:[#allocation2 + $0x6f] sm:$0xff]
    %v1584 = vld [vmem:[#allocation2 + $0x77] sm:$0xff]
    %v1585 = vld [vmem:[#allocation2 + $0x7f] sm:$0xff]
    %v1586 = vld [vmem:[#allocation2 + $0x87] sm:$0xff]
    %v1587 = vld [vmem:[#allocation2 + $0x8f] sm:$0xff]
    %v1588 = vld [vmem:[#allocation2 + $0x97] sm:$0xff]
    %v1589 = vld [vmem:[#allocation2 + $0x9f] sm:$0xff]
    %v1590 = vld [vmem:[#allocation2 + $0xa7] sm:$0xff]
    %v1591 = vld [vmem:[#allocation2 + $0xaf] sm:$0xff]
    %v1592 = vld [vmem:[#allocation2 + $0xb7] sm:$0xff]
    %v1593 = vld [vmem:[#allocation2 + $0xbf] sm:$0xff]
    %v1594 = vld [vmem:[#allocation2 + $0xc7] sm:$0xff]
    %v1595 = vld [vmem:[#allocation2 + $0xcf] sm:$0xff]
    %v1596 = vld [vmem:[#allocation2 + $0xd7] sm:$0xff]
    %v1597 = vld [vmem:[#allocation2 + $0xdf] sm:$0xff]
    %v1598 = vld [vmem:[#allocation2 + $0xe7] sm:$0xff]
    %v1599 = vld [vmem:[#allocation2 + $0xef] sm:$0xff]
    %v1600 = vld [vmem:[#allocation2 + $0xf7] sm:$0xff]
    %v1601 = vld [vmem:[#allocation2 + $0xff] sm:$0xff]
    %v1602 = vld [vmem:[#allocation2 + $0x107] sm:$0xff]
    %v1603 = vld [vmem:[#allocation2 + $0x10f] sm:$0xff]
    %v1604 = vld [vmem:[#allocation2 + $0x117] sm:$0xff]
    %v1605 = vld [vmem:[#allocation2 + $0x11f] sm:$0xff]
    %v1606 = vld [vmem:[#allocation2 + $0x127] sm:$0xff]
    %v1607 = vld [vmem:[#allocation2 + $0x12f] sm:$0xff]
    %v1608 = vld [vmem:[#allocation2 + $0x137] sm:$0xff]
    %v1609 = vld [vmem:[#allocation2 + $0x13f] sm:$0xff]
    %v1610 = vld [vmem:[#allocation2 + $0x147] sm:$0xff]
    %v1611 = vld [vmem:[#allocation2 + $0x14f] sm:$0xff]
    %v1612 = vld [vmem:[#allocation2 + $0x157] sm:$0xff]
    %v1613 = vld [vmem:[#allocation2 + $0x15f] sm:$0xff]
    %v1614 = vld [vmem:[#allocation2 + $0x167] sm:$0xff]
    %v1615 = vld [vmem:[#allocation2 + $0x16f] sm:$0xff]
    %v1616 = vld [vmem:[#allocation2 + $0x177] sm:$0xff]
    %v1617 = vld [vmem:[#allocation2 + $0x17f] sm:$0xff]
    %v1618 = vld [vmem:[#allocation2 + $0x187] sm:$0xff]
    %v1619 = vld [vmem:[#allocation2 + $0x18f] sm:$0xff]
    %v1620 = vld [vmem:[#allocation2 + $0x197] sm:$0xff]
    %v1621 = vld [vmem:[#allocation2 + $0x19f] sm:$0xff]
    %v1622 = vld [vmem:[#allocation2 + $0x1a7] sm:$0xff]
    %v1623 = vld [vmem:[#allocation2 + $0x1af] sm:$0xff]
    %v1624 = vld [vmem:[#allocation2 + $0x1b7] sm:$0xff]
    %v1625 = vld [vmem:[#allocation2 + $0x1bf] sm:$0xff]
    %v1626 = vld [vmem:[#allocation2 + $0x1c7] sm:$0xff]
    %v1627 = vld [vmem:[#allocation2 + $0x1cf] sm:$0xff]
    %v1628 = vld [vmem:[#allocation2 + $0x1d7] sm:$0xff]
    %v1629 = vld [vmem:[#allocation2 + $0x1df] sm:$0xff]
    %v1630 = vld [vmem:[#allocation2 + $0x1e7] sm:$0xff]
    %v1631 = vld [vmem:[#allocation2 + $0x1ef] sm:$0xff]
    %v1632 = vld [vmem:[#allocation2 + $0x1f7] sm:$0xff]
    %v1633 = vld [vmem:[#allocation2 + $0x1ff] sm:$0xff]
    %v1634 = vmul.f32 %v1052, %v1308
    %v1635 = vmul.f32 %v1053, %v1309
    %v1636 = vmul.f32 %v1054, %v1310
    %v1637 = vmul.f32 %v1055, %v1311
    %v1638 = vmul.f32 %v1056, %v1312
    %v1639 = vmul.f32 %v1057, %v1313
    %v1640 = vmul.f32 %v1058, %v1314
    %v1641 = vmul.f32 %v1059, %v1315
    %v1642 = vmul.f32 %v1060, %v1316
    %v1643 = vmul.f32 %v1061, %v1317
    %v1644 = vmul.f32 %v1062, %v1318
    %v1645 = vmul.f32 %v1063, %v1319
    %v1646 = vmul.f32 %v1064, %v1320
    %v1647 = vmul.f32 %v1065, %v1321
    %v1648 = vmul.f32 %v1066, %v1322
    %v1649 = vmul.f32 %v1067, %v1323
    %v1650 = vmul.f32 %v1068, %v1324
    %v1651 = vmul.f32 %v1069, %v1325
    %v1652 = vmul.f32 %v1070, %v1326
    %v1653 = vmul.f32 %v1071, %v1327
    %v1654 = vmul.f32 %v1072, %v1328
    %v1655 = vmul.f32 %v1073, %v1329
    %v1656 = vmul.f32 %v1074, %v1330
    %v1657 = vmul.f32 %v1075, %v1331
    %v1658 = vmul.f32 %v1076, %v1332
    %v1659 = vmul.f32 %v1077, %v1333
    %v1660 = vmul.f32 %v1078, %v1334
    %v1661 = vmul.f32 %v1079, %v1335
    %v1662 = vmul.f32 %v1080, %v1336
    %v1663 = vmul.f32 %v1081, %v1337
    %v1664 = vmul.f32 %v1082, %v1338
    %v1665 = vmul.f32 %v1083, %v1339
    %v1666 = vmul.f32 %v1084, %v1340
    %v1667 = vmul.f32 %v1085, %v1341
    %v1668 = vmul.f32 %v1086, %v1342
    %v1669 = vmul.f32 %v1087, %v1343
    %v1670 = vmul.f32 %v1088, %v1344
    %v1671 = vmul.f32 %v1089, %v1345
    %v1672 = vmul.f32 %v1090, %v1346
    %v1673 = vmul.f32 %v1091, %v1347
    %v1674 = vmul.f32 %v1092, %v1348
    %v1675 = vmul.f32 %v1093, %v1349
    %v1676 = vmul.f32 %v1094, %v1350
    %v1677 = vmul.f32 %v1095, %v1351
    %v1678 = vmul.f32 %v1096, %v1352
    %v1679 = vmul.f32 %v1097, %v1353
    %v1680 = vmul.f32 %v1098, %v1354
    %v1681 = vmul.f32 %v1099, %v1355
    %v1682 = vmul.f32 %v1100, %v1356
    %v1683 = vmul.f32 %v1101, %v1357
    %v1684 = vmul.f32 %v1102, %v1358
    %v1685 = vmul.f32 %v1103, %v1359
    %v1686 = vmul.f32 %v1104, %v1360
    %v1687 = vmul.f32 %v1105, %v1361
    %v1688 = vmul.f32 %v1106, %v1362
    %v1689 = vmul.f32 %v1107, %v1363
    %v1690 = vmul.f32 %v1108, %v1364
    %v1691 = vmul.f32 %v1109, %v1365
    %v1692 = vmul.f32 %v1110, %v1366
    %v1693 = vmul.f32 %v1111, %v1367
    %v1694 = vmul.f32 %v1112, %v1368
    %v1695 = vmul.f32 %v1113, %v1369
    %v1696 = vmul.f32 %v1114, %v1370
    %v1697 = vmul.f32 %v1115, %v1371
    %v1698 = vmul.f32 %v1570, %v1634
    %v1699 = vmul.f32 %v1571, %v1635
    %v1700 = vmul.f32 %v1572, %v1636
    %v1701 = vmul.f32 %v1573, %v1637
    %v1702 = vmul.f32 %v1574, %v1638
    %v1703 = vmul.f32 %v1575, %v1639
    %v1704 = vmul.f32 %v1576, %v1640
    %v1705 = vmul.f32 %v1577, %v1641
    %v1706 = vmul.f32 %v1578, %v1642
    %v1707 = vmul.f32 %v1579, %v1643
    %v1708 = vmul.f32 %v1580, %v1644
    %v1709 = vmul.f32 %v1581, %v1645
    %v1710 = vmul.f32 %v1582, %v1646
    %v1711 = vmul.f32 %v1583, %v1647
    %v1712 = vmul.f32 %v1584, %v1648
    %v1713 = vmul.f32 %v1585, %v1649
    %v1714 = vmul.f32 %v1586, %v1650
    %v1715 = vmul.f32 %v1587, %v1651
    %v1716 = vmul.f32 %v1588, %v1652
    %v1717 = vmul.f32 %v1589, %v1653
    %v1718 = vmul.f32 %v1590, %v1654
    %v1719 = vmul.f32 %v1591, %v1655
    %v1720 = vmul.f32 %v1592, %v1656
    %v1721 = vmul.f32 %v1593, %v1657
    %v1722 = vmul.f32 %v1594, %v1658
    %v1723 = vmul.f32 %v1595, %v1659
    %v1724 = vmul.f32 %v1596, %v1660
    %v1725 = vmul.f32 %v1597, %v1661
    %v1726 = vmul.f32 %v1598, %v1662
    %v1727 = vmul.f32 %v1599, %v1663
    %v1728 = vmul.f32 %v1600, %v1664
    %v1729 = vmul.f32 %v1601, %v1665
    %v1730 = vmul.f32 %v1602, %v1666
    %v1731 = vmul.f32 %v1603, %v1667
    %v1732 = vmul.f32 %v1604, %v1668
    %v1733 = vmul.f32 %v1605, %v1669
    %v1734 = vmul.f32 %v1606, %v1670
    %v1735 = vmul.f32 %v1607, %v1671
    %v1736 = vmul.f32 %v1608, %v1672
    %v1737 = vmul.f32 %v1609, %v1673
    %v1738 = vmul.f32 %v1610, %v1674
    %v1739 = vmul.f32 %v1611, %v1675
    %v1740 = vmul.f32 %v1612, %v1676
    %v1741 = vmul.f32 %v1613, %v1677
    %v1742 = vmul.f32 %v1614, %v1678
    %v1743 = vmul.f32 %v1615, %v1679
    %v1744 = vmul.f32 %v1616, %v1680
    %v1745 = vmul.f32 %v1617, %v1681
    %v1746 = vmul.f32 %v1618, %v1682
    %v1747 = vmul.f32 %v1619, %v1683
    %v1748 = vmul.f32 %v1620, %v1684
    %v1749 = vmul.f32 %v1621, %v1685
    %v1750 = vmul.f32 %v1622, %v1686
    %v1751 = vmul.f32 %v1623, %v1687
    %v1752 = vmul.f32 %v1624, %v1688
    %v1753 = vmul.f32 %v1625, %v1689
    %v1754 = vmul.f32 %v1626, %v1690
    %v1755 = vmul.f32 %v1627, %v1691
    %v1756 = vmul.f32 %v1628, %v1692
    %v1757 = vmul.f32 %v1629, %v1693
    %v1758 = vmul.f32 %v1630, %v1694
    %v1759 = vmul.f32 %v1631, %v1695
    %v1760 = vmul.f32 %v1632, %v1696
    %v1761 = vmul.f32 %v1633, %v1697
    %v1762 = vld [vmem:[#allocation2 + $0x8] sm:$0xff]
    %v1763 = vld [vmem:[#allocation2 + $0x10] sm:$0xff]
    %v1764 = vld [vmem:[#allocation2 + $0x18] sm:$0xff]
    %v1765 = vld [vmem:[#allocation2 + $0x20] sm:$0xff]
    %v1766 = vld [vmem:[#allocation2 + $0x28] sm:$0xff]
    %v1767 = vld [vmem:[#allocation2 + $0x30] sm:$0xff]
    %v1768 = vld [vmem:[#allocation2 + $0x38] sm:$0xff]
    %v1769 = vld [vmem:[#allocation2 + $0x40] sm:$0xff]
    %v1770 = vld [vmem:[#allocation2 + $0x48] sm:$0xff]
    %v1771 = vld [vmem:[#allocation2 + $0x50] sm:$0xff]
    %v1772 = vld [vmem:[#allocation2 + $0x58] sm:$0xff]
    %v1773 = vld [vmem:[#allocation2 + $0x60] sm:$0xff]
    %v1774 = vld [vmem:[#allocation2 + $0x68] sm:$0xff]
    %v1775 = vld [vmem:[#allocation2 + $0x70] sm:$0xff]
    %v1776 = vld [vmem:[#allocation2 + $0x78] sm:$0xff]
    %v1777 = vld [vmem:[#allocation2 + $0x80] sm:$0xff]
    %v1778 = vld [vmem:[#allocation2 + $0x88] sm:$0xff]
    %v1779 = vld [vmem:[#allocation2 + $0x90] sm:$0xff]
    %v1780 = vld [vmem:[#allocation2 + $0x98] sm:$0xff]
    %v1781 = vld [vmem:[#allocation2 + $0xa0] sm:$0xff]
    %v1782 = vld [vmem:[#allocation2 + $0xa8] sm:$0xff]
    %v1783 = vld [vmem:[#allocation2 + $0xb0] sm:$0xff]
    %v1784 = vld [vmem:[#allocation2 + $0xb8] sm:$0xff]
    %v1785 = vld [vmem:[#allocation2 + $0xc0] sm:$0xff]
    %v1786 = vld [vmem:[#allocation2 + $0xc8] sm:$0xff]
    %v1787 = vld [vmem:[#allocation2 + $0xd0] sm:$0xff]
    %v1788 = vld [vmem:[#allocation2 + $0xd8] sm:$0xff]
    %v1789 = vld [vmem:[#allocation2 + $0xe0] sm:$0xff]
    %v1790 = vld [vmem:[#allocation2 + $0xe8] sm:$0xff]
    %v1791 = vld [vmem:[#allocation2 + $0xf0] sm:$0xff]
    %v1792 = vld [vmem:[#allocation2 + $0xf8] sm:$0xff]
    %v1793 = vld [vmem:[#allocation2 + $0x100] sm:$0xff]
    %v1794 = vld [vmem:[#allocation2 + $0x108] sm:$0xff]
    %v1795 = vld [vmem:[#allocation2 + $0x110] sm:$0xff]
    %v1796 = vld [vmem:[#allocation2 + $0x118] sm:$0xff]
    %v1797 = vld [vmem:[#allocation2 + $0x120] sm:$0xff]
    %v1798 = vld [vmem:[#allocation2 + $0x128] sm:$0xff]
    %v1799 = vld [vmem:[#allocation2 + $0x130] sm:$0xff]
    %v1800 = vld [vmem:[#allocation2 + $0x138] sm:$0xff]
    %v1801 = vld [vmem:[#allocation2 + $0x140] sm:$0xff]
    %v1802 = vld [vmem:[#allocation2 + $0x148] sm:$0xff]
    %v1803 = vld [vmem:[#allocation2 + $0x150] sm:$0xff]
    %v1804 = vld [vmem:[#allocation2 + $0x158] sm:$0xff]
    %v1805 = vld [vmem:[#allocation2 + $0x160] sm:$0xff]
    %v1806 = vld [vmem:[#allocation2 + $0x168] sm:$0xff]
    %v1807 = vld [vmem:[#allocation2 + $0x170] sm:$0xff]
    %v1808 = vld [vmem:[#allocation2 + $0x178] sm:$0xff]
    %v1809 = vld [vmem:[#allocation2 + $0x180] sm:$0xff]
    %v1810 = vld [vmem:[#allocation2 + $0x188] sm:$0xff]
    %v1811 = vld [vmem:[#allocation2 + $0x190] sm:$0xff]
    %v1812 = vld [vmem:[#allocation2 + $0x198] sm:$0xff]
    %v1813 = vld [vmem:[#allocation2 + $0x1a0] sm:$0xff]
    %v1814 = vld [vmem:[#allocation2 + $0x1a8] sm:$0xff]
    %v1815 = vld [vmem:[#allocation2 + $0x1b0] sm:$0xff]
    %v1816 = vld [vmem:[#allocation2 + $0x1b8] sm:$0xff]
    %v1817 = vld [vmem:[#allocation2 + $0x1c0] sm:$0xff]
    %v1818 = vld [vmem:[#allocation2 + $0x1c8] sm:$0xff]
    %v1819 = vld [vmem:[#allocation2 + $0x1d0] sm:$0xff]
    %v1820 = vld [vmem:[#allocation2 + $0x1d8] sm:$0xff]
    %v1821 = vld [vmem:[#allocation2 + $0x1e0] sm:$0xff]
    %v1822 = vld [vmem:[#allocation2 + $0x1e8] sm:$0xff]
    %v1823 = vld [vmem:[#allocation2 + $0x1f0] sm:$0xff]
    %v1824 = vld [vmem:[#allocation2 + $0x1f8] sm:$0xff]
    %v1825 = vld [vmem:[#allocation2 + $0x200] sm:$0xff]
    %v1826 = vmul.f32 %v1762, %v1052
    %v1827 = vmul.f32 %v1763, %v1053
    %v1828 = vmul.f32 %v1764, %v1054
    %v1829 = vmul.f32 %v1765, %v1055
    %v1830 = vmul.f32 %v1766, %v1056
    %v1831 = vmul.f32 %v1767, %v1057
    %v1832 = vmul.f32 %v1768, %v1058
    %v1833 = vmul.f32 %v1769, %v1059
    %v1834 = vmul.f32 %v1770, %v1060
    %v1835 = vmul.f32 %v1771, %v1061
    %v1836 = vmul.f32 %v1772, %v1062
    %v1837 = vmul.f32 %v1773, %v1063
    %v1838 = vmul.f32 %v1774, %v1064
    %v1839 = vmul.f32 %v1775, %v1065
    %v1840 = vmul.f32 %v1776, %v1066
    %v1841 = vmul.f32 %v1777, %v1067
    %v1842 = vmul.f32 %v1778, %v1068
    %v1843 = vmul.f32 %v1779, %v1069
    %v1844 = vmul.f32 %v1780, %v1070
    %v1845 = vmul.f32 %v1781, %v1071
    %v1846 = vmul.f32 %v1782, %v1072
    %v1847 = vmul.f32 %v1783, %v1073
    %v1848 = vmul.f32 %v1784, %v1074
    %v1849 = vmul.f32 %v1785, %v1075
    %v1850 = vmul.f32 %v1786, %v1076
    %v1851 = vmul.f32 %v1787, %v1077
    %v1852 = vmul.f32 %v1788, %v1078
    %v1853 = vmul.f32 %v1789, %v1079
    %v1854 = vmul.f32 %v1790, %v1080
    %v1855 = vmul.f32 %v1791, %v1081
    %v1856 = vmul.f32 %v1792, %v1082
    %v1857 = vmul.f32 %v1793, %v1083
    %v1858 = vmul.f32 %v1794, %v1084
    %v1859 = vmul.f32 %v1795, %v1085
    %v1860 = vmul.f32 %v1796, %v1086
    %v1861 = vmul.f32 %v1797, %v1087
    %v1862 = vmul.f32 %v1798, %v1088
    %v1863 = vmul.f32 %v1799, %v1089
    %v1864 = vmul.f32 %v1800, %v1090
    %v1865 = vmul.f32 %v1801, %v1091
    %v1866 = vmul.f32 %v1802, %v1092
    %v1867 = vmul.f32 %v1803, %v1093
    %v1868 = vmul.f32 %v1804, %v1094
    %v1869 = vmul.f32 %v1805, %v1095
    %v1870 = vmul.f32 %v1806, %v1096
    %v1871 = vmul.f32 %v1807, %v1097
    %v1872 = vmul.f32 %v1808, %v1098
    %v1873 = vmul.f32 %v1809, %v1099
    %v1874 = vmul.f32 %v1810, %v1100
    %v1875 = vmul.f32 %v1811, %v1101
    %v1876 = vmul.f32 %v1812, %v1102
    %v1877 = vmul.f32 %v1813, %v1103
    %v1878 = vmul.f32 %v1814, %v1104
    %v1879 = vmul.f32 %v1815, %v1105
    %v1880 = vmul.f32 %v1816, %v1106
    %v1881 = vmul.f32 %v1817, %v1107
    %v1882 = vmul.f32 %v1818, %v1108
    %v1883 = vmul.f32 %v1819, %v1109
    %v1884 = vmul.f32 %v1820, %v1110
    %v1885 = vmul.f32 %v1821, %v1111
    %v1886 = vmul.f32 %v1822, %v1112
    %v1887 = vmul.f32 %v1823, %v1113
    %v1888 = vmul.f32 %v1824, %v1114
    %v1889 = vmul.f32 %v1825, %v1115
    %v1890 = vld [vmem:[#allocation2 + $0x9] sm:$0xff]
    %v1891 = vld [vmem:[#allocation2 + $0x11] sm:$0xff]
    %v1892 = vld [vmem:[#allocation2 + $0x19] sm:$0xff]
    %v1893 = vld [vmem:[#allocation2 + $0x21] sm:$0xff]
    %v1894 = vld [vmem:[#allocation2 + $0x29] sm:$0xff]
    %v1895 = vld [vmem:[#allocation2 + $0x31] sm:$0xff]
    %v1896 = vld [vmem:[#allocation2 + $0x39] sm:$0xff]
    %v1897 = vld [vmem:[#allocation2 + $0x41] sm:$0xff]
    %v1898 = vld [vmem:[#allocation2 + $0x49] sm:$0xff]
    %v1899 = vld [vmem:[#allocation2 + $0x51] sm:$0xff]
    %v1900 = vld [vmem:[#allocation2 + $0x59] sm:$0xff]
    %v1901 = vld [vmem:[#allocation2 + $0x61] sm:$0xff]
    %v1902 = vld [vmem:[#allocation2 + $0x69] sm:$0xff]
    %v1903 = vld [vmem:[#allocation2 + $0x71] sm:$0xff]
    %v1904 = vld [vmem:[#allocation2 + $0x79] sm:$0xff]
    %v1905 = vld [vmem:[#allocation2 + $0x81] sm:$0xff]
    %v1906 = vld [vmem:[#allocation2 + $0x89] sm:$0xff]
    %v1907 = vld [vmem:[#allocation2 + $0x91] sm:$0xff]
    %v1908 = vld [vmem:[#allocation2 + $0x99] sm:$0xff]
    %v1909 = vld [vmem:[#allocation2 + $0xa1] sm:$0xff]
    %v1910 = vld [vmem:[#allocation2 + $0xa9] sm:$0xff]
    %v1911 = vld [vmem:[#allocation2 + $0xb1] sm:$0xff]
    %v1912 = vld [vmem:[#allocation2 + $0xb9] sm:$0xff]
    %v1913 = vld [vmem:[#allocation2 + $0xc1] sm:$0xff]
    %v1914 = vld [vmem:[#allocation2 + $0xc9] sm:$0xff]
    %v1915 = vld [vmem:[#allocation2 + $0xd1] sm:$0xff]
    %v1916 = vld [vmem:[#allocation2 + $0xd9] sm:$0xff]
    %v1917 = vld [vmem:[#allocation2 + $0xe1] sm:$0xff]
    %v1918 = vld [vmem:[#allocation2 + $0xe9] sm:$0xff]
    %v1919 = vld [vmem:[#allocation2 + $0xf1] sm:$0xff]
    %v1920 = vld [vmem:[#allocation2 + $0xf9] sm:$0xff]
    %v1921 = vld [vmem:[#allocation2 + $0x101] sm:$0xff]
    %v1922 = vld [vmem:[#allocation2 + $0x109] sm:$0xff]
    %v1923 = vld [vmem:[#allocation2 + $0x111] sm:$0xff]
    %v1924 = vld [vmem:[#allocation2 + $0x119] sm:$0xff]
    %v1925 = vld [vmem:[#allocation2 + $0x121] sm:$0xff]
    %v1926 = vld [vmem:[#allocation2 + $0x129] sm:$0xff]
    %v1927 = vld [vmem:[#allocation2 + $0x131] sm:$0xff]
    %v1928 = vld [vmem:[#allocation2 + $0x139] sm:$0xff]
    %v1929 = vld [vmem:[#allocation2 + $0x141] sm:$0xff]
    %v1930 = vld [vmem:[#allocation2 + $0x149] sm:$0xff]
    %v1931 = vld [vmem:[#allocation2 + $0x151] sm:$0xff]
    %v1932 = vld [vmem:[#allocation2 + $0x159] sm:$0xff]
    %v1933 = vld [vmem:[#allocation2 + $0x161] sm:$0xff]
    %v1934 = vld [vmem:[#allocation2 + $0x169] sm:$0xff]
    %v1935 = vld [vmem:[#allocation2 + $0x171] sm:$0xff]
    %v1936 = vld [vmem:[#allocation2 + $0x179] sm:$0xff]
    %v1937 = vld [vmem:[#allocation2 + $0x181] sm:$0xff]
    %v1938 = vld [vmem:[#allocation2 + $0x189] sm:$0xff]
    %v1939 = vld [vmem:[#allocation2 + $0x191] sm:$0xff]
    %v1940 = vld [vmem:[#allocation2 + $0x199] sm:$0xff]
    %v1941 = vld [vmem:[#allocation2 + $0x1a1] sm:$0xff]
    %v1942 = vld [vmem:[#allocation2 + $0x1a9] sm:$0xff]
    %v1943 = vld [vmem:[#allocation2 + $0x1b1] sm:$0xff]
    %v1944 = vld [vmem:[#allocation2 + $0x1b9] sm:$0xff]
    %v1945 = vld [vmem:[#allocation2 + $0x1c1] sm:$0xff]
    %v1946 = vld [vmem:[#allocation2 + $0x1c9] sm:$0xff]
    %v1947 = vld [vmem:[#allocation2 + $0x1d1] sm:$0xff]
    %v1948 = vld [vmem:[#allocation2 + $0x1d9] sm:$0xff]
    %v1949 = vld [vmem:[#allocation2 + $0x1e1] sm:$0xff]
    %v1950 = vld [vmem:[#allocation2 + $0x1e9] sm:$0xff]
    %v1951 = vld [vmem:[#allocation2 + $0x1f1] sm:$0xff]
    %v1952 = vld [vmem:[#allocation2 + $0x1f9] sm:$0xff]
    %v1953 = vld [vmem:[#allocation2 + $0x201] sm:$0xff]
    %v1954 = vmul.f32 %v1052, %v1436
    %v1955 = vmul.f32 %v1053, %v1437
    %v1956 = vmul.f32 %v1054, %v1438
    %v1957 = vmul.f32 %v1055, %v1439
    %v1958 = vmul.f32 %v1056, %v1440
    %v1959 = vmul.f32 %v1057, %v1441
    %v1960 = vmul.f32 %v1058, %v1442
    %v1961 = vmul.f32 %v1059, %v1443
    %v1962 = vmul.f32 %v1060, %v1444
    %v1963 = vmul.f32 %v1061, %v1445
    %v1964 = vmul.f32 %v1062, %v1446
    %v1965 = vmul.f32 %v1063, %v1447
    %v1966 = vmul.f32 %v1064, %v1448
    %v1967 = vmul.f32 %v1065, %v1449
    %v1968 = vmul.f32 %v1066, %v1450
    %v1969 = vmul.f32 %v1067, %v1451
    %v1970 = vmul.f32 %v1068, %v1452
    %v1971 = vmul.f32 %v1069, %v1453
    %v1972 = vmul.f32 %v1070, %v1454
    %v1973 = vmul.f32 %v1071, %v1455
    %v1974 = vmul.f32 %v1072, %v1456
    %v1975 = vmul.f32 %v1073, %v1457
    %v1976 = vmul.f32 %v1074, %v1458
    %v1977 = vmul.f32 %v1075, %v1459
    %v1978 = vmul.f32 %v1076, %v1460
    %v1979 = vmul.f32 %v1077, %v1461
    %v1980 = vmul.f32 %v1078, %v1462
    %v1981 = vmul.f32 %v1079, %v1463
    %v1982 = vmul.f32 %v1080, %v1464
    %v1983 = vmul.f32 %v1081, %v1465
    %v1984 = vmul.f32 %v1082, %v1466
    %v1985 = vmul.f32 %v1083, %v1467
    %v1986 = vmul.f32 %v1084, %v1468
    %v1987 = vmul.f32 %v1085, %v1469
    %v1988 = vmul.f32 %v1086, %v1470
    %v1989 = vmul.f32 %v1087, %v1471
    %v1990 = vmul.f32 %v1088, %v1472
    %v1991 = vmul.f32 %v1089, %v1473
    %v1992 = vmul.f32 %v1090, %v1474
    %v1993 = vmul.f32 %v1091, %v1475
    %v1994 = vmul.f32 %v1092, %v1476
    %v1995 = vmul.f32 %v1093, %v1477
    %v1996 = vmul.f32 %v1094, %v1478
    %v1997 = vmul.f32 %v1095, %v1479
    %v1998 = vmul.f32 %v1096, %v1480
    %v1999 = vmul.f32 %v1097, %v1481
    %v2000 = vmul.f32 %v1098, %v1482
    %v2001 = vmul.f32 %v1099, %v1483
    %v2002 = vmul.f32 %v1100, %v1484
    %v2003 = vmul.f32 %v1101, %v1485
    %v2004 = vmul.f32 %v1102, %v1486
    %v2005 = vmul.f32 %v1103, %v1487
    %v2006 = vmul.f32 %v1104, %v1488
    %v2007 = vmul.f32 %v1105, %v1489
    %v2008 = vmul.f32 %v1106, %v1490
    %v2009 = vmul.f32 %v1107, %v1491
    %v2010 = vmul.f32 %v1108, %v1492
    %v2011 = vmul.f32 %v1109, %v1493
    %v2012 = vmul.f32 %v1110, %v1494
    %v2013 = vmul.f32 %v1111, %v1495
    %v2014 = vmul.f32 %v1112, %v1496
    %v2015 = vmul.f32 %v1113, %v1497
    %v2016 = vmul.f32 %v1114, %v1498
    %v2017 = vmul.f32 %v1115, %v1499
    %v2018 = vmul.f32 %v1890, %v1954
    %v2019 = vmul.f32 %v1891, %v1955
    %v2020 = vmul.f32 %v1892, %v1956
    %v2021 = vmul.f32 %v1893, %v1957
    %v2022 = vmul.f32 %v1894, %v1958
    %v2023 = vmul.f32 %v1895, %v1959
    %v2024 = vmul.f32 %v1896, %v1960
    %v2025 = vmul.f32 %v1897, %v1961
    %v2026 = vmul.f32 %v1898, %v1962
    %v2027 = vmul.f32 %v1899, %v1963
    %v2028 = vmul.f32 %v1900, %v1964
    %v2029 = vmul.f32 %v1901, %v1965
    %v2030 = vmul.f32 %v1902, %v1966
    %v2031 = vmul.f32 %v1903, %v1967
    %v2032 = vmul.f32 %v1904, %v1968
    %v2033 = vmul.f32 %v1905, %v1969
    %v2034 = vmul.f32 %v1906, %v1970
    %v2035 = vmul.f32 %v1907, %v1971
    %v2036 = vmul.f32 %v1908, %v1972
    %v2037 = vmul.f32 %v1909, %v1973
    %v2038 = vmul.f32 %v1910, %v1974
    %v2039 = vmul.f32 %v1911, %v1975
    %v2040 = vmul.f32 %v1912, %v1976
    %v2041 = vmul.f32 %v1913, %v1977
    %v2042 = vmul.f32 %v1914, %v1978
    %v2043 = vmul.f32 %v1915, %v1979
    %v2044 = vmul.f32 %v1916, %v1980
    %v2045 = vmul.f32 %v1917, %v1981
    %v2046 = vmul.f32 %v1918, %v1982
    %v2047 = vmul.f32 %v1919, %v1983
    %v2048 = vmul.f32 %v1920, %v1984
    %v2049 = vmul.f32 %v1921, %v1985
    %v2050 = vmul.f32 %v1922, %v1986
    %v2051 = vmul.f32 %v1923, %v1987
    %v2052 = vmul.f32 %v1924, %v1988
    %v2053 = vmul.f32 %v1925, %v1989
    %v2054 = vmul.f32 %v1926, %v1990
    %v2055 = vmul.f32 %v1927, %v1991
    %v2056 = vmul.f32 %v1928, %v1992
    %v2057 = vmul.f32 %v1929, %v1993
    %v2058 = vmul.f32 %v1930, %v1994
    %v2059 = vmul.f32 %v1931, %v1995
    %v2060 = vmul.f32 %v1932, %v1996
    %v2061 = vmul.f32 %v1933, %v1997
    %v2062 = vmul.f32 %v1934, %v1998
    %v2063 = vmul.f32 %v1935, %v1999
    %v2064 = vmul.f32 %v1936, %v2000
    %v2065 = vmul.f32 %v1937, %v2001
    %v2066 = vmul.f32 %v1938, %v2002
    %v2067 = vmul.f32 %v1939, %v2003
    %v2068 = vmul.f32 %v1940, %v2004
    %v2069 = vmul.f32 %v1941, %v2005
    %v2070 = vmul.f32 %v1942, %v2006
    %v2071 = vmul.f32 %v1943, %v2007
    %v2072 = vmul.f32 %v1944, %v2008
    %v2073 = vmul.f32 %v1945, %v2009
    %v2074 = vmul.f32 %v1946, %v2010
    %v2075 = vmul.f32 %v1947, %v2011
    %v2076 = vmul.f32 %v1948, %v2012
    %v2077 = vmul.f32 %v1949, %v2013
    %v2078 = vmul.f32 %v1950, %v2014
    %v2079 = vmul.f32 %v1951, %v2015
    %v2080 = vmul.f32 %v1952, %v2016
    %v2081 = vmul.f32 %v1953, %v2017
    %v2082 = vpack.c.bf16 %v1699, %v1698
    %v2083 = vpack.c.bf16 %v1827, %v1826
    %v2084 = vpack.c.bf16 %v2019, %v2018
    %v2085 = vpack.c.bf16 %v1701, %v1700
    %v2086 = vpack.c.bf16 %v1829, %v1828
    %v2087 = vpack.c.bf16 %v2021, %v2020
    %v2088 = vpack.c.bf16 %v1703, %v1702
    %v2089 = vpack.c.bf16 %v1831, %v1830
    %v2090 = vpack.c.bf16 %v2023, %v2022
    %v2091 = vpack.c.bf16 %v1705, %v1704
    %v2092 = vpack.c.bf16 %v1833, %v1832
    %v2093 = vpack.c.bf16 %v2025, %v2024
    %v2094 = vpack.c.bf16 %v1707, %v1706
    %v2095 = vpack.c.bf16 %v1835, %v1834
    %v2096 = vpack.c.bf16 %v2027, %v2026
    %v2097 = vpack.c.bf16 %v1709, %v1708
    %v2098 = vpack.c.bf16 %v1837, %v1836
    %v2099 = vpack.c.bf16 %v2029, %v2028
    %v2100 = vpack.c.bf16 %v1711, %v1710
    %v2101 = vpack.c.bf16 %v1839, %v1838
    %v2102 = vpack.c.bf16 %v2031, %v2030
    %v2103 = vpack.c.bf16 %v1713, %v1712
    %v2104 = vpack.c.bf16 %v1841, %v1840
    %v2105 = vpack.c.bf16 %v2033, %v2032
    %v2106 = vpack.c.bf16 %v1715, %v1714
    %v2107 = vpack.c.bf16 %v1843, %v1842
    %v2108 = vpack.c.bf16 %v2035, %v2034
    %v2109 = vpack.c.bf16 %v1717, %v1716
    %v2110 = vpack.c.bf16 %v1845, %v1844
    %v2111 = vpack.c.bf16 %v2037, %v2036
    %v2112 = vpack.c.bf16 %v1719, %v1718
    %v2113 = vpack.c.bf16 %v1847, %v1846
    %v2114 = vpack.c.bf16 %v2039, %v2038
    %v2115 = vpack.c.bf16 %v1721, %v1720
    %v2116 = vpack.c.bf16 %v1849, %v1848
    %v2117 = vpack.c.bf16 %v2041, %v2040
    %v2118 = vpack.c.bf16 %v1723, %v1722
    %v2119 = vpack.c.bf16 %v1851, %v1850
    %v2120 = vpack.c.bf16 %v2043, %v2042
    %v2121 = vpack.c.bf16 %v1725, %v1724
    %v2122 = vpack.c.bf16 %v1853, %v1852
    %v2123 = vpack.c.bf16 %v2045, %v2044
    %v2124 = vpack.c.bf16 %v1727, %v1726
    %v2125 = vpack.c.bf16 %v1855, %v1854
    %v2126 = vpack.c.bf16 %v2047, %v2046
    %v2127 = vpack.c.bf16 %v1729, %v1728
    %v2128 = vpack.c.bf16 %v1857, %v1856
    %v2129 = vpack.c.bf16 %v2049, %v2048
    %v2130 = vpack.c.bf16 %v1731, %v1730
    %v2131 = vpack.c.bf16 %v1859, %v1858
    %v2132 = vpack.c.bf16 %v2051, %v2050
    %v2133 = vpack.c.bf16 %v1733, %v1732
    %v2134 = vpack.c.bf16 %v1861, %v1860
    %v2135 = vpack.c.bf16 %v2053, %v2052
    %v2136 = vpack.c.bf16 %v1735, %v1734
    %v2137 = vpack.c.bf16 %v1863, %v1862
    %v2138 = vpack.c.bf16 %v2055, %v2054
    %v2139 = vpack.c.bf16 %v1737, %v1736
    %v2140 = vpack.c.bf16 %v1865, %v1864
    %v2141 = vpack.c.bf16 %v2057, %v2056
    %v2142 = vpack.c.bf16 %v1739, %v1738
    %v2143 = vpack.c.bf16 %v1867, %v1866
    %v2144 = vpack.c.bf16 %v2059, %v2058
    %v2145 = vpack.c.bf16 %v1741, %v1740
    %v2146 = vpack.c.bf16 %v1869, %v1868
    %v2147 = vpack.c.bf16 %v2061, %v2060
    %v2148 = vpack.c.bf16 %v1743, %v1742
    %v2149 = vpack.c.bf16 %v1871, %v1870
    %v2150 = vpack.c.bf16 %v2063, %v2062
    %v2151 = vpack.c.bf16 %v1745, %v1744
    %v2152 = vpack.c.bf16 %v1873, %v1872
    %v2153 = vpack.c.bf16 %v2065, %v2064
    %v2154 = vpack.c.bf16 %v1747, %v1746
    %v2155 = vpack.c.bf16 %v1875, %v1874
    %v2156 = vpack.c.bf16 %v2067, %v2066
    %v2157 = vpack.c.bf16 %v1749, %v1748
    %v2158 = vpack.c.bf16 %v1877, %v1876
    %v2159 = vpack.c.bf16 %v2069, %v2068
    %v2160 = vpack.c.bf16 %v1751, %v1750
    %v2161 = vpack.c.bf16 %v1879, %v1878
    %v2162 = vpack.c.bf16 %v2071, %v2070
    %v2163 = vpack.c.bf16 %v1753, %v1752
    %v2164 = vpack.c.bf16 %v1881, %v1880
    %v2165 = vpack.c.bf16 %v2073, %v2072
    %v2166 = vpack.c.bf16 %v1755, %v1754
    %v2167 = vpack.c.bf16 %v1883, %v1882
    %v2168 = vpack.c.bf16 %v2075, %v2074
    %v2169 = vpack.c.bf16 %v1757, %v1756
    %v2170 = vpack.c.bf16 %v1885, %v1884
    %v2171 = vpack.c.bf16 %v2077, %v2076
    %v2172 = vpack.c.bf16 %v1759, %v1758
    %v2173 = vpack.c.bf16 %v1887, %v1886
    %v2174 = vpack.c.bf16 %v2079, %v2078
    %v2175 = vpack.c.bf16 %v1761, %v1760
    %v2176 = vpack.c.bf16 %v1889, %v1888
    %v2177 = vpack.c.bf16 %v2081, %v2080
    %v2178 = vld [vmem:[#allocation3] sm:$0xf]
    %v2179 = vld [vmem:[#allocation3 + $0x4] sm:$0xf]
    %v2180 = vld [vmem:[#allocation3 + $0x8] sm:$0xf]
    %v2181 = vld [vmem:[#allocation3 + $0xc] sm:$0xf]
    %v2182 = vld [vmem:[#allocation3 + $0x10] sm:$0xf]
    %v2183 = vld [vmem:[#allocation3 + $0x14] sm:$0xf]
    %v2184 = vld [vmem:[#allocation3 + $0x18] sm:$0xf]
    %v2185 = vld [vmem:[#allocation3 + $0x1c] sm:$0xf]
    %v2186 = vld [vmem:[#allocation3 + $0x20] sm:$0xf]
    %v2187 = vld [vmem:[#allocation3 + $0x24] sm:$0xf]
    %v2188 = vld [vmem:[#allocation3 + $0x28] sm:$0xf]
    %v2189 = vld [vmem:[#allocation3 + $0x2c] sm:$0xf]
    %v2190 = vld [vmem:[#allocation3 + $0x30] sm:$0xf]
    %v2191 = vld [vmem:[#allocation3 + $0x34] sm:$0xf]
    %v2192 = vld [vmem:[#allocation3 + $0x38] sm:$0xf]
    %v2193 = vld [vmem:[#allocation3 + $0x3c] sm:$0xf]
    %v2194 = vld [vmem:[#allocation3 + $0x40] sm:$0xf]
    %v2195 = vld [vmem:[#allocation3 + $0x44] sm:$0xf]
    %v2196 = vld [vmem:[#allocation3 + $0x48] sm:$0xf]
    %v2197 = vld [vmem:[#allocation3 + $0x4c] sm:$0xf]
    %v2198 = vld [vmem:[#allocation3 + $0x50] sm:$0xf]
    %v2199 = vld [vmem:[#allocation3 + $0x54] sm:$0xf]
    %v2200 = vld [vmem:[#allocation3 + $0x58] sm:$0xf]
    %v2201 = vld [vmem:[#allocation3 + $0x5c] sm:$0xf]
    %v2202 = vld [vmem:[#allocation3 + $0x60] sm:$0xf]
    %v2203 = vld [vmem:[#allocation3 + $0x64] sm:$0xf]
    %v2204 = vld [vmem:[#allocation3 + $0x68] sm:$0xf]
    %v2205 = vld [vmem:[#allocation3 + $0x6c] sm:$0xf]
    %v2206 = vld [vmem:[#allocation3 + $0x70] sm:$0xf]
    %v2207 = vld [vmem:[#allocation3 + $0x74] sm:$0xf]
    %v2208 = vld [vmem:[#allocation3 + $0x78] sm:$0xf]
    %v2209 = vld [vmem:[#allocation3 + $0x7c] sm:$0xf]
    %v2210 = vld [vmem:[#allocation3 + $0x80] sm:$0xf]
    %v2211 = vld [vmem:[#allocation3 + $0x84] sm:$0xf]
    %v2212 = vld [vmem:[#allocation3 + $0x88] sm:$0xf]
    %v2213 = vld [vmem:[#allocation3 + $0x8c] sm:$0xf]
    %v2214 = vld [vmem:[#allocation3 + $0x90] sm:$0xf]
    %v2215 = vld [vmem:[#allocation3 + $0x94] sm:$0xf]
    %v2216 = vld [vmem:[#allocation3 + $0x98] sm:$0xf]
    %v2217 = vld [vmem:[#allocation3 + $0x9c] sm:$0xf]
    %v2218 = vld [vmem:[#allocation3 + $0xa0] sm:$0xf]
    %v2219 = vld [vmem:[#allocation3 + $0xa4] sm:$0xf]
    %v2220 = vld [vmem:[#allocation3 + $0xa8] sm:$0xf]
    %v2221 = vld [vmem:[#allocation3 + $0xac] sm:$0xf]
    %v2222 = vld [vmem:[#allocation3 + $0xb0] sm:$0xf]
    %v2223 = vld [vmem:[#allocation3 + $0xb4] sm:$0xf]
    %v2224 = vld [vmem:[#allocation3 + $0xb8] sm:$0xf]
    %v2225 = vld [vmem:[#allocation3 + $0xbc] sm:$0xf]
    %v2226 = vld [vmem:[#allocation2 + $0x207] sm:$0xff]
    %v2227 = vld [vmem:[#allocation2 + $0x20f] sm:$0xff]
    %v2228 = vmul.f32 %v1572, %v1308
    %v2229 = vmul.f32 %v1573, %v1309
    %v2230 = vmul.f32 %v1574, %v1310
    %v2231 = vmul.f32 %v1575, %v1311
    %v2232 = vmul.f32 %v1576, %v1312
    %v2233 = vmul.f32 %v1577, %v1313
    %v2234 = vmul.f32 %v1578, %v1314
    %v2235 = vmul.f32 %v1579, %v1315
    %v2236 = vmul.f32 %v1580, %v1316
    %v2237 = vmul.f32 %v1581, %v1317
    %v2238 = vmul.f32 %v1582, %v1318
    %v2239 = vmul.f32 %v1583, %v1319
    %v2240 = vmul.f32 %v1584, %v1320
    %v2241 = vmul.f32 %v1585, %v1321
    %v2242 = vmul.f32 %v1586, %v1322
    %v2243 = vmul.f32 %v1587, %v1323
    %v2244 = vmul.f32 %v1588, %v1324
    %v2245 = vmul.f32 %v1589, %v1325
    %v2246 = vmul.f32 %v1590, %v1326
    %v2247 = vmul.f32 %v1591, %v1327
    %v2248 = vmul.f32 %v1592, %v1328
    %v2249 = vmul.f32 %v1593, %v1329
    %v2250 = vmul.f32 %v1594, %v1330
    %v2251 = vmul.f32 %v1595, %v1331
    %v2252 = vmul.f32 %v1596, %v1332
    %v2253 = vmul.f32 %v1597, %v1333
    %v2254 = vmul.f32 %v1598, %v1334
    %v2255 = vmul.f32 %v1599, %v1335
    %v2256 = vmul.f32 %v1600, %v1336
    %v2257 = vmul.f32 %v1601, %v1337
    %v2258 = vmul.f32 %v1602, %v1338
    %v2259 = vmul.f32 %v1603, %v1339
    %v2260 = vmul.f32 %v1604, %v1340
    %v2261 = vmul.f32 %v1605, %v1341
    %v2262 = vmul.f32 %v1606, %v1342
    %v2263 = vmul.f32 %v1607, %v1343
    %v2264 = vmul.f32 %v1608, %v1344
    %v2265 = vmul.f32 %v1609, %v1345
    %v2266 = vmul.f32 %v1610, %v1346
    %v2267 = vmul.f32 %v1611, %v1347
    %v2268 = vmul.f32 %v1612, %v1348
    %v2269 = vmul.f32 %v1613, %v1349
    %v2270 = vmul.f32 %v1614, %v1350
    %v2271 = vmul.f32 %v1615, %v1351
    %v2272 = vmul.f32 %v1616, %v1352
    %v2273 = vmul.f32 %v1617, %v1353
    %v2274 = vmul.f32 %v1618, %v1354
    %v2275 = vmul.f32 %v1619, %v1355
    %v2276 = vmul.f32 %v1620, %v1356
    %v2277 = vmul.f32 %v1621, %v1357
    %v2278 = vmul.f32 %v1622, %v1358
    %v2279 = vmul.f32 %v1623, %v1359
    %v2280 = vmul.f32 %v1624, %v1360
    %v2281 = vmul.f32 %v1625, %v1361
    %v2282 = vmul.f32 %v1626, %v1362
    %v2283 = vmul.f32 %v1627, %v1363
    %v2284 = vmul.f32 %v1628, %v1364
    %v2285 = vmul.f32 %v1629, %v1365
    %v2286 = vmul.f32 %v1630, %v1366
    %v2287 = vmul.f32 %v1631, %v1367
    %v2288 = vmul.f32 %v1632, %v1368
    %v2289 = vmul.f32 %v1633, %v1369
    %v2290 = vmul.f32 %v2226, %v1370
    %v2291 = vmul.f32 %v2227, %v1371
    %v2292 = vld [vmem:[#allocation2 + $0x209] sm:$0xff]
    %v2293 = vld [vmem:[#allocation2 + $0x211] sm:$0xff]
    %v2294 = vmul.f32 %v1892, %v1436
    %v2295 = vmul.f32 %v1893, %v1437
    %v2296 = vmul.f32 %v1894, %v1438
    %v2297 = vmul.f32 %v1895, %v1439
    %v2298 = vmul.f32 %v1896, %v1440
    %v2299 = vmul.f32 %v1897, %v1441
    %v2300 = vmul.f32 %v1898, %v1442
    %v2301 = vmul.f32 %v1899, %v1443
    %v2302 = vmul.f32 %v1900, %v1444
    %v2303 = vmul.f32 %v1901, %v1445
    %v2304 = vmul.f32 %v1902, %v1446
    %v2305 = vmul.f32 %v1903, %v1447
    %v2306 = vmul.f32 %v1904, %v1448
    %v2307 = vmul.f32 %v1905, %v1449
    %v2308 = vmul.f32 %v1906, %v1450
    %v2309 = vmul.f32 %v1907, %v1451
    %v2310 = vmul.f32 %v1908, %v1452
    %v2311 = vmul.f32 %v1909, %v1453
    %v2312 = vmul.f32 %v1910, %v1454
    %v2313 = vmul.f32 %v1911, %v1455
    %v2314 = vmul.f32 %v1912, %v1456
    %v2315 = vmul.f32 %v1913, %v1457
    %v2316 = vmul.f32 %v1914, %v1458
    %v2317 = vmul.f32 %v1915, %v1459
    %v2318 = vmul.f32 %v1916, %v1460
    %v2319 = vmul.f32 %v1917, %v1461
    %v2320 = vmul.f32 %v1918, %v1462
    %v2321 = vmul.f32 %v1919, %v1463
    %v2322 = vmul.f32 %v1920, %v1464
    %v2323 = vmul.f32 %v1921, %v1465
    %v2324 = vmul.f32 %v1922, %v1466
    %v2325 = vmul.f32 %v1923, %v1467
    %v2326 = vmul.f32 %v1924, %v1468
    %v2327 = vmul.f32 %v1925, %v1469
    %v2328 = vmul.f32 %v1926, %v1470
    %v2329 = vmul.f32 %v1927, %v1471
    %v2330 = vmul.f32 %v1928, %v1472
    %v2331 = vmul.f32 %v1929, %v1473
    %v2332 = vmul.f32 %v1930, %v1474
    %v2333 = vmul.f32 %v1931, %v1475
    %v2334 = vmul.f32 %v1932, %v1476
    %v2335 = vmul.f32 %v1933, %v1477
    %v2336 = vmul.f32 %v1934, %v1478
    %v2337 = vmul.f32 %v1935, %v1479
    %v2338 = vmul.f32 %v1936, %v1480
    %v2339 = vmul.f32 %v1937, %v1481
    %v2340 = vmul.f32 %v1938, %v1482
    %v2341 = vmul.f32 %v1939, %v1483
    %v2342 = vmul.f32 %v1940, %v1484
    %v2343 = vmul.f32 %v1941, %v1485
    %v2344 = vmul.f32 %v1942, %v1486
    %v2345 = vmul.f32 %v1943, %v1487
    %v2346 = vmul.f32 %v1944, %v1488
    %v2347 = vmul.f32 %v1945, %v1489
    %v2348 = vmul.f32 %v1946, %v1490
    %v2349 = vmul.f32 %v1947, %v1491
    %v2350 = vmul.f32 %v1948, %v1492
    %v2351 = vmul.f32 %v1949, %v1493
    %v2352 = vmul.f32 %v1950, %v1494
    %v2353 = vmul.f32 %v1951, %v1495
    %v2354 = vmul.f32 %v1952, %v1496
    %v2355 = vmul.f32 %v1953, %v1497
    %v2356 = vmul.f32 %v2292, %v1498
    %v2357 = vmul.f32 %v2293, %v1499
    %v2358 = vpack.c.bf16 %v2229, %v2228
    %v2359 = vpack.c.bf16 %v668, %v667
    %v2360 = vpack.c.bf16 %v2295, %v2294
    %v2361 = vpack.c.bf16 %v2231, %v2230
    %v2362 = vpack.c.bf16 %v670, %v669
    %v2363 = vpack.c.bf16 %v2297, %v2296
    %v2364 = vpack.c.bf16 %v2233, %v2232
    %v2365 = vpack.c.bf16 %v672, %v671
    %v2366 = vpack.c.bf16 %v2299, %v2298
    %v2367 = vpack.c.bf16 %v2235, %v2234
    %v2368 = vpack.c.bf16 %v674, %v673
    %v2369 = vpack.c.bf16 %v2301, %v2300
    %v2370 = vpack.c.bf16 %v2237, %v2236
    %v2371 = vpack.c.bf16 %v676, %v675
    %v2372 = vpack.c.bf16 %v2303, %v2302
    %v2373 = vpack.c.bf16 %v2239, %v2238
    %v2374 = vpack.c.bf16 %v678, %v677
    %v2375 = vpack.c.bf16 %v2305, %v2304
    %v2376 = vpack.c.bf16 %v2241, %v2240
    %v2377 = vpack.c.bf16 %v680, %v679
    %v2378 = vpack.c.bf16 %v2307, %v2306
    %v2379 = vpack.c.bf16 %v2243, %v2242
    %v2380 = vpack.c.bf16 %v682, %v681
    %v2381 = vpack.c.bf16 %v2309, %v2308
    %v2382 = vpack.c.bf16 %v2245, %v2244
    %v2383 = vpack.c.bf16 %v684, %v683
    %v2384 = vpack.c.bf16 %v2311, %v2310
    %v2385 = vpack.c.bf16 %v2247, %v2246
    %v2386 = vpack.c.bf16 %v686, %v685
    %v2387 = vpack.c.bf16 %v2313, %v2312
    %v2388 = vpack.c.bf16 %v2249, %v2248
    %v2389 = vpack.c.bf16 %v688, %v687
    %v2390 = vpack.c.bf16 %v2315, %v2314
    %v2391 = vpack.c.bf16 %v2251, %v2250
    %v2392 = vpack.c.bf16 %v690, %v689
    %v2393 = vpack.c.bf16 %v2317, %v2316
    %v2394 = vpack.c.bf16 %v2253, %v2252
    %v2395 = vpack.c.bf16 %v692, %v691
    %v2396 = vpack.c.bf16 %v2319, %v2318
    %v2397 = vpack.c.bf16 %v2255, %v2254
    %v2398 = vpack.c.bf16 %v694, %v693
    %v2399 = vpack.c.bf16 %v2321, %v2320
    %v2400 = vpack.c.bf16 %v2257, %v2256
    %v2401 = vpack.c.bf16 %v696, %v695
    %v2402 = vpack.c.bf16 %v2323, %v2322
    %v2403 = vpack.c.bf16 %v2259, %v2258
    %v2404 = vpack.c.bf16 %v698, %v697
    %v2405 = vpack.c.bf16 %v2325, %v2324
    %v2406 = vpack.c.bf16 %v2261, %v2260
    %v2407 = vpack.c.bf16 %v700, %v699
    %v2408 = vpack.c.bf16 %v2327, %v2326
    %v2409 = vpack.c.bf16 %v2263, %v2262
    %v2410 = vpack.c.bf16 %v702, %v701
    %v2411 = vpack.c.bf16 %v2329, %v2328
    %v2412 = vpack.c.bf16 %v2265, %v2264
    %v2413 = vpack.c.bf16 %v704, %v703
    %v2414 = vpack.c.bf16 %v2331, %v2330
    %v2415 = vpack.c.bf16 %v2267, %v2266
    %v2416 = vpack.c.bf16 %v706, %v705
    %v2417 = vpack.c.bf16 %v2333, %v2332
    %v2418 = vpack.c.bf16 %v2269, %v2268
    %v2419 = vpack.c.bf16 %v708, %v707
    %v2420 = vpack.c.bf16 %v2335, %v2334
    %v2421 = vpack.c.bf16 %v2271, %v2270
    %v2422 = vpack.c.bf16 %v710, %v709
    %v2423 = vpack.c.bf16 %v2337, %v2336
    %v2424 = vpack.c.bf16 %v2273, %v2272
    %v2425 = vpack.c.bf16 %v712, %v711
    %v2426 = vpack.c.bf16 %v2339, %v2338
    %v2427 = vpack.c.bf16 %v2275, %v2274
    %v2428 = vpack.c.bf16 %v714, %v713
    %v2429 = vpack.c.bf16 %v2341, %v2340
    %v2430 = vpack.c.bf16 %v2277, %v2276
    %v2431 = vpack.c.bf16 %v716, %v715
    %v2432 = vpack.c.bf16 %v2343, %v2342
    %v2433 = vpack.c.bf16 %v2279, %v2278
    %v2434 = vpack.c.bf16 %v718, %v717
    %v2435 = vpack.c.bf16 %v2345, %v2344
    %v2436 = vpack.c.bf16 %v2281, %v2280
    %v2437 = vpack.c.bf16 %v720, %v719
    %v2438 = vpack.c.bf16 %v2347, %v2346
    %v2439 = vpack.c.bf16 %v2283, %v2282
    %v2440 = vpack.c.bf16 %v722, %v721
    %v2441 = vpack.c.bf16 %v2349, %v2348
    %v2442 = vpack.c.bf16 %v2285, %v2284
    %v2443 = vpack.c.bf16 %v724, %v723
    %v2444 = vpack.c.bf16 %v2351, %v2350
    %v2445 = vpack.c.bf16 %v2287, %v2286
    %v2446 = vpack.c.bf16 %v726, %v725
    %v2447 = vpack.c.bf16 %v2353, %v2352
    %v2448 = vpack.c.bf16 %v2289, %v2288
    %v2449 = vpack.c.bf16 %v728, %v727
    %v2450 = vpack.c.bf16 %v2355, %v2354
    %v2451 = vpack.c.bf16 %v2291, %v2290
    %v2452 = vpack.c.bf16 %v730, %v729
    %v2453 = vpack.c.bf16 %v2357, %v2356
    %s2454 = scalar_lea.vmem [#allocation3], 192
    %v2455 = vld [vmem:[%s2454] sm:$0xf]
    %v2456 = vld [vmem:[%s2454 + $0x4] sm:$0xf]
    %v2457 = vld [vmem:[%s2454 + $0x8] sm:$0xf]
    %v2458 = vld [vmem:[%s2454 + $0xc] sm:$0xf]
    %v2459 = vld [vmem:[%s2454 + $0x10] sm:$0xf]
    %v2460 = vld [vmem:[%s2454 + $0x14] sm:$0xf]
    %v2461 = vld [vmem:[%s2454 + $0x18] sm:$0xf]
    %v2462 = vld [vmem:[%s2454 + $0x1c] sm:$0xf]
    %v2463 = vld [vmem:[%s2454 + $0x20] sm:$0xf]
    %v2464 = vld [vmem:[%s2454 + $0x24] sm:$0xf]
    %v2465 = vld [vmem:[%s2454 + $0x28] sm:$0xf]
    %v2466 = vld [vmem:[%s2454 + $0x2c] sm:$0xf]
    %v2467 = vld [vmem:[%s2454 + $0x30] sm:$0xf]
    %v2468 = vld [vmem:[%s2454 + $0x34] sm:$0xf]
    %v2469 = vld [vmem:[%s2454 + $0x38] sm:$0xf]
    %v2470 = vld [vmem:[%s2454 + $0x3c] sm:$0xf]
    %v2471 = vld [vmem:[%s2454 + $0x40] sm:$0xf]
    %v2472 = vld [vmem:[%s2454 + $0x44] sm:$0xf]
    %v2473 = vld [vmem:[%s2454 + $0x48] sm:$0xf]
    %v2474 = vld [vmem:[%s2454 + $0x4c] sm:$0xf]
    %v2475 = vld [vmem:[%s2454 + $0x50] sm:$0xf]
    %v2476 = vld [vmem:[%s2454 + $0x54] sm:$0xf]
    %v2477 = vld [vmem:[%s2454 + $0x58] sm:$0xf]
    %v2478 = vld [vmem:[%s2454 + $0x5c] sm:$0xf]
    %v2479 = vld [vmem:[%s2454 + $0x60] sm:$0xf]
    %v2480 = vld [vmem:[%s2454 + $0x64] sm:$0xf]
    %v2481 = vld [vmem:[%s2454 + $0x68] sm:$0xf]
    %v2482 = vld [vmem:[%s2454 + $0x6c] sm:$0xf]
    %v2483 = vld [vmem:[%s2454 + $0x70] sm:$0xf]
    %v2484 = vld [vmem:[%s2454 + $0x74] sm:$0xf]
    %v2485 = vld [vmem:[%s2454 + $0x78] sm:$0xf]
    %v2486 = vld [vmem:[%s2454 + $0x7c] sm:$0xf]
    %v2487 = vld [vmem:[%s2454 + $0x80] sm:$0xf]
    %v2488 = vld [vmem:[%s2454 + $0x84] sm:$0xf]
    %v2489 = vld [vmem:[%s2454 + $0x88] sm:$0xf]
    %v2490 = vld [vmem:[%s2454 + $0x8c] sm:$0xf]
    %v2491 = vld [vmem:[%s2454 + $0x90] sm:$0xf]
    %v2492 = vld [vmem:[%s2454 + $0x94] sm:$0xf]
    %v2493 = vld [vmem:[%s2454 + $0x98] sm:$0xf]
    %v2494 = vld [vmem:[%s2454 + $0x9c] sm:$0xf]
    %v2495 = vld [vmem:[%s2454 + $0xa0] sm:$0xf]
    %v2496 = vld [vmem:[%s2454 + $0xa4] sm:$0xf]
    %v2497 = vld [vmem:[%s2454 + $0xa8] sm:$0xf]
    %v2498 = vld [vmem:[%s2454 + $0xac] sm:$0xf]
    %v2499 = vld [vmem:[%s2454 + $0xb0] sm:$0xf]
    %v2500 = vld [vmem:[%s2454 + $0xb4] sm:$0xf]
    %v2501 = vld [vmem:[%s2454 + $0xb8] sm:$0xf]
    %v2502 = vld [vmem:[%s2454 + $0xbc] sm:$0xf]
    %v2551 = vunpack.c.l.b16 %v2455
    %v2552 = vunpack.c.l.b16 %v2456
    %v2553 = vunpack.c.l.b16 %v2457
    %v2554 = vunpack.c.l.b16 %v2458
    %v2555 = vunpack.c.l.b16 %v2459
    %v2556 = vunpack.c.l.b16 %v2460
    %v2557 = vunpack.c.l.b16 %v2461
    %v2558 = vunpack.c.l.b16 %v2462
    %v2559 = vunpack.c.l.b16 %v2463
    %v2560 = vunpack.c.l.b16 %v2464
    %v2561 = vunpack.c.l.b16 %v2465
    %v2562 = vunpack.c.l.b16 %v2466
    %v2563 = vunpack.c.l.b16 %v2467
    %v2564 = vunpack.c.l.b16 %v2468
    %v2565 = vunpack.c.l.b16 %v2469
    %v2566 = vunpack.c.l.b16 %v2470
    %v2567 = vunpack.c.l.b16 %v2471
    %v2568 = vunpack.c.l.b16 %v2472
    %v2569 = vunpack.c.l.b16 %v2473
    %v2570 = vunpack.c.l.b16 %v2474
    %v2571 = vunpack.c.l.b16 %v2475
    %v2572 = vunpack.c.l.b16 %v2476
    %v2573 = vunpack.c.l.b16 %v2477
    %v2574 = vunpack.c.l.b16 %v2478
    %v2575 = vunpack.c.l.b16 %v2479
    %v2576 = vunpack.c.l.b16 %v2480
    %v2577 = vunpack.c.l.b16 %v2481
    %v2578 = vunpack.c.l.b16 %v2482
    %v2579 = vunpack.c.l.b16 %v2483
    %v2580 = vunpack.c.l.b16 %v2484
    %v2581 = vunpack.c.l.b16 %v2485
    %v2582 = vunpack.c.l.b16 %v2486
    %v2583 = vunpack.c.l.b16 %v2487
    %v2584 = vunpack.c.l.b16 %v2488
    %v2585 = vunpack.c.l.b16 %v2489
    %v2586 = vunpack.c.l.b16 %v2490
    %v2587 = vunpack.c.l.b16 %v2491
    %v2588 = vunpack.c.l.b16 %v2492
    %v2589 = vunpack.c.l.b16 %v2493
    %v2590 = vunpack.c.l.b16 %v2494
    %v2591 = vunpack.c.l.b16 %v2495
    %v2592 = vunpack.c.l.b16 %v2496
    %v2593 = vunpack.c.l.b16 %v2497
    %v2594 = vunpack.c.l.b16 %v2498
    %v2595 = vunpack.c.l.b16 %v2499
    %v2596 = vunpack.c.l.b16 %v2500
    %v2597 = vunpack.c.l.b16 %v2501
    %v2598 = vunpack.c.l.b16 %v2502
    %v2599 = vpack.c.b16 %v2552, %v2551
    %v2600 = vpack.c.b16 %v2554, %v2553
    %v2601 = vpack.c.b16 %v2556, %v2555
    %v2602 = vpack.c.b16 %v2558, %v2557
    %v2603 = vpack.c.b16 %v2560, %v2559
    %v2604 = vpack.c.b16 %v2562, %v2561
    %v2605 = vpack.c.b16 %v2564, %v2563
    %v2606 = vpack.c.b16 %v2566, %v2565
    %v2607 = vpack.c.b16 %v2568, %v2567
    %v2608 = vpack.c.b16 %v2570, %v2569
    %v2609 = vpack.c.b16 %v2572, %v2571
    %v2610 = vpack.c.b16 %v2574, %v2573
    %v2611 = vpack.c.b16 %v2576, %v2575
    %v2612 = vpack.c.b16 %v2578, %v2577
    %v2613 = vpack.c.b16 %v2580, %v2579
    %v2614 = vpack.c.b16 %v2582, %v2581
    %v2615 = vpack.c.b16 %v2584, %v2583
    %v2616 = vpack.c.b16 %v2586, %v2585
    %v2617 = vpack.c.b16 %v2588, %v2587
    %v2618 = vpack.c.b16 %v2590, %v2589
    %v2619 = vpack.c.b16 %v2592, %v2591
    %v2620 = vpack.c.b16 %v2594, %v2593
    %v2621 = vpack.c.b16 %v2596, %v2595
    %v2622 = vpack.c.b16 %v2598, %v2597
    %2647 = vmatprep.subr.bf16.mxu0 0
    %2648 = vmatpush1.bf16.msra.mxu0 %v2599
    %2649 = vmatprep.subr.bf16.mxu0 0
    %2650 = vmatpush1.bf16.msra.mxu0 %v2600
    %2651 = vmatprep.subr.bf16.mxu0 0
    %2652 = vmatpush1.bf16.msra.mxu0 %v2601
    %2653 = vmatprep.subr.bf16.mxu0 0
    %2654 = vmatpush1.bf16.msra.mxu0 %v2602
    %2655 = vmatprep.subr.bf16.mxu0 0
    %2656 = vmatpush1.bf16.msra.mxu0 %v2603
    %2657 = vmatprep.subr.bf16.mxu0 0
    %2658 = vmatpush1.bf16.msra.mxu0 %v2604
    %2659 = vmatprep.subr.bf16.mxu0 0
    %2660 = vmatpush1.bf16.msra.mxu0 %v2605
    %2661 = vmatprep.subr.bf16.mxu0 0
    %2662 = vmatpush1.bf16.msra.mxu0 %v2606
    %2663 = vmatprep.subr.bf16.mxu0 0
    %2664 = vmatpush1.bf16.msra.mxu0 %v2607
    %2665 = vmatprep.subr.bf16.mxu0 0
    %2666 = vmatpush1.bf16.msra.mxu0 %v2608
    %2667 = vmatprep.subr.bf16.mxu0 0
    %2668 = vmatpush1.bf16.msra.mxu0 %v2609
    %2669 = vmatprep.subr.bf16.mxu0 0
    %2670 = vmatpush1.bf16.msra.mxu0 %v2610
    %2671 = vmatprep.subr.bf16.mxu0 0
    %2672 = vmatpush1.bf16.msra.mxu0 %v2611
    %2673 = vmatprep.subr.bf16.mxu0 0
    %2674 = vmatpush1.bf16.msra.mxu0 %v2612
    %2675 = vmatprep.subr.bf16.mxu0 0
    %2676 = vmatpush1.bf16.msra.mxu0 %v2613
    %2677 = vmatprep.subr.bf16.mxu0 0
    %2678 = vmatpush1.bf16.msra.mxu0 %v2614
    %2679 = vmatprep.mubr.bf16.mxu0 %v2359
    %2680 = vmatmul.mubr.bf16.gmra.mrb[0].mxu0 %v2358
    %v2681 = vpop.f32.mrb[0].mxu0
    %v2682 = vadd.f32 0.0, %v2681
    %v2683 = vpop.f32.mrb[0].mxu0
    %v2684 = vpop.f32.mrb[0].mxu0
    %v2685 = vadd.f32 0.0, %v2684
    %v2686 = vpop.f32.mrb[0].mxu0
    %2687 = vmatprep.mubr.bf16.mxu0 %v2362
    %2688 = vmatmul.mubr.bf16.gmra.mrb[0].mxu0 %v2361
    %v2689 = vpop.f32.mrb[0].mxu0
    %v2690 = vadd.f32 0.0, %v2689
    %v2691 = vpop.f32.mrb[0].mxu0
    %v2692 = vpop.f32.mrb[0].mxu0
    %v2693 = vadd.f32 0.0, %v2692
    %v2694 = vpop.f32.mrb[0].mxu0
    %2695 = vmatprep.mubr.bf16.mxu0 %v2365
    %2696 = vmatmul.mubr.bf16.gmra.mrb[0].mxu0 %v2364
    %v2697 = vpop.f32.mrb[0].mxu0
    %v2698 = vadd.f32 0.0, %v2697
    %v2699 = vpop.f32.mrb[0].mxu0
    %v2700 = vpop.f32.mrb[0].mxu0
    %v2701 = vadd.f32 0.0, %v2700
    %v2702 = vpop.f32.mrb[0].mxu0
    %2703 = vmatprep.mubr.bf16.mxu0 %v2368
    %2704 = vmatmul.mubr.bf16.gmra.mrb[0].mxu0 %v2367
    %v2705 = vpop.f32.mrb[0].mxu0
    %v2706 = vadd.f32 0.0, %v2705
    %v2707 = vpop.f32.mrb[0].mxu0
    %v2708 = vpop.f32.mrb[0].mxu0
    %v2709 = vadd.f32 0.0, %v2708
    %v2710 = vpop.f32.mrb[0].mxu0
    %2711 = vmatprep.mubr.bf16.mxu0 %v2371
    %2712 = vmatmul.mubr.bf16.gmra.mrb[0].mxu0 %v2370
    %v2713 = vpop.f32.mrb[0].mxu0
    %v2714 = vadd.f32 0.0, %v2713
    %v2715 = vpop.f32.mrb[0].mxu0
    %v2716 = vpop.f32.mrb[0].mxu0
    %v2717 = vadd.f32 0.0, %v2716
    %v2718 = vpop.f32.mrb[0].mxu0
    %2719 = vmatprep.mubr.bf16.mxu0 %v2374
    %2720 = vmatmul.mubr.bf16.gmra.mrb[0].mxu0 %v2373
    %v2721 = vpop.f32.mrb[0].mxu0
    %v2722 = vadd.f32 0.0, %v2721
    %v2723 = vpop.f32.mrb[0].mxu0
    %v2724 = vpop.f32.mrb[0].mxu0
    %v2725 = vadd.f32 0.0, %v2724
    %v2726 = vpop.f32.mrb[0].mxu0
    %2727 = vmatprep.mubr.bf16.mxu0 %v2377
    %2728 = vmatmul.mubr.bf16.gmra.mrb[0].mxu0 %v2376
    %v2729 = vpop.f32.mrb[0].mxu0
    %v2730 = vadd.f32 0.0, %v2729
    %v2731 = vpop.f32.mrb[0].mxu0
    %v2732 = vpop.f32.mrb[0].mxu0
    %v2733 = vadd.f32 0.0, %v2732
    %v2734 = vpop.f32.mrb[0].mxu0
    %2735 = vmatprep.mubr.bf16.mxu0 %v2380
    %2736 = vmatmul.mubr.bf16.gmra.mrb[0].mxu0 %v2379
    %v2737 = vpop.f32.mrb[0].mxu0
    %v2738 = vadd.f32 0.0, %v2737
    %v2739 = vpop.f32.mrb[0].mxu0
    %v2740 = vpop.f32.mrb[0].mxu0
    %v2741 = vadd.f32 0.0, %v2740
    %v2742 = vpop.f32.mrb[0].mxu0
    %2743 = vmatprep.mubr.bf16.mxu0 %v2383
    %2744 = vmatmul.mubr.bf16.gmra.mrb[0].mxu0 %v2382
    %v2745 = vpop.f32.mrb[0].mxu0
    %v2746 = vadd.f32 0.0, %v2745
    %v2747 = vpop.f32.mrb[0].mxu0
    %v2748 = vpop.f32.mrb[0].mxu0
    %v2749 = vadd.f32 0.0, %v2748
    %v2750 = vpop.f32.mrb[0].mxu0
    %2751 = vmatprep.mubr.bf16.mxu0 %v2386
    %2752 = vmatmul.mubr.bf16.gmra.mrb[0].mxu0 %v2385
    %v2753 = vpop.f32.mrb[0].mxu0
    %v2754 = vadd.f32 0.0, %v2753
    %v2755 = vpop.f32.mrb[0].mxu0
    %v2756 = vpop.f32.mrb[0].mxu0
    %v2757 = vadd.f32 0.0, %v2756
    %v2758 = vpop.f32.mrb[0].mxu0
    %2759 = vmatprep.mubr.bf16.mxu0 %v2389
    %2760 = vmatmul.mubr.bf16.gmra.mrb[0].mxu0 %v2388
    %v2761 = vpop.f32.mrb[0].mxu0
    %v2762 = vadd.f32 0.0, %v2761
    %v2763 = vpop.f32.mrb[0].mxu0
    %v2764 = vpop.f32.mrb[0].mxu0
    %v2765 = vadd.f32 0.0, %v2764
    %v2766 = vpop.f32.mrb[0].mxu0
    %2767 = vmatprep.mubr.bf16.mxu0 %v2392
    %2768 = vmatmul.mubr.bf16.gmra.mrb[0].mxu0 %v2391
    %v2769 = vpop.f32.mrb[0].mxu0
    %v2770 = vadd.f32 0.0, %v2769
    %v2771 = vpop.f32.mrb[0].mxu0
    %v2772 = vpop.f32.mrb[0].mxu0
    %v2773 = vadd.f32 0.0, %v2772
    %v2774 = vpop.f32.mrb[0].mxu0
    %2775 = vmatprep.mubr.bf16.mxu0 %v2395
    %2776 = vmatmul.mubr.bf16.gmra.mrb[0].mxu0 %v2394
    %v2777 = vpop.f32.mrb[0].mxu0
    %v2778 = vadd.f32 0.0, %v2777
    %v2779 = vpop.f32.mrb[0].mxu0
    %v2780 = vpop.f32.mrb[0].mxu0
    %v2781 = vadd.f32 0.0, %v2780
    %v2782 = vpop.f32.mrb[0].mxu0
    %2783 = vmatprep.mubr.bf16.mxu0 %v2398
    %2784 = vmatmul.mubr.bf16.gmra.mrb[0].mxu0 %v2397
    %v2785 = vpop.f32.mrb[0].mxu0
    %v2786 = vadd.f32 0.0, %v2785
    %v2787 = vpop.f32.mrb[0].mxu0
    %v2788 = vpop.f32.mrb[0].mxu0
    %v2789 = vadd.f32 0.0, %v2788
    %v2790 = vpop.f32.mrb[0].mxu0
    %2791 = vmatprep.mubr.bf16.mxu0 %v2401
    %2792 = vmatmul.mubr.bf16.gmra.mrb[0].mxu0 %v2400
    %v2793 = vpop.f32.mrb[0].mxu0
    %v2794 = vadd.f32 0.0, %v2793
    %v2795 = vpop.f32.mrb[0].mxu0
    %v2796 = vpop.f32.mrb[0].mxu0
    %v2797 = vadd.f32 0.0, %v2796
    %v2798 = vpop.f32.mrb[0].mxu0
    %2799 = vmatprep.mubr.bf16.mxu0 %v2404
    %2800 = vmatmul.mubr.bf16.gmra.mrb[0].mxu0 %v2403
    %v2801 = vpop.f32.mrb[0].mxu0
    %v2802 = vadd.f32 0.0, %v2801
    %v2803 = vpop.f32.mrb[0].mxu0
    %v2804 = vpop.f32.mrb[0].mxu0
    %v2805 = vadd.f32 0.0, %v2804
    %v2806 = vpop.f32.mrb[0].mxu0
    %2807 = vmatprep.mubr.bf16.mxu0 %v2407
    %2808 = vmatmul.mubr.bf16.gmra.mrb[0].mxu0 %v2406
    %v2809 = vpop.f32.mrb[0].mxu0
    %v2810 = vadd.f32 0.0, %v2809
    %v2811 = vpop.f32.mrb[0].mxu0
    %v2812 = vpop.f32.mrb[0].mxu0
    %v2813 = vadd.f32 0.0, %v2812
    %v2814 = vpop.f32.mrb[0].mxu0
    %2815 = vmatprep.mubr.bf16.mxu0 %v2410
    %2816 = vmatmul.mubr.bf16.gmra.mrb[0].mxu0 %v2409
    %v2817 = vpop.f32.mrb[0].mxu0
    %v2818 = vadd.f32 0.0, %v2817
    %v2819 = vpop.f32.mrb[0].mxu0
    %v2820 = vpop.f32.mrb[0].mxu0
    %v2821 = vadd.f32 0.0, %v2820
    %v2822 = vpop.f32.mrb[0].mxu0
    %2823 = vmatprep.mubr.bf16.mxu0 %v2413
    %2824 = vmatmul.mubr.bf16.gmra.mrb[0].mxu0 %v2412
    %v2825 = vpop.f32.mrb[0].mxu0
    %v2826 = vadd.f32 0.0, %v2825
    %v2827 = vpop.f32.mrb[0].mxu0
    %v2828 = vpop.f32.mrb[0].mxu0
    %v2829 = vadd.f32 0.0, %v2828
    %v2830 = vpop.f32.mrb[0].mxu0
    %2831 = vmatprep.mubr.bf16.mxu0 %v2416
    %2832 = vmatmul.mubr.bf16.gmra.mrb[0].mxu0 %v2415
    %v2833 = vpop.f32.mrb[0].mxu0
    %v2834 = vadd.f32 0.0, %v2833
    %v2835 = vpop.f32.mrb[0].mxu0
    %v2836 = vpop.f32.mrb[0].mxu0
    %v2837 = vadd.f32 0.0, %v2836
    %v2838 = vpop.f32.mrb[0].mxu0
    %2839 = vmatprep.mubr.bf16.mxu0 %v2419
    %2840 = vmatmul.mubr.bf16.gmra.mrb[0].mxu0 %v2418
    %v2841 = vpop.f32.mrb[0].mxu0
    %v2842 = vadd.f32 0.0, %v2841
    %v2843 = vpop.f32.mrb[0].mxu0
    %v2844 = vpop.f32.mrb[0].mxu0
    %v2845 = vadd.f32 0.0, %v2844
    %v2846 = vpop.f32.mrb[0].mxu0
    %2847 = vmatprep.mubr.bf16.mxu0 %v2422
    %2848 = vmatmul.mubr.bf16.gmra.mrb[0].mxu0 %v2421
    %v2849 = vpop.f32.mrb[0].mxu0
    %v2850 = vadd.f32 0.0, %v2849
    %v2851 = vpop.f32.mrb[0].mxu0
    %v2852 = vpop.f32.mrb[0].mxu0
    %v2853 = vadd.f32 0.0, %v2852
    %v2854 = vpop.f32.mrb[0].mxu0
    %2855 = vmatprep.mubr.bf16.mxu0 %v2425
    %2856 = vmatmul.mubr.bf16.gmra.mrb[0].mxu0 %v2424
    %v2857 = vpop.f32.mrb[0].mxu0
    %v2858 = vadd.f32 0.0, %v2857
    %v2859 = vpop.f32.mrb[0].mxu0
    %v2860 = vpop.f32.mrb[0].mxu0
    %v2861 = vadd.f32 0.0, %v2860
    %v2862 = vpop.f32.mrb[0].mxu0
    %2863 = vmatprep.mubr.bf16.mxu0 %v2428
    %2864 = vmatmul.mubr.bf16.gmra.mrb[0].mxu0 %v2427
    %v2865 = vpop.f32.mrb[0].mxu0
    %v2866 = vadd.f32 0.0, %v2865
    %v2867 = vpop.f32.mrb[0].mxu0
    %v2868 = vpop.f32.mrb[0].mxu0
    %v2869 = vadd.f32 0.0, %v2868
    %v2870 = vpop.f32.mrb[0].mxu0
    %2871 = vmatprep.mubr.bf16.mxu0 %v2431
    %2872 = vmatmul.mubr.bf16.gmra.mrb[0].mxu0 %v2430
    %v2873 = vpop.f32.mrb[0].mxu0
    %v2874 = vadd.f32 0.0, %v2873
    %v2875 = vpop.f32.mrb[0].mxu0
    %v2876 = vpop.f32.mrb[0].mxu0
    %v2877 = vadd.f32 0.0, %v2876
    %v2878 = vpop.f32.mrb[0].mxu0
    %2879 = vmatprep.mubr.bf16.mxu0 %v2434
    %2880 = vmatmul.mubr.bf16.gmra.mrb[0].mxu0 %v2433
    %v2881 = vpop.f32.mrb[0].mxu0
    %v2882 = vadd.f32 0.0, %v2881
    %v2883 = vpop.f32.mrb[0].mxu0
    %v2884 = vpop.f32.mrb[0].mxu0
    %v2885 = vadd.f32 0.0, %v2884
    %v2886 = vpop.f32.mrb[0].mxu0
    %2887 = vmatprep.mubr.bf16.mxu0 %v2437
    %2888 = vmatmul.mubr.bf16.gmra.mrb[0].mxu0 %v2436
    %v2889 = vpop.f32.mrb[0].mxu0
    %v2890 = vadd.f32 0.0, %v2889
    %v2891 = vpop.f32.mrb[0].mxu0
    %v2892 = vpop.f32.mrb[0].mxu0
    %v2893 = vadd.f32 0.0, %v2892
    %v2894 = vpop.f32.mrb[0].mxu0
    %2895 = vmatprep.mubr.bf16.mxu0 %v2440
    %2896 = vmatmul.mubr.bf16.gmra.mrb[0].mxu0 %v2439
    %v2897 = vpop.f32.mrb[0].mxu0
    %v2898 = vadd.f32 0.0, %v2897
    %v2899 = vpop.f32.mrb[0].mxu0
    %v2900 = vpop.f32.mrb[0].mxu0
    %v2901 = vadd.f32 0.0, %v2900
    %v2902 = vpop.f32.mrb[0].mxu0
    %2903 = vmatprep.mubr.bf16.mxu0 %v2443
    %2904 = vmatmul.mubr.bf16.gmra.mrb[0].mxu0 %v2442
    %v2905 = vpop.f32.mrb[0].mxu0
    %v2906 = vadd.f32 0.0, %v2905
    %v2907 = vpop.f32.mrb[0].mxu0
    %v2908 = vpop.f32.mrb[0].mxu0
    %v2909 = vadd.f32 0.0, %v2908
    %v2910 = vpop.f32.mrb[0].mxu0
    %2911 = vmatprep.mubr.bf16.mxu0 %v2446
    %2912 = vmatmul.mubr.bf16.gmra.mrb[0].mxu0 %v2445
    %v2913 = vpop.f32.mrb[0].mxu0
    %v2914 = vadd.f32 0.0, %v2913
    %v2915 = vpop.f32.mrb[0].mxu0
    %v2916 = vpop.f32.mrb[0].mxu0
    %v2917 = vadd.f32 0.0, %v2916
    %v2918 = vpop.f32.mrb[0].mxu0
    %2919 = vmatprep.mubr.bf16.mxu0 %v2449
    %2920 = vmatmul.mubr.bf16.gmra.mrb[0].mxu0 %v2448
    %v2921 = vpop.f32.mrb[0].mxu0
    %v2922 = vadd.f32 0.0, %v2921
    %v2923 = vpop.f32.mrb[0].mxu0
    %v2924 = vpop.f32.mrb[0].mxu0
    %v2925 = vadd.f32 0.0, %v2924
    %v2926 = vpop.f32.mrb[0].mxu0
    %2927 = vmatprep.mubr.bf16.mxu0 %v2452
    %2928 = vmatmul.mubr.bf16.gmra.mrb[0].mxu0 %v2451
    %v2929 = vpop.f32.mrb[0].mxu0
    %v2930 = vadd.f32 0.0, %v2929
    %v2931 = vpop.f32.mrb[0].mxu0
    %v2932 = vpop.f32.mrb[0].mxu0
    %v2933 = vadd.f32 0.0, %v2932
    %v2934 = vpop.f32.mrb[0].mxu0
    %2935 = vdwg.mxu0
    %2936 = vmatprep.subr.bf16.mxu0 0
    %2937 = vmatpush1.bf16.msra.mxu0 %v2615
    %2938 = vmatprep.subr.bf16.mxu0 0
    %2939 = vmatpush1.bf16.msra.mxu0 %v2616
    %2940 = vmatprep.subr.bf16.mxu0 0
    %2941 = vmatpush1.bf16.msra.mxu0 %v2617
    %2942 = vmatprep.subr.bf16.mxu0 0
    %2943 = vmatpush1.bf16.msra.mxu0 %v2618
    %2944 = vmatprep.subr.bf16.mxu0 0
    %2945 = vmatpush1.bf16.msra.mxu0 %v2619
    %2946 = vmatprep.subr.bf16.mxu0 0
    %2947 = vmatpush1.bf16.msra.mxu0 %v2620
    %2948 = vmatprep.subr.bf16.mxu0 0
    %2949 = vmatpush1.bf16.msra.mxu0 %v2621
    %2950 = vmatprep.subr.bf16.mxu0 0
    %2951 = vmatpush1.bf16.msra.mxu0 %v2622
    %2952 = vmatprep.subr.bf16.mxu0 0
    %2953 = vmatpush1.bf16.msra.mxu0 0
    %2954 = vmatprep.subr.bf16.mxu0 0
    %2955 = vmatpush1.bf16.msra.mxu0 0
    %2956 = vmatprep.subr.bf16.mxu0 0
    %2957 = vmatpush1.bf16.msra.mxu0 0
    %2958 = vmatprep.subr.bf16.mxu0 0
    %2959 = vmatpush1.bf16.msra.mxu0 0
    %2960 = vmatprep.subr.bf16.mxu0 0
    %2961 = vmatpush1.bf16.msra.mxu0 0
    %2962 = vmatprep.subr.bf16.mxu0 0
    %2963 = vmatpush1.bf16.msra.mxu0 0
    %2964 = vmatprep.subr.bf16.mxu0 0
    %2965 = vmatpush1.bf16.msra.mxu0 0
    %2966 = vmatprep.subr.bf16.mxu0 0
    %2967 = vmatpush1.bf16.msra.mxu0 0
    %2968 = vmatprep.mubr.bf16.mxu0 0
    %2969 = vmatmul.mubr.bf16.gmra.mrb[0].mxu0 %v2360
    %v2970 = vpop.f32.mrb[0].mxu0
    %v2971 = vadd.f32 %v2682, %v2970
    %v2972 = vpop.f32.mrb[0].mxu0
    %v2973 = vpop.f32.mrb[0].mxu0
    %v2974 = vadd.f32 %v2685, %v2973
    %v2975 = vpop.f32.mrb[0].mxu0
    %2976 = vmatprep.mubr.bf16.mxu0 0
    %2977 = vmatmul.mubr.bf16.gmra.mrb[0].mxu0 %v2363
    %v2978 = vpop.f32.mrb[0].mxu0
    %v2979 = vadd.f32 %v2690, %v2978
    %v2980 = vpop.f32.mrb[0].mxu0
    %v2981 = vpop.f32.mrb[0].mxu0
    %v2982 = vadd.f32 %v2693, %v2981
    %v2983 = vpop.f32.mrb[0].mxu0
    %2984 = vmatprep.mubr.bf16.mxu0 0
    %2985 = vmatmul.mubr.bf16.gmra.mrb[0].mxu0 %v2366
    %v2986 = vpop.f32.mrb[0].mxu0
    %v2987 = vadd.f32 %v2698, %v2986
    %v2988 = vpop.f32.mrb[0].mxu0
    %v2989 = vpop.f32.mrb[0].mxu0
    %v2990 = vadd.f32 %v2701, %v2989
    %v2991 = vpop.f32.mrb[0].mxu0
    %2992 = vmatprep.mubr.bf16.mxu0 0
    %2993 = vmatmul.mubr.bf16.gmra.mrb[0].mxu0 %v2369
    %v2994 = vpop.f32.mrb[0].mxu0
    %v2995 = vadd.f32 %v2706, %v2994
    %v2996 = vpop.f32.mrb[0].mxu0
    %v2997 = vpop.f32.mrb[0].mxu0
    %v2998 = vadd.f32 %v2709, %v2997
    %v2999 = vpop.f32.mrb[0].mxu0
    %3000 = vmatprep.mubr.bf16.mxu0 0
    %3001 = vmatmul.mubr.bf16.gmra.mrb[0].mxu0 %v2372
    %v3002 = vpop.f32.mrb[0].mxu0
    %v3003 = vadd.f32 %v2714, %v3002
    %v3004 = vpop.f32.mrb[0].mxu0
    %v3005 = vpop.f32.mrb[0].mxu0
    %v3006 = vadd.f32 %v2717, %v3005
    %v3007 = vpop.f32.mrb[0].mxu0
    %3008 = vmatprep.mubr.bf16.mxu0 0
    %3009 = vmatmul.mubr.bf16.gmra.mrb[0].mxu0 %v2375
    %v3010 = vpop.f32.mrb[0].mxu0
    %v3011 = vadd.f32 %v2722, %v3010
    %v3012 = vpop.f32.mrb[0].mxu0
    %v3013 = vpop.f32.mrb[0].mxu0
    %v3014 = vadd.f32 %v2725, %v3013
    %v3015 = vpop.f32.mrb[0].mxu0
    %3016 = vmatprep.mubr.bf16.mxu0 0
    %3017 = vmatmul.mubr.bf16.gmra.mrb[0].mxu0 %v2378
    %v3018 = vpop.f32.mrb[0].mxu0
    %v3019 = vadd.f32 %v2730, %v3018
    %v3020 = vpop.f32.mrb[0].mxu0
    %v3021 = vpop.f32.mrb[0].mxu0
    %v3022 = vadd.f32 %v2733, %v3021
    %v3023 = vpop.f32.mrb[0].mxu0
    %3024 = vmatprep.mubr.bf16.mxu0 0
    %3025 = vmatmul.mubr.bf16.gmra.mrb[0].mxu0 %v2381
    %v3026 = vpop.f32.mrb[0].mxu0
    %v3027 = vadd.f32 %v2738, %v3026
    %v3028 = vpop.f32.mrb[0].mxu0
    %v3029 = vpop.f32.mrb[0].mxu0
    %v3030 = vadd.f32 %v2741, %v3029
    %v3031 = vpop.f32.mrb[0].mxu0
    %3032 = vmatprep.mubr.bf16.mxu0 0
    %3033 = vmatmul.mubr.bf16.gmra.mrb[0].mxu0 %v2384
    %v3034 = vpop.f32.mrb[0].mxu0
    %v3035 = vadd.f32 %v2746, %v3034
    %v3036 = vpop.f32.mrb[0].mxu0
    %v3037 = vpop.f32.mrb[0].mxu0
    %v3038 = vadd.f32 %v2749, %v3037
    %v3039 = vpop.f32.mrb[0].mxu0
    %3040 = vmatprep.mubr.bf16.mxu0 0
    %3041 = vmatmul.mubr.bf16.gmra.mrb[0].mxu0 %v2387
    %v3042 = vpop.f32.mrb[0].mxu0
    %v3043 = vadd.f32 %v2754, %v3042
    %v3044 = vpop.f32.mrb[0].mxu0
    %v3045 = vpop.f32.mrb[0].mxu0
    %v3046 = vadd.f32 %v2757, %v3045
    %v3047 = vpop.f32.mrb[0].mxu0
    %3048 = vmatprep.mubr.bf16.mxu0 0
    %3049 = vmatmul.mubr.bf16.gmra.mrb[0].mxu0 %v2390
    %v3050 = vpop.f32.mrb[0].mxu0
    %v3051 = vadd.f32 %v2762, %v3050
    %v3052 = vpop.f32.mrb[0].mxu0
    %v3053 = vpop.f32.mrb[0].mxu0
    %v3054 = vadd.f32 %v2765, %v3053
    %v3055 = vpop.f32.mrb[0].mxu0
    %3056 = vmatprep.mubr.bf16.mxu0 0
    %3057 = vmatmul.mubr.bf16.gmra.mrb[0].mxu0 %v2393
    %v3058 = vpop.f32.mrb[0].mxu0
    %v3059 = vadd.f32 %v2770, %v3058
    %v3060 = vpop.f32.mrb[0].mxu0
    %v3061 = vpop.f32.mrb[0].mxu0
    %v3062 = vadd.f32 %v2773, %v3061
    %v3063 = vpop.f32.mrb[0].mxu0
    %3064 = vmatprep.mubr.bf16.mxu0 0
    %3065 = vmatmul.mubr.bf16.gmra.mrb[0].mxu0 %v2396
    %v3066 = vpop.f32.mrb[0].mxu0
    %v3067 = vadd.f32 %v2778, %v3066
    %v3068 = vpop.f32.mrb[0].mxu0
    %v3069 = vpop.f32.mrb[0].mxu0
    %v3070 = vadd.f32 %v2781, %v3069
    %v3071 = vpop.f32.mrb[0].mxu0
    %3072 = vmatprep.mubr.bf16.mxu0 0
    %3073 = vmatmul.mubr.bf16.gmra.mrb[0].mxu0 %v2399
    %v3074 = vpop.f32.mrb[0].mxu0
    %v3075 = vadd.f32 %v2786, %v3074
    %v3076 = vpop.f32.mrb[0].mxu0
    %v3077 = vpop.f32.mrb[0].mxu0
    %v3078 = vadd.f32 %v2789, %v3077
    %v3079 = vpop.f32.mrb[0].mxu0
    %3080 = vmatprep.mubr.bf16.mxu0 0
    %3081 = vmatmul.mubr.bf16.gmra.mrb[0].mxu0 %v2402
    %v3082 = vpop.f32.mrb[0].mxu0
    %v3083 = vadd.f32 %v2794, %v3082
    %v3084 = vpop.f32.mrb[0].mxu0
    %v3085 = vpop.f32.mrb[0].mxu0
    %v3086 = vadd.f32 %v2797, %v3085
    %v3087 = vpop.f32.mrb[0].mxu0
    %3088 = vmatprep.mubr.bf16.mxu0 0
    %3089 = vmatmul.mubr.bf16.gmra.mrb[0].mxu0 %v2405
    %v3090 = vpop.f32.mrb[0].mxu0
    %v3091 = vadd.f32 %v2802, %v3090
    %v3092 = vpop.f32.mrb[0].mxu0
    %v3093 = vpop.f32.mrb[0].mxu0
    %v3094 = vadd.f32 %v2805, %v3093
    %v3095 = vpop.f32.mrb[0].mxu0
    %3096 = vmatprep.mubr.bf16.mxu0 0
    %3097 = vmatmul.mubr.bf16.gmra.mrb[0].mxu0 %v2408
    %v3098 = vpop.f32.mrb[0].mxu0
    %v3099 = vadd.f32 %v2810, %v3098
    %v3100 = vpop.f32.mrb[0].mxu0
    %v3101 = vpop.f32.mrb[0].mxu0
    %v3102 = vadd.f32 %v2813, %v3101
    %v3103 = vpop.f32.mrb[0].mxu0
    %3104 = vmatprep.mubr.bf16.mxu0 0
    %3105 = vmatmul.mubr.bf16.gmra.mrb[0].mxu0 %v2411
    %v3106 = vpop.f32.mrb[0].mxu0
    %v3107 = vadd.f32 %v2818, %v3106
    %v3108 = vpop.f32.mrb[0].mxu0
    %v3109 = vpop.f32.mrb[0].mxu0
    %v3110 = vadd.f32 %v2821, %v3109
    %v3111 = vpop.f32.mrb[0].mxu0
    %3112 = vmatprep.mubr.bf16.mxu0 0
    %3113 = vmatmul.mubr.bf16.gmra.mrb[0].mxu0 %v2414
    %v3114 = vpop.f32.mrb[0].mxu0
    %v3115 = vadd.f32 %v2826, %v3114
    %v3116 = vpop.f32.mrb[0].mxu0
    %v3117 = vpop.f32.mrb[0].mxu0
    %v3118 = vadd.f32 %v2829, %v3117
    %v3119 = vpop.f32.mrb[0].mxu0
    %3120 = vmatprep.mubr.bf16.mxu0 0
    %3121 = vmatmul.mubr.bf16.gmra.mrb[0].mxu0 %v2417
    %v3122 = vpop.f32.mrb[0].mxu0
    %v3123 = vadd.f32 %v2834, %v3122
    %v3124 = vpop.f32.mrb[0].mxu0
    %v3125 = vpop.f32.mrb[0].mxu0
    %v3126 = vadd.f32 %v2837, %v3125
    %v3127 = vpop.f32.mrb[0].mxu0
    %3128 = vmatprep.mubr.bf16.mxu0 0
    %3129 = vmatmul.mubr.bf16.gmra.mrb[0].mxu0 %v2420
    %v3130 = vpop.f32.mrb[0].mxu0
    %v3131 = vadd.f32 %v2842, %v3130
    %v3132 = vpop.f32.mrb[0].mxu0
    %v3133 = vpop.f32.mrb[0].mxu0
    %v3134 = vadd.f32 %v2845, %v3133
    %v3135 = vpop.f32.mrb[0].mxu0
    %3136 = vmatprep.mubr.bf16.mxu0 0
    %3137 = vmatmul.mubr.bf16.gmra.mrb[0].mxu0 %v2423
    %v3138 = vpop.f32.mrb[0].mxu0
    %v3139 = vadd.f32 %v2850, %v3138
    %v3140 = vpop.f32.mrb[0].mxu0
    %v3141 = vpop.f32.mrb[0].mxu0
    %v3142 = vadd.f32 %v2853, %v3141
    %v3143 = vpop.f32.mrb[0].mxu0
    %3144 = vmatprep.mubr.bf16.mxu0 0
    %3145 = vmatmul.mubr.bf16.gmra.mrb[0].mxu0 %v2426
    %v3146 = vpop.f32.mrb[0].mxu0
    %v3147 = vadd.f32 %v2858, %v3146
    %v3148 = vpop.f32.mrb[0].mxu0
    %v3149 = vpop.f32.mrb[0].mxu0
    %v3150 = vadd.f32 %v2861, %v3149
    %v3151 = vpop.f32.mrb[0].mxu0
    %3152 = vmatprep.mubr.bf16.mxu0 0
    %3153 = vmatmul.mubr.bf16.gmra.mrb[0].mxu0 %v2429
    %v3154 = vpop.f32.mrb[0].mxu0
    %v3155 = vadd.f32 %v2866, %v3154
    %v3156 = vpop.f32.mrb[0].mxu0
    %v3157 = vpop.f32.mrb[0].mxu0
    %v3158 = vadd.f32 %v2869, %v3157
    %v3159 = vpop.f32.mrb[0].mxu0
    %3160 = vmatprep.mubr.bf16.mxu0 0
    %3161 = vmatmul.mubr.bf16.gmra.mrb[0].mxu0 %v2432
    %v3162 = vpop.f32.mrb[0].mxu0
    %v3163 = vadd.f32 %v2874, %v3162
    %v3164 = vpop.f32.mrb[0].mxu0
    %v3165 = vpop.f32.mrb[0].mxu0
    %v3166 = vadd.f32 %v2877, %v3165
    %v3167 = vpop.f32.mrb[0].mxu0
    %3168 = vmatprep.mubr.bf16.mxu0 0
    %3169 = vmatmul.mubr.bf16.gmra.mrb[0].mxu0 %v2435
    %v3170 = vpop.f32.mrb[0].mxu0
    %v3171 = vadd.f32 %v2882, %v3170
    %v3172 = vpop.f32.mrb[0].mxu0
    %v3173 = vpop.f32.mrb[0].mxu0
    %v3174 = vadd.f32 %v2885, %v3173
    %v3175 = vpop.f32.mrb[0].mxu0
    %3176 = vmatprep.mubr.bf16.mxu0 0
    %3177 = vmatmul.mubr.bf16.gmra.mrb[0].mxu0 %v2438
    %v3178 = vpop.f32.mrb[0].mxu0
    %v3179 = vadd.f32 %v2890, %v3178
    %v3180 = vpop.f32.mrb[0].mxu0
    %v3181 = vpop.f32.mrb[0].mxu0
    %v3182 = vadd.f32 %v2893, %v3181
    %v3183 = vpop.f32.mrb[0].mxu0
    %3184 = vmatprep.mubr.bf16.mxu0 0
    %3185 = vmatmul.mubr.bf16.gmra.mrb[0].mxu0 %v2441
    %v3186 = vpop.f32.mrb[0].mxu0
    %v3187 = vadd.f32 %v2898, %v3186
    %v3188 = vpop.f32.mrb[0].mxu0
    %v3189 = vpop.f32.mrb[0].mxu0
    %v3190 = vadd.f32 %v2901, %v3189
    %v3191 = vpop.f32.mrb[0].mxu0
    %3192 = vmatprep.mubr.bf16.mxu0 0
    %3193 = vmatmul.mubr.bf16.gmra.mrb[0].mxu0 %v2444
    %v3194 = vpop.f32.mrb[0].mxu0
    %v3195 = vadd.f32 %v2906, %v3194
    %v3196 = vpop.f32.mrb[0].mxu0
    %v3197 = vpop.f32.mrb[0].mxu0
    %v3198 = vadd.f32 %v2909, %v3197
    %v3199 = vpop.f32.mrb[0].mxu0
    %3200 = vmatprep.mubr.bf16.mxu0 0
    %3201 = vmatmul.mubr.bf16.gmra.mrb[0].mxu0 %v2447
    %v3202 = vpop.f32.mrb[0].mxu0
    %v3203 = vadd.f32 %v2914, %v3202
    %v3204 = vpop.f32.mrb[0].mxu0
    %v3205 = vpop.f32.mrb[0].mxu0
    %v3206 = vadd.f32 %v2917, %v3205
    %v3207 = vpop.f32.mrb[0].mxu0
    %3208 = vmatprep.mubr.bf16.mxu0 0
    %3209 = vmatmul.mubr.bf16.gmra.mrb[0].mxu0 %v2450
    %v3210 = vpop.f32.mrb[0].mxu0
    %v3211 = vadd.f32 %v2922, %v3210
    %v3212 = vpop.f32.mrb[0].mxu0
    %v3213 = vpop.f32.mrb[0].mxu0
    %v3214 = vadd.f32 %v2925, %v3213
    %v3215 = vpop.f32.mrb[0].mxu0
    %3216 = vmatprep.mubr.bf16.mxu0 0
    %3217 = vmatmul.mubr.bf16.gmra.mrb[0].mxu0 %v2453
    %v3218 = vpop.f32.mrb[0].mxu0
    %v3219 = vadd.f32 %v2930, %v3218
    %v3220 = vpop.f32.mrb[0].mxu0
    %v3221 = vpop.f32.mrb[0].mxu0
    %v3222 = vadd.f32 %v2933, %v3221
    %v3223 = vpop.f32.mrb[0].mxu0
    %3224 = vdwg.mxu0
    %v3273 = vunpack.c.l.b16 %v2178
    %v3274 = vunpack.c.l.b16 %v2179
    %v3275 = vunpack.c.l.b16 %v2180
    %v3276 = vunpack.c.l.b16 %v2181
    %v3277 = vunpack.c.l.b16 %v2182
    %v3278 = vunpack.c.l.b16 %v2183
    %v3279 = vunpack.c.l.b16 %v2184
    %v3280 = vunpack.c.l.b16 %v2185
    %v3281 = vunpack.c.l.b16 %v2186
    %v3282 = vunpack.c.l.b16 %v2187
    %v3283 = vunpack.c.l.b16 %v2188
    %v3284 = vunpack.c.l.b16 %v2189
    %v3285 = vunpack.c.l.b16 %v2190
    %v3286 = vunpack.c.l.b16 %v2191
    %v3287 = vunpack.c.l.b16 %v2192
    %v3288 = vunpack.c.l.b16 %v2193
    %v3289 = vunpack.c.l.b16 %v2194
    %v3290 = vunpack.c.l.b16 %v2195
    %v3291 = vunpack.c.l.b16 %v2196
    %v3292 = vunpack.c.l.b16 %v2197
    %v3293 = vunpack.c.l.b16 %v2198
    %v3294 = vunpack.c.l.b16 %v2199
    %v3295 = vunpack.c.l.b16 %v2200
    %v3296 = vunpack.c.l.b16 %v2201
    %v3297 = vunpack.c.l.b16 %v2202
    %v3298 = vunpack.c.l.b16 %v2203
    %v3299 = vunpack.c.l.b16 %v2204
    %v3300 = vunpack.c.l.b16 %v2205
    %v3301 = vunpack.c.l.b16 %v2206
    %v3302 = vunpack.c.l.b16 %v2207
    %v3303 = vunpack.c.l.b16 %v2208
    %v3304 = vunpack.c.l.b16 %v2209
    %v3305 = vunpack.c.l.b16 %v2210
    %v3306 = vunpack.c.l.b16 %v2211
    %v3307 = vunpack.c.l.b16 %v2212
    %v3308 = vunpack.c.l.b16 %v2213
    %v3309 = vunpack.c.l.b16 %v2214
    %v3310 = vunpack.c.l.b16 %v2215
    %v3311 = vunpack.c.l.b16 %v2216
    %v3312 = vunpack.c.l.b16 %v2217
    %v3313 = vunpack.c.l.b16 %v2218
    %v3314 = vunpack.c.l.b16 %v2219
    %v3315 = vunpack.c.l.b16 %v2220
    %v3316 = vunpack.c.l.b16 %v2221
    %v3317 = vunpack.c.l.b16 %v2222
    %v3318 = vunpack.c.l.b16 %v2223
    %v3319 = vunpack.c.l.b16 %v2224
    %v3320 = vunpack.c.l.b16 %v2225
    %v3321 = vpack.c.b16 %v3274, %v3273
    %v3322 = vpack.c.b16 %v3276, %v3275
    %v3323 = vpack.c.b16 %v3278, %v3277
    %v3324 = vpack.c.b16 %v3280, %v3279
    %v3325 = vpack.c.b16 %v3282, %v3281
    %v3326 = vpack.c.b16 %v3284, %v3283
    %v3327 = vpack.c.b16 %v3286, %v3285
    %v3328 = vpack.c.b16 %v3288, %v3287
    %v3329 = vpack.c.b16 %v3290, %v3289
    %v3330 = vpack.c.b16 %v3292, %v3291
    %v3331 = vpack.c.b16 %v3294, %v3293
    %v3332 = vpack.c.b16 %v3296, %v3295
    %v3333 = vpack.c.b16 %v3298, %v3297
    %v3334 = vpack.c.b16 %v3300, %v3299
    %v3335 = vpack.c.b16 %v3302, %v3301
    %v3336 = vpack.c.b16 %v3304, %v3303
    %v3337 = vpack.c.b16 %v3306, %v3305
    %v3338 = vpack.c.b16 %v3308, %v3307
    %v3339 = vpack.c.b16 %v3310, %v3309
    %v3340 = vpack.c.b16 %v3312, %v3311
    %v3341 = vpack.c.b16 %v3314, %v3313
    %v3342 = vpack.c.b16 %v3316, %v3315
    %v3343 = vpack.c.b16 %v3318, %v3317
    %v3344 = vpack.c.b16 %v3320, %v3319
    %3369 = vmatprep.subr.bf16.mxu0 0
    %3370 = vmatpush1.bf16.msra.mxu0 %v3321
    %3371 = vmatprep.subr.bf16.mxu0 0
    %3372 = vmatpush1.bf16.msra.mxu0 %v3322
    %3373 = vmatprep.subr.bf16.mxu0 0
    %3374 = vmatpush1.bf16.msra.mxu0 %v3323
    %3375 = vmatprep.subr.bf16.mxu0 0
    %3376 = vmatpush1.bf16.msra.mxu0 %v3324
    %3377 = vmatprep.subr.bf16.mxu0 0
    %3378 = vmatpush1.bf16.msra.mxu0 %v3325
    %3379 = vmatprep.subr.bf16.mxu0 0
    %3380 = vmatpush1.bf16.msra.mxu0 %v3326
    %3381 = vmatprep.subr.bf16.mxu0 0
    %3382 = vmatpush1.bf16.msra.mxu0 %v3327
    %3383 = vmatprep.subr.bf16.mxu0 0
    %3384 = vmatpush1.bf16.msra.mxu0 %v3328
    %3385 = vmatprep.subr.bf16.mxu0 0
    %3386 = vmatpush1.bf16.msra.mxu0 %v3329
    %3387 = vmatprep.subr.bf16.mxu0 0
    %3388 = vmatpush1.bf16.msra.mxu0 %v3330
    %3389 = vmatprep.subr.bf16.mxu0 0
    %3390 = vmatpush1.bf16.msra.mxu0 %v3331
    %3391 = vmatprep.subr.bf16.mxu0 0
    %3392 = vmatpush1.bf16.msra.mxu0 %v3332
    %3393 = vmatprep.subr.bf16.mxu0 0
    %3394 = vmatpush1.bf16.msra.mxu0 %v3333
    %3395 = vmatprep.subr.bf16.mxu0 0
    %3396 = vmatpush1.bf16.msra.mxu0 %v3334
    %3397 = vmatprep.subr.bf16.mxu0 0
    %3398 = vmatpush1.bf16.msra.mxu0 %v3335
    %3399 = vmatprep.subr.bf16.mxu0 0
    %3400 = vmatpush1.bf16.msra.mxu0 %v3336
    %3401 = vmatprep.mubr.bf16.mxu0 %v2083
    %3402 = vmatmul.mubr.bf16.gmra.mrb[0].mxu0 %v2082
    %v3403 = vpop.f32.mrb[0].mxu0
    %v3404 = vadd.f32 %v2971, %v3403
    %v3405 = vpop.f32.mrb[0].mxu0
    %v3406 = vpop.f32.mrb[0].mxu0
    %v3407 = vadd.f32 %v2974, %v3406
    %v3408 = vpop.f32.mrb[0].mxu0
    %3409 = vmatprep.mubr.bf16.mxu0 %v2086
    %3410 = vmatmul.mubr.bf16.gmra.mrb[0].mxu0 %v2085
    %v3411 = vpop.f32.mrb[0].mxu0
    %v3412 = vadd.f32 %v2979, %v3411
    %v3413 = vpop.f32.mrb[0].mxu0
    %v3414 = vpop.f32.mrb[0].mxu0
    %v3415 = vadd.f32 %v2982, %v3414
    %v3416 = vpop.f32.mrb[0].mxu0
    %3417 = vmatprep.mubr.bf16.mxu0 %v2089
    %3418 = vmatmul.mubr.bf16.gmra.mrb[0].mxu0 %v2088
    %v3419 = vpop.f32.mrb[0].mxu0
    %v3420 = vadd.f32 %v2987, %v3419
    %v3421 = vpop.f32.mrb[0].mxu0
    %v3422 = vpop.f32.mrb[0].mxu0
    %v3423 = vadd.f32 %v2990, %v3422
    %v3424 = vpop.f32.mrb[0].mxu0
    %3425 = vmatprep.mubr.bf16.mxu0 %v2092
    %3426 = vmatmul.mubr.bf16.gmra.mrb[0].mxu0 %v2091
    %v3427 = vpop.f32.mrb[0].mxu0
    %v3428 = vadd.f32 %v2995, %v3427
    %v3429 = vpop.f32.mrb[0].mxu0
    %v3430 = vpop.f32.mrb[0].mxu0
    %v3431 = vadd.f32 %v2998, %v3430
    %v3432 = vpop.f32.mrb[0].mxu0
    %3433 = vmatprep.mubr.bf16.mxu0 %v2095
    %3434 = vmatmul.mubr.bf16.gmra.mrb[0].mxu0 %v2094
    %v3435 = vpop.f32.mrb[0].mxu0
    %v3436 = vadd.f32 %v3003, %v3435
    %v3437 = vpop.f32.mrb[0].mxu0
    %v3438 = vpop.f32.mrb[0].mxu0
    %v3439 = vadd.f32 %v3006, %v3438
    %v3440 = vpop.f32.mrb[0].mxu0
    %3441 = vmatprep.mubr.bf16.mxu0 %v2098
    %3442 = vmatmul.mubr.bf16.gmra.mrb[0].mxu0 %v2097
    %v3443 = vpop.f32.mrb[0].mxu0
    %v3444 = vadd.f32 %v3011, %v3443
    %v3445 = vpop.f32.mrb[0].mxu0
    %v3446 = vpop.f32.mrb[0].mxu0
    %v3447 = vadd.f32 %v3014, %v3446
    %v3448 = vpop.f32.mrb[0].mxu0
    %3449 = vmatprep.mubr.bf16.mxu0 %v2101
    %3450 = vmatmul.mubr.bf16.gmra.mrb[0].mxu0 %v2100
    %v3451 = vpop.f32.mrb[0].mxu0
    %v3452 = vadd.f32 %v3019, %v3451
    %v3453 = vpop.f32.mrb[0].mxu0
    %v3454 = vpop.f32.mrb[0].mxu0
    %v3455 = vadd.f32 %v3022, %v3454
    %v3456 = vpop.f32.mrb[0].mxu0
    %3457 = vmatprep.mubr.bf16.mxu0 %v2104
    %3458 = vmatmul.mubr.bf16.gmra.mrb[0].mxu0 %v2103
    %v3459 = vpop.f32.mrb[0].mxu0
    %v3460 = vadd.f32 %v3027, %v3459
    %v3461 = vpop.f32.mrb[0].mxu0
    %v3462 = vpop.f32.mrb[0].mxu0
    %v3463 = vadd.f32 %v3030, %v3462
    %v3464 = vpop.f32.mrb[0].mxu0
    %3465 = vmatprep.mubr.bf16.mxu0 %v2107
    %3466 = vmatmul.mubr.bf16.gmra.mrb[0].mxu0 %v2106
    %v3467 = vpop.f32.mrb[0].mxu0
    %v3468 = vadd.f32 %v3035, %v3467
    %v3469 = vpop.f32.mrb[0].mxu0
    %v3470 = vpop.f32.mrb[0].mxu0
    %v3471 = vadd.f32 %v3038, %v3470
    %v3472 = vpop.f32.mrb[0].mxu0
    %3473 = vmatprep.mubr.bf16.mxu0 %v2110
    %3474 = vmatmul.mubr.bf16.gmra.mrb[0].mxu0 %v2109
    %v3475 = vpop.f32.mrb[0].mxu0
    %v3476 = vadd.f32 %v3043, %v3475
    %v3477 = vpop.f32.mrb[0].mxu0
    %v3478 = vpop.f32.mrb[0].mxu0
    %v3479 = vadd.f32 %v3046, %v3478
    %v3480 = vpop.f32.mrb[0].mxu0
    %3481 = vmatprep.mubr.bf16.mxu0 %v2113
    %3482 = vmatmul.mubr.bf16.gmra.mrb[0].mxu0 %v2112
    %v3483 = vpop.f32.mrb[0].mxu0
    %v3484 = vadd.f32 %v3051, %v3483
    %v3485 = vpop.f32.mrb[0].mxu0
    %v3486 = vpop.f32.mrb[0].mxu0
    %v3487 = vadd.f32 %v3054, %v3486
    %v3488 = vpop.f32.mrb[0].mxu0
    %3489 = vmatprep.mubr.bf16.mxu0 %v2116
    %3490 = vmatmul.mubr.bf16.gmra.mrb[0].mxu0 %v2115
    %v3491 = vpop.f32.mrb[0].mxu0
    %v3492 = vadd.f32 %v3059, %v3491
    %v3493 = vpop.f32.mrb[0].mxu0
    %v3494 = vpop.f32.mrb[0].mxu0
    %v3495 = vadd.f32 %v3062, %v3494
    %v3496 = vpop.f32.mrb[0].mxu0
    %3497 = vmatprep.mubr.bf16.mxu0 %v2119
    %3498 = vmatmul.mubr.bf16.gmra.mrb[0].mxu0 %v2118
    %v3499 = vpop.f32.mrb[0].mxu0
    %v3500 = vadd.f32 %v3067, %v3499
    %v3501 = vpop.f32.mrb[0].mxu0
    %v3502 = vpop.f32.mrb[0].mxu0
    %v3503 = vadd.f32 %v3070, %v3502
    %v3504 = vpop.f32.mrb[0].mxu0
    %3505 = vmatprep.mubr.bf16.mxu0 %v2122
    %3506 = vmatmul.mubr.bf16.gmra.mrb[0].mxu0 %v2121
    %v3507 = vpop.f32.mrb[0].mxu0
    %v3508 = vadd.f32 %v3075, %v3507
    %v3509 = vpop.f32.mrb[0].mxu0
    %v3510 = vpop.f32.mrb[0].mxu0
    %v3511 = vadd.f32 %v3078, %v3510
    %v3512 = vpop.f32.mrb[0].mxu0
    %3513 = vmatprep.mubr.bf16.mxu0 %v2125
    %3514 = vmatmul.mubr.bf16.gmra.mrb[0].mxu0 %v2124
    %v3515 = vpop.f32.mrb[0].mxu0
    %v3516 = vadd.f32 %v3083, %v3515
    %v3517 = vpop.f32.mrb[0].mxu0
    %v3518 = vpop.f32.mrb[0].mxu0
    %v3519 = vadd.f32 %v3086, %v3518
    %v3520 = vpop.f32.mrb[0].mxu0
    %3521 = vmatprep.mubr.bf16.mxu0 %v2128
    %3522 = vmatmul.mubr.bf16.gmra.mrb[0].mxu0 %v2127
    %v3523 = vpop.f32.mrb[0].mxu0
    %v3524 = vadd.f32 %v3091, %v3523
    %v3525 = vpop.f32.mrb[0].mxu0
    %v3526 = vpop.f32.mrb[0].mxu0
    %v3527 = vadd.f32 %v3094, %v3526
    %v3528 = vpop.f32.mrb[0].mxu0
    %3529 = vmatprep.mubr.bf16.mxu0 %v2131
    %3530 = vmatmul.mubr.bf16.gmra.mrb[0].mxu0 %v2130
    %v3531 = vpop.f32.mrb[0].mxu0
    %v3532 = vadd.f32 %v3099, %v3531
    %v3533 = vpop.f32.mrb[0].mxu0
    %v3534 = vpop.f32.mrb[0].mxu0
    %v3535 = vadd.f32 %v3102, %v3534
    %v3536 = vpop.f32.mrb[0].mxu0
    %3537 = vmatprep.mubr.bf16.mxu0 %v2134
    %3538 = vmatmul.mubr.bf16.gmra.mrb[0].mxu0 %v2133
    %v3539 = vpop.f32.mrb[0].mxu0
    %v3540 = vadd.f32 %v3107, %v3539
    %v3541 = vpop.f32.mrb[0].mxu0
    %v3542 = vpop.f32.mrb[0].mxu0
    %v3543 = vadd.f32 %v3110, %v3542
    %v3544 = vpop.f32.mrb[0].mxu0
    %3545 = vmatprep.mubr.bf16.mxu0 %v2137
    %3546 = vmatmul.mubr.bf16.gmra.mrb[0].mxu0 %v2136
    %v3547 = vpop.f32.mrb[0].mxu0
    %v3548 = vadd.f32 %v3115, %v3547
    %v3549 = vpop.f32.mrb[0].mxu0
    %v3550 = vpop.f32.mrb[0].mxu0
    %v3551 = vadd.f32 %v3118, %v3550
    %v3552 = vpop.f32.mrb[0].mxu0
    %3553 = vmatprep.mubr.bf16.mxu0 %v2140
    %3554 = vmatmul.mubr.bf16.gmra.mrb[0].mxu0 %v2139
    %v3555 = vpop.f32.mrb[0].mxu0
    %v3556 = vadd.f32 %v3123, %v3555
    %v3557 = vpop.f32.mrb[0].mxu0
    %v3558 = vpop.f32.mrb[0].mxu0
    %v3559 = vadd.f32 %v3126, %v3558
    %v3560 = vpop.f32.mrb[0].mxu0
    %3561 = vmatprep.mubr.bf16.mxu0 %v2143
    %3562 = vmatmul.mubr.bf16.gmra.mrb[0].mxu0 %v2142
    %v3563 = vpop.f32.mrb[0].mxu0
    %v3564 = vadd.f32 %v3131, %v3563
    %v3565 = vpop.f32.mrb[0].mxu0
    %v3566 = vpop.f32.mrb[0].mxu0
    %v3567 = vadd.f32 %v3134, %v3566
    %v3568 = vpop.f32.mrb[0].mxu0
    %3569 = vmatprep.mubr.bf16.mxu0 %v2146
    %3570 = vmatmul.mubr.bf16.gmra.mrb[0].mxu0 %v2145
    %v3571 = vpop.f32.mrb[0].mxu0
    %v3572 = vadd.f32 %v3139, %v3571
    %v3573 = vpop.f32.mrb[0].mxu0
    %v3574 = vpop.f32.mrb[0].mxu0
    %v3575 = vadd.f32 %v3142, %v3574
    %v3576 = vpop.f32.mrb[0].mxu0
    %3577 = vmatprep.mubr.bf16.mxu0 %v2149
    %3578 = vmatmul.mubr.bf16.gmra.mrb[0].mxu0 %v2148
    %v3579 = vpop.f32.mrb[0].mxu0
    %v3580 = vadd.f32 %v3147, %v3579
    %v3581 = vpop.f32.mrb[0].mxu0
    %v3582 = vpop.f32.mrb[0].mxu0
    %v3583 = vadd.f32 %v3150, %v3582
    %v3584 = vpop.f32.mrb[0].mxu0
    %3585 = vmatprep.mubr.bf16.mxu0 %v2152
    %3586 = vmatmul.mubr.bf16.gmra.mrb[0].mxu0 %v2151
    %v3587 = vpop.f32.mrb[0].mxu0
    %v3588 = vadd.f32 %v3155, %v3587
    %v3589 = vpop.f32.mrb[0].mxu0
    %v3590 = vpop.f32.mrb[0].mxu0
    %v3591 = vadd.f32 %v3158, %v3590
    %v3592 = vpop.f32.mrb[0].mxu0
    %3593 = vmatprep.mubr.bf16.mxu0 %v2155
    %3594 = vmatmul.mubr.bf16.gmra.mrb[0].mxu0 %v2154
    %v3595 = vpop.f32.mrb[0].mxu0
    %v3596 = vadd.f32 %v3163, %v3595
    %v3597 = vpop.f32.mrb[0].mxu0
    %v3598 = vpop.f32.mrb[0].mxu0
    %v3599 = vadd.f32 %v3166, %v3598
    %v3600 = vpop.f32.mrb[0].mxu0
    %3601 = vmatprep.mubr.bf16.mxu0 %v2158
    %3602 = vmatmul.mubr.bf16.gmra.mrb[0].mxu0 %v2157
    %v3603 = vpop.f32.mrb[0].mxu0
    %v3604 = vadd.f32 %v3171, %v3603
    %v3605 = vpop.f32.mrb[0].mxu0
    %v3606 = vpop.f32.mrb[0].mxu0
    %v3607 = vadd.f32 %v3174, %v3606
    %v3608 = vpop.f32.mrb[0].mxu0
    %3609 = vmatprep.mubr.bf16.mxu0 %v2161
    %3610 = vmatmul.mubr.bf16.gmra.mrb[0].mxu0 %v2160
    %v3611 = vpop.f32.mrb[0].mxu0
    %v3612 = vadd.f32 %v3179, %v3611
    %v3613 = vpop.f32.mrb[0].mxu0
    %v3614 = vpop.f32.mrb[0].mxu0
    %v3615 = vadd.f32 %v3182, %v3614
    %v3616 = vpop.f32.mrb[0].mxu0
    %3617 = vmatprep.mubr.bf16.mxu0 %v2164
    %3618 = vmatmul.mubr.bf16.gmra.mrb[0].mxu0 %v2163
    %v3619 = vpop.f32.mrb[0].mxu0
    %v3620 = vadd.f32 %v3187, %v3619
    %v3621 = vpop.f32.mrb[0].mxu0
    %v3622 = vpop.f32.mrb[0].mxu0
    %v3623 = vadd.f32 %v3190, %v3622
    %v3624 = vpop.f32.mrb[0].mxu0
    %3625 = vmatprep.mubr.bf16.mxu0 %v2167
    %3626 = vmatmul.mubr.bf16.gmra.mrb[0].mxu0 %v2166
    %v3627 = vpop.f32.mrb[0].mxu0
    %v3628 = vadd.f32 %v3195, %v3627
    %v3629 = vpop.f32.mrb[0].mxu0
    %v3630 = vpop.f32.mrb[0].mxu0
    %v3631 = vadd.f32 %v3198, %v3630
    %v3632 = vpop.f32.mrb[0].mxu0
    %3633 = vmatprep.mubr.bf16.mxu0 %v2170
    %3634 = vmatmul.mubr.bf16.gmra.mrb[0].mxu0 %v2169
    %v3635 = vpop.f32.mrb[0].mxu0
    %v3636 = vadd.f32 %v3203, %v3635
    %v3637 = vpop.f32.mrb[0].mxu0
    %v3638 = vpop.f32.mrb[0].mxu0
    %v3639 = vadd.f32 %v3206, %v3638
    %v3640 = vpop.f32.mrb[0].mxu0
    %3641 = vmatprep.mubr.bf16.mxu0 %v2173
    %3642 = vmatmul.mubr.bf16.gmra.mrb[0].mxu0 %v2172
    %v3643 = vpop.f32.mrb[0].mxu0
    %v3644 = vadd.f32 %v3211, %v3643
    %v3645 = vpop.f32.mrb[0].mxu0
    %v3646 = vpop.f32.mrb[0].mxu0
    %v3647 = vadd.f32 %v3214, %v3646
    %v3648 = vpop.f32.mrb[0].mxu0
    %3649 = vmatprep.mubr.bf16.mxu0 %v2176
    %3650 = vmatmul.mubr.bf16.gmra.mrb[0].mxu0 %v2175
    %v3651 = vpop.f32.mrb[0].mxu0
    %v3652 = vadd.f32 %v3219, %v3651
    %v3653 = vpop.f32.mrb[0].mxu0
    %v3654 = vpop.f32.mrb[0].mxu0
    %v3655 = vadd.f32 %v3222, %v3654
    %v3656 = vpop.f32.mrb[0].mxu0
    %3657 = vdwg.mxu0
    %3658 = vmatprep.subr.bf16.mxu0 0
    %3659 = vmatpush1.bf16.msra.mxu0 %v3337
    %3660 = vmatprep.subr.bf16.mxu0 0
    %3661 = vmatpush1.bf16.msra.mxu0 %v3338
    %3662 = vmatprep.subr.bf16.mxu0 0
    %3663 = vmatpush1.bf16.msra.mxu0 %v3339
    %3664 = vmatprep.subr.bf16.mxu0 0
    %3665 = vmatpush1.bf16.msra.mxu0 %v3340
    %3666 = vmatprep.subr.bf16.mxu0 0
    %3667 = vmatpush1.bf16.msra.mxu0 %v3341
    %3668 = vmatprep.subr.bf16.mxu0 0
    %3669 = vmatpush1.bf16.msra.mxu0 %v3342
    %3670 = vmatprep.subr.bf16.mxu0 0
    %3671 = vmatpush1.bf16.msra.mxu0 %v3343
    %3672 = vmatprep.subr.bf16.mxu0 0
    %3673 = vmatpush1.bf16.msra.mxu0 %v3344
    %3674 = vmatprep.subr.bf16.mxu0 0
    %3675 = vmatpush1.bf16.msra.mxu0 0
    %3676 = vmatprep.subr.bf16.mxu0 0
    %3677 = vmatpush1.bf16.msra.mxu0 0
    %3678 = vmatprep.subr.bf16.mxu0 0
    %3679 = vmatpush1.bf16.msra.mxu0 0
    %3680 = vmatprep.subr.bf16.mxu0 0
    %3681 = vmatpush1.bf16.msra.mxu0 0
    %3682 = vmatprep.subr.bf16.mxu0 0
    %3683 = vmatpush1.bf16.msra.mxu0 0
    %3684 = vmatprep.subr.bf16.mxu0 0
    %3685 = vmatpush1.bf16.msra.mxu0 0
    %3686 = vmatprep.subr.bf16.mxu0 0
    %3687 = vmatpush1.bf16.msra.mxu0 0
    %3688 = vmatprep.subr.bf16.mxu0 0
    %3689 = vmatpush1.bf16.msra.mxu0 0
    %3690 = vmatprep.mubr.bf16.mxu0 0
    %3691 = vmatmul.mubr.bf16.gmra.mrb[0].mxu0 %v2084
    %v3692 = vpop.f32.mrb[0].mxu0
    %v3693 = vadd.f32 %v3404, %v3692
    %v3694 = vpop.f32.mrb[0].mxu0
    %v3695 = vpop.f32.mrb[0].mxu0
    %v3696 = vadd.f32 %v3407, %v3695
    %v3697 = vpop.f32.mrb[0].mxu0
    %3698 = vmatprep.mubr.bf16.mxu0 0
    %3699 = vmatmul.mubr.bf16.gmra.mrb[0].mxu0 %v2087
    %v3700 = vpop.f32.mrb[0].mxu0
    %v3701 = vadd.f32 %v3412, %v3700
    %v3702 = vpop.f32.mrb[0].mxu0
    %v3703 = vpop.f32.mrb[0].mxu0
    %v3704 = vadd.f32 %v3415, %v3703
    %v3705 = vpop.f32.mrb[0].mxu0
    %3706 = vmatprep.mubr.bf16.mxu0 0
    %3707 = vmatmul.mubr.bf16.gmra.mrb[0].mxu0 %v2090
    %v3708 = vpop.f32.mrb[0].mxu0
    %v3709 = vadd.f32 %v3420, %v3708
    %v3710 = vpop.f32.mrb[0].mxu0
    %v3711 = vpop.f32.mrb[0].mxu0
    %v3712 = vadd.f32 %v3423, %v3711
    %v3713 = vpop.f32.mrb[0].mxu0
    %3714 = vmatprep.mubr.bf16.mxu0 0
    %3715 = vmatmul.mubr.bf16.gmra.mrb[0].mxu0 %v2093
    %v3716 = vpop.f32.mrb[0].mxu0
    %v3717 = vadd.f32 %v3428, %v3716
    %v3718 = vpop.f32.mrb[0].mxu0
    %v3719 = vpop.f32.mrb[0].mxu0
    %v3720 = vadd.f32 %v3431, %v3719
    %v3721 = vpop.f32.mrb[0].mxu0
    %3722 = vmatprep.mubr.bf16.mxu0 0
    %3723 = vmatmul.mubr.bf16.gmra.mrb[0].mxu0 %v2096
    %v3724 = vpop.f32.mrb[0].mxu0
    %v3725 = vadd.f32 %v3436, %v3724
    %v3726 = vpop.f32.mrb[0].mxu0
    %v3727 = vpop.f32.mrb[0].mxu0
    %v3728 = vadd.f32 %v3439, %v3727
    %v3729 = vpop.f32.mrb[0].mxu0
    %3730 = vmatprep.mubr.bf16.mxu0 0
    %3731 = vmatmul.mubr.bf16.gmra.mrb[0].mxu0 %v2099
    %v3732 = vpop.f32.mrb[0].mxu0
    %v3733 = vadd.f32 %v3444, %v3732
    %v3734 = vpop.f32.mrb[0].mxu0
    %v3735 = vpop.f32.mrb[0].mxu0
    %v3736 = vadd.f32 %v3447, %v3735
    %v3737 = vpop.f32.mrb[0].mxu0
    %3738 = vmatprep.mubr.bf16.mxu0 0
    %3739 = vmatmul.mubr.bf16.gmra.mrb[0].mxu0 %v2102
    %v3740 = vpop.f32.mrb[0].mxu0
    %v3741 = vadd.f32 %v3452, %v3740
    %v3742 = vpop.f32.mrb[0].mxu0
    %v3743 = vpop.f32.mrb[0].mxu0
    %v3744 = vadd.f32 %v3455, %v3743
    %v3745 = vpop.f32.mrb[0].mxu0
    %3746 = vmatprep.mubr.bf16.mxu0 0
    %3747 = vmatmul.mubr.bf16.gmra.mrb[0].mxu0 %v2105
    %v3748 = vpop.f32.mrb[0].mxu0
    %v3749 = vadd.f32 %v3460, %v3748
    %v3750 = vpop.f32.mrb[0].mxu0
    %v3751 = vpop.f32.mrb[0].mxu0
    %v3752 = vadd.f32 %v3463, %v3751
    %v3753 = vpop.f32.mrb[0].mxu0
    %3754 = vmatprep.mubr.bf16.mxu0 0
    %3755 = vmatmul.mubr.bf16.gmra.mrb[0].mxu0 %v2108
    %v3756 = vpop.f32.mrb[0].mxu0
    %v3757 = vadd.f32 %v3468, %v3756
    %v3758 = vpop.f32.mrb[0].mxu0
    %v3759 = vpop.f32.mrb[0].mxu0
    %v3760 = vadd.f32 %v3471, %v3759
    %v3761 = vpop.f32.mrb[0].mxu0
    %3762 = vmatprep.mubr.bf16.mxu0 0
    %3763 = vmatmul.mubr.bf16.gmra.mrb[0].mxu0 %v2111
    %v3764 = vpop.f32.mrb[0].mxu0
    %v3765 = vadd.f32 %v3476, %v3764
    %v3766 = vpop.f32.mrb[0].mxu0
    %v3767 = vpop.f32.mrb[0].mxu0
    %v3768 = vadd.f32 %v3479, %v3767
    %v3769 = vpop.f32.mrb[0].mxu0
    %3770 = vmatprep.mubr.bf16.mxu0 0
    %3771 = vmatmul.mubr.bf16.gmra.mrb[0].mxu0 %v2114
    %v3772 = vpop.f32.mrb[0].mxu0
    %v3773 = vadd.f32 %v3484, %v3772
    %v3774 = vpop.f32.mrb[0].mxu0
    %v3775 = vpop.f32.mrb[0].mxu0
    %v3776 = vadd.f32 %v3487, %v3775
    %v3777 = vpop.f32.mrb[0].mxu0
    %3778 = vmatprep.mubr.bf16.mxu0 0
    %3779 = vmatmul.mubr.bf16.gmra.mrb[0].mxu0 %v2117
    %v3780 = vpop.f32.mrb[0].mxu0
    %v3781 = vadd.f32 %v3492, %v3780
    %v3782 = vpop.f32.mrb[0].mxu0
    %v3783 = vpop.f32.mrb[0].mxu0
    %v3784 = vadd.f32 %v3495, %v3783
    %v3785 = vpop.f32.mrb[0].mxu0
    %3786 = vmatprep.mubr.bf16.mxu0 0
    %3787 = vmatmul.mubr.bf16.gmra.mrb[0].mxu0 %v2120
    %v3788 = vpop.f32.mrb[0].mxu0
    %v3789 = vadd.f32 %v3500, %v3788
    %v3790 = vpop.f32.mrb[0].mxu0
    %v3791 = vpop.f32.mrb[0].mxu0
    %v3792 = vadd.f32 %v3503, %v3791
    %v3793 = vpop.f32.mrb[0].mxu0
    %3794 = vmatprep.mubr.bf16.mxu0 0
    %3795 = vmatmul.mubr.bf16.gmra.mrb[0].mxu0 %v2123
    %v3796 = vpop.f32.mrb[0].mxu0
    %v3797 = vadd.f32 %v3508, %v3796
    %v3798 = vpop.f32.mrb[0].mxu0
    %v3799 = vpop.f32.mrb[0].mxu0
    %v3800 = vadd.f32 %v3511, %v3799
    %v3801 = vpop.f32.mrb[0].mxu0
    %3802 = vmatprep.mubr.bf16.mxu0 0
    %3803 = vmatmul.mubr.bf16.gmra.mrb[0].mxu0 %v2126
    %v3804 = vpop.f32.mrb[0].mxu0
    %v3805 = vadd.f32 %v3516, %v3804
    %v3806 = vpop.f32.mrb[0].mxu0
    %v3807 = vpop.f32.mrb[0].mxu0
    %v3808 = vadd.f32 %v3519, %v3807
    %v3809 = vpop.f32.mrb[0].mxu0
    %3810 = vmatprep.mubr.bf16.mxu0 0
    %3811 = vmatmul.mubr.bf16.gmra.mrb[0].mxu0 %v2129
    %v3812 = vpop.f32.mrb[0].mxu0
    %v3813 = vadd.f32 %v3524, %v3812
    %v3814 = vpop.f32.mrb[0].mxu0
    %v3815 = vpop.f32.mrb[0].mxu0
    %v3816 = vadd.f32 %v3527, %v3815
    %v3817 = vpop.f32.mrb[0].mxu0
    %3818 = vmatprep.mubr.bf16.mxu0 0
    %3819 = vmatmul.mubr.bf16.gmra.mrb[0].mxu0 %v2132
    %v3820 = vpop.f32.mrb[0].mxu0
    %v3821 = vadd.f32 %v3532, %v3820
    %v3822 = vpop.f32.mrb[0].mxu0
    %v3823 = vpop.f32.mrb[0].mxu0
    %v3824 = vadd.f32 %v3535, %v3823
    %v3825 = vpop.f32.mrb[0].mxu0
    %3826 = vmatprep.mubr.bf16.mxu0 0
    %3827 = vmatmul.mubr.bf16.gmra.mrb[0].mxu0 %v2135
    %v3828 = vpop.f32.mrb[0].mxu0
    %v3829 = vadd.f32 %v3540, %v3828
    %v3830 = vpop.f32.mrb[0].mxu0
    %v3831 = vpop.f32.mrb[0].mxu0
    %v3832 = vadd.f32 %v3543, %v3831
    %v3833 = vpop.f32.mrb[0].mxu0
    %3834 = vmatprep.mubr.bf16.mxu0 0
    %3835 = vmatmul.mubr.bf16.gmra.mrb[0].mxu0 %v2138
    %v3836 = vpop.f32.mrb[0].mxu0
    %v3837 = vadd.f32 %v3548, %v3836
    %v3838 = vpop.f32.mrb[0].mxu0
    %v3839 = vpop.f32.mrb[0].mxu0
    %v3840 = vadd.f32 %v3551, %v3839
    %v3841 = vpop.f32.mrb[0].mxu0
    %3842 = vmatprep.mubr.bf16.mxu0 0
    %3843 = vmatmul.mubr.bf16.gmra.mrb[0].mxu0 %v2141
    %v3844 = vpop.f32.mrb[0].mxu0
    %v3845 = vadd.f32 %v3556, %v3844
    %v3846 = vpop.f32.mrb[0].mxu0
    %v3847 = vpop.f32.mrb[0].mxu0
    %v3848 = vadd.f32 %v3559, %v3847
    %v3849 = vpop.f32.mrb[0].mxu0
    %3850 = vmatprep.mubr.bf16.mxu0 0
    %3851 = vmatmul.mubr.bf16.gmra.mrb[0].mxu0 %v2144
    %v3852 = vpop.f32.mrb[0].mxu0
    %v3853 = vadd.f32 %v3564, %v3852
    %v3854 = vpop.f32.mrb[0].mxu0
    %v3855 = vpop.f32.mrb[0].mxu0
    %v3856 = vadd.f32 %v3567, %v3855
    %v3857 = vpop.f32.mrb[0].mxu0
    %3858 = vmatprep.mubr.bf16.mxu0 0
    %3859 = vmatmul.mubr.bf16.gmra.mrb[0].mxu0 %v2147
    %v3860 = vpop.f32.mrb[0].mxu0
    %v3861 = vadd.f32 %v3572, %v3860
    %v3862 = vpop.f32.mrb[0].mxu0
    %v3863 = vpop.f32.mrb[0].mxu0
    %v3864 = vadd.f32 %v3575, %v3863
    %v3865 = vpop.f32.mrb[0].mxu0
    %3866 = vmatprep.mubr.bf16.mxu0 0
    %3867 = vmatmul.mubr.bf16.gmra.mrb[0].mxu0 %v2150
    %v3868 = vpop.f32.mrb[0].mxu0
    %v3869 = vadd.f32 %v3580, %v3868
    %v3870 = vpop.f32.mrb[0].mxu0
    %v3871 = vpop.f32.mrb[0].mxu0
    %v3872 = vadd.f32 %v3583, %v3871
    %v3873 = vpop.f32.mrb[0].mxu0
    %3874 = vmatprep.mubr.bf16.mxu0 0
    %3875 = vmatmul.mubr.bf16.gmra.mrb[0].mxu0 %v2153
    %v3876 = vpop.f32.mrb[0].mxu0
    %v3877 = vadd.f32 %v3588, %v3876
    %v3878 = vpop.f32.mrb[0].mxu0
    %v3879 = vpop.f32.mrb[0].mxu0
    %v3880 = vadd.f32 %v3591, %v3879
    %v3881 = vpop.f32.mrb[0].mxu0
    %3882 = vmatprep.mubr.bf16.mxu0 0
    %3883 = vmatmul.mubr.bf16.gmra.mrb[0].mxu0 %v2156
    %v3884 = vpop.f32.mrb[0].mxu0
    %v3885 = vadd.f32 %v3596, %v3884
    %v3886 = vpop.f32.mrb[0].mxu0
    %v3887 = vpop.f32.mrb[0].mxu0
    %v3888 = vadd.f32 %v3599, %v3887
    %v3889 = vpop.f32.mrb[0].mxu0
    %3890 = vmatprep.mubr.bf16.mxu0 0
    %3891 = vmatmul.mubr.bf16.gmra.mrb[0].mxu0 %v2159
    %v3892 = vpop.f32.mrb[0].mxu0
    %v3893 = vadd.f32 %v3604, %v3892
    %v3894 = vpop.f32.mrb[0].mxu0
    %v3895 = vpop.f32.mrb[0].mxu0
    %v3896 = vadd.f32 %v3607, %v3895
    %v3897 = vpop.f32.mrb[0].mxu0
    %3898 = vmatprep.mubr.bf16.mxu0 0
    %3899 = vmatmul.mubr.bf16.gmra.mrb[0].mxu0 %v2162
    %v3900 = vpop.f32.mrb[0].mxu0
    %v3901 = vadd.f32 %v3612, %v3900
    %v3902 = vpop.f32.mrb[0].mxu0
    %v3903 = vpop.f32.mrb[0].mxu0
    %v3904 = vadd.f32 %v3615, %v3903
    %v3905 = vpop.f32.mrb[0].mxu0
    %3906 = vmatprep.mubr.bf16.mxu0 0
    %3907 = vmatmul.mubr.bf16.gmra.mrb[0].mxu0 %v2165
    %v3908 = vpop.f32.mrb[0].mxu0
    %v3909 = vadd.f32 %v3620, %v3908
    %v3910 = vpop.f32.mrb[0].mxu0
    %v3911 = vpop.f32.mrb[0].mxu0
    %v3912 = vadd.f32 %v3623, %v3911
    %v3913 = vpop.f32.mrb[0].mxu0
    %3914 = vmatprep.mubr.bf16.mxu0 0
    %3915 = vmatmul.mubr.bf16.gmra.mrb[0].mxu0 %v2168
    %v3916 = vpop.f32.mrb[0].mxu0
    %v3917 = vadd.f32 %v3628, %v3916
    %v3918 = vpop.f32.mrb[0].mxu0
    %v3919 = vpop.f32.mrb[0].mxu0
    %v3920 = vadd.f32 %v3631, %v3919
    %v3921 = vpop.f32.mrb[0].mxu0
    %3922 = vmatprep.mubr.bf16.mxu0 0
    %3923 = vmatmul.mubr.bf16.gmra.mrb[0].mxu0 %v2171
    %v3924 = vpop.f32.mrb[0].mxu0
    %v3925 = vadd.f32 %v3636, %v3924
    %v3926 = vpop.f32.mrb[0].mxu0
    %v3927 = vpop.f32.mrb[0].mxu0
    %v3928 = vadd.f32 %v3639, %v3927
    %v3929 = vpop.f32.mrb[0].mxu0
    %3930 = vmatprep.mubr.bf16.mxu0 0
    %3931 = vmatmul.mubr.bf16.gmra.mrb[0].mxu0 %v2174
    %v3932 = vpop.f32.mrb[0].mxu0
    %v3933 = vadd.f32 %v3644, %v3932
    %v3934 = vpop.f32.mrb[0].mxu0
    %v3935 = vpop.f32.mrb[0].mxu0
    %v3936 = vadd.f32 %v3647, %v3935
    %v3937 = vpop.f32.mrb[0].mxu0
    %3938 = vmatprep.mubr.bf16.mxu0 0
    %3939 = vmatmul.mubr.bf16.gmra.mrb[0].mxu0 %v2177
    %v3940 = vpop.f32.mrb[0].mxu0
    %v3941 = vadd.f32 %v3652, %v3940
    %v3942 = vpop.f32.mrb[0].mxu0
    %v3943 = vpop.f32.mrb[0].mxu0
    %v3944 = vadd.f32 %v3655, %v3943
    %v3945 = vpop.f32.mrb[0].mxu0
    %3946 = vdwg.mxu0
    %v3947 = vld [vmem:[#allocation2 + $0x27] sm:$0xff]
    %v3948 = vld [vmem:[#allocation2 + $0x2f] sm:$0xff]
    %v3949 = vld [vmem:[#allocation2 + $0x37] sm:$0xff]
    %v3950 = vld [vmem:[#allocation2 + $0x3f] sm:$0xff]
    %v3951 = vld [vmem:[#allocation2 + $0x47] sm:$0xff]
    %v3952 = vld [vmem:[#allocation2 + $0x4f] sm:$0xff]
    %v3953 = vld [vmem:[#allocation2 + $0x57] sm:$0xff]
    %v3954 = vld [vmem:[#allocation2 + $0x5f] sm:$0xff]
    %v3955 = vld [vmem:[#allocation2 + $0x67] sm:$0xff]
    %v3956 = vld [vmem:[#allocation2 + $0x6f] sm:$0xff]
    %v3957 = vld [vmem:[#allocation2 + $0x77] sm:$0xff]
    %v3958 = vld [vmem:[#allocation2 + $0x7f] sm:$0xff]
    %v3959 = vld [vmem:[#allocation2 + $0x87] sm:$0xff]
    %v3960 = vld [vmem:[#allocation2 + $0x8f] sm:$0xff]
    %v3961 = vld [vmem:[#allocation2 + $0x97] sm:$0xff]
    %v3962 = vld [vmem:[#allocation2 + $0x9f] sm:$0xff]
    %v3963 = vld [vmem:[#allocation2 + $0xa7] sm:$0xff]
    %v3964 = vld [vmem:[#allocation2 + $0xaf] sm:$0xff]
    %v3965 = vld [vmem:[#allocation2 + $0xb7] sm:$0xff]
    %v3966 = vld [vmem:[#allocation2 + $0xbf] sm:$0xff]
    %v3967 = vld [vmem:[#allocation2 + $0xc7] sm:$0xff]
    %v3968 = vld [vmem:[#allocation2 + $0xcf] sm:$0xff]
    %v3969 = vld [vmem:[#allocation2 + $0xd7] sm:$0xff]
    %v3970 = vld [vmem:[#allocation2 + $0xdf] sm:$0xff]
    %v3971 = vld [vmem:[#allocation2 + $0xe7] sm:$0xff]
    %v3972 = vld [vmem:[#allocation2 + $0xef] sm:$0xff]
    %v3973 = vld [vmem:[#allocation2 + $0xf7] sm:$0xff]
    %v3974 = vld [vmem:[#allocation2 + $0xff] sm:$0xff]
    %v3975 = vld [vmem:[#allocation2 + $0x107] sm:$0xff]
    %v3976 = vld [vmem:[#allocation2 + $0x10f] sm:$0xff]
    %v3977 = vld [vmem:[#allocation2 + $0x117] sm:$0xff]
    %v3978 = vld [vmem:[#allocation2 + $0x11f] sm:$0xff]
    %v3979 = vld [vmem:[#allocation2 + $0x127] sm:$0xff]
    %v3980 = vld [vmem:[#allocation2 + $0x12f] sm:$0xff]
    %v3981 = vld [vmem:[#allocation2 + $0x137] sm:$0xff]
    %v3982 = vld [vmem:[#allocation2 + $0x13f] sm:$0xff]
    %v3983 = vld [vmem:[#allocation2 + $0x147] sm:$0xff]
    %v3984 = vld [vmem:[#allocation2 + $0x14f] sm:$0xff]
    %v3985 = vld [vmem:[#allocation2 + $0x157] sm:$0xff]
    %v3986 = vld [vmem:[#allocation2 + $0x15f] sm:$0xff]
    %v3987 = vld [vmem:[#allocation2 + $0x167] sm:$0xff]
    %v3988 = vld [vmem:[#allocation2 + $0x16f] sm:$0xff]
    %v3989 = vld [vmem:[#allocation2 + $0x177] sm:$0xff]
    %v3990 = vld [vmem:[#allocation2 + $0x17f] sm:$0xff]
    %v3991 = vld [vmem:[#allocation2 + $0x187] sm:$0xff]
    %v3992 = vld [vmem:[#allocation2 + $0x18f] sm:$0xff]
    %v3993 = vld [vmem:[#allocation2 + $0x197] sm:$0xff]
    %v3994 = vld [vmem:[#allocation2 + $0x19f] sm:$0xff]
    %v3995 = vld [vmem:[#allocation2 + $0x1a7] sm:$0xff]
    %v3996 = vld [vmem:[#allocation2 + $0x1af] sm:$0xff]
    %v3997 = vld [vmem:[#allocation2 + $0x1b7] sm:$0xff]
    %v3998 = vld [vmem:[#allocation2 + $0x1bf] sm:$0xff]
    %v3999 = vld [vmem:[#allocation2 + $0x1c7] sm:$0xff]
    %v4000 = vld [vmem:[#allocation2 + $0x1cf] sm:$0xff]
    %v4001 = vld [vmem:[#allocation2 + $0x1d7] sm:$0xff]
    %v4002 = vld [vmem:[#allocation2 + $0x1df] sm:$0xff]
    %v4003 = vld [vmem:[#allocation2 + $0x1e7] sm:$0xff]
    %v4004 = vld [vmem:[#allocation2 + $0x1ef] sm:$0xff]
    %v4005 = vld [vmem:[#allocation2 + $0x1f7] sm:$0xff]
    %v4006 = vld [vmem:[#allocation2 + $0x1ff] sm:$0xff]
    %v4007 = vld [vmem:[#allocation2 + $0x207] sm:$0xff]
    %v4008 = vld [vmem:[#allocation2 + $0x20f] sm:$0xff]
    %v4009 = vld [vmem:[#allocation2 + $0x217] sm:$0xff]
    %v4010 = vld [vmem:[#allocation2 + $0x21f] sm:$0xff]
    %v4011 = vmul.f32 %v1180, %v1308
    %v4012 = vmul.f32 %v1181, %v1309
    %v4013 = vmul.f32 %v1182, %v1310
    %v4014 = vmul.f32 %v1183, %v1311
    %v4015 = vmul.f32 %v1184, %v1312
    %v4016 = vmul.f32 %v1185, %v1313
    %v4017 = vmul.f32 %v1186, %v1314
    %v4018 = vmul.f32 %v1187, %v1315
    %v4019 = vmul.f32 %v1188, %v1316
    %v4020 = vmul.f32 %v1189, %v1317
    %v4021 = vmul.f32 %v1190, %v1318
    %v4022 = vmul.f32 %v1191, %v1319
    %v4023 = vmul.f32 %v1192, %v1320
    %v4024 = vmul.f32 %v1193, %v1321
    %v4025 = vmul.f32 %v1194, %v1322
    %v4026 = vmul.f32 %v1195, %v1323
    %v4027 = vmul.f32 %v1196, %v1324
    %v4028 = vmul.f32 %v1197, %v1325
    %v4029 = vmul.f32 %v1198, %v1326
    %v4030 = vmul.f32 %v1199, %v1327
    %v4031 = vmul.f32 %v1200, %v1328
    %v4032 = vmul.f32 %v1201, %v1329
    %v4033 = vmul.f32 %v1202, %v1330
    %v4034 = vmul.f32 %v1203, %v1331
    %v4035 = vmul.f32 %v1204, %v1332
    %v4036 = vmul.f32 %v1205, %v1333
    %v4037 = vmul.f32 %v1206, %v1334
    %v4038 = vmul.f32 %v1207, %v1335
    %v4039 = vmul.f32 %v1208, %v1336
    %v4040 = vmul.f32 %v1209, %v1337
    %v4041 = vmul.f32 %v1210, %v1338
    %v4042 = vmul.f32 %v1211, %v1339
    %v4043 = vmul.f32 %v1212, %v1340
    %v4044 = vmul.f32 %v1213, %v1341
    %v4045 = vmul.f32 %v1214, %v1342
    %v4046 = vmul.f32 %v1215, %v1343
    %v4047 = vmul.f32 %v1216, %v1344
    %v4048 = vmul.f32 %v1217, %v1345
    %v4049 = vmul.f32 %v1218, %v1346
    %v4050 = vmul.f32 %v1219, %v1347
    %v4051 = vmul.f32 %v1220, %v1348
    %v4052 = vmul.f32 %v1221, %v1349
    %v4053 = vmul.f32 %v1222, %v1350
    %v4054 = vmul.f32 %v1223, %v1351
    %v4055 = vmul.f32 %v1224, %v1352
    %v4056 = vmul.f32 %v1225, %v1353
    %v4057 = vmul.f32 %v1226, %v1354
    %v4058 = vmul.f32 %v1227, %v1355
    %v4059 = vmul.f32 %v1228, %v1356
    %v4060 = vmul.f32 %v1229, %v1357
    %v4061 = vmul.f32 %v1230, %v1358
    %v4062 = vmul.f32 %v1231, %v1359
    %v4063 = vmul.f32 %v1232, %v1360
    %v4064 = vmul.f32 %v1233, %v1361
    %v4065 = vmul.f32 %v1234, %v1362
    %v4066 = vmul.f32 %v1235, %v1363
    %v4067 = vmul.f32 %v1236, %v1364
    %v4068 = vmul.f32 %v1237, %v1365
    %v4069 = vmul.f32 %v1238, %v1366
    %v4070 = vmul.f32 %v1239, %v1367
    %v4071 = vmul.f32 %v1240, %v1368
    %v4072 = vmul.f32 %v1241, %v1369
    %v4073 = vmul.f32 %v1242, %v1370
    %v4074 = vmul.f32 %v1243, %v1371
    %v4075 = vmul.f32 %v3947, %v4011
    %v4076 = vmul.f32 %v3948, %v4012
    %v4077 = vmul.f32 %v3949, %v4013
    %v4078 = vmul.f32 %v3950, %v4014
    %v4079 = vmul.f32 %v3951, %v4015
    %v4080 = vmul.f32 %v3952, %v4016
    %v4081 = vmul.f32 %v3953, %v4017
    %v4082 = vmul.f32 %v3954, %v4018
    %v4083 = vmul.f32 %v3955, %v4019
    %v4084 = vmul.f32 %v3956, %v4020
    %v4085 = vmul.f32 %v3957, %v4021
    %v4086 = vmul.f32 %v3958, %v4022
    %v4087 = vmul.f32 %v3959, %v4023
    %v4088 = vmul.f32 %v3960, %v4024
    %v4089 = vmul.f32 %v3961, %v4025
    %v4090 = vmul.f32 %v3962, %v4026
    %v4091 = vmul.f32 %v3963, %v4027
    %v4092 = vmul.f32 %v3964, %v4028
    %v4093 = vmul.f32 %v3965, %v4029
    %v4094 = vmul.f32 %v3966, %v4030
    %v4095 = vmul.f32 %v3967, %v4031
    %v4096 = vmul.f32 %v3968, %v4032
    %v4097 = vmul.f32 %v3969, %v4033
    %v4098 = vmul.f32 %v3970, %v4034
    %v4099 = vmul.f32 %v3971, %v4035
    %v4100 = vmul.f32 %v3972, %v4036
    %v4101 = vmul.f32 %v3973, %v4037
    %v4102 = vmul.f32 %v3974, %v4038
    %v4103 = vmul.f32 %v3975, %v4039
    %v4104 = vmul.f32 %v3976, %v4040
    %v4105 = vmul.f32 %v3977, %v4041
    %v4106 = vmul.f32 %v3978, %v4042
    %v4107 = vmul.f32 %v3979, %v4043
    %v4108 = vmul.f32 %v3980, %v4044
    %v4109 = vmul.f32 %v3981, %v4045
    %v4110 = vmul.f32 %v3982, %v4046
    %v4111 = vmul.f32 %v3983, %v4047
    %v4112 = vmul.f32 %v3984, %v4048
    %v4113 = vmul.f32 %v3985, %v4049
    %v4114 = vmul.f32 %v3986, %v4050
    %v4115 = vmul.f32 %v3987, %v4051
    %v4116 = vmul.f32 %v3988, %v4052
    %v4117 = vmul.f32 %v3989, %v4053
    %v4118 = vmul.f32 %v3990, %v4054
    %v4119 = vmul.f32 %v3991, %v4055
    %v4120 = vmul.f32 %v3992, %v4056
    %v4121 = vmul.f32 %v3993, %v4057
    %v4122 = vmul.f32 %v3994, %v4058
    %v4123 = vmul.f32 %v3995, %v4059
    %v4124 = vmul.f32 %v3996, %v4060
    %v4125 = vmul.f32 %v3997, %v4061
    %v4126 = vmul.f32 %v3998, %v4062
    %v4127 = vmul.f32 %v3999, %v4063
    %v4128 = vmul.f32 %v4000, %v4064
    %v4129 = vmul.f32 %v4001, %v4065
    %v4130 = vmul.f32 %v4002, %v4066
    %v4131 = vmul.f32 %v4003, %v4067
    %v4132 = vmul.f32 %v4004, %v4068
    %v4133 = vmul.f32 %v4005, %v4069
    %v4134 = vmul.f32 %v4006, %v4070
    %v4135 = vmul.f32 %v4007, %v4071
    %v4136 = vmul.f32 %v4008, %v4072
    %v4137 = vmul.f32 %v4009, %v4073
    %v4138 = vmul.f32 %v4010, %v4074
    %v4139 = vld [vmem:[#allocation2 + $0x28] sm:$0xff]
    %v4140 = vld [vmem:[#allocation2 + $0x30] sm:$0xff]
    %v4141 = vld [vmem:[#allocation2 + $0x38] sm:$0xff]
    %v4142 = vld [vmem:[#allocation2 + $0x40] sm:$0xff]
    %v4143 = vld [vmem:[#allocation2 + $0x48] sm:$0xff]
    %v4144 = vld [vmem:[#allocation2 + $0x50] sm:$0xff]
    %v4145 = vld [vmem:[#allocation2 + $0x58] sm:$0xff]
    %v4146 = vld [vmem:[#allocation2 + $0x60] sm:$0xff]
    %v4147 = vld [vmem:[#allocation2 + $0x68] sm:$0xff]
    %v4148 = vld [vmem:[#allocation2 + $0x70] sm:$0xff]
    %v4149 = vld [vmem:[#allocation2 + $0x78] sm:$0xff]
    %v4150 = vld [vmem:[#allocation2 + $0x80] sm:$0xff]
    %v4151 = vld [vmem:[#allocation2 + $0x88] sm:$0xff]
    %v4152 = vld [vmem:[#allocation2 + $0x90] sm:$0xff]
    %v4153 = vld [vmem:[#allocation2 + $0x98] sm:$0xff]
    %v4154 = vld [vmem:[#allocation2 + $0xa0] sm:$0xff]
    %v4155 = vld [vmem:[#allocation2 + $0xa8] sm:$0xff]
    %v4156 = vld [vmem:[#allocation2 + $0xb0] sm:$0xff]
    %v4157 = vld [vmem:[#allocation2 + $0xb8] sm:$0xff]
    %v4158 = vld [vmem:[#allocation2 + $0xc0] sm:$0xff]
    %v4159 = vld [vmem:[#allocation2 + $0xc8] sm:$0xff]
    %v4160 = vld [vmem:[#allocation2 + $0xd0] sm:$0xff]
    %v4161 = vld [vmem:[#allocation2 + $0xd8] sm:$0xff]
    %v4162 = vld [vmem:[#allocation2 + $0xe0] sm:$0xff]
    %v4163 = vld [vmem:[#allocation2 + $0xe8] sm:$0xff]
    %v4164 = vld [vmem:[#allocation2 + $0xf0] sm:$0xff]
    %v4165 = vld [vmem:[#allocation2 + $0xf8] sm:$0xff]
    %v4166 = vld [vmem:[#allocation2 + $0x100] sm:$0xff]
    %v4167 = vld [vmem:[#allocation2 + $0x108] sm:$0xff]
    %v4168 = vld [vmem:[#allocation2 + $0x110] sm:$0xff]
    %v4169 = vld [vmem:[#allocation2 + $0x118] sm:$0xff]
    %v4170 = vld [vmem:[#allocation2 + $0x120] sm:$0xff]
    %v4171 = vld [vmem:[#allocation2 + $0x128] sm:$0xff]
    %v4172 = vld [vmem:[#allocation2 + $0x130] sm:$0xff]
    %v4173 = vld [vmem:[#allocation2 + $0x138] sm:$0xff]
    %v4174 = vld [vmem:[#allocation2 + $0x140] sm:$0xff]
    %v4175 = vld [vmem:[#allocation2 + $0x148] sm:$0xff]
    %v4176 = vld [vmem:[#allocation2 + $0x150] sm:$0xff]
    %v4177 = vld [vmem:[#allocation2 + $0x158] sm:$0xff]
    %v4178 = vld [vmem:[#allocation2 + $0x160] sm:$0xff]
    %v4179 = vld [vmem:[#allocation2 + $0x168] sm:$0xff]
    %v4180 = vld [vmem:[#allocation2 + $0x170] sm:$0xff]
    %v4181 = vld [vmem:[#allocation2 + $0x178] sm:$0xff]
    %v4182 = vld [vmem:[#allocation2 + $0x180] sm:$0xff]
    %v4183 = vld [vmem:[#allocation2 + $0x188] sm:$0xff]
    %v4184 = vld [vmem:[#allocation2 + $0x190] sm:$0xff]
    %v4185 = vld [vmem:[#allocation2 + $0x198] sm:$0xff]
    %v4186 = vld [vmem:[#allocation2 + $0x1a0] sm:$0xff]
    %v4187 = vld [vmem:[#allocation2 + $0x1a8] sm:$0xff]
    %v4188 = vld [vmem:[#allocation2 + $0x1b0] sm:$0xff]
    %v4189 = vld [vmem:[#allocation2 + $0x1b8] sm:$0xff]
    %v4190 = vld [vmem:[#allocation2 + $0x1c0] sm:$0xff]
    %v4191 = vld [vmem:[#allocation2 + $0x1c8] sm:$0xff]
    %v4192 = vld [vmem:[#allocation2 + $0x1d0] sm:$0xff]
    %v4193 = vld [vmem:[#allocation2 + $0x1d8] sm:$0xff]
    %v4194 = vld [vmem:[#allocation2 + $0x1e0] sm:$0xff]
    %v4195 = vld [vmem:[#allocation2 + $0x1e8] sm:$0xff]
    %v4196 = vld [vmem:[#allocation2 + $0x1f0] sm:$0xff]
    %v4197 = vld [vmem:[#allocation2 + $0x1f8] sm:$0xff]
    %v4198 = vld [vmem:[#allocation2 + $0x200] sm:$0xff]
    %v4199 = vld [vmem:[#allocation2 + $0x208] sm:$0xff]
    %v4200 = vld [vmem:[#allocation2 + $0x210] sm:$0xff]
    %v4201 = vld [vmem:[#allocation2 + $0x218] sm:$0xff]
    %v4202 = vld [vmem:[#allocation2 + $0x220] sm:$0xff]
    %v4203 = vmul.f32 %v4139, %v1180
    %v4204 = vmul.f32 %v4140, %v1181
    %v4205 = vmul.f32 %v4141, %v1182
    %v4206 = vmul.f32 %v4142, %v1183
    %v4207 = vmul.f32 %v4143, %v1184
    %v4208 = vmul.f32 %v4144, %v1185
    %v4209 = vmul.f32 %v4145, %v1186
    %v4210 = vmul.f32 %v4146, %v1187
    %v4211 = vmul.f32 %v4147, %v1188
    %v4212 = vmul.f32 %v4148, %v1189
    %v4213 = vmul.f32 %v4149, %v1190
    %v4214 = vmul.f32 %v4150, %v1191
    %v4215 = vmul.f32 %v4151, %v1192
    %v4216 = vmul.f32 %v4152, %v1193
    %v4217 = vmul.f32 %v4153, %v1194
    %v4218 = vmul.f32 %v4154, %v1195
    %v4219 = vmul.f32 %v4155, %v1196
    %v4220 = vmul.f32 %v4156, %v1197
    %v4221 = vmul.f32 %v4157, %v1198
    %v4222 = vmul.f32 %v4158, %v1199
    %v4223 = vmul.f32 %v4159, %v1200
    %v4224 = vmul.f32 %v4160, %v1201
    %v4225 = vmul.f32 %v4161, %v1202
    %v4226 = vmul.f32 %v4162, %v1203
    %v4227 = vmul.f32 %v4163, %v1204
    %v4228 = vmul.f32 %v4164, %v1205
    %v4229 = vmul.f32 %v4165, %v1206
    %v4230 = vmul.f32 %v4166, %v1207
    %v4231 = vmul.f32 %v4167, %v1208
    %v4232 = vmul.f32 %v4168, %v1209
    %v4233 = vmul.f32 %v4169, %v1210
    %v4234 = vmul.f32 %v4170, %v1211
    %v4235 = vmul.f32 %v4171, %v1212
    %v4236 = vmul.f32 %v4172, %v1213
    %v4237 = vmul.f32 %v4173, %v1214
    %v4238 = vmul.f32 %v4174, %v1215
    %v4239 = vmul.f32 %v4175, %v1216
    %v4240 = vmul.f32 %v4176, %v1217
    %v4241 = vmul.f32 %v4177, %v1218
    %v4242 = vmul.f32 %v4178, %v1219
    %v4243 = vmul.f32 %v4179, %v1220
    %v4244 = vmul.f32 %v4180, %v1221
    %v4245 = vmul.f32 %v4181, %v1222
    %v4246 = vmul.f32 %v4182, %v1223
    %v4247 = vmul.f32 %v4183, %v1224
    %v4248 = vmul.f32 %v4184, %v1225
    %v4249 = vmul.f32 %v4185, %v1226
    %v4250 = vmul.f32 %v4186, %v1227
    %v4251 = vmul.f32 %v4187, %v1228
    %v4252 = vmul.f32 %v4188, %v1229
    %v4253 = vmul.f32 %v4189, %v1230
    %v4254 = vmul.f32 %v4190, %v1231
    %v4255 = vmul.f32 %v4191, %v1232
    %v4256 = vmul.f32 %v4192, %v1233
    %v4257 = vmul.f32 %v4193, %v1234
    %v4258 = vmul.f32 %v4194, %v1235
    %v4259 = vmul.f32 %v4195, %v1236
    %v4260 = vmul.f32 %v4196, %v1237
    %v4261 = vmul.f32 %v4197, %v1238
    %v4262 = vmul.f32 %v4198, %v1239
    %v4263 = vmul.f32 %v4199, %v1240
    %v4264 = vmul.f32 %v4200, %v1241
    %v4265 = vmul.f32 %v4201, %v1242
    %v4266 = vmul.f32 %v4202, %v1243
    %v4267 = vld [vmem:[#allocation2 + $0x29] sm:$0xff]
    %v4268 = vld [vmem:[#allocation2 + $0x31] sm:$0xff]
    %v4269 = vld [vmem:[#allocation2 + $0x39] sm:$0xff]
    %v4270 = vld [vmem:[#allocation2 + $0x41] sm:$0xff]
    %v4271 = vld [vmem:[#allocation2 + $0x49] sm:$0xff]
    %v4272 = vld [vmem:[#allocation2 + $0x51] sm:$0xff]
    %v4273 = vld [vmem:[#allocation2 + $0x59] sm:$0xff]
    %v4274 = vld [vmem:[#allocation2 + $0x61] sm:$0xff]
    %v4275 = vld [vmem:[#allocation2 + $0x69] sm:$0xff]
    %v4276 = vld [vmem:[#allocation2 + $0x71] sm:$0xff]
    %v4277 = vld [vmem:[#allocation2 + $0x79] sm:$0xff]
    %v4278 = vld [vmem:[#allocation2 + $0x81] sm:$0xff]
    %v4279 = vld [vmem:[#allocation2 + $0x89] sm:$0xff]
    %v4280 = vld [vmem:[#allocation2 + $0x91] sm:$0xff]
    %v4281 = vld [vmem:[#allocation2 + $0x99] sm:$0xff]
    %v4282 = vld [vmem:[#allocation2 + $0xa1] sm:$0xff]
    %v4283 = vld [vmem:[#allocation2 + $0xa9] sm:$0xff]
    %v4284 = vld [vmem:[#allocation2 + $0xb1] sm:$0xff]
    %v4285 = vld [vmem:[#allocation2 + $0xb9] sm:$0xff]
    %v4286 = vld [vmem:[#allocation2 + $0xc1] sm:$0xff]
    %v4287 = vld [vmem:[#allocation2 + $0xc9] sm:$0xff]
    %v4288 = vld [vmem:[#allocation2 + $0xd1] sm:$0xff]
    %v4289 = vld [vmem:[#allocation2 + $0xd9] sm:$0xff]
    %v4290 = vld [vmem:[#allocation2 + $0xe1] sm:$0xff]
    %v4291 = vld [vmem:[#allocation2 + $0xe9] sm:$0xff]
    %v4292 = vld [vmem:[#allocation2 + $0xf1] sm:$0xff]
    %v4293 = vld [vmem:[#allocation2 + $0xf9] sm:$0xff]
    %v4294 = vld [vmem:[#allocation2 + $0x101] sm:$0xff]
    %v4295 = vld [vmem:[#allocation2 + $0x109] sm:$0xff]
    %v4296 = vld [vmem:[#allocation2 + $0x111] sm:$0xff]
    %v4297 = vld [vmem:[#allocation2 + $0x119] sm:$0xff]
    %v4298 = vld [vmem:[#allocation2 + $0x121] sm:$0xff]
    %v4299 = vld [vmem:[#allocation2 + $0x129] sm:$0xff]
    %v4300 = vld [vmem:[#allocation2 + $0x131] sm:$0xff]
    %v4301 = vld [vmem:[#allocation2 + $0x139] sm:$0xff]
    %v4302 = vld [vmem:[#allocation2 + $0x141] sm:$0xff]
    %v4303 = vld [vmem:[#allocation2 + $0x149] sm:$0xff]
    %v4304 = vld [vmem:[#allocation2 + $0x151] sm:$0xff]
    %v4305 = vld [vmem:[#allocation2 + $0x159] sm:$0xff]
    %v4306 = vld [vmem:[#allocation2 + $0x161] sm:$0xff]
    %v4307 = vld [vmem:[#allocation2 + $0x169] sm:$0xff]
    %v4308 = vld [vmem:[#allocation2 + $0x171] sm:$0xff]
    %v4309 = vld [vmem:[#allocation2 + $0x179] sm:$0xff]
    %v4310 = vld [vmem:[#allocation2 + $0x181] sm:$0xff]
    %v4311 = vld [vmem:[#allocation2 + $0x189] sm:$0xff]
    %v4312 = vld [vmem:[#allocation2 + $0x191] sm:$0xff]
    %v4313 = vld [vmem:[#allocation2 + $0x199] sm:$0xff]
    %v4314 = vld [vmem:[#allocation2 + $0x1a1] sm:$0xff]
    %v4315 = vld [vmem:[#allocation2 + $0x1a9] sm:$0xff]
    %v4316 = vld [vmem:[#allocation2 + $0x1b1] sm:$0xff]
    %v4317 = vld [vmem:[#allocation2 + $0x1b9] sm:$0xff]
    %v4318 = vld [vmem:[#allocation2 + $0x1c1] sm:$0xff]
    %v4319 = vld [vmem:[#allocation2 + $0x1c9] sm:$0xff]
    %v4320 = vld [vmem:[#allocation2 + $0x1d1] sm:$0xff]
    %v4321 = vld [vmem:[#allocation2 + $0x1d9] sm:$0xff]
    %v4322 = vld [vmem:[#allocation2 + $0x1e1] sm:$0xff]
    %v4323 = vld [vmem:[#allocation2 + $0x1e9] sm:$0xff]
    %v4324 = vld [vmem:[#allocation2 + $0x1f1] sm:$0xff]
    %v4325 = vld [vmem:[#allocation2 + $0x1f9] sm:$0xff]
    %v4326 = vld [vmem:[#allocation2 + $0x201] sm:$0xff]
    %v4327 = vld [vmem:[#allocation2 + $0x209] sm:$0xff]
    %v4328 = vld [vmem:[#allocation2 + $0x211] sm:$0xff]
    %v4329 = vld [vmem:[#allocation2 + $0x219] sm:$0xff]
    %v4330 = vld [vmem:[#allocation2 + $0x221] sm:$0xff]
    %v4331 = vmul.f32 %v1180, %v1436
    %v4332 = vmul.f32 %v1181, %v1437
    %v4333 = vmul.f32 %v1182, %v1438
    %v4334 = vmul.f32 %v1183, %v1439
    %v4335 = vmul.f32 %v1184, %v1440
    %v4336 = vmul.f32 %v1185, %v1441
    %v4337 = vmul.f32 %v1186, %v1442
    %v4338 = vmul.f32 %v1187, %v1443
    %v4339 = vmul.f32 %v1188, %v1444
    %v4340 = vmul.f32 %v1189, %v1445
    %v4341 = vmul.f32 %v1190, %v1446
    %v4342 = vmul.f32 %v1191, %v1447
    %v4343 = vmul.f32 %v1192, %v1448
    %v4344 = vmul.f32 %v1193, %v1449
    %v4345 = vmul.f32 %v1194, %v1450
    %v4346 = vmul.f32 %v1195, %v1451
    %v4347 = vmul.f32 %v1196, %v1452
    %v4348 = vmul.f32 %v1197, %v1453
    %v4349 = vmul.f32 %v1198, %v1454
    %v4350 = vmul.f32 %v1199, %v1455
    %v4351 = vmul.f32 %v1200, %v1456
    %v4352 = vmul.f32 %v1201, %v1457
    %v4353 = vmul.f32 %v1202, %v1458
    %v4354 = vmul.f32 %v1203, %v1459
    %v4355 = vmul.f32 %v1204, %v1460
    %v4356 = vmul.f32 %v1205, %v1461
    %v4357 = vmul.f32 %v1206, %v1462
    %v4358 = vmul.f32 %v1207, %v1463
    %v4359 = vmul.f32 %v1208, %v1464
    %v4360 = vmul.f32 %v1209, %v1465
    %v4361 = vmul.f32 %v1210, %v1466
    %v4362 = vmul.f32 %v1211, %v1467
    %v4363 = vmul.f32 %v1212, %v1468
    %v4364 = vmul.f32 %v1213, %v1469
    %v4365 = vmul.f32 %v1214, %v1470
    %v4366 = vmul.f32 %v1215, %v1471
    %v4367 = vmul.f32 %v1216, %v1472
    %v4368 = vmul.f32 %v1217, %v1473
    %v4369 = vmul.f32 %v1218, %v1474
    %v4370 = vmul.f32 %v1219, %v1475
    %v4371 = vmul.f32 %v1220, %v1476
    %v4372 = vmul.f32 %v1221, %v1477
    %v4373 = vmul.f32 %v1222, %v1478
    %v4374 = vmul.f32 %v1223, %v1479
    %v4375 = vmul.f32 %v1224, %v1480
    %v4376 = vmul.f32 %v1225, %v1481
    %v4377 = vmul.f32 %v1226, %v1482
    %v4378 = vmul.f32 %v1227, %v1483
    %v4379 = vmul.f32 %v1228, %v1484
    %v4380 = vmul.f32 %v1229, %v1485
    %v4381 = vmul.f32 %v1230, %v1486
    %v4382 = vmul.f32 %v1231, %v1487
    %v4383 = vmul.f32 %v1232, %v1488
    %v4384 = vmul.f32 %v1233, %v1489
    %v4385 = vmul.f32 %v1234, %v1490
    %v4386 = vmul.f32 %v1235, %v1491
    %v4387 = vmul.f32 %v1236, %v1492
    %v4388 = vmul.f32 %v1237, %v1493
    %v4389 = vmul.f32 %v1238, %v1494
    %v4390 = vmul.f32 %v1239, %v1495
    %v4391 = vmul.f32 %v1240, %v1496
    %v4392 = vmul.f32 %v1241, %v1497
    %v4393 = vmul.f32 %v1242, %v1498
    %v4394 = vmul.f32 %v1243, %v1499
    %v4395 = vmul.f32 %v4267, %v4331
    %v4396 = vmul.f32 %v4268, %v4332
    %v4397 = vmul.f32 %v4269, %v4333
    %v4398 = vmul.f32 %v4270, %v4334
    %v4399 = vmul.f32 %v4271, %v4335
    %v4400 = vmul.f32 %v4272, %v4336
    %v4401 = vmul.f32 %v4273, %v4337
    %v4402 = vmul.f32 %v4274, %v4338
    %v4403 = vmul.f32 %v4275, %v4339
    %v4404 = vmul.f32 %v4276, %v4340
    %v4405 = vmul.f32 %v4277, %v4341
    %v4406 = vmul.f32 %v4278, %v4342
    %v4407 = vmul.f32 %v4279, %v4343
    %v4408 = vmul.f32 %v4280, %v4344
    %v4409 = vmul.f32 %v4281, %v4345
    %v4410 = vmul.f32 %v4282, %v4346
    %v4411 = vmul.f32 %v4283, %v4347
    %v4412 = vmul.f32 %v4284, %v4348
    %v4413 = vmul.f32 %v4285, %v4349
    %v4414 = vmul.f32 %v4286, %v4350
    %v4415 = vmul.f32 %v4287, %v4351
    %v4416 = vmul.f32 %v4288, %v4352
    %v4417 = vmul.f32 %v4289, %v4353
    %v4418 = vmul.f32 %v4290, %v4354
    %v4419 = vmul.f32 %v4291, %v4355
    %v4420 = vmul.f32 %v4292, %v4356
    %v4421 = vmul.f32 %v4293, %v4357
    %v4422 = vmul.f32 %v4294, %v4358
    %v4423 = vmul.f32 %v4295, %v4359
    %v4424 = vmul.f32 %v4296, %v4360
    %v4425 = vmul.f32 %v4297, %v4361
    %v4426 = vmul.f32 %v4298, %v4362
    %v4427 = vmul.f32 %v4299, %v4363
    %v4428 = vmul.f32 %v4300, %v4364
    %v4429 = vmul.f32 %v4301, %v4365
    %v4430 = vmul.f32 %v4302, %v4366
    %v4431 = vmul.f32 %v4303, %v4367
    %v4432 = vmul.f32 %v4304, %v4368
    %v4433 = vmul.f32 %v4305, %v4369
    %v4434 = vmul.f32 %v4306, %v4370
    %v4435 = vmul.f32 %v4307, %v4371
    %v4436 = vmul.f32 %v4308, %v4372
    %v4437 = vmul.f32 %v4309, %v4373
    %v4438 = vmul.f32 %v4310, %v4374
    %v4439 = vmul.f32 %v4311, %v4375
    %v4440 = vmul.f32 %v4312, %v4376
    %v4441 = vmul.f32 %v4313, %v4377
    %v4442 = vmul.f32 %v4314, %v4378
    %v4443 = vmul.f32 %v4315, %v4379
    %v4444 = vmul.f32 %v4316, %v4380
    %v4445 = vmul.f32 %v4317, %v4381
    %v4446 = vmul.f32 %v4318, %v4382
    %v4447 = vmul.f32 %v4319, %v4383
    %v4448 = vmul.f32 %v4320, %v4384
    %v4449 = vmul.f32 %v4321, %v4385
    %v4450 = vmul.f32 %v4322, %v4386
    %v4451 = vmul.f32 %v4323, %v4387
    %v4452 = vmul.f32 %v4324, %v4388
    %v4453 = vmul.f32 %v4325, %v4389
    %v4454 = vmul.f32 %v4326, %v4390
    %v4455 = vmul.f32 %v4327, %v4391
    %v4456 = vmul.f32 %v4328, %v4392
    %v4457 = vmul.f32 %v4329, %v4393
    %v4458 = vmul.f32 %v4330, %v4394
    %v4459 = vpack.c.bf16 %v4076, %v4075
    %v4460 = vpack.c.bf16 %v4204, %v4203
    %v4461 = vpack.c.bf16 %v4396, %v4395
    %v4462 = vpack.c.bf16 %v4078, %v4077
    %v4463 = vpack.c.bf16 %v4206, %v4205
    %v4464 = vpack.c.bf16 %v4398, %v4397
    %v4465 = vpack.c.bf16 %v4080, %v4079
    %v4466 = vpack.c.bf16 %v4208, %v4207
    %v4467 = vpack.c.bf16 %v4400, %v4399
    %v4468 = vpack.c.bf16 %v4082, %v4081
    %v4469 = vpack.c.bf16 %v4210, %v4209
    %v4470 = vpack.c.bf16 %v4402, %v4401
    %v4471 = vpack.c.bf16 %v4084, %v4083
    %v4472 = vpack.c.bf16 %v4212, %v4211
    %v4473 = vpack.c.bf16 %v4404, %v4403
    %v4474 = vpack.c.bf16 %v4086, %v4085
    %v4475 = vpack.c.bf16 %v4214, %v4213
    %v4476 = vpack.c.bf16 %v4406, %v4405
    %v4477 = vpack.c.bf16 %v4088, %v4087
    %v4478 = vpack.c.bf16 %v4216, %v4215
    %v4479 = vpack.c.bf16 %v4408, %v4407
    %v4480 = vpack.c.bf16 %v4090, %v4089
    %v4481 = vpack.c.bf16 %v4218, %v4217
    %v4482 = vpack.c.bf16 %v4410, %v4409
    %v4483 = vpack.c.bf16 %v4092, %v4091
    %v4484 = vpack.c.bf16 %v4220, %v4219
    %v4485 = vpack.c.bf16 %v4412, %v4411
    %v4486 = vpack.c.bf16 %v4094, %v4093
    %v4487 = vpack.c.bf16 %v4222, %v4221
    %v4488 = vpack.c.bf16 %v4414, %v4413
    %v4489 = vpack.c.bf16 %v4096, %v4095
    %v4490 = vpack.c.bf16 %v4224, %v4223
    %v4491 = vpack.c.bf16 %v4416, %v4415
    %v4492 = vpack.c.bf16 %v4098, %v4097
    %v4493 = vpack.c.bf16 %v4226, %v4225
    %v4494 = vpack.c.bf16 %v4418, %v4417
    %v4495 = vpack.c.bf16 %v4100, %v4099
    %v4496 = vpack.c.bf16 %v4228, %v4227
    %v4497 = vpack.c.bf16 %v4420, %v4419
    %v4498 = vpack.c.bf16 %v4102, %v4101
    %v4499 = vpack.c.bf16 %v4230, %v4229
    %v4500 = vpack.c.bf16 %v4422, %v4421
    %v4501 = vpack.c.bf16 %v4104, %v4103
    %v4502 = vpack.c.bf16 %v4232, %v4231
    %v4503 = vpack.c.bf16 %v4424, %v4423
    %v4504 = vpack.c.bf16 %v4106, %v4105
    %v4505 = vpack.c.bf16 %v4234, %v4233
    %v4506 = vpack.c.bf16 %v4426, %v4425
    %v4507 = vpack.c.bf16 %v4108, %v4107
    %v4508 = vpack.c.bf16 %v4236, %v4235
    %v4509 = vpack.c.bf16 %v4428, %v4427
    %v4510 = vpack.c.bf16 %v4110, %v4109
    %v4511 = vpack.c.bf16 %v4238, %v4237
    %v4512 = vpack.c.bf16 %v4430, %v4429
    %v4513 = vpack.c.bf16 %v4112, %v4111
    %v4514 = vpack.c.bf16 %v4240, %v4239
    %v4515 = vpack.c.bf16 %v4432, %v4431
    %v4516 = vpack.c.bf16 %v4114, %v4113
    %v4517 = vpack.c.bf16 %v4242, %v4241
    %v4518 = vpack.c.bf16 %v4434, %v4433
    %v4519 = vpack.c.bf16 %v4116, %v4115
    %v4520 = vpack.c.bf16 %v4244, %v4243
    %v4521 = vpack.c.bf16 %v4436, %v4435
    %v4522 = vpack.c.bf16 %v4118, %v4117
    %v4523 = vpack.c.bf16 %v4246, %v4245
    %v4524 = vpack.c.bf16 %v4438, %v4437
    %v4525 = vpack.c.bf16 %v4120, %v4119
    %v4526 = vpack.c.bf16 %v4248, %v4247
    %v4527 = vpack.c.bf16 %v4440, %v4439
    %v4528 = vpack.c.bf16 %v4122, %v4121
    %v4529 = vpack.c.bf16 %v4250, %v4249
    %v4530 = vpack.c.bf16 %v4442, %v4441
    %v4531 = vpack.c.bf16 %v4124, %v4123
    %v4532 = vpack.c.bf16 %v4252, %v4251
    %v4533 = vpack.c.bf16 %v4444, %v4443
    %v4534 = vpack.c.bf16 %v4126, %v4125
    %v4535 = vpack.c.bf16 %v4254, %v4253
    %v4536 = vpack.c.bf16 %v4446, %v4445
    %v4537 = vpack.c.bf16 %v4128, %v4127
    %v4538 = vpack.c.bf16 %v4256, %v4255
    %v4539 = vpack.c.bf16 %v4448, %v4447
    %v4540 = vpack.c.bf16 %v4130, %v4129
    %v4541 = vpack.c.bf16 %v4258, %v4257
    %v4542 = vpack.c.bf16 %v4450, %v4449
    %v4543 = vpack.c.bf16 %v4132, %v4131
    %v4544 = vpack.c.bf16 %v4260, %v4259
    %v4545 = vpack.c.bf16 %v4452, %v4451
    %v4546 = vpack.c.bf16 %v4134, %v4133
    %v4547 = vpack.c.bf16 %v4262, %v4261
    %v4548 = vpack.c.bf16 %v4454, %v4453
    %v4549 = vpack.c.bf16 %v4136, %v4135
    %v4550 = vpack.c.bf16 %v4264, %v4263
    %v4551 = vpack.c.bf16 %v4456, %v4455
    %v4552 = vpack.c.bf16 %v4138, %v4137
    %v4553 = vpack.c.bf16 %v4266, %v4265
    %v4554 = vpack.c.bf16 %v4458, %v4457
    %s4555 = scalar_lea.vmem [#allocation3], 384
    %v4556 = vld [vmem:[%s4555] sm:$0xf]
    %v4557 = vld [vmem:[%s4555 + $0x4] sm:$0xf]
    %v4558 = vld [vmem:[%s4555 + $0x8] sm:$0xf]
    %v4559 = vld [vmem:[%s4555 + $0xc] sm:$0xf]
    %v4560 = vld [vmem:[%s4555 + $0x10] sm:$0xf]
    %v4561 = vld [vmem:[%s4555 + $0x14] sm:$0xf]
    %v4562 = vld [vmem:[%s4555 + $0x18] sm:$0xf]
    %v4563 = vld [vmem:[%s4555 + $0x1c] sm:$0xf]
    %v4564 = vld [vmem:[%s4555 + $0x20] sm:$0xf]
    %v4565 = vld [vmem:[%s4555 + $0x24] sm:$0xf]
    %v4566 = vld [vmem:[%s4555 + $0x28] sm:$0xf]
    %v4567 = vld [vmem:[%s4555 + $0x2c] sm:$0xf]
    %v4568 = vld [vmem:[%s4555 + $0x30] sm:$0xf]
    %v4569 = vld [vmem:[%s4555 + $0x34] sm:$0xf]
    %v4570 = vld [vmem:[%s4555 + $0x38] sm:$0xf]
    %v4571 = vld [vmem:[%s4555 + $0x3c] sm:$0xf]
    %v4572 = vld [vmem:[%s4555 + $0x40] sm:$0xf]
    %v4573 = vld [vmem:[%s4555 + $0x44] sm:$0xf]
    %v4574 = vld [vmem:[%s4555 + $0x48] sm:$0xf]
    %v4575 = vld [vmem:[%s4555 + $0x4c] sm:$0xf]
    %v4576 = vld [vmem:[%s4555 + $0x50] sm:$0xf]
    %v4577 = vld [vmem:[%s4555 + $0x54] sm:$0xf]
    %v4578 = vld [vmem:[%s4555 + $0x58] sm:$0xf]
    %v4579 = vld [vmem:[%s4555 + $0x5c] sm:$0xf]
    %v4580 = vld [vmem:[%s4555 + $0x60] sm:$0xf]
    %v4581 = vld [vmem:[%s4555 + $0x64] sm:$0xf]
    %v4582 = vld [vmem:[%s4555 + $0x68] sm:$0xf]
    %v4583 = vld [vmem:[%s4555 + $0x6c] sm:$0xf]
    %v4584 = vld [vmem:[%s4555 + $0x70] sm:$0xf]
    %v4585 = vld [vmem:[%s4555 + $0x74] sm:$0xf]
    %v4586 = vld [vmem:[%s4555 + $0x78] sm:$0xf]
    %v4587 = vld [vmem:[%s4555 + $0x7c] sm:$0xf]
    %v4588 = vld [vmem:[%s4555 + $0x80] sm:$0xf]
    %v4589 = vld [vmem:[%s4555 + $0x84] sm:$0xf]
    %v4590 = vld [vmem:[%s4555 + $0x88] sm:$0xf]
    %v4591 = vld [vmem:[%s4555 + $0x8c] sm:$0xf]
    %v4592 = vld [vmem:[%s4555 + $0x90] sm:$0xf]
    %v4593 = vld [vmem:[%s4555 + $0x94] sm:$0xf]
    %v4594 = vld [vmem:[%s4555 + $0x98] sm:$0xf]
    %v4595 = vld [vmem:[%s4555 + $0x9c] sm:$0xf]
    %v4596 = vld [vmem:[%s4555 + $0xa0] sm:$0xf]
    %v4597 = vld [vmem:[%s4555 + $0xa4] sm:$0xf]
    %v4598 = vld [vmem:[%s4555 + $0xa8] sm:$0xf]
    %v4599 = vld [vmem:[%s4555 + $0xac] sm:$0xf]
    %v4600 = vld [vmem:[%s4555 + $0xb0] sm:$0xf]
    %v4601 = vld [vmem:[%s4555 + $0xb4] sm:$0xf]
    %v4602 = vld [vmem:[%s4555 + $0xb8] sm:$0xf]
    %v4603 = vld [vmem:[%s4555 + $0xbc] sm:$0xf]
    %v4652 = vunpack.c.l.b16 %v4556
    %v4653 = vunpack.c.l.b16 %v4557
    %v4654 = vunpack.c.l.b16 %v4558
    %v4655 = vunpack.c.l.b16 %v4559
    %v4656 = vunpack.c.l.b16 %v4560
    %v4657 = vunpack.c.l.b16 %v4561
    %v4658 = vunpack.c.l.b16 %v4562
    %v4659 = vunpack.c.l.b16 %v4563
    %v4660 = vunpack.c.l.b16 %v4564
    %v4661 = vunpack.c.l.b16 %v4565
    %v4662 = vunpack.c.l.b16 %v4566
    %v4663 = vunpack.c.l.b16 %v4567
    %v4664 = vunpack.c.l.b16 %v4568
    %v4665 = vunpack.c.l.b16 %v4569
    %v4666 = vunpack.c.l.b16 %v4570
    %v4667 = vunpack.c.l.b16 %v4571
    %v4668 = vunpack.c.l.b16 %v4572
    %v4669 = vunpack.c.l.b16 %v4573
    %v4670 = vunpack.c.l.b16 %v4574
    %v4671 = vunpack.c.l.b16 %v4575
    %v4672 = vunpack.c.l.b16 %v4576
    %v4673 = vunpack.c.l.b16 %v4577
    %v4674 = vunpack.c.l.b16 %v4578
    %v4675 = vunpack.c.l.b16 %v4579
    %v4676 = vunpack.c.l.b16 %v4580
    %v4677 = vunpack.c.l.b16 %v4581
    %v4678 = vunpack.c.l.b16 %v4582
    %v4679 = vunpack.c.l.b16 %v4583
    %v4680 = vunpack.c.l.b16 %v4584
    %v4681 = vunpack.c.l.b16 %v4585
    %v4682 = vunpack.c.l.b16 %v4586
    %v4683 = vunpack.c.l.b16 %v4587
    %v4684 = vunpack.c.l.b16 %v4588
    %v4685 = vunpack.c.l.b16 %v4589
    %v4686 = vunpack.c.l.b16 %v4590
    %v4687 = vunpack.c.l.b16 %v4591
    %v4688 = vunpack.c.l.b16 %v4592
    %v4689 = vunpack.c.l.b16 %v4593
    %v4690 = vunpack.c.l.b16 %v4594
    %v4691 = vunpack.c.l.b16 %v4595
    %v4692 = vunpack.c.l.b16 %v4596
    %v4693 = vunpack.c.l.b16 %v4597
    %v4694 = vunpack.c.l.b16 %v4598
    %v4695 = vunpack.c.l.b16 %v4599
    %v4696 = vunpack.c.l.b16 %v4600
    %v4697 = vunpack.c.l.b16 %v4601
    %v4698 = vunpack.c.l.b16 %v4602
    %v4699 = vunpack.c.l.b16 %v4603
    %v4700 = vpack.c.b16 %v4653, %v4652
    %v4701 = vpack.c.b16 %v4655, %v4654
    %v4702 = vpack.c.b16 %v4657, %v4656
    %v4703 = vpack.c.b16 %v4659, %v4658
    %v4704 = vpack.c.b16 %v4661, %v4660
    %v4705 = vpack.c.b16 %v4663, %v4662
    %v4706 = vpack.c.b16 %v4665, %v4664
    %v4707 = vpack.c.b16 %v4667, %v4666
    %v4708 = vpack.c.b16 %v4669, %v4668
    %v4709 = vpack.c.b16 %v4671, %v4670
    %v4710 = vpack.c.b16 %v4673, %v4672
    %v4711 = vpack.c.b16 %v4675, %v4674
    %v4712 = vpack.c.b16 %v4677, %v4676
    %v4713 = vpack.c.b16 %v4679, %v4678
    %v4714 = vpack.c.b16 %v4681, %v4680
    %v4715 = vpack.c.b16 %v4683, %v4682
    %v4716 = vpack.c.b16 %v4685, %v4684
    %v4717 = vpack.c.b16 %v4687, %v4686
    %v4718 = vpack.c.b16 %v4689, %v4688
    %v4719 = vpack.c.b16 %v4691, %v4690
    %v4720 = vpack.c.b16 %v4693, %v4692
    %v4721 = vpack.c.b16 %v4695, %v4694
    %v4722 = vpack.c.b16 %v4697, %v4696
    %v4723 = vpack.c.b16 %v4699, %v4698
    %4748 = vmatprep.subr.bf16.mxu0 0
    %4749 = vmatpush1.bf16.msra.mxu0 %v4700
    %4750 = vmatprep.subr.bf16.mxu0 0
    %4751 = vmatpush1.bf16.msra.mxu0 %v4701
    %4752 = vmatprep.subr.bf16.mxu0 0
    %4753 = vmatpush1.bf16.msra.mxu0 %v4702
    %4754 = vmatprep.subr.bf16.mxu0 0
    %4755 = vmatpush1.bf16.msra.mxu0 %v4703
    %4756 = vmatprep.subr.bf16.mxu0 0
    %4757 = vmatpush1.bf16.msra.mxu0 %v4704
    %4758 = vmatprep.subr.bf16.mxu0 0
    %4759 = vmatpush1.bf16.msra.mxu0 %v4705
    %4760 = vmatprep.subr.bf16.mxu0 0
    %4761 = vmatpush1.bf16.msra.mxu0 %v4706
    %4762 = vmatprep.subr.bf16.mxu0 0
    %4763 = vmatpush1.bf16.msra.mxu0 %v4707
    %4764 = vmatprep.subr.bf16.mxu0 0
    %4765 = vmatpush1.bf16.msra.mxu0 %v4708
    %4766 = vmatprep.subr.bf16.mxu0 0
    %4767 = vmatpush1.bf16.msra.mxu0 %v4709
    %4768 = vmatprep.subr.bf16.mxu0 0
    %4769 = vmatpush1.bf16.msra.mxu0 %v4710
    %4770 = vmatprep.subr.bf16.mxu0 0
    %4771 = vmatpush1.bf16.msra.mxu0 %v4711
    %4772 = vmatprep.subr.bf16.mxu0 0
    %4773 = vmatpush1.bf16.msra.mxu0 %v4712
    %4774 = vmatprep.subr.bf16.mxu0 0
    %4775 = vmatpush1.bf16.msra.mxu0 %v4713
    %4776 = vmatprep.subr.bf16.mxu0 0
    %4777 = vmatpush1.bf16.msra.mxu0 %v4714
    %4778 = vmatprep.subr.bf16.mxu0 0
    %4779 = vmatpush1.bf16.msra.mxu0 %v4715
    %4780 = vmatprep.mubr.bf16.mxu0 %v4460
    %4781 = vmatmul.mubr.bf16.gmra.mrb[0].mxu0 %v4459
    %v4782 = vpop.f32.mrb[0].mxu0
    %v4783 = vadd.f32 0.0, %v4782
    %v4784 = vpop.f32.mrb[0].mxu0
    %v4785 = vpop.f32.mrb[0].mxu0
    %v4786 = vadd.f32 0.0, %v4785
    %v4787 = vpop.f32.mrb[0].mxu0
    %4788 = vmatprep.mubr.bf16.mxu0 %v4463
    %4789 = vmatmul.mubr.bf16.gmra.mrb[0].mxu0 %v4462
    %v4790 = vpop.f32.mrb[0].mxu0
    %v4791 = vadd.f32 0.0, %v4790
    %v4792 = vpop.f32.mrb[0].mxu0
    %v4793 = vpop.f32.mrb[0].mxu0
    %v4794 = vadd.f32 0.0, %v4793
    %v4795 = vpop.f32.mrb[0].mxu0
    %4796 = vmatprep.mubr.bf16.mxu0 %v4466
    %4797 = vmatmul.mubr.bf16.gmra.mrb[0].mxu0 %v4465
    %v4798 = vpop.f32.mrb[0].mxu0
    %v4799 = vadd.f32 0.0, %v4798
    %v4800 = vpop.f32.mrb[0].mxu0
    %v4801 = vpop.f32.mrb[0].mxu0
    %v4802 = vadd.f32 0.0, %v4801
    %v4803 = vpop.f32.mrb[0].mxu0
    %4804 = vmatprep.mubr.bf16.mxu0 %v4469
    %4805 = vmatmul.mubr.bf16.gmra.mrb[0].mxu0 %v4468
    %v4806 = vpop.f32.mrb[0].mxu0
    %v4807 = vadd.f32 0.0, %v4806
    %v4808 = vpop.f32.mrb[0].mxu0
    %v4809 = vpop.f32.mrb[0].mxu0
    %v4810 = vadd.f32 0.0, %v4809
    %v4811 = vpop.f32.mrb[0].mxu0
    %4812 = vmatprep.mubr.bf16.mxu0 %v4472
    %4813 = vmatmul.mubr.bf16.gmra.mrb[0].mxu0 %v4471
    %v4814 = vpop.f32.mrb[0].mxu0
    %v4815 = vadd.f32 0.0, %v4814
    %v4816 = vpop.f32.mrb[0].mxu0
    %v4817 = vpop.f32.mrb[0].mxu0
    %v4818 = vadd.f32 0.0, %v4817
    %v4819 = vpop.f32.mrb[0].mxu0
    %4820 = vmatprep.mubr.bf16.mxu0 %v4475
    %4821 = vmatmul.mubr.bf16.gmra.mrb[0].mxu0 %v4474
    %v4822 = vpop.f32.mrb[0].mxu0
    %v4823 = vadd.f32 0.0, %v4822
    %v4824 = vpop.f32.mrb[0].mxu0
    %v4825 = vpop.f32.mrb[0].mxu0
    %v4826 = vadd.f32 0.0, %v4825
    %v4827 = vpop.f32.mrb[0].mxu0
    %4828 = vmatprep.mubr.bf16.mxu0 %v4478
    %4829 = vmatmul.mubr.bf16.gmra.mrb[0].mxu0 %v4477
    %v4830 = vpop.f32.mrb[0].mxu0
    %v4831 = vadd.f32 0.0, %v4830
    %v4832 = vpop.f32.mrb[0].mxu0
    %v4833 = vpop.f32.mrb[0].mxu0
    %v4834 = vadd.f32 0.0, %v4833
    %v4835 = vpop.f32.mrb[0].mxu0
    %4836 = vmatprep.mubr.bf16.mxu0 %v4481
    %4837 = vmatmul.mubr.bf16.gmra.mrb[0].mxu0 %v4480
    %v4838 = vpop.f32.mrb[0].mxu0
    %v4839 = vadd.f32 0.0, %v4838
    %v4840 = vpop.f32.mrb[0].mxu0
    %v4841 = vpop.f32.mrb[0].mxu0
    %v4842 = vadd.f32 0.0, %v4841
    %v4843 = vpop.f32.mrb[0].mxu0
    %4844 = vmatprep.mubr.bf16.mxu0 %v4484
    %4845 = vmatmul.mubr.bf16.gmra.mrb[0].mxu0 %v4483
    %v4846 = vpop.f32.mrb[0].mxu0
    %v4847 = vadd.f32 0.0, %v4846
    %v4848 = vpop.f32.mrb[0].mxu0
    %v4849 = vpop.f32.mrb[0].mxu0
    %v4850 = vadd.f32 0.0, %v4849
    %v4851 = vpop.f32.mrb[0].mxu0
    %4852 = vmatprep.mubr.bf16.mxu0 %v4487
    %4853 = vmatmul.mubr.bf16.gmra.mrb[0].mxu0 %v4486
    %v4854 = vpop.f32.mrb[0].mxu0
    %v4855 = vadd.f32 0.0, %v4854
    %v4856 = vpop.f32.mrb[0].mxu0
    %v4857 = vpop.f32.mrb[0].mxu0
    %v4858 = vadd.f32 0.0, %v4857
    %v4859 = vpop.f32.mrb[0].mxu0
    %4860 = vmatprep.mubr.bf16.mxu0 %v4490
    %4861 = vmatmul.mubr.bf16.gmra.mrb[0].mxu0 %v4489
    %v4862 = vpop.f32.mrb[0].mxu0
    %v4863 = vadd.f32 0.0, %v4862
    %v4864 = vpop.f32.mrb[0].mxu0
    %v4865 = vpop.f32.mrb[0].mxu0
    %v4866 = vadd.f32 0.0, %v4865
    %v4867 = vpop.f32.mrb[0].mxu0
    %4868 = vmatprep.mubr.bf16.mxu0 %v4493
    %4869 = vmatmul.mubr.bf16.gmra.mrb[0].mxu0 %v4492
    %v4870 = vpop.f32.mrb[0].mxu0
    %v4871 = vadd.f32 0.0, %v4870
    %v4872 = vpop.f32.mrb[0].mxu0
    %v4873 = vpop.f32.mrb[0].mxu0
    %v4874 = vadd.f32 0.0, %v4873
    %v4875 = vpop.f32.mrb[0].mxu0
    %4876 = vmatprep.mubr.bf16.mxu0 %v4496
    %4877 = vmatmul.mubr.bf16.gmra.mrb[0].mxu0 %v4495
    %v4878 = vpop.f32.mrb[0].mxu0
    %v4879 = vadd.f32 0.0, %v4878
    %v4880 = vpop.f32.mrb[0].mxu0
    %v4881 = vpop.f32.mrb[0].mxu0
    %v4882 = vadd.f32 0.0, %v4881
    %v4883 = vpop.f32.mrb[0].mxu0
    %4884 = vmatprep.mubr.bf16.mxu0 %v4499
    %4885 = vmatmul.mubr.bf16.gmra.mrb[0].mxu0 %v4498
    %v4886 = vpop.f32.mrb[0].mxu0
    %v4887 = vadd.f32 0.0, %v4886
    %v4888 = vpop.f32.mrb[0].mxu0
    %v4889 = vpop.f32.mrb[0].mxu0
    %v4890 = vadd.f32 0.0, %v4889
    %v4891 = vpop.f32.mrb[0].mxu0
    %4892 = vmatprep.mubr.bf16.mxu0 %v4502
    %4893 = vmatmul.mubr.bf16.gmra.mrb[0].mxu0 %v4501
    %v4894 = vpop.f32.mrb[0].mxu0
    %v4895 = vadd.f32 0.0, %v4894
    %v4896 = vpop.f32.mrb[0].mxu0
    %v4897 = vpop.f32.mrb[0].mxu0
    %v4898 = vadd.f32 0.0, %v4897
    %v4899 = vpop.f32.mrb[0].mxu0
    %4900 = vmatprep.mubr.bf16.mxu0 %v4505
    %4901 = vmatmul.mubr.bf16.gmra.mrb[0].mxu0 %v4504
    %v4902 = vpop.f32.mrb[0].mxu0
    %v4903 = vadd.f32 0.0, %v4902
    %v4904 = vpop.f32.mrb[0].mxu0
    %v4905 = vpop.f32.mrb[0].mxu0
    %v4906 = vadd.f32 0.0, %v4905
    %v4907 = vpop.f32.mrb[0].mxu0
    %4908 = vmatprep.mubr.bf16.mxu0 %v4508
    %4909 = vmatmul.mubr.bf16.gmra.mrb[0].mxu0 %v4507
    %v4910 = vpop.f32.mrb[0].mxu0
    %v4911 = vadd.f32 0.0, %v4910
    %v4912 = vpop.f32.mrb[0].mxu0
    %v4913 = vpop.f32.mrb[0].mxu0
    %v4914 = vadd.f32 0.0, %v4913
    %v4915 = vpop.f32.mrb[0].mxu0
    %4916 = vmatprep.mubr.bf16.mxu0 %v4511
    %4917 = vmatmul.mubr.bf16.gmra.mrb[0].mxu0 %v4510
    %v4918 = vpop.f32.mrb[0].mxu0
    %v4919 = vadd.f32 0.0, %v4918
    %v4920 = vpop.f32.mrb[0].mxu0
    %v4921 = vpop.f32.mrb[0].mxu0
    %v4922 = vadd.f32 0.0, %v4921
    %v4923 = vpop.f32.mrb[0].mxu0
    %4924 = vmatprep.mubr.bf16.mxu0 %v4514
    %4925 = vmatmul.mubr.bf16.gmra.mrb[0].mxu0 %v4513
    %v4926 = vpop.f32.mrb[0].mxu0
    %v4927 = vadd.f32 0.0, %v4926
    %v4928 = vpop.f32.mrb[0].mxu0
    %v4929 = vpop.f32.mrb[0].mxu0
    %v4930 = vadd.f32 0.0, %v4929
    %v4931 = vpop.f32.mrb[0].mxu0
    %4932 = vmatprep.mubr.bf16.mxu0 %v4517
    %4933 = vmatmul.mubr.bf16.gmra.mrb[0].mxu0 %v4516
    %v4934 = vpop.f32.mrb[0].mxu0
    %v4935 = vadd.f32 0.0, %v4934
    %v4936 = vpop.f32.mrb[0].mxu0
    %v4937 = vpop.f32.mrb[0].mxu0
    %v4938 = vadd.f32 0.0, %v4937
    %v4939 = vpop.f32.mrb[0].mxu0
    %4940 = vmatprep.mubr.bf16.mxu0 %v4520
    %4941 = vmatmul.mubr.bf16.gmra.mrb[0].mxu0 %v4519
    %v4942 = vpop.f32.mrb[0].mxu0
    %v4943 = vadd.f32 0.0, %v4942
    %v4944 = vpop.f32.mrb[0].mxu0
    %v4945 = vpop.f32.mrb[0].mxu0
    %v4946 = vadd.f32 0.0, %v4945
    %v4947 = vpop.f32.mrb[0].mxu0
    %4948 = vmatprep.mubr.bf16.mxu0 %v4523
    %4949 = vmatmul.mubr.bf16.gmra.mrb[0].mxu0 %v4522
    %v4950 = vpop.f32.mrb[0].mxu0
    %v4951 = vadd.f32 0.0, %v4950
    %v4952 = vpop.f32.mrb[0].mxu0
    %v4953 = vpop.f32.mrb[0].mxu0
    %v4954 = vadd.f32 0.0, %v4953
    %v4955 = vpop.f32.mrb[0].mxu0
    %4956 = vmatprep.mubr.bf16.mxu0 %v4526
    %4957 = vmatmul.mubr.bf16.gmra.mrb[0].mxu0 %v4525
    %v4958 = vpop.f32.mrb[0].mxu0
    %v4959 = vadd.f32 0.0, %v4958
    %v4960 = vpop.f32.mrb[0].mxu0
    %v4961 = vpop.f32.mrb[0].mxu0
    %v4962 = vadd.f32 0.0, %v4961
    %v4963 = vpop.f32.mrb[0].mxu0
    %4964 = vmatprep.mubr.bf16.mxu0 %v4529
    %4965 = vmatmul.mubr.bf16.gmra.mrb[0].mxu0 %v4528
    %v4966 = vpop.f32.mrb[0].mxu0
    %v4967 = vadd.f32 0.0, %v4966
    %v4968 = vpop.f32.mrb[0].mxu0
    %v4969 = vpop.f32.mrb[0].mxu0
    %v4970 = vadd.f32 0.0, %v4969
    %v4971 = vpop.f32.mrb[0].mxu0
    %4972 = vmatprep.mubr.bf16.mxu0 %v4532
    %4973 = vmatmul.mubr.bf16.gmra.mrb[0].mxu0 %v4531
    %v4974 = vpop.f32.mrb[0].mxu0
    %v4975 = vadd.f32 0.0, %v4974
    %v4976 = vpop.f32.mrb[0].mxu0
    %v4977 = vpop.f32.mrb[0].mxu0
    %v4978 = vadd.f32 0.0, %v4977
    %v4979 = vpop.f32.mrb[0].mxu0
    %4980 = vmatprep.mubr.bf16.mxu0 %v4535
    %4981 = vmatmul.mubr.bf16.gmra.mrb[0].mxu0 %v4534
    %v4982 = vpop.f32.mrb[0].mxu0
    %v4983 = vadd.f32 0.0, %v4982
    %v4984 = vpop.f32.mrb[0].mxu0
    %v4985 = vpop.f32.mrb[0].mxu0
    %v4986 = vadd.f32 0.0, %v4985
    %v4987 = vpop.f32.mrb[0].mxu0
    %4988 = vmatprep.mubr.bf16.mxu0 %v4538
    %4989 = vmatmul.mubr.bf16.gmra.mrb[0].mxu0 %v4537
    %v4990 = vpop.f32.mrb[0].mxu0
    %v4991 = vadd.f32 0.0, %v4990
    %v4992 = vpop.f32.mrb[0].mxu0
    %v4993 = vpop.f32.mrb[0].mxu0
    %v4994 = vadd.f32 0.0, %v4993
    %v4995 = vpop.f32.mrb[0].mxu0
    %4996 = vmatprep.mubr.bf16.mxu0 %v4541
    %4997 = vmatmul.mubr.bf16.gmra.mrb[0].mxu0 %v4540
    %v4998 = vpop.f32.mrb[0].mxu0
    %v4999 = vadd.f32 0.0, %v4998
    %v5000 = vpop.f32.mrb[0].mxu0
    %v5001 = vpop.f32.mrb[0].mxu0
    %v5002 = vadd.f32 0.0, %v5001
    %v5003 = vpop.f32.mrb[0].mxu0
    %5004 = vmatprep.mubr.bf16.mxu0 %v4544
    %5005 = vmatmul.mubr.bf16.gmra.mrb[0].mxu0 %v4543
    %v5006 = vpop.f32.mrb[0].mxu0
    %v5007 = vadd.f32 0.0, %v5006
    %v5008 = vpop.f32.mrb[0].mxu0
    %v5009 = vpop.f32.mrb[0].mxu0
    %v5010 = vadd.f32 0.0, %v5009
    %v5011 = vpop.f32.mrb[0].mxu0
    %5012 = vmatprep.mubr.bf16.mxu0 %v4547
    %5013 = vmatmul.mubr.bf16.gmra.mrb[0].mxu0 %v4546
    %v5014 = vpop.f32.mrb[0].mxu0
    %v5015 = vadd.f32 0.0, %v5014
    %v5016 = vpop.f32.mrb[0].mxu0
    %v5017 = vpop.f32.mrb[0].mxu0
    %v5018 = vadd.f32 0.0, %v5017
    %v5019 = vpop.f32.mrb[0].mxu0
    %5020 = vmatprep.mubr.bf16.mxu0 %v4550
    %5021 = vmatmul.mubr.bf16.gmra.mrb[0].mxu0 %v4549
    %v5022 = vpop.f32.mrb[0].mxu0
    %v5023 = vadd.f32 0.0, %v5022
    %v5024 = vpop.f32.mrb[0].mxu0
    %v5025 = vpop.f32.mrb[0].mxu0
    %v5026 = vadd.f32 0.0, %v5025
    %v5027 = vpop.f32.mrb[0].mxu0
    %5028 = vmatprep.mubr.bf16.mxu0 %v4553
    %5029 = vmatmul.mubr.bf16.gmra.mrb[0].mxu0 %v4552
    %v5030 = vpop.f32.mrb[0].mxu0
    %v5031 = vadd.f32 0.0, %v5030
    %v5032 = vpop.f32.mrb[0].mxu0
    %v5033 = vpop.f32.mrb[0].mxu0
    %v5034 = vadd.f32 0.0, %v5033
    %v5035 = vpop.f32.mrb[0].mxu0
    %5036 = vdwg.mxu0
    %5037 = vmatprep.subr.bf16.mxu0 0
    %5038 = vmatpush1.bf16.msra.mxu0 %v4716
    %5039 = vmatprep.subr.bf16.mxu0 0
    %5040 = vmatpush1.bf16.msra.mxu0 %v4717
    %5041 = vmatprep.subr.bf16.mxu0 0
    %5042 = vmatpush1.bf16.msra.mxu0 %v4718
    %5043 = vmatprep.subr.bf16.mxu0 0
    %5044 = vmatpush1.bf16.msra.mxu0 %v4719
    %5045 = vmatprep.subr.bf16.mxu0 0
    %5046 = vmatpush1.bf16.msra.mxu0 %v4720
    %5047 = vmatprep.subr.bf16.mxu0 0
    %5048 = vmatpush1.bf16.msra.mxu0 %v4721
    %5049 = vmatprep.subr.bf16.mxu0 0
    %5050 = vmatpush1.bf16.msra.mxu0 %v4722
    %5051 = vmatprep.subr.bf16.mxu0 0
    %5052 = vmatpush1.bf16.msra.mxu0 %v4723
    %5053 = vmatprep.subr.bf16.mxu0 0
    %5054 = vmatpush1.bf16.msra.mxu0 0
    %5055 = vmatprep.subr.bf16.mxu0 0
    %5056 = vmatpush1.bf16.msra.mxu0 0
    %5057 = vmatprep.subr.bf16.mxu0 0
    %5058 = vmatpush1.bf16.msra.mxu0 0
    %5059 = vmatprep.subr.bf16.mxu0 0
    %5060 = vmatpush1.bf16.msra.mxu0 0
    %5061 = vmatprep.subr.bf16.mxu0 0
    %5062 = vmatpush1.bf16.msra.mxu0 0
    %5063 = vmatprep.subr.bf16.mxu0 0
    %5064 = vmatpush1.bf16.msra.mxu0 0
    %5065 = vmatprep.subr.bf16.mxu0 0
    %5066 = vmatpush1.bf16.msra.mxu0 0
    %5067 = vmatprep.subr.bf16.mxu0 0
    %5068 = vmatpush1.bf16.msra.mxu0 0
    %5069 = vmatprep.mubr.bf16.mxu0 0
    %5070 = vmatmul.mubr.bf16.gmra.mrb[0].mxu0 %v4461
    %v5071 = vpop.f32.mrb[0].mxu0
    %v5072 = vadd.f32 %v4783, %v5071
    %v5073 = vpop.f32.mrb[0].mxu0
    %v5074 = vpop.f32.mrb[0].mxu0
    %v5075 = vadd.f32 %v4786, %v5074
    %v5076 = vpop.f32.mrb[0].mxu0
    %5077 = vmatprep.mubr.bf16.mxu0 0
    %5078 = vmatmul.mubr.bf16.gmra.mrb[0].mxu0 %v4464
    %v5079 = vpop.f32.mrb[0].mxu0
    %v5080 = vadd.f32 %v4791, %v5079
    %v5081 = vpop.f32.mrb[0].mxu0
    %v5082 = vpop.f32.mrb[0].mxu0
    %v5083 = vadd.f32 %v4794, %v5082
    %v5084 = vpop.f32.mrb[0].mxu0
    %5085 = vmatprep.mubr.bf16.mxu0 0
    %5086 = vmatmul.mubr.bf16.gmra.mrb[0].mxu0 %v4467
    %v5087 = vpop.f32.mrb[0].mxu0
    %v5088 = vadd.f32 %v4799, %v5087
    %v5089 = vpop.f32.mrb[0].mxu0
    %v5090 = vpop.f32.mrb[0].mxu0
    %v5091 = vadd.f32 %v4802, %v5090
    %v5092 = vpop.f32.mrb[0].mxu0
    %5093 = vmatprep.mubr.bf16.mxu0 0
    %5094 = vmatmul.mubr.bf16.gmra.mrb[0].mxu0 %v4470
    %v5095 = vpop.f32.mrb[0].mxu0
    %v5096 = vadd.f32 %v4807, %v5095
    %v5097 = vpop.f32.mrb[0].mxu0
    %v5098 = vpop.f32.mrb[0].mxu0
    %v5099 = vadd.f32 %v4810, %v5098
    %v5100 = vpop.f32.mrb[0].mxu0
    %5101 = vmatprep.mubr.bf16.mxu0 0
    %5102 = vmatmul.mubr.bf16.gmra.mrb[0].mxu0 %v4473
    %v5103 = vpop.f32.mrb[0].mxu0
    %v5104 = vadd.f32 %v4815, %v5103
    %v5105 = vpop.f32.mrb[0].mxu0
    %v5106 = vpop.f32.mrb[0].mxu0
    %v5107 = vadd.f32 %v4818, %v5106
    %v5108 = vpop.f32.mrb[0].mxu0
    %5109 = vmatprep.mubr.bf16.mxu0 0
    %5110 = vmatmul.mubr.bf16.gmra.mrb[0].mxu0 %v4476
    %v5111 = vpop.f32.mrb[0].mxu0
    %v5112 = vadd.f32 %v4823, %v5111
    %v5113 = vpop.f32.mrb[0].mxu0
    %v5114 = vpop.f32.mrb[0].mxu0
    %v5115 = vadd.f32 %v4826, %v5114
    %v5116 = vpop.f32.mrb[0].mxu0
    %5117 = vmatprep.mubr.bf16.mxu0 0
    %5118 = vmatmul.mubr.bf16.gmra.mrb[0].mxu0 %v4479
    %v5119 = vpop.f32.mrb[0].mxu0
    %v5120 = vadd.f32 %v4831, %v5119
    %v5121 = vpop.f32.mrb[0].mxu0
    %v5122 = vpop.f32.mrb[0].mxu0
    %v5123 = vadd.f32 %v4834, %v5122
    %v5124 = vpop.f32.mrb[0].mxu0
    %5125 = vmatprep.mubr.bf16.mxu0 0
    %5126 = vmatmul.mubr.bf16.gmra.mrb[0].mxu0 %v4482
    %v5127 = vpop.f32.mrb[0].mxu0
    %v5128 = vadd.f32 %v4839, %v5127
    %v5129 = vpop.f32.mrb[0].mxu0
    %v5130 = vpop.f32.mrb[0].mxu0
    %v5131 = vadd.f32 %v4842, %v5130
    %v5132 = vpop.f32.mrb[0].mxu0
    %5133 = vmatprep.mubr.bf16.mxu0 0
    %5134 = vmatmul.mubr.bf16.gmra.mrb[0].mxu0 %v4485
    %v5135 = vpop.f32.mrb[0].mxu0
    %v5136 = vadd.f32 %v4847, %v5135
    %v5137 = vpop.f32.mrb[0].mxu0
    %v5138 = vpop.f32.mrb[0].mxu0
    %v5139 = vadd.f32 %v4850, %v5138
    %v5140 = vpop.f32.mrb[0].mxu0
    %5141 = vmatprep.mubr.bf16.mxu0 0
    %5142 = vmatmul.mubr.bf16.gmra.mrb[0].mxu0 %v4488
    %v5143 = vpop.f32.mrb[0].mxu0
    %v5144 = vadd.f32 %v4855, %v5143
    %v5145 = vpop.f32.mrb[0].mxu0
    %v5146 = vpop.f32.mrb[0].mxu0
    %v5147 = vadd.f32 %v4858, %v5146
    %v5148 = vpop.f32.mrb[0].mxu0
    %5149 = vmatprep.mubr.bf16.mxu0 0
    %5150 = vmatmul.mubr.bf16.gmra.mrb[0].mxu0 %v4491
    %v5151 = vpop.f32.mrb[0].mxu0
    %v5152 = vadd.f32 %v4863, %v5151
    %v5153 = vpop.f32.mrb[0].mxu0
    %v5154 = vpop.f32.mrb[0].mxu0
    %v5155 = vadd.f32 %v4866, %v5154
    %v5156 = vpop.f32.mrb[0].mxu0
    %5157 = vmatprep.mubr.bf16.mxu0 0
    %5158 = vmatmul.mubr.bf16.gmra.mrb[0].mxu0 %v4494
    %v5159 = vpop.f32.mrb[0].mxu0
    %v5160 = vadd.f32 %v4871, %v5159
    %v5161 = vpop.f32.mrb[0].mxu0
    %v5162 = vpop.f32.mrb[0].mxu0
    %v5163 = vadd.f32 %v4874, %v5162
    %v5164 = vpop.f32.mrb[0].mxu0
    %5165 = vmatprep.mubr.bf16.mxu0 0
    %5166 = vmatmul.mubr.bf16.gmra.mrb[0].mxu0 %v4497
    %v5167 = vpop.f32.mrb[0].mxu0
    %v5168 = vadd.f32 %v4879, %v5167
    %v5169 = vpop.f32.mrb[0].mxu0
    %v5170 = vpop.f32.mrb[0].mxu0
    %v5171 = vadd.f32 %v4882, %v5170
    %v5172 = vpop.f32.mrb[0].mxu0
    %5173 = vmatprep.mubr.bf16.mxu0 0
    %5174 = vmatmul.mubr.bf16.gmra.mrb[0].mxu0 %v4500
    %v5175 = vpop.f32.mrb[0].mxu0
    %v5176 = vadd.f32 %v4887, %v5175
    %v5177 = vpop.f32.mrb[0].mxu0
    %v5178 = vpop.f32.mrb[0].mxu0
    %v5179 = vadd.f32 %v4890, %v5178
    %v5180 = vpop.f32.mrb[0].mxu0
    %5181 = vmatprep.mubr.bf16.mxu0 0
    %5182 = vmatmul.mubr.bf16.gmra.mrb[0].mxu0 %v4503
    %v5183 = vpop.f32.mrb[0].mxu0
    %v5184 = vadd.f32 %v4895, %v5183
    %v5185 = vpop.f32.mrb[0].mxu0
    %v5186 = vpop.f32.mrb[0].mxu0
    %v5187 = vadd.f32 %v4898, %v5186
    %v5188 = vpop.f32.mrb[0].mxu0
    %5189 = vmatprep.mubr.bf16.mxu0 0
    %5190 = vmatmul.mubr.bf16.gmra.mrb[0].mxu0 %v4506
    %v5191 = vpop.f32.mrb[0].mxu0
    %v5192 = vadd.f32 %v4903, %v5191
    %v5193 = vpop.f32.mrb[0].mxu0
    %v5194 = vpop.f32.mrb[0].mxu0
    %v5195 = vadd.f32 %v4906, %v5194
    %v5196 = vpop.f32.mrb[0].mxu0
    %5197 = vmatprep.mubr.bf16.mxu0 0
    %5198 = vmatmul.mubr.bf16.gmra.mrb[0].mxu0 %v4509
    %v5199 = vpop.f32.mrb[0].mxu0
    %v5200 = vadd.f32 %v4911, %v5199
    %v5201 = vpop.f32.mrb[0].mxu0
    %v5202 = vpop.f32.mrb[0].mxu0
    %v5203 = vadd.f32 %v4914, %v5202
    %v5204 = vpop.f32.mrb[0].mxu0
    %5205 = vmatprep.mubr.bf16.mxu0 0
    %5206 = vmatmul.mubr.bf16.gmra.mrb[0].mxu0 %v4512
    %v5207 = vpop.f32.mrb[0].mxu0
    %v5208 = vadd.f32 %v4919, %v5207
    %v5209 = vpop.f32.mrb[0].mxu0
    %v5210 = vpop.f32.mrb[0].mxu0
    %v5211 = vadd.f32 %v4922, %v5210
    %v5212 = vpop.f32.mrb[0].mxu0
    %5213 = vmatprep.mubr.bf16.mxu0 0
    %5214 = vmatmul.mubr.bf16.gmra.mrb[0].mxu0 %v4515
    %v5215 = vpop.f32.mrb[0].mxu0
    %v5216 = vadd.f32 %v4927, %v5215
    %v5217 = vpop.f32.mrb[0].mxu0
    %v5218 = vpop.f32.mrb[0].mxu0
    %v5219 = vadd.f32 %v4930, %v5218
    %v5220 = vpop.f32.mrb[0].mxu0
    %5221 = vmatprep.mubr.bf16.mxu0 0
    %5222 = vmatmul.mubr.bf16.gmra.mrb[0].mxu0 %v4518
    %v5223 = vpop.f32.mrb[0].mxu0
    %v5224 = vadd.f32 %v4935, %v5223
    %v5225 = vpop.f32.mrb[0].mxu0
    %v5226 = vpop.f32.mrb[0].mxu0
    %v5227 = vadd.f32 %v4938, %v5226
    %v5228 = vpop.f32.mrb[0].mxu0
    %5229 = vmatprep.mubr.bf16.mxu0 0
    %5230 = vmatmul.mubr.bf16.gmra.mrb[0].mxu0 %v4521
    %v5231 = vpop.f32.mrb[0].mxu0
    %v5232 = vadd.f32 %v4943, %v5231
    %v5233 = vpop.f32.mrb[0].mxu0
    %v5234 = vpop.f32.mrb[0].mxu0
    %v5235 = vadd.f32 %v4946, %v5234
    %v5236 = vpop.f32.mrb[0].mxu0
    %5237 = vmatprep.mubr.bf16.mxu0 0
    %5238 = vmatmul.mubr.bf16.gmra.mrb[0].mxu0 %v4524
    %v5239 = vpop.f32.mrb[0].mxu0
    %v5240 = vadd.f32 %v4951, %v5239
    %v5241 = vpop.f32.mrb[0].mxu0
    %v5242 = vpop.f32.mrb[0].mxu0
    %v5243 = vadd.f32 %v4954, %v5242
    %v5244 = vpop.f32.mrb[0].mxu0
    %5245 = vmatprep.mubr.bf16.mxu0 0
    %5246 = vmatmul.mubr.bf16.gmra.mrb[0].mxu0 %v4527
    %v5247 = vpop.f32.mrb[0].mxu0
    %v5248 = vadd.f32 %v4959, %v5247
    %v5249 = vpop.f32.mrb[0].mxu0
    %v5250 = vpop.f32.mrb[0].mxu0
    %v5251 = vadd.f32 %v4962, %v5250
    %v5252 = vpop.f32.mrb[0].mxu0
    %5253 = vmatprep.mubr.bf16.mxu0 0
    %5254 = vmatmul.mubr.bf16.gmra.mrb[0].mxu0 %v4530
    %v5255 = vpop.f32.mrb[0].mxu0
    %v5256 = vadd.f32 %v4967, %v5255
    %v5257 = vpop.f32.mrb[0].mxu0
    %v5258 = vpop.f32.mrb[0].mxu0
    %v5259 = vadd.f32 %v4970, %v5258
    %v5260 = vpop.f32.mrb[0].mxu0
    %5261 = vmatprep.mubr.bf16.mxu0 0
    %5262 = vmatmul.mubr.bf16.gmra.mrb[0].mxu0 %v4533
    %v5263 = vpop.f32.mrb[0].mxu0
    %v5264 = vadd.f32 %v4975, %v5263
    %v5265 = vpop.f32.mrb[0].mxu0
    %v5266 = vpop.f32.mrb[0].mxu0
    %v5267 = vadd.f32 %v4978, %v5266
    %v5268 = vpop.f32.mrb[0].mxu0
    %5269 = vmatprep.mubr.bf16.mxu0 0
    %5270 = vmatmul.mubr.bf16.gmra.mrb[0].mxu0 %v4536
    %v5271 = vpop.f32.mrb[0].mxu0
    %v5272 = vadd.f32 %v4983, %v5271
    %v5273 = vpop.f32.mrb[0].mxu0
    %v5274 = vpop.f32.mrb[0].mxu0
    %v5275 = vadd.f32 %v4986, %v5274
    %v5276 = vpop.f32.mrb[0].mxu0
    %5277 = vmatprep.mubr.bf16.mxu0 0
    %5278 = vmatmul.mubr.bf16.gmra.mrb[0].mxu0 %v4539
    %v5279 = vpop.f32.mrb[0].mxu0
    %v5280 = vadd.f32 %v4991, %v5279
    %v5281 = vpop.f32.mrb[0].mxu0
    %v5282 = vpop.f32.mrb[0].mxu0
    %v5283 = vadd.f32 %v4994, %v5282
    %v5284 = vpop.f32.mrb[0].mxu0
    %5285 = vmatprep.mubr.bf16.mxu0 0
    %5286 = vmatmul.mubr.bf16.gmra.mrb[0].mxu0 %v4542
    %v5287 = vpop.f32.mrb[0].mxu0
    %v5288 = vadd.f32 %v4999, %v5287
    %v5289 = vpop.f32.mrb[0].mxu0
    %v5290 = vpop.f32.mrb[0].mxu0
    %v5291 = vadd.f32 %v5002, %v5290
    %v5292 = vpop.f32.mrb[0].mxu0
    %5293 = vmatprep.mubr.bf16.mxu0 0
    %5294 = vmatmul.mubr.bf16.gmra.mrb[0].mxu0 %v4545
    %v5295 = vpop.f32.mrb[0].mxu0
    %v5296 = vadd.f32 %v5007, %v5295
    %v5297 = vpop.f32.mrb[0].mxu0
    %v5298 = vpop.f32.mrb[0].mxu0
    %v5299 = vadd.f32 %v5010, %v5298
    %v5300 = vpop.f32.mrb[0].mxu0
    %5301 = vmatprep.mubr.bf16.mxu0 0
    %5302 = vmatmul.mubr.bf16.gmra.mrb[0].mxu0 %v4548
    %v5303 = vpop.f32.mrb[0].mxu0
    %v5304 = vadd.f32 %v5015, %v5303
    %v5305 = vpop.f32.mrb[0].mxu0
    %v5306 = vpop.f32.mrb[0].mxu0
    %v5307 = vadd.f32 %v5018, %v5306
    %v5308 = vpop.f32.mrb[0].mxu0
    %5309 = vmatprep.mubr.bf16.mxu0 0
    %5310 = vmatmul.mubr.bf16.gmra.mrb[0].mxu0 %v4551
    %v5311 = vpop.f32.mrb[0].mxu0
    %v5312 = vadd.f32 %v5023, %v5311
    %v5313 = vpop.f32.mrb[0].mxu0
    %v5314 = vpop.f32.mrb[0].mxu0
    %v5315 = vadd.f32 %v5026, %v5314
    %v5316 = vpop.f32.mrb[0].mxu0
    %5317 = vmatprep.mubr.bf16.mxu0 0
    %5318 = vmatmul.mubr.bf16.gmra.mrb[0].mxu0 %v4554
    %v5319 = vpop.f32.mrb[0].mxu0
    %v5320 = vadd.f32 %v5031, %v5319
    %v5321 = vpop.f32.mrb[0].mxu0
    %v5322 = vpop.f32.mrb[0].mxu0
    %v5323 = vadd.f32 %v5034, %v5322
    %v5324 = vpop.f32.mrb[0].mxu0
    %5325 = vdwg.mxu0
    %v5326 = vadd.f32 %v3693, %v5072
    %v5327 = vadd.f32 %v3696, %v5075
    %v5328 = vadd.f32 %v3701, %v5080
    %v5329 = vadd.f32 %v3704, %v5083
    %v5330 = vadd.f32 %v3709, %v5088
    %v5331 = vadd.f32 %v3712, %v5091
    %v5332 = vadd.f32 %v3717, %v5096
    %v5333 = vadd.f32 %v3720, %v5099
    %v5334 = vadd.f32 %v3725, %v5104
    %v5335 = vadd.f32 %v3728, %v5107
    %v5336 = vadd.f32 %v3733, %v5112
    %v5337 = vadd.f32 %v3736, %v5115
    %v5338 = vadd.f32 %v3741, %v5120
    %v5339 = vadd.f32 %v3744, %v5123
    %v5340 = vadd.f32 %v3749, %v5128
    %v5341 = vadd.f32 %v3752, %v5131
    %v5342 = vadd.f32 %v3757, %v5136
    %v5343 = vadd.f32 %v3760, %v5139
    %v5344 = vadd.f32 %v3765, %v5144
    %v5345 = vadd.f32 %v3768, %v5147
    %v5346 = vadd.f32 %v3773, %v5152
    %v5347 = vadd.f32 %v3776, %v5155
    %v5348 = vadd.f32 %v3781, %v5160
    %v5349 = vadd.f32 %v3784, %v5163
    %v5350 = vadd.f32 %v3789, %v5168
    %v5351 = vadd.f32 %v3792, %v5171
    %v5352 = vadd.f32 %v3797, %v5176
    %v5353 = vadd.f32 %v3800, %v5179
    %v5354 = vadd.f32 %v3805, %v5184
    %v5355 = vadd.f32 %v3808, %v5187
    %v5356 = vadd.f32 %v3813, %v5192
    %v5357 = vadd.f32 %v3816, %v5195
    %v5358 = vadd.f32 %v3821, %v5200
    %v5359 = vadd.f32 %v3824, %v5203
    %v5360 = vadd.f32 %v3829, %v5208
    %v5361 = vadd.f32 %v3832, %v5211
    %v5362 = vadd.f32 %v3837, %v5216
    %v5363 = vadd.f32 %v3840, %v5219
    %v5364 = vadd.f32 %v3845, %v5224
    %v5365 = vadd.f32 %v3848, %v5227
    %v5366 = vadd.f32 %v3853, %v5232
    %v5367 = vadd.f32 %v3856, %v5235
    %v5368 = vadd.f32 %v3861, %v5240
    %v5369 = vadd.f32 %v3864, %v5243
    %v5370 = vadd.f32 %v3869, %v5248
    %v5371 = vadd.f32 %v3872, %v5251
    %v5372 = vadd.f32 %v3877, %v5256
    %v5373 = vadd.f32 %v3880, %v5259
    %v5374 = vadd.f32 %v3885, %v5264
    %v5375 = vadd.f32 %v3888, %v5267
    %v5376 = vadd.f32 %v3893, %v5272
    %v5377 = vadd.f32 %v3896, %v5275
    %v5378 = vadd.f32 %v3901, %v5280
    %v5379 = vadd.f32 %v3904, %v5283
    %v5380 = vadd.f32 %v3909, %v5288
    %v5381 = vadd.f32 %v3912, %v5291
    %v5382 = vadd.f32 %v3917, %v5296
    %v5383 = vadd.f32 %v3920, %v5299
    %v5384 = vadd.f32 %v3925, %v5304
    %v5385 = vadd.f32 %v3928, %v5307
    %v5386 = vadd.f32 %v3933, %v5312
    %v5387 = vadd.f32 %v3936, %v5315
    %v5388 = vadd.f32 %v3941, %v5320
    %v5389 = vadd.f32 %v3944, %v5323
    %v5390 = vld [vmem:[%s4 + $0x1] sm:$0x1]
    %v5391 = vlaneseq
    %v5392 = vshrl.u32 %v5391, 7
    %v5393 = vsub.s32 0, %v5392
    %v5394 = vrot.slane %v5390, %v5393
    %v5395 = vadd.f32 %v5326, %v5394
    %v5396 = vadd.f32 %v5327, %v5394
    %v5397 = vadd.f32 %v5328, %v5394
    %v5398 = vadd.f32 %v5329, %v5394
    %v5399 = vadd.f32 %v5330, %v5394
    %v5400 = vadd.f32 %v5331, %v5394
    %v5401 = vadd.f32 %v5332, %v5394
    %v5402 = vadd.f32 %v5333, %v5394
    %v5403 = vadd.f32 %v5334, %v5394
    %v5404 = vadd.f32 %v5335, %v5394
    %v5405 = vadd.f32 %v5336, %v5394
    %v5406 = vadd.f32 %v5337, %v5394
    %v5407 = vadd.f32 %v5338, %v5394
    %v5408 = vadd.f32 %v5339, %v5394
    %v5409 = vadd.f32 %v5340, %v5394
    %v5410 = vadd.f32 %v5341, %v5394
    %v5411 = vadd.f32 %v5342, %v5394
    %v5412 = vadd.f32 %v5343, %v5394
    %v5413 = vadd.f32 %v5344, %v5394
    %v5414 = vadd.f32 %v5345, %v5394
    %v5415 = vadd.f32 %v5346, %v5394
    %v5416 = vadd.f32 %v5347, %v5394
    %v5417 = vadd.f32 %v5348, %v5394
    %v5418 = vadd.f32 %v5349, %v5394
    %v5419 = vadd.f32 %v5350, %v5394
    %v5420 = vadd.f32 %v5351, %v5394
    %v5421 = vadd.f32 %v5352, %v5394
    %v5422 = vadd.f32 %v5353, %v5394
    %v5423 = vadd.f32 %v5354, %v5394
    %v5424 = vadd.f32 %v5355, %v5394
    %v5425 = vadd.f32 %v5356, %v5394
    %v5426 = vadd.f32 %v5357, %v5394
    %v5427 = vadd.f32 %v5358, %v5394
    %v5428 = vadd.f32 %v5359, %v5394
    %v5429 = vadd.f32 %v5360, %v5394
    %v5430 = vadd.f32 %v5361, %v5394
    %v5431 = vadd.f32 %v5362, %v5394
    %v5432 = vadd.f32 %v5363, %v5394
    %v5433 = vadd.f32 %v5364, %v5394
    %v5434 = vadd.f32 %v5365, %v5394
    %v5435 = vadd.f32 %v5366, %v5394
    %v5436 = vadd.f32 %v5367, %v5394
    %v5437 = vadd.f32 %v5368, %v5394
    %v5438 = vadd.f32 %v5369, %v5394
    %v5439 = vadd.f32 %v5370, %v5394
    %v5440 = vadd.f32 %v5371, %v5394
    %v5441 = vadd.f32 %v5372, %v5394
    %v5442 = vadd.f32 %v5373, %v5394
    %v5443 = vadd.f32 %v5374, %v5394
    %v5444 = vadd.f32 %v5375, %v5394
    %v5445 = vadd.f32 %v5376, %v5394
    %v5446 = vadd.f32 %v5377, %v5394
    %v5447 = vadd.f32 %v5378, %v5394
    %v5448 = vadd.f32 %v5379, %v5394
    %v5449 = vadd.f32 %v5380, %v5394
    %v5450 = vadd.f32 %v5381, %v5394
    %v5451 = vadd.f32 %v5382, %v5394
    %v5452 = vadd.f32 %v5383, %v5394
    %v5453 = vadd.f32 %v5384, %v5394
    %v5454 = vadd.f32 %v5385, %v5394
    %v5455 = vadd.f32 %v5386, %v5394
    %v5456 = vadd.f32 %v5387, %v5394
    %v5457 = vadd.f32 %v5388, %v5394
    %v5458 = vadd.f32 %v5389, %v5394
    %v5459 = vmax.f32 %v5395, 0.0
    %v5460 = vmax.f32 %v5396, 0.0
    %v5461 = vmax.f32 %v5397, 0.0
    %v5462 = vmax.f32 %v5398, 0.0
    %v5463 = vmax.f32 %v5399, 0.0
    %v5464 = vmax.f32 %v5400, 0.0
    %v5465 = vmax.f32 %v5401, 0.0
    %v5466 = vmax.f32 %v5402, 0.0
    %v5467 = vmax.f32 %v5403, 0.0
    %v5468 = vmax.f32 %v5404, 0.0
    %v5469 = vmax.f32 %v5405, 0.0
    %v5470 = vmax.f32 %v5406, 0.0
    %v5471 = vmax.f32 %v5407, 0.0
    %v5472 = vmax.f32 %v5408, 0.0
    %v5473 = vmax.f32 %v5409, 0.0
    %v5474 = vmax.f32 %v5410, 0.0
    %v5475 = vmax.f32 %v5411, 0.0
    %v5476 = vmax.f32 %v5412, 0.0
    %v5477 = vmax.f32 %v5413, 0.0
    %v5478 = vmax.f32 %v5414, 0.0
    %v5479 = vmax.f32 %v5415, 0.0
    %v5480 = vmax.f32 %v5416, 0.0
    %v5481 = vmax.f32 %v5417, 0.0
    %v5482 = vmax.f32 %v5418, 0.0
    %v5483 = vmax.f32 %v5419, 0.0
    %v5484 = vmax.f32 %v5420, 0.0
    %v5485 = vmax.f32 %v5421, 0.0
    %v5486 = vmax.f32 %v5422, 0.0
    %v5487 = vmax.f32 %v5423, 0.0
    %v5488 = vmax.f32 %v5424, 0.0
    %v5489 = vmax.f32 %v5425, 0.0
    %v5490 = vmax.f32 %v5426, 0.0
    %v5491 = vmax.f32 %v5427, 0.0
    %v5492 = vmax.f32 %v5428, 0.0
    %v5493 = vmax.f32 %v5429, 0.0
    %v5494 = vmax.f32 %v5430, 0.0
    %v5495 = vmax.f32 %v5431, 0.0
    %v5496 = vmax.f32 %v5432, 0.0
    %v5497 = vmax.f32 %v5433, 0.0
    %v5498 = vmax.f32 %v5434, 0.0
    %v5499 = vmax.f32 %v5435, 0.0
    %v5500 = vmax.f32 %v5436, 0.0
    %v5501 = vmax.f32 %v5437, 0.0
    %v5502 = vmax.f32 %v5438, 0.0
    %v5503 = vmax.f32 %v5439, 0.0
    %v5504 = vmax.f32 %v5440, 0.0
    %v5505 = vmax.f32 %v5441, 0.0
    %v5506 = vmax.f32 %v5442, 0.0
    %v5507 = vmax.f32 %v5443, 0.0
    %v5508 = vmax.f32 %v5444, 0.0
    %v5509 = vmax.f32 %v5445, 0.0
    %v5510 = vmax.f32 %v5446, 0.0
    %v5511 = vmax.f32 %v5447, 0.0
    %v5512 = vmax.f32 %v5448, 0.0
    %v5513 = vmax.f32 %v5449, 0.0
    %v5514 = vmax.f32 %v5450, 0.0
    %v5515 = vmax.f32 %v5451, 0.0
    %v5516 = vmax.f32 %v5452, 0.0
    %v5517 = vmax.f32 %v5453, 0.0
    %v5518 = vmax.f32 %v5454, 0.0
    %v5519 = vmax.f32 %v5455, 0.0
    %v5520 = vmax.f32 %v5456, 0.0
    %v5521 = vmax.f32 %v5457, 0.0
    %v5522 = vmax.f32 %v5458, 0.0
    %v5523 = vpack.c.bf16 %v5460, %v5459
    %v5524 = vpack.c.bf16 %v5462, %v5461
    %v5525 = vpack.c.bf16 %v5464, %v5463
    %v5526 = vpack.c.bf16 %v5466, %v5465
    %v5527 = vpack.c.bf16 %v5468, %v5467
    %v5528 = vpack.c.bf16 %v5470, %v5469
    %v5529 = vpack.c.bf16 %v5472, %v5471
    %v5530 = vpack.c.bf16 %v5474, %v5473
    %v5531 = vpack.c.bf16 %v5476, %v5475
    %v5532 = vpack.c.bf16 %v5478, %v5477
    %v5533 = vpack.c.bf16 %v5480, %v5479
    %v5534 = vpack.c.bf16 %v5482, %v5481
    %v5535 = vpack.c.bf16 %v5484, %v5483
    %v5536 = vpack.c.bf16 %v5486, %v5485
    %v5537 = vpack.c.bf16 %v5488, %v5487
    %v5538 = vpack.c.bf16 %v5490, %v5489
    %v5539 = vpack.c.bf16 %v5492, %v5491
    %v5540 = vpack.c.bf16 %v5494, %v5493
    %v5541 = vpack.c.bf16 %v5496, %v5495
    %v5542 = vpack.c.bf16 %v5498, %v5497
    %v5543 = vpack.c.bf16 %v5500, %v5499
    %v5544 = vpack.c.bf16 %v5502, %v5501
    %v5545 = vpack.c.bf16 %v5504, %v5503
    %v5546 = vpack.c.bf16 %v5506, %v5505
    %v5547 = vpack.c.bf16 %v5508, %v5507
    %v5548 = vpack.c.bf16 %v5510, %v5509
    %v5549 = vpack.c.bf16 %v5512, %v5511
    %v5550 = vpack.c.bf16 %v5514, %v5513
    %v5551 = vpack.c.bf16 %v5516, %v5515
    %v5552 = vpack.c.bf16 %v5518, %v5517
    %v5553 = vpack.c.bf16 %v5520, %v5519
    %v5554 = vpack.c.bf16 %v5522, %v5521
    %v5555 = vld [vmem:[%s3] sm:$0xf]
    %v5556 = vld [vmem:[%s3 + $0x4] sm:$0xf]
    %v5557 = vld [vmem:[%s3 + $0x8] sm:$0xf]
    %v5558 = vld [vmem:[%s3 + $0xc] sm:$0xf]
    %v5559 = vld [vmem:[%s3 + $0x10] sm:$0xf]
    %v5560 = vld [vmem:[%s3 + $0x14] sm:$0xf]
    %v5561 = vld [vmem:[%s3 + $0x18] sm:$0xf]
    %v5562 = vld [vmem:[%s3 + $0x1c] sm:$0xf]
    %v5563 = vld [vmem:[%s3 + $0x20] sm:$0xf]
    %v5564 = vld [vmem:[%s3 + $0x24] sm:$0xf]
    %v5565 = vld [vmem:[%s3 + $0x28] sm:$0xf]
    %v5566 = vld [vmem:[%s3 + $0x2c] sm:$0xf]
    %v5567 = vld [vmem:[%s3 + $0x30] sm:$0xf]
    %v5568 = vld [vmem:[%s3 + $0x34] sm:$0xf]
    %v5569 = vld [vmem:[%s3 + $0x38] sm:$0xf]
    %v5570 = vld [vmem:[%s3 + $0x3c] sm:$0xf]
    %v5571 = vld [vmem:[%s4 + $0x2] sm:$0x1]
    %v5572 = vlaneseq
    %v5573 = vshrl.u32 %v5572, 7
    %v5574 = vsub.s32 0, %v5573
    %v5575 = vrot.slane %v5571, %v5574
    %v5592 = vunpack.c.l.b16 %v5555
    %v5593 = vunpack.c.l.b16 %v5556
    %v5594 = vunpack.c.l.b16 %v5557
    %v5595 = vunpack.c.l.b16 %v5558
    %v5596 = vunpack.c.l.b16 %v5559
    %v5597 = vunpack.c.l.b16 %v5560
    %v5598 = vunpack.c.l.b16 %v5561
    %v5599 = vunpack.c.l.b16 %v5562
    %v5600 = vunpack.c.l.b16 %v5563
    %v5601 = vunpack.c.l.b16 %v5564
    %v5602 = vunpack.c.l.b16 %v5565
    %v5603 = vunpack.c.l.b16 %v5566
    %v5604 = vunpack.c.l.b16 %v5567
    %v5605 = vunpack.c.l.b16 %v5568
    %v5606 = vunpack.c.l.b16 %v5569
    %v5607 = vunpack.c.l.b16 %v5570
    %v5608 = vpack.c.b16 %v5593, %v5592
    %v5609 = vpack.c.b16 %v5595, %v5594
    %v5610 = vpack.c.b16 %v5597, %v5596
    %v5611 = vpack.c.b16 %v5599, %v5598
    %v5612 = vpack.c.b16 %v5601, %v5600
    %v5613 = vpack.c.b16 %v5603, %v5602
    %v5614 = vpack.c.b16 %v5605, %v5604
    %v5615 = vpack.c.b16 %v5607, %v5606
    %5624 = vmatprep.subr.bf16.mxu0 0
    %5625 = vmatpush1.bf16.msra.mxu0 %v5608
    %5626 = vmatprep.subr.bf16.mxu0 0
    %5627 = vmatpush1.bf16.msra.mxu0 %v5609
    %5628 = vmatprep.subr.bf16.mxu0 0
    %5629 = vmatpush1.bf16.msra.mxu0 %v5610
    %5630 = vmatprep.subr.bf16.mxu0 0
    %5631 = vmatpush1.bf16.msra.mxu0 %v5611
    %5632 = vmatprep.subr.bf16.mxu0 0
    %5633 = vmatpush1.bf16.msra.mxu0 %v5612
    %5634 = vmatprep.subr.bf16.mxu0 0
    %5635 = vmatpush1.bf16.msra.mxu0 %v5613
    %5636 = vmatprep.subr.bf16.mxu0 0
    %5637 = vmatpush1.bf16.msra.mxu0 %v5614
    %5638 = vmatprep.subr.bf16.mxu0 0
    %5639 = vmatpush1.bf16.msra.mxu0 %v5615
    %5640 = vmatprep.subr.bf16.mxu0 0
    %5641 = vmatpush1.bf16.msra.mxu0 0
    %5642 = vmatprep.subr.bf16.mxu0 0
    %5643 = vmatpush1.bf16.msra.mxu0 0
    %5644 = vmatprep.subr.bf16.mxu0 0
    %5645 = vmatpush1.bf16.msra.mxu0 0
    %5646 = vmatprep.subr.bf16.mxu0 0
    %5647 = vmatpush1.bf16.msra.mxu0 0
    %5648 = vmatprep.subr.bf16.mxu0 0
    %5649 = vmatpush1.bf16.msra.mxu0 0
    %5650 = vmatprep.subr.bf16.mxu0 0
    %5651 = vmatpush1.bf16.msra.mxu0 0
    %5652 = vmatprep.subr.bf16.mxu0 0
    %5653 = vmatpush1.bf16.msra.mxu0 0
    %5654 = vmatprep.subr.bf16.mxu0 0
    %5655 = vmatpush1.bf16.msra.mxu0 0
    %5656 = vmatprep.mubr.bf16.mxu0 0
    %5657 = vmatmul.mubr.bf16.gmra.mrb[0].mxu0 %v5523
    %v5658 = vpop.f32.mrb[0].mxu0
    %v5659 = vadd.f32 %v5575, %v5658
    %v5660 = vpop.f32.mrb[0].mxu0
    %v5661 = vpop.f32.mrb[0].mxu0
    %v5662 = vadd.f32 %v5575, %v5661
    %v5663 = vpop.f32.mrb[0].mxu0
    %5664 = vmatprep.mubr.bf16.mxu0 0
    %5665 = vmatmul.mubr.bf16.gmra.mrb[0].mxu0 %v5524
    %v5666 = vpop.f32.mrb[0].mxu0
    %v5667 = vadd.f32 %v5575, %v5666
    %v5668 = vpop.f32.mrb[0].mxu0
    %v5669 = vpop.f32.mrb[0].mxu0
    %v5670 = vadd.f32 %v5575, %v5669
    %v5671 = vpop.f32.mrb[0].mxu0
    %5672 = vmatprep.mubr.bf16.mxu0 0
    %5673 = vmatmul.mubr.bf16.gmra.mrb[0].mxu0 %v5525
    %v5674 = vpop.f32.mrb[0].mxu0
    %v5675 = vadd.f32 %v5575, %v5674
    %v5676 = vpop.f32.mrb[0].mxu0
    %v5677 = vpop.f32.mrb[0].mxu0
    %v5678 = vadd.f32 %v5575, %v5677
    %v5679 = vpop.f32.mrb[0].mxu0
    %5680 = vmatprep.mubr.bf16.mxu0 0
    %5681 = vmatmul.mubr.bf16.gmra.mrb[0].mxu0 %v5526
    %v5682 = vpop.f32.mrb[0].mxu0
    %v5683 = vadd.f32 %v5575, %v5682
    %v5684 = vpop.f32.mrb[0].mxu0
    %v5685 = vpop.f32.mrb[0].mxu0
    %v5686 = vadd.f32 %v5575, %v5685
    %v5687 = vpop.f32.mrb[0].mxu0
    %5688 = vmatprep.mubr.bf16.mxu0 0
    %5689 = vmatmul.mubr.bf16.gmra.mrb[0].mxu0 %v5527
    %v5690 = vpop.f32.mrb[0].mxu0
    %v5691 = vadd.f32 %v5575, %v5690
    %v5692 = vpop.f32.mrb[0].mxu0
    %v5693 = vpop.f32.mrb[0].mxu0
    %v5694 = vadd.f32 %v5575, %v5693
    %v5695 = vpop.f32.mrb[0].mxu0
    %5696 = vmatprep.mubr.bf16.mxu0 0
    %5697 = vmatmul.mubr.bf16.gmra.mrb[0].mxu0 %v5528
    %v5698 = vpop.f32.mrb[0].mxu0
    %v5699 = vadd.f32 %v5575, %v5698
    %v5700 = vpop.f32.mrb[0].mxu0
    %v5701 = vpop.f32.mrb[0].mxu0
    %v5702 = vadd.f32 %v5575, %v5701
    %v5703 = vpop.f32.mrb[0].mxu0
    %5704 = vmatprep.mubr.bf16.mxu0 0
    %5705 = vmatmul.mubr.bf16.gmra.mrb[0].mxu0 %v5529
    %v5706 = vpop.f32.mrb[0].mxu0
    %v5707 = vadd.f32 %v5575, %v5706
    %v5708 = vpop.f32.mrb[0].mxu0
    %v5709 = vpop.f32.mrb[0].mxu0
    %v5710 = vadd.f32 %v5575, %v5709
    %v5711 = vpop.f32.mrb[0].mxu0
    %5712 = vmatprep.mubr.bf16.mxu0 0
    %5713 = vmatmul.mubr.bf16.gmra.mrb[0].mxu0 %v5530
    %v5714 = vpop.f32.mrb[0].mxu0
    %v5715 = vadd.f32 %v5575, %v5714
    %v5716 = vpop.f32.mrb[0].mxu0
    %v5717 = vpop.f32.mrb[0].mxu0
    %v5718 = vadd.f32 %v5575, %v5717
    %v5719 = vpop.f32.mrb[0].mxu0
    %5720 = vmatprep.mubr.bf16.mxu0 0
    %5721 = vmatmul.mubr.bf16.gmra.mrb[0].mxu0 %v5531
    %v5722 = vpop.f32.mrb[0].mxu0
    %v5723 = vadd.f32 %v5575, %v5722
    %v5724 = vpop.f32.mrb[0].mxu0
    %v5725 = vpop.f32.mrb[0].mxu0
    %v5726 = vadd.f32 %v5575, %v5725
    %v5727 = vpop.f32.mrb[0].mxu0
    %5728 = vmatprep.mubr.bf16.mxu0 0
    %5729 = vmatmul.mubr.bf16.gmra.mrb[0].mxu0 %v5532
    %v5730 = vpop.f32.mrb[0].mxu0
    %v5731 = vadd.f32 %v5575, %v5730
    %v5732 = vpop.f32.mrb[0].mxu0
    %v5733 = vpop.f32.mrb[0].mxu0
    %v5734 = vadd.f32 %v5575, %v5733
    %v5735 = vpop.f32.mrb[0].mxu0
    %5736 = vmatprep.mubr.bf16.mxu0 0
    %5737 = vmatmul.mubr.bf16.gmra.mrb[0].mxu0 %v5533
    %v5738 = vpop.f32.mrb[0].mxu0
    %v5739 = vadd.f32 %v5575, %v5738
    %v5740 = vpop.f32.mrb[0].mxu0
    %v5741 = vpop.f32.mrb[0].mxu0
    %v5742 = vadd.f32 %v5575, %v5741
    %v5743 = vpop.f32.mrb[0].mxu0
    %5744 = vmatprep.mubr.bf16.mxu0 0
    %5745 = vmatmul.mubr.bf16.gmra.mrb[0].mxu0 %v5534
    %v5746 = vpop.f32.mrb[0].mxu0
    %v5747 = vadd.f32 %v5575, %v5746
    %v5748 = vpop.f32.mrb[0].mxu0
    %v5749 = vpop.f32.mrb[0].mxu0
    %v5750 = vadd.f32 %v5575, %v5749
    %v5751 = vpop.f32.mrb[0].mxu0
    %5752 = vmatprep.mubr.bf16.mxu0 0
    %5753 = vmatmul.mubr.bf16.gmra.mrb[0].mxu0 %v5535
    %v5754 = vpop.f32.mrb[0].mxu0
    %v5755 = vadd.f32 %v5575, %v5754
    %v5756 = vpop.f32.mrb[0].mxu0
    %v5757 = vpop.f32.mrb[0].mxu0
    %v5758 = vadd.f32 %v5575, %v5757
    %v5759 = vpop.f32.mrb[0].mxu0
    %5760 = vmatprep.mubr.bf16.mxu0 0
    %5761 = vmatmul.mubr.bf16.gmra.mrb[0].mxu0 %v5536
    %v5762 = vpop.f32.mrb[0].mxu0
    %v5763 = vadd.f32 %v5575, %v5762
    %v5764 = vpop.f32.mrb[0].mxu0
    %v5765 = vpop.f32.mrb[0].mxu0
    %v5766 = vadd.f32 %v5575, %v5765
    %v5767 = vpop.f32.mrb[0].mxu0
    %5768 = vmatprep.mubr.bf16.mxu0 0
    %5769 = vmatmul.mubr.bf16.gmra.mrb[0].mxu0 %v5537
    %v5770 = vpop.f32.mrb[0].mxu0
    %v5771 = vadd.f32 %v5575, %v5770
    %v5772 = vpop.f32.mrb[0].mxu0
    %v5773 = vpop.f32.mrb[0].mxu0
    %v5774 = vadd.f32 %v5575, %v5773
    %v5775 = vpop.f32.mrb[0].mxu0
    %5776 = vmatprep.mubr.bf16.mxu0 0
    %5777 = vmatmul.mubr.bf16.gmra.mrb[0].mxu0 %v5538
    %v5778 = vpop.f32.mrb[0].mxu0
    %v5779 = vadd.f32 %v5575, %v5778
    %v5780 = vpop.f32.mrb[0].mxu0
    %v5781 = vpop.f32.mrb[0].mxu0
    %v5782 = vadd.f32 %v5575, %v5781
    %v5783 = vpop.f32.mrb[0].mxu0
    %5784 = vmatprep.mubr.bf16.mxu0 0
    %5785 = vmatmul.mubr.bf16.gmra.mrb[0].mxu0 %v5539
    %v5786 = vpop.f32.mrb[0].mxu0
    %v5787 = vadd.f32 %v5575, %v5786
    %v5788 = vpop.f32.mrb[0].mxu0
    %v5789 = vpop.f32.mrb[0].mxu0
    %v5790 = vadd.f32 %v5575, %v5789
    %v5791 = vpop.f32.mrb[0].mxu0
    %5792 = vmatprep.mubr.bf16.mxu0 0
    %5793 = vmatmul.mubr.bf16.gmra.mrb[0].mxu0 %v5540
    %v5794 = vpop.f32.mrb[0].mxu0
    %v5795 = vadd.f32 %v5575, %v5794
    %v5796 = vpop.f32.mrb[0].mxu0
    %v5797 = vpop.f32.mrb[0].mxu0
    %v5798 = vadd.f32 %v5575, %v5797
    %v5799 = vpop.f32.mrb[0].mxu0
    %5800 = vmatprep.mubr.bf16.mxu0 0
    %5801 = vmatmul.mubr.bf16.gmra.mrb[0].mxu0 %v5541
    %v5802 = vpop.f32.mrb[0].mxu0
    %v5803 = vadd.f32 %v5575, %v5802
    %v5804 = vpop.f32.mrb[0].mxu0
    %v5805 = vpop.f32.mrb[0].mxu0
    %v5806 = vadd.f32 %v5575, %v5805
    %v5807 = vpop.f32.mrb[0].mxu0
    %5808 = vmatprep.mubr.bf16.mxu0 0
    %5809 = vmatmul.mubr.bf16.gmra.mrb[0].mxu0 %v5542
    %v5810 = vpop.f32.mrb[0].mxu0
    %v5811 = vadd.f32 %v5575, %v5810
    %v5812 = vpop.f32.mrb[0].mxu0
    %v5813 = vpop.f32.mrb[0].mxu0
    %v5814 = vadd.f32 %v5575, %v5813
    %v5815 = vpop.f32.mrb[0].mxu0
    %5816 = vmatprep.mubr.bf16.mxu0 0
    %5817 = vmatmul.mubr.bf16.gmra.mrb[0].mxu0 %v5543
    %v5818 = vpop.f32.mrb[0].mxu0
    %v5819 = vadd.f32 %v5575, %v5818
    %v5820 = vpop.f32.mrb[0].mxu0
    %v5821 = vpop.f32.mrb[0].mxu0
    %v5822 = vadd.f32 %v5575, %v5821
    %v5823 = vpop.f32.mrb[0].mxu0
    %5824 = vmatprep.mubr.bf16.mxu0 0
    %5825 = vmatmul.mubr.bf16.gmra.mrb[0].mxu0 %v5544
    %v5826 = vpop.f32.mrb[0].mxu0
    %v5827 = vadd.f32 %v5575, %v5826
    %v5828 = vpop.f32.mrb[0].mxu0
    %v5829 = vpop.f32.mrb[0].mxu0
    %v5830 = vadd.f32 %v5575, %v5829
    %v5831 = vpop.f32.mrb[0].mxu0
    %5832 = vmatprep.mubr.bf16.mxu0 0
    %5833 = vmatmul.mubr.bf16.gmra.mrb[0].mxu0 %v5545
    %v5834 = vpop.f32.mrb[0].mxu0
    %v5835 = vadd.f32 %v5575, %v5834
    %v5836 = vpop.f32.mrb[0].mxu0
    %v5837 = vpop.f32.mrb[0].mxu0
    %v5838 = vadd.f32 %v5575, %v5837
    %v5839 = vpop.f32.mrb[0].mxu0
    %5840 = vmatprep.mubr.bf16.mxu0 0
    %5841 = vmatmul.mubr.bf16.gmra.mrb[0].mxu0 %v5546
    %v5842 = vpop.f32.mrb[0].mxu0
    %v5843 = vadd.f32 %v5575, %v5842
    %v5844 = vpop.f32.mrb[0].mxu0
    %v5845 = vpop.f32.mrb[0].mxu0
    %v5846 = vadd.f32 %v5575, %v5845
    %v5847 = vpop.f32.mrb[0].mxu0
    %5848 = vmatprep.mubr.bf16.mxu0 0
    %5849 = vmatmul.mubr.bf16.gmra.mrb[0].mxu0 %v5547
    %v5850 = vpop.f32.mrb[0].mxu0
    %v5851 = vadd.f32 %v5575, %v5850
    %v5852 = vpop.f32.mrb[0].mxu0
    %v5853 = vpop.f32.mrb[0].mxu0
    %v5854 = vadd.f32 %v5575, %v5853
    %v5855 = vpop.f32.mrb[0].mxu0
    %5856 = vmatprep.mubr.bf16.mxu0 0
    %5857 = vmatmul.mubr.bf16.gmra.mrb[0].mxu0 %v5548
    %v5858 = vpop.f32.mrb[0].mxu0
    %v5859 = vadd.f32 %v5575, %v5858
    %v5860 = vpop.f32.mrb[0].mxu0
    %v5861 = vpop.f32.mrb[0].mxu0
    %v5862 = vadd.f32 %v5575, %v5861
    %v5863 = vpop.f32.mrb[0].mxu0
    %5864 = vmatprep.mubr.bf16.mxu0 0
    %5865 = vmatmul.mubr.bf16.gmra.mrb[0].mxu0 %v5549
    %v5866 = vpop.f32.mrb[0].mxu0
    %v5867 = vadd.f32 %v5575, %v5866
    %v5868 = vpop.f32.mrb[0].mxu0
    %v5869 = vpop.f32.mrb[0].mxu0
    %v5870 = vadd.f32 %v5575, %v5869
    %v5871 = vpop.f32.mrb[0].mxu0
    %5872 = vmatprep.mubr.bf16.mxu0 0
    %5873 = vmatmul.mubr.bf16.gmra.mrb[0].mxu0 %v5550
    %v5874 = vpop.f32.mrb[0].mxu0
    %v5875 = vadd.f32 %v5575, %v5874
    %v5876 = vpop.f32.mrb[0].mxu0
    %v5877 = vpop.f32.mrb[0].mxu0
    %v5878 = vadd.f32 %v5575, %v5877
    %v5879 = vpop.f32.mrb[0].mxu0
    %5880 = vmatprep.mubr.bf16.mxu0 0
    %5881 = vmatmul.mubr.bf16.gmra.mrb[0].mxu0 %v5551
    %v5882 = vpop.f32.mrb[0].mxu0
    %v5883 = vadd.f32 %v5575, %v5882
    %v5884 = vpop.f32.mrb[0].mxu0
    %v5885 = vpop.f32.mrb[0].mxu0
    %v5886 = vadd.f32 %v5575, %v5885
    %v5887 = vpop.f32.mrb[0].mxu0
    %5888 = vmatprep.mubr.bf16.mxu0 0
    %5889 = vmatmul.mubr.bf16.gmra.mrb[0].mxu0 %v5552
    %v5890 = vpop.f32.mrb[0].mxu0
    %v5891 = vadd.f32 %v5575, %v5890
    %v5892 = vpop.f32.mrb[0].mxu0
    %v5893 = vpop.f32.mrb[0].mxu0
    %v5894 = vadd.f32 %v5575, %v5893
    %v5895 = vpop.f32.mrb[0].mxu0
    %5896 = vmatprep.mubr.bf16.mxu0 0
    %5897 = vmatmul.mubr.bf16.gmra.mrb[0].mxu0 %v5553
    %v5898 = vpop.f32.mrb[0].mxu0
    %v5899 = vadd.f32 %v5575, %v5898
    %v5900 = vpop.f32.mrb[0].mxu0
    %v5901 = vpop.f32.mrb[0].mxu0
    %v5902 = vadd.f32 %v5575, %v5901
    %v5903 = vpop.f32.mrb[0].mxu0
    %5904 = vmatprep.mubr.bf16.mxu0 0
    %5905 = vmatmul.mubr.bf16.gmra.mrb[0].mxu0 %v5554
    %v5906 = vpop.f32.mrb[0].mxu0
    %v5907 = vadd.f32 %v5575, %v5906
    %v5908 = vpop.f32.mrb[0].mxu0
    %v5909 = vpop.f32.mrb[0].mxu0
    %v5910 = vadd.f32 %v5575, %v5909
    %v5911 = vpop.f32.mrb[0].mxu0
    %5912 = vdwg.mxu0
    %v5913 = vmax.f32 %v5659, 0.0
    %v5914 = vmax.f32 %v5662, 0.0
    %v5915 = vmax.f32 %v5667, 0.0
    %v5916 = vmax.f32 %v5670, 0.0
    %v5917 = vmax.f32 %v5675, 0.0
    %v5918 = vmax.f32 %v5678, 0.0
    %v5919 = vmax.f32 %v5683, 0.0
    %v5920 = vmax.f32 %v5686, 0.0
    %v5921 = vmax.f32 %v5691, 0.0
    %v5922 = vmax.f32 %v5694, 0.0
    %v5923 = vmax.f32 %v5699, 0.0
    %v5924 = vmax.f32 %v5702, 0.0
    %v5925 = vmax.f32 %v5707, 0.0
    %v5926 = vmax.f32 %v5710, 0.0
    %v5927 = vmax.f32 %v5715, 0.0
    %v5928 = vmax.f32 %v5718, 0.0
    %v5929 = vmax.f32 %v5723, 0.0
    %v5930 = vmax.f32 %v5726, 0.0
    %v5931 = vmax.f32 %v5731, 0.0
    %v5932 = vmax.f32 %v5734, 0.0
    %v5933 = vmax.f32 %v5739, 0.0
    %v5934 = vmax.f32 %v5742, 0.0
    %v5935 = vmax.f32 %v5747, 0.0
    %v5936 = vmax.f32 %v5750, 0.0
    %v5937 = vmax.f32 %v5755, 0.0
    %v5938 = vmax.f32 %v5758, 0.0
    %v5939 = vmax.f32 %v5763, 0.0
    %v5940 = vmax.f32 %v5766, 0.0
    %v5941 = vmax.f32 %v5771, 0.0
    %v5942 = vmax.f32 %v5774, 0.0
    %v5943 = vmax.f32 %v5779, 0.0
    %v5944 = vmax.f32 %v5782, 0.0
    %v5945 = vmax.f32 %v5787, 0.0
    %v5946 = vmax.f32 %v5790, 0.0
    %v5947 = vmax.f32 %v5795, 0.0
    %v5948 = vmax.f32 %v5798, 0.0
    %v5949 = vmax.f32 %v5803, 0.0
    %v5950 = vmax.f32 %v5806, 0.0
    %v5951 = vmax.f32 %v5811, 0.0
    %v5952 = vmax.f32 %v5814, 0.0
    %v5953 = vmax.f32 %v5819, 0.0
    %v5954 = vmax.f32 %v5822, 0.0
    %v5955 = vmax.f32 %v5827, 0.0
    %v5956 = vmax.f32 %v5830, 0.0
    %v5957 = vmax.f32 %v5835, 0.0
    %v5958 = vmax.f32 %v5838, 0.0
    %v5959 = vmax.f32 %v5843, 0.0
    %v5960 = vmax.f32 %v5846, 0.0
    %v5961 = vmax.f32 %v5851, 0.0
    %v5962 = vmax.f32 %v5854, 0.0
    %v5963 = vmax.f32 %v5859, 0.0
    %v5964 = vmax.f32 %v5862, 0.0
    %v5965 = vmax.f32 %v5867, 0.0
    %v5966 = vmax.f32 %v5870, 0.0
    %v5967 = vmax.f32 %v5875, 0.0
    %v5968 = vmax.f32 %v5878, 0.0
    %v5969 = vmax.f32 %v5883, 0.0
    %v5970 = vmax.f32 %v5886, 0.0
    %v5971 = vmax.f32 %v5891, 0.0
    %v5972 = vmax.f32 %v5894, 0.0
    %v5973 = vmax.f32 %v5899, 0.0
    %v5974 = vmax.f32 %v5902, 0.0
    %v5975 = vmax.f32 %v5907, 0.0
    %v5976 = vmax.f32 %v5910, 0.0
    %v5977 = vlaneseq
    %v5978 = vand.u32 %v5977, 127
    %vm5979 = vcmp.eq.s32.totalorder %v732, %v5978
    %vm5980 = vcmp.eq.s32.totalorder %v733, %v5978
    %vm5981 = vcmp.eq.s32.totalorder %v734, %v5978
    %vm5982 = vcmp.eq.s32.totalorder %v735, %v5978
    %v5983 = vsel %vm5979, 1.0, 0.0
    %v5984 = vsel %vm5980, 1.0, 0.0
    %v5985 = vsel %vm5981, 1.0, 0.0
    %v5986 = vsel %vm5982, 1.0, 0.0
    %v5987 = vpack.c.bf16 %v5984, %v5983
    %v5988 = vpack.c.bf16 %v5986, %v5985
    %5989 = vmatprep.subr.bf16.mxu0 0
    %5990 = vmatpush1.bf16.msra.mxu0 %v5987
    %5991 = vmatprep.subr.bf16.mxu0 0
    %5992 = vmatpush1.bf16.msra.mxu0 %v5988
    %5993 = vmatprep.subr.bf16.mxu0 0
    %5994 = vmatpush1.bf16.msra.mxu0 0
    %5995 = vmatprep.subr.bf16.mxu0 0
    %5996 = vmatpush1.bf16.msra.mxu0 0
    %5997 = vmatprep.subr.bf16.mxu0 0
    %5998 = vmatpush1.bf16.msra.mxu0 0
    %5999 = vmatprep.subr.bf16.mxu0 0
    %6000 = vmatpush1.bf16.msra.mxu0 0
    %6001 = vmatprep.subr.bf16.mxu0 0
    %6002 = vmatpush1.bf16.msra.mxu0 0
    %6003 = vmatprep.subr.bf16.mxu0 0
    %6004 = vmatpush1.bf16.msra.mxu0 0
    %6005 = vmatprep.subr.bf16.mxu0 0
    %6006 = vmatpush1.bf16.msra.mxu0 0
    %6007 = vmatprep.subr.bf16.mxu0 0
    %6008 = vmatpush1.bf16.msra.mxu0 0
    %6009 = vmatprep.subr.bf16.mxu0 0
    %6010 = vmatpush1.bf16.msra.mxu0 0
    %6011 = vmatprep.subr.bf16.mxu0 0
    %6012 = vmatpush1.bf16.msra.mxu0 0
    %6013 = vmatprep.subr.bf16.mxu0 0
    %6014 = vmatpush1.bf16.msra.mxu0 0
    %6015 = vmatprep.subr.bf16.mxu0 0
    %6016 = vmatpush1.bf16.msra.mxu0 0
    %6017 = vmatprep.subr.bf16.mxu0 0
    %6018 = vmatpush1.bf16.msra.mxu0 0
    %6019 = vmatprep.subr.bf16.mxu0 0
    %6020 = vmatpush1.bf16.msra.mxu0 0
    %6021 = vmatprep.mubr.bf16.mxu0 0
    %6022 = vmatmul.mubr.bf16.gmra.mrb[0].mxu0 %v283
    %v6023 = vpop.f32.mrb[0].mxu0
    %v6024 = vadd.f32 %v5913, %v6023
    %v6025 = vpop.f32.mrb[0].mxu0
    %v6026 = vpop.f32.mrb[0].mxu0
    %v6027 = vadd.f32 %v5914, %v6026
    %v6028 = vpop.f32.mrb[0].mxu0
    %6029 = vmatprep.mubr.bf16.mxu0 0
    %6030 = vmatmul.mubr.bf16.gmra.mrb[0].mxu0 %v286
    %v6031 = vpop.f32.mrb[0].mxu0
    %v6032 = vadd.f32 %v5915, %v6031
    %v6033 = vpop.f32.mrb[0].mxu0
    %v6034 = vpop.f32.mrb[0].mxu0
    %v6035 = vadd.f32 %v5916, %v6034
    %v6036 = vpop.f32.mrb[0].mxu0
    %6037 = vmatprep.mubr.bf16.mxu0 0
    %6038 = vmatmul.mubr.bf16.gmra.mrb[0].mxu0 %v289
    %v6039 = vpop.f32.mrb[0].mxu0
    %v6040 = vadd.f32 %v5917, %v6039
    %v6041 = vpop.f32.mrb[0].mxu0
    %v6042 = vpop.f32.mrb[0].mxu0
    %v6043 = vadd.f32 %v5918, %v6042
    %v6044 = vpop.f32.mrb[0].mxu0
    %6045 = vmatprep.mubr.bf16.mxu0 0
    %6046 = vmatmul.mubr.bf16.gmra.mrb[0].mxu0 %v292
    %v6047 = vpop.f32.mrb[0].mxu0
    %v6048 = vadd.f32 %v5919, %v6047
    %v6049 = vpop.f32.mrb[0].mxu0
    %v6050 = vpop.f32.mrb[0].mxu0
    %v6051 = vadd.f32 %v5920, %v6050
    %v6052 = vpop.f32.mrb[0].mxu0
    %6053 = vmatprep.mubr.bf16.mxu0 0
    %6054 = vmatmul.mubr.bf16.gmra.mrb[0].mxu0 %v295
    %v6055 = vpop.f32.mrb[0].mxu0
    %v6056 = vadd.f32 %v5921, %v6055
    %v6057 = vpop.f32.mrb[0].mxu0
    %v6058 = vpop.f32.mrb[0].mxu0
    %v6059 = vadd.f32 %v5922, %v6058
    %v6060 = vpop.f32.mrb[0].mxu0
    %6061 = vmatprep.mubr.bf16.mxu0 0
    %6062 = vmatmul.mubr.bf16.gmra.mrb[0].mxu0 %v298
    %v6063 = vpop.f32.mrb[0].mxu0
    %v6064 = vadd.f32 %v5923, %v6063
    %v6065 = vpop.f32.mrb[0].mxu0
    %v6066 = vpop.f32.mrb[0].mxu0
    %v6067 = vadd.f32 %v5924, %v6066
    %v6068 = vpop.f32.mrb[0].mxu0
    %6069 = vmatprep.mubr.bf16.mxu0 0
    %6070 = vmatmul.mubr.bf16.gmra.mrb[0].mxu0 %v301
    %v6071 = vpop.f32.mrb[0].mxu0
    %v6072 = vadd.f32 %v5925, %v6071
    %v6073 = vpop.f32.mrb[0].mxu0
    %v6074 = vpop.f32.mrb[0].mxu0
    %v6075 = vadd.f32 %v5926, %v6074
    %v6076 = vpop.f32.mrb[0].mxu0
    %6077 = vmatprep.mubr.bf16.mxu0 0
    %6078 = vmatmul.mubr.bf16.gmra.mrb[0].mxu0 %v304
    %v6079 = vpop.f32.mrb[0].mxu0
    %v6080 = vadd.f32 %v5927, %v6079
    %v6081 = vpop.f32.mrb[0].mxu0
    %v6082 = vpop.f32.mrb[0].mxu0
    %v6083 = vadd.f32 %v5928, %v6082
    %v6084 = vpop.f32.mrb[0].mxu0
    %6085 = vmatprep.mubr.bf16.mxu0 0
    %6086 = vmatmul.mubr.bf16.gmra.mrb[0].mxu0 %v307
    %v6087 = vpop.f32.mrb[0].mxu0
    %v6088 = vadd.f32 %v5929, %v6087
    %v6089 = vpop.f32.mrb[0].mxu0
    %v6090 = vpop.f32.mrb[0].mxu0
    %v6091 = vadd.f32 %v5930, %v6090
    %v6092 = vpop.f32.mrb[0].mxu0
    %6093 = vmatprep.mubr.bf16.mxu0 0
    %6094 = vmatmul.mubr.bf16.gmra.mrb[0].mxu0 %v310
    %v6095 = vpop.f32.mrb[0].mxu0
    %v6096 = vadd.f32 %v5931, %v6095
    %v6097 = vpop.f32.mrb[0].mxu0
    %v6098 = vpop.f32.mrb[0].mxu0
    %v6099 = vadd.f32 %v5932, %v6098
    %v6100 = vpop.f32.mrb[0].mxu0
    %6101 = vmatprep.mubr.bf16.mxu0 0
    %6102 = vmatmul.mubr.bf16.gmra.mrb[0].mxu0 %v313
    %v6103 = vpop.f32.mrb[0].mxu0
    %v6104 = vadd.f32 %v5933, %v6103
    %v6105 = vpop.f32.mrb[0].mxu0
    %v6106 = vpop.f32.mrb[0].mxu0
    %v6107 = vadd.f32 %v5934, %v6106
    %v6108 = vpop.f32.mrb[0].mxu0
    %6109 = vmatprep.mubr.bf16.mxu0 0
    %6110 = vmatmul.mubr.bf16.gmra.mrb[0].mxu0 %v316
    %v6111 = vpop.f32.mrb[0].mxu0
    %v6112 = vadd.f32 %v5935, %v6111
    %v6113 = vpop.f32.mrb[0].mxu0
    %v6114 = vpop.f32.mrb[0].mxu0
    %v6115 = vadd.f32 %v5936, %v6114
    %v6116 = vpop.f32.mrb[0].mxu0
    %6117 = vmatprep.mubr.bf16.mxu0 0
    %6118 = vmatmul.mubr.bf16.gmra.mrb[0].mxu0 %v319
    %v6119 = vpop.f32.mrb[0].mxu0
    %v6120 = vadd.f32 %v5937, %v6119
    %v6121 = vpop.f32.mrb[0].mxu0
    %v6122 = vpop.f32.mrb[0].mxu0
    %v6123 = vadd.f32 %v5938, %v6122
    %v6124 = vpop.f32.mrb[0].mxu0
    %6125 = vmatprep.mubr.bf16.mxu0 0
    %6126 = vmatmul.mubr.bf16.gmra.mrb[0].mxu0 %v322
    %v6127 = vpop.f32.mrb[0].mxu0
    %v6128 = vadd.f32 %v5939, %v6127
    %v6129 = vpop.f32.mrb[0].mxu0
    %v6130 = vpop.f32.mrb[0].mxu0
    %v6131 = vadd.f32 %v5940, %v6130
    %v6132 = vpop.f32.mrb[0].mxu0
    %6133 = vmatprep.mubr.bf16.mxu0 0
    %6134 = vmatmul.mubr.bf16.gmra.mrb[0].mxu0 %v325
    %v6135 = vpop.f32.mrb[0].mxu0
    %v6136 = vadd.f32 %v5941, %v6135
    %v6137 = vpop.f32.mrb[0].mxu0
    %v6138 = vpop.f32.mrb[0].mxu0
    %v6139 = vadd.f32 %v5942, %v6138
    %v6140 = vpop.f32.mrb[0].mxu0
    %6141 = vmatprep.mubr.bf16.mxu0 0
    %6142 = vmatmul.mubr.bf16.gmra.mrb[0].mxu0 %v328
    %v6143 = vpop.f32.mrb[0].mxu0
    %v6144 = vadd.f32 %v5943, %v6143
    %v6145 = vpop.f32.mrb[0].mxu0
    %v6146 = vpop.f32.mrb[0].mxu0
    %v6147 = vadd.f32 %v5944, %v6146
    %v6148 = vpop.f32.mrb[0].mxu0
    %6149 = vmatprep.mubr.bf16.mxu0 0
    %6150 = vmatmul.mubr.bf16.gmra.mrb[0].mxu0 %v331
    %v6151 = vpop.f32.mrb[0].mxu0
    %v6152 = vadd.f32 %v5945, %v6151
    %v6153 = vpop.f32.mrb[0].mxu0
    %v6154 = vpop.f32.mrb[0].mxu0
    %v6155 = vadd.f32 %v5946, %v6154
    %v6156 = vpop.f32.mrb[0].mxu0
    %6157 = vmatprep.mubr.bf16.mxu0 0
    %6158 = vmatmul.mubr.bf16.gmra.mrb[0].mxu0 %v334
    %v6159 = vpop.f32.mrb[0].mxu0
    %v6160 = vadd.f32 %v5947, %v6159
    %v6161 = vpop.f32.mrb[0].mxu0
    %v6162 = vpop.f32.mrb[0].mxu0
    %v6163 = vadd.f32 %v5948, %v6162
    %v6164 = vpop.f32.mrb[0].mxu0
    %6165 = vmatprep.mubr.bf16.mxu0 0
    %6166 = vmatmul.mubr.bf16.gmra.mrb[0].mxu0 %v337
    %v6167 = vpop.f32.mrb[0].mxu0
    %v6168 = vadd.f32 %v5949, %v6167
    %v6169 = vpop.f32.mrb[0].mxu0
    %v6170 = vpop.f32.mrb[0].mxu0
    %v6171 = vadd.f32 %v5950, %v6170
    %v6172 = vpop.f32.mrb[0].mxu0
    %6173 = vmatprep.mubr.bf16.mxu0 0
    %6174 = vmatmul.mubr.bf16.gmra.mrb[0].mxu0 %v340
    %v6175 = vpop.f32.mrb[0].mxu0
    %v6176 = vadd.f32 %v5951, %v6175
    %v6177 = vpop.f32.mrb[0].mxu0
    %v6178 = vpop.f32.mrb[0].mxu0
    %v6179 = vadd.f32 %v5952, %v6178
    %v6180 = vpop.f32.mrb[0].mxu0
    %6181 = vmatprep.mubr.bf16.mxu0 0
    %6182 = vmatmul.mubr.bf16.gmra.mrb[0].mxu0 %v343
    %v6183 = vpop.f32.mrb[0].mxu0
    %v6184 = vadd.f32 %v5953, %v6183
    %v6185 = vpop.f32.mrb[0].mxu0
    %v6186 = vpop.f32.mrb[0].mxu0
    %v6187 = vadd.f32 %v5954, %v6186
    %v6188 = vpop.f32.mrb[0].mxu0
    %6189 = vmatprep.mubr.bf16.mxu0 0
    %6190 = vmatmul.mubr.bf16.gmra.mrb[0].mxu0 %v346
    %v6191 = vpop.f32.mrb[0].mxu0
    %v6192 = vadd.f32 %v5955, %v6191
    %v6193 = vpop.f32.mrb[0].mxu0
    %v6194 = vpop.f32.mrb[0].mxu0
    %v6195 = vadd.f32 %v5956, %v6194
    %v6196 = vpop.f32.mrb[0].mxu0
    %6197 = vmatprep.mubr.bf16.mxu0 0
    %6198 = vmatmul.mubr.bf16.gmra.mrb[0].mxu0 %v349
    %v6199 = vpop.f32.mrb[0].mxu0
    %v6200 = vadd.f32 %v5957, %v6199
    %v6201 = vpop.f32.mrb[0].mxu0
    %v6202 = vpop.f32.mrb[0].mxu0
    %v6203 = vadd.f32 %v5958, %v6202
    %v6204 = vpop.f32.mrb[0].mxu0
    %6205 = vmatprep.mubr.bf16.mxu0 0
    %6206 = vmatmul.mubr.bf16.gmra.mrb[0].mxu0 %v352
    %v6207 = vpop.f32.mrb[0].mxu0
    %v6208 = vadd.f32 %v5959, %v6207
    %v6209 = vpop.f32.mrb[0].mxu0
    %v6210 = vpop.f32.mrb[0].mxu0
    %v6211 = vadd.f32 %v5960, %v6210
    %v6212 = vpop.f32.mrb[0].mxu0
    %6213 = vmatprep.mubr.bf16.mxu0 0
    %6214 = vmatmul.mubr.bf16.gmra.mrb[0].mxu0 %v355
    %v6215 = vpop.f32.mrb[0].mxu0
    %v6216 = vadd.f32 %v5961, %v6215
    %v6217 = vpop.f32.mrb[0].mxu0
    %v6218 = vpop.f32.mrb[0].mxu0
    %v6219 = vadd.f32 %v5962, %v6218
    %v6220 = vpop.f32.mrb[0].mxu0
    %6221 = vmatprep.mubr.bf16.mxu0 0
    %6222 = vmatmul.mubr.bf16.gmra.mrb[0].mxu0 %v358
    %v6223 = vpop.f32.mrb[0].mxu0
    %v6224 = vadd.f32 %v5963, %v6223
    %v6225 = vpop.f32.mrb[0].mxu0
    %v6226 = vpop.f32.mrb[0].mxu0
    %v6227 = vadd.f32 %v5964, %v6226
    %v6228 = vpop.f32.mrb[0].mxu0
    %6229 = vmatprep.mubr.bf16.mxu0 0
    %6230 = vmatmul.mubr.bf16.gmra.mrb[0].mxu0 %v361
    %v6231 = vpop.f32.mrb[0].mxu0
    %v6232 = vadd.f32 %v5965, %v6231
    %v6233 = vpop.f32.mrb[0].mxu0
    %v6234 = vpop.f32.mrb[0].mxu0
    %v6235 = vadd.f32 %v5966, %v6234
    %v6236 = vpop.f32.mrb[0].mxu0
    %6237 = vmatprep.mubr.bf16.mxu0 0
    %6238 = vmatmul.mubr.bf16.gmra.mrb[0].mxu0 %v364
    %v6239 = vpop.f32.mrb[0].mxu0
    %v6240 = vadd.f32 %v5967, %v6239
    %v6241 = vpop.f32.mrb[0].mxu0
    %v6242 = vpop.f32.mrb[0].mxu0
    %v6243 = vadd.f32 %v5968, %v6242
    %v6244 = vpop.f32.mrb[0].mxu0
    %6245 = vmatprep.mubr.bf16.mxu0 0
    %6246 = vmatmul.mubr.bf16.gmra.mrb[0].mxu0 %v367
    %v6247 = vpop.f32.mrb[0].mxu0
    %v6248 = vadd.f32 %v5969, %v6247
    %v6249 = vpop.f32.mrb[0].mxu0
    %v6250 = vpop.f32.mrb[0].mxu0
    %v6251 = vadd.f32 %v5970, %v6250
    %v6252 = vpop.f32.mrb[0].mxu0
    %6253 = vmatprep.mubr.bf16.mxu0 0
    %6254 = vmatmul.mubr.bf16.gmra.mrb[0].mxu0 %v370
    %v6255 = vpop.f32.mrb[0].mxu0
    %v6256 = vadd.f32 %v5971, %v6255
    %v6257 = vpop.f32.mrb[0].mxu0
    %v6258 = vpop.f32.mrb[0].mxu0
    %v6259 = vadd.f32 %v5972, %v6258
    %v6260 = vpop.f32.mrb[0].mxu0
    %6261 = vmatprep.mubr.bf16.mxu0 0
    %6262 = vmatmul.mubr.bf16.gmra.mrb[0].mxu0 %v373
    %v6263 = vpop.f32.mrb[0].mxu0
    %v6264 = vadd.f32 %v5973, %v6263
    %v6265 = vpop.f32.mrb[0].mxu0
    %v6266 = vpop.f32.mrb[0].mxu0
    %v6267 = vadd.f32 %v5974, %v6266
    %v6268 = vpop.f32.mrb[0].mxu0
    %6269 = vmatprep.mubr.bf16.mxu0 0
    %6270 = vmatmul.mubr.bf16.gmra.mrb[0].mxu0 %v376
    %v6271 = vpop.f32.mrb[0].mxu0
    %v6272 = vadd.f32 %v5975, %v6271
    %v6273 = vpop.f32.mrb[0].mxu0
    %v6274 = vpop.f32.mrb[0].mxu0
    %v6275 = vadd.f32 %v5976, %v6274
    %v6276 = vpop.f32.mrb[0].mxu0
    %6277 = vdwg.mxu0
    %v6278 = vmax.f32 %v6024, 0.0
    %v6279 = vmax.f32 %v6027, 0.0
    %v6280 = vmax.f32 %v6032, 0.0
    %v6281 = vmax.f32 %v6035, 0.0
    %v6282 = vmax.f32 %v6040, 0.0
    %v6283 = vmax.f32 %v6043, 0.0
    %v6284 = vmax.f32 %v6048, 0.0
    %v6285 = vmax.f32 %v6051, 0.0
    %v6286 = vmax.f32 %v6056, 0.0
    %v6287 = vmax.f32 %v6059, 0.0
    %v6288 = vmax.f32 %v6064, 0.0
    %v6289 = vmax.f32 %v6067, 0.0
    %v6290 = vmax.f32 %v6072, 0.0
    %v6291 = vmax.f32 %v6075, 0.0
    %v6292 = vmax.f32 %v6080, 0.0
    %v6293 = vmax.f32 %v6083, 0.0
    %v6294 = vmax.f32 %v6088, 0.0
    %v6295 = vmax.f32 %v6091, 0.0
    %v6296 = vmax.f32 %v6096, 0.0
    %v6297 = vmax.f32 %v6099, 0.0
    %v6298 = vmax.f32 %v6104, 0.0
    %v6299 = vmax.f32 %v6107, 0.0
    %v6300 = vmax.f32 %v6112, 0.0
    %v6301 = vmax.f32 %v6115, 0.0
    %v6302 = vmax.f32 %v6120, 0.0
    %v6303 = vmax.f32 %v6123, 0.0
    %v6304 = vmax.f32 %v6128, 0.0
    %v6305 = vmax.f32 %v6131, 0.0
    %v6306 = vmax.f32 %v6136, 0.0
    %v6307 = vmax.f32 %v6139, 0.0
    %v6308 = vmax.f32 %v6144, 0.0
    %v6309 = vmax.f32 %v6147, 0.0
    %v6310 = vmax.f32 %v6152, 0.0
    %v6311 = vmax.f32 %v6155, 0.0
    %v6312 = vmax.f32 %v6160, 0.0
    %v6313 = vmax.f32 %v6163, 0.0
    %v6314 = vmax.f32 %v6168, 0.0
    %v6315 = vmax.f32 %v6171, 0.0
    %v6316 = vmax.f32 %v6176, 0.0
    %v6317 = vmax.f32 %v6179, 0.0
    %v6318 = vmax.f32 %v6184, 0.0
    %v6319 = vmax.f32 %v6187, 0.0
    %v6320 = vmax.f32 %v6192, 0.0
    %v6321 = vmax.f32 %v6195, 0.0
    %v6322 = vmax.f32 %v6200, 0.0
    %v6323 = vmax.f32 %v6203, 0.0
    %v6324 = vmax.f32 %v6208, 0.0
    %v6325 = vmax.f32 %v6211, 0.0
    %v6326 = vmax.f32 %v6216, 0.0
    %v6327 = vmax.f32 %v6219, 0.0
    %v6328 = vmax.f32 %v6224, 0.0
    %v6329 = vmax.f32 %v6227, 0.0
    %v6330 = vmax.f32 %v6232, 0.0
    %v6331 = vmax.f32 %v6235, 0.0
    %v6332 = vmax.f32 %v6240, 0.0
    %v6333 = vmax.f32 %v6243, 0.0
    %v6334 = vmax.f32 %v6248, 0.0
    %v6335 = vmax.f32 %v6251, 0.0
    %v6336 = vmax.f32 %v6256, 0.0
    %v6337 = vmax.f32 %v6259, 0.0
    %v6338 = vmax.f32 %v6264, 0.0
    %v6339 = vmax.f32 %v6267, 0.0
    %v6340 = vmax.f32 %v6272, 0.0
    %v6341 = vmax.f32 %v6275, 0.0
    %v6342 = vpack.c.bf16 %v6279, %v6278
    %v6343 = vpack.c.bf16 %v6281, %v6280
    %v6344 = vpack.c.bf16 %v6283, %v6282
    %v6345 = vpack.c.bf16 %v6285, %v6284
    %v6346 = vpack.c.bf16 %v6287, %v6286
    %v6347 = vpack.c.bf16 %v6289, %v6288
    %v6348 = vpack.c.bf16 %v6291, %v6290
    %v6349 = vpack.c.bf16 %v6293, %v6292
    %v6350 = vpack.c.bf16 %v6295, %v6294
    %v6351 = vpack.c.bf16 %v6297, %v6296
    %v6352 = vpack.c.bf16 %v6299, %v6298
    %v6353 = vpack.c.bf16 %v6301, %v6300
    %v6354 = vpack.c.bf16 %v6303, %v6302
    %v6355 = vpack.c.bf16 %v6305, %v6304
    %v6356 = vpack.c.bf16 %v6307, %v6306
    %v6357 = vpack.c.bf16 %v6309, %v6308
    %v6358 = vpack.c.bf16 %v6311, %v6310
    %v6359 = vpack.c.bf16 %v6313, %v6312
    %v6360 = vpack.c.bf16 %v6315, %v6314
    %v6361 = vpack.c.bf16 %v6317, %v6316
    %v6362 = vpack.c.bf16 %v6319, %v6318
    %v6363 = vpack.c.bf16 %v6321, %v6320
    %v6364 = vpack.c.bf16 %v6323, %v6322
    %v6365 = vpack.c.bf16 %v6325, %v6324
    %v6366 = vpack.c.bf16 %v6327, %v6326
    %v6367 = vpack.c.bf16 %v6329, %v6328
    %v6368 = vpack.c.bf16 %v6331, %v6330
    %v6369 = vpack.c.bf16 %v6333, %v6332
    %v6370 = vpack.c.bf16 %v6335, %v6334
    %v6371 = vpack.c.bf16 %v6337, %v6336
    %v6372 = vpack.c.bf16 %v6339, %v6338
    %v6373 = vpack.c.bf16 %v6341, %v6340
    %v6406 = vunpack.c.l.b16 %v6342
    %v6407 = vunpack.c.h.b16 %v6342
    %v6408 = vunpack.c.l.b16 %v6343
    %v6409 = vunpack.c.h.b16 %v6343
    %v6410 = vunpack.c.l.b16 %v6344
    %v6411 = vunpack.c.h.b16 %v6344
    %v6412 = vunpack.c.l.b16 %v6345
    %v6413 = vunpack.c.h.b16 %v6345
    %v6414 = vunpack.c.l.b16 %v6346
    %v6415 = vunpack.c.h.b16 %v6346
    %v6416 = vunpack.c.l.b16 %v6347
    %v6417 = vunpack.c.h.b16 %v6347
    %v6418 = vunpack.c.l.b16 %v6348
    %v6419 = vunpack.c.h.b16 %v6348
    %v6420 = vunpack.c.l.b16 %v6349
    %v6421 = vunpack.c.h.b16 %v6349
    %v6422 = vunpack.c.l.b16 %v6350
    %v6423 = vunpack.c.h.b16 %v6350
    %v6424 = vunpack.c.l.b16 %v6351
    %v6425 = vunpack.c.h.b16 %v6351
    %v6426 = vunpack.c.l.b16 %v6352
    %v6427 = vunpack.c.h.b16 %v6352
    %v6428 = vunpack.c.l.b16 %v6353
    %v6429 = vunpack.c.h.b16 %v6353
    %v6430 = vunpack.c.l.b16 %v6354
    %v6431 = vunpack.c.h.b16 %v6354
    %v6432 = vunpack.c.l.b16 %v6355
    %v6433 = vunpack.c.h.b16 %v6355
    %v6434 = vunpack.c.l.b16 %v6356
    %v6435 = vunpack.c.h.b16 %v6356
    %v6436 = vunpack.c.l.b16 %v6357
    %v6437 = vunpack.c.h.b16 %v6357
    %v6438 = vunpack.c.l.b16 %v6358
    %v6439 = vunpack.c.h.b16 %v6358
    %v6440 = vunpack.c.l.b16 %v6359
    %v6441 = vunpack.c.h.b16 %v6359
    %v6442 = vunpack.c.l.b16 %v6360
    %v6443 = vunpack.c.h.b16 %v6360
    %v6444 = vunpack.c.l.b16 %v6361
    %v6445 = vunpack.c.h.b16 %v6361
    %v6446 = vunpack.c.l.b16 %v6362
    %v6447 = vunpack.c.h.b16 %v6362
    %v6448 = vunpack.c.l.b16 %v6363
    %v6449 = vunpack.c.h.b16 %v6363
    %v6450 = vunpack.c.l.b16 %v6364
    %v6451 = vunpack.c.h.b16 %v6364
    %v6452 = vunpack.c.l.b16 %v6365
    %v6453 = vunpack.c.h.b16 %v6365
    %v6454 = vunpack.c.l.b16 %v6366
    %v6455 = vunpack.c.h.b16 %v6366
    %v6456 = vunpack.c.l.b16 %v6367
    %v6457 = vunpack.c.h.b16 %v6367
    %v6458 = vunpack.c.l.b16 %v6368
    %v6459 = vunpack.c.h.b16 %v6368
    %v6460 = vunpack.c.l.b16 %v6369
    %v6461 = vunpack.c.h.b16 %v6369
    %v6462 = vunpack.c.l.b16 %v6370
    %v6463 = vunpack.c.h.b16 %v6370
    %v6464 = vunpack.c.l.b16 %v6371
    %v6465 = vunpack.c.h.b16 %v6371
    %v6466 = vunpack.c.l.b16 %v6372
    %v6467 = vunpack.c.h.b16 %v6372
    %v6468 = vunpack.c.l.b16 %v6373
    %v6469 = vunpack.c.h.b16 %v6373
    %v6470 = vpack.c.b16 %v6406, %v6406
    %v6471 = vpack.c.b16 %v6407, %v6407
    %v6472 = vpack.c.b16 %v6408, %v6408
    %v6473 = vpack.c.b16 %v6409, %v6409
    %v6474 = vpack.c.b16 %v6410, %v6410
    %v6475 = vpack.c.b16 %v6411, %v6411
    %v6476 = vpack.c.b16 %v6412, %v6412
    %v6477 = vpack.c.b16 %v6413, %v6413
    %v6478 = vpack.c.b16 %v6414, %v6414
    %v6479 = vpack.c.b16 %v6415, %v6415
    %v6480 = vpack.c.b16 %v6416, %v6416
    %v6481 = vpack.c.b16 %v6417, %v6417
    %v6482 = vpack.c.b16 %v6418, %v6418
    %v6483 = vpack.c.b16 %v6419, %v6419
    %v6484 = vpack.c.b16 %v6420, %v6420
    %v6485 = vpack.c.b16 %v6421, %v6421
    %v6486 = vpack.c.b16 %v6422, %v6422
    %v6487 = vpack.c.b16 %v6423, %v6423
    %v6488 = vpack.c.b16 %v6424, %v6424
    %v6489 = vpack.c.b16 %v6425, %v6425
    %v6490 = vpack.c.b16 %v6426, %v6426
    %v6491 = vpack.c.b16 %v6427, %v6427
    %v6492 = vpack.c.b16 %v6428, %v6428
    %v6493 = vpack.c.b16 %v6429, %v6429
    %v6494 = vpack.c.b16 %v6430, %v6430
    %v6495 = vpack.c.b16 %v6431, %v6431
    %v6496 = vpack.c.b16 %v6432, %v6432
    %v6497 = vpack.c.b16 %v6433, %v6433
    %v6498 = vpack.c.b16 %v6434, %v6434
    %v6499 = vpack.c.b16 %v6435, %v6435
    %v6500 = vpack.c.b16 %v6436, %v6436
    %v6501 = vpack.c.b16 %v6437, %v6437
    %v6502 = vpack.c.b16 %v6438, %v6438
    %v6503 = vpack.c.b16 %v6439, %v6439
    %v6504 = vpack.c.b16 %v6440, %v6440
    %v6505 = vpack.c.b16 %v6441, %v6441
    %v6506 = vpack.c.b16 %v6442, %v6442
    %v6507 = vpack.c.b16 %v6443, %v6443
    %v6508 = vpack.c.b16 %v6444, %v6444
    %v6509 = vpack.c.b16 %v6445, %v6445
    %v6510 = vpack.c.b16 %v6446, %v6446
    %v6511 = vpack.c.b16 %v6447, %v6447
    %v6512 = vpack.c.b16 %v6448, %v6448
    %v6513 = vpack.c.b16 %v6449, %v6449
    %v6514 = vpack.c.b16 %v6450, %v6450
    %v6515 = vpack.c.b16 %v6451, %v6451
    %v6516 = vpack.c.b16 %v6452, %v6452
    %v6517 = vpack.c.b16 %v6453, %v6453
    %v6518 = vpack.c.b16 %v6454, %v6454
    %v6519 = vpack.c.b16 %v6455, %v6455
    %v6520 = vpack.c.b16 %v6456, %v6456
    %v6521 = vpack.c.b16 %v6457, %v6457
    %v6522 = vpack.c.b16 %v6458, %v6458
    %v6523 = vpack.c.b16 %v6459, %v6459
    %v6524 = vpack.c.b16 %v6460, %v6460
    %v6525 = vpack.c.b16 %v6461, %v6461
    %v6526 = vpack.c.b16 %v6462, %v6462
    %v6527 = vpack.c.b16 %v6463, %v6463
    %v6528 = vpack.c.b16 %v6464, %v6464
    %v6529 = vpack.c.b16 %v6465, %v6465
    %v6530 = vpack.c.b16 %v6466, %v6466
    %v6531 = vpack.c.b16 %v6467, %v6467
    %v6532 = vpack.c.b16 %v6468, %v6468
    %v6533 = vpack.c.b16 %v6469, %v6469
    %6598 = vst [vmem:[#allocation6] sm:$0xf] %v6470
    %6599 = vst [vmem:[#allocation6 + $0x4] sm:$0xf] %v6471
    %6600 = vst [vmem:[#allocation6 + $0x8] sm:$0xf] %v6472
    %6601 = vst [vmem:[#allocation6 + $0xc] sm:$0xf] %v6473
    %6602 = vst [vmem:[#allocation6 + $0x10] sm:$0xf] %v6474
    %6603 = vst [vmem:[#allocation6 + $0x14] sm:$0xf] %v6475
    %6604 = vst [vmem:[#allocation6 + $0x18] sm:$0xf] %v6476
    %6605 = vst [vmem:[#allocation6 + $0x1c] sm:$0xf] %v6477
    %6606 = vst [vmem:[#allocation6 + $0x20] sm:$0xf] %v6478
    %6607 = vst [vmem:[#allocation6 + $0x24] sm:$0xf] %v6479
    %6608 = vst [vmem:[#allocation6 + $0x28] sm:$0xf] %v6480
    %6609 = vst [vmem:[#allocation6 + $0x2c] sm:$0xf] %v6481
    %6610 = vst [vmem:[#allocation6 + $0x30] sm:$0xf] %v6482
    %6611 = vst [vmem:[#allocation6 + $0x34] sm:$0xf] %v6483
    %6612 = vst [vmem:[#allocation6 + $0x38] sm:$0xf] %v6484
    %6613 = vst [vmem:[#allocation6 + $0x3c] sm:$0xf] %v6485
    %6614 = vst [vmem:[#allocation6 + $0x40] sm:$0xf] %v6486
    %6615 = vst [vmem:[#allocation6 + $0x44] sm:$0xf] %v6487
    %6616 = vst [vmem:[#allocation6 + $0x48] sm:$0xf] %v6488
    %6617 = vst [vmem:[#allocation6 + $0x4c] sm:$0xf] %v6489
    %6618 = vst [vmem:[#allocation6 + $0x50] sm:$0xf] %v6490
    %6619 = vst [vmem:[#allocation6 + $0x54] sm:$0xf] %v6491
    %6620 = vst [vmem:[#allocation6 + $0x58] sm:$0xf] %v6492
    %6621 = vst [vmem:[#allocation6 + $0x5c] sm:$0xf] %v6493
    %6622 = vst [vmem:[#allocation6 + $0x60] sm:$0xf] %v6494
    %6623 = vst [vmem:[#allocation6 + $0x64] sm:$0xf] %v6495
    %6624 = vst [vmem:[#allocation6 + $0x68] sm:$0xf] %v6496
    %6625 = vst [vmem:[#allocation6 + $0x6c] sm:$0xf] %v6497
    %6626 = vst [vmem:[#allocation6 + $0x70] sm:$0xf] %v6498
    %6627 = vst [vmem:[#allocation6 + $0x74] sm:$0xf] %v6499
    %6628 = vst [vmem:[#allocation6 + $0x78] sm:$0xf] %v6500
    %6629 = vst [vmem:[#allocation6 + $0x7c] sm:$0xf] %v6501
    %6630 = vst [vmem:[#allocation6 + $0x80] sm:$0xf] %v6502
    %6631 = vst [vmem:[#allocation6 + $0x84] sm:$0xf] %v6503
    %6632 = vst [vmem:[#allocation6 + $0x88] sm:$0xf] %v6504
    %6633 = vst [vmem:[#allocation6 + $0x8c] sm:$0xf] %v6505
    %6634 = vst [vmem:[#allocation6 + $0x90] sm:$0xf] %v6506
    %6635 = vst [vmem:[#allocation6 + $0x94] sm:$0xf] %v6507
    %6636 = vst [vmem:[#allocation6 + $0x98] sm:$0xf] %v6508
    %6637 = vst [vmem:[#allocation6 + $0x9c] sm:$0xf] %v6509
    %6638 = vst [vmem:[#allocation6 + $0xa0] sm:$0xf] %v6510
    %6639 = vst [vmem:[#allocation6 + $0xa4] sm:$0xf] %v6511
    %6640 = vst [vmem:[#allocation6 + $0xa8] sm:$0xf] %v6512
    %6641 = vst [vmem:[#allocation6 + $0xac] sm:$0xf] %v6513
    %6642 = vst [vmem:[#allocation6 + $0xb0] sm:$0xf] %v6514
    %6643 = vst [vmem:[#allocation6 + $0xb4] sm:$0xf] %v6515
    %6644 = vst [vmem:[#allocation6 + $0xb8] sm:$0xf] %v6516
    %6645 = vst [vmem:[#allocation6 + $0xbc] sm:$0xf] %v6517
    %6646 = vst [vmem:[#allocation6 + $0xc0] sm:$0xf] %v6518
    %6647 = vst [vmem:[#allocation6 + $0xc4] sm:$0xf] %v6519
    %6648 = vst [vmem:[#allocation6 + $0xc8] sm:$0xf] %v6520
    %6649 = vst [vmem:[#allocation6 + $0xcc] sm:$0xf] %v6521
    %6650 = vst [vmem:[#allocation6 + $0xd0] sm:$0xf] %v6522
    %6651 = vst [vmem:[#allocation6 + $0xd4] sm:$0xf] %v6523
    %6652 = vst [vmem:[#allocation6 + $0xd8] sm:$0xf] %v6524
    %6653 = vst [vmem:[#allocation6 + $0xdc] sm:$0xf] %v6525
    %6654 = vst [vmem:[#allocation6 + $0xe0] sm:$0xf] %v6526
    %6655 = vst [vmem:[#allocation6 + $0xe4] sm:$0xf] %v6527
    %6656 = vst [vmem:[#allocation6 + $0xe8] sm:$0xf] %v6528
    %6657 = vst [vmem:[#allocation6 + $0xec] sm:$0xf] %v6529
    %6658 = vst [vmem:[#allocation6 + $0xf0] sm:$0xf] %v6530
    %6659 = vst [vmem:[#allocation6 + $0xf4] sm:$0xf] %v6531
    %6660 = vst [vmem:[#allocation6 + $0xf8] sm:$0xf] %v6532
    %6661 = vst [vmem:[#allocation6 + $0xfc] sm:$0xf] %v6533
    // Predicated region
    $region26: #{tpu_custom_call.1} parent=1 // pred_check
      _
    $region27: #{tpu_custom_call.1} parent=1 // pred_check_branch
      %6663 = sbr.rel (0) target = $region29
    $region28: #{tpu_custom_call.1} parent=1 // pred_region
      %s6665 = ssub.s32 4096, 4096
      %6666 = vsyncadd [#allocation5], %s6665
      %s6667 = sshll.u32 [#allocation6], 4
      %s6668 = int_to_ptr.vmem [resolvable:$true] %s6667
      %6673 = dma.vmem_to_hbm [thread:$0]  %s6668, 4096, %s5, [#allocation5], 64, 64, 4
    $region29: #{tpu_custom_call.1} parent=1 // pred_fallthru
      _
    // Predicated region
    $region30: #{tpu_custom_call.1} parent=1 // pred_check
      _
    $region31: #{tpu_custom_call.1} parent=1 // pred_check_branch
      %6675 = sbr.rel (0) target = $region33
    $region32: #{tpu_custom_call.1} parent=1 // pred_region
      %6676 = dma.done [#allocation5], 4096
    $region33: #{tpu_custom_call.1} parent=1 // pred_fallthru
      _
    %6677 = vsyncpa [#allocation4], 1
    %6678 = vsyncpa [#allocation5], 1

</llo_original>
